<compile_context>
chip_gen: v7x
topology: tpu7x:2x2x1
jax: 0.10.0
libtpu: 0.0.40
codegen_flags: <defaults>
</compile_context>

<pallas_src>
import functools

import jax
import jax.numpy as jnp
from jax.experimental import pallas as pl
from jax.experimental.pallas import tpu as pltpu

IN_FEATURES = 19962
HIDDEN = 256
K_PADDED = 20480               # next multiple of 128 (and of 10240) >= 19962
NUM_K_SPLITS = 2               # leading "parallel" axis: 2 TCs on v7x, serial on v5e/v6e
K_HALF = K_PADDED // NUM_K_SPLITS   # 10240 rows per split -> one contiguous W1 slab each


def _omic_l1_kernel(x_ref, w1_ref, o_ref):
    """Grid = (k_split,). Each step computes one K-half of x @ W1.

    x_ref  : (B, K_HALF)      bf16
    w1_ref : (K_HALF, HIDDEN) bf16   -- fully contiguous HBM slab
    o_ref  : (1, B, HIDDEN)   f32    -- pre-activation partial for this K-half
    """
    o_ref[0] = jnp.dot(
        x_ref[...], w1_ref[...], preferred_element_type=jnp.float32
    )


def prepare_w1(w1):
    """One-time parameter prep (do NOT call per forward): pad K to 20480 and cast
    the big weight to bf16 for streaming. Rows [19962, 20480) are zero."""
    return jnp.pad(w1, ((0, K_PADDED - w1.shape[0]), (0, 0))).astype(jnp.bfloat16)


@jax.jit
def omic_network_forward(x, w1_padded_bf16, b1, w2, b2):
    """x: [B, 19962] f32 -> [B, embedding_dim] f32."""
    B, K = x.shape
    k_pad, H = w1_padded_bf16.shape
    E = w2.shape[1]
    assert K == IN_FEATURES and H == HIDDEN and k_pad == K_PADDED

    # x is tiny (~80 KB bf16); padding/casting it per call is negligible vs. the
    # ~10.5 MB W1 stream. Padded lanes are zero on both x and W1 -> contribute 0.
    x_p = jnp.pad(x, ((0, 0), (0, K_PADDED - K))).astype(jnp.bfloat16)

    cost = pl.CostEstimate(
        flops=2 * B * K_PADDED * HIDDEN,
        transcendentals=0,
        bytes_accessed=(
            K_PADDED * HIDDEN * 2          # W1 bf16 stream (dominant)
            + B * K_PADDED * 2             # x bf16
            + NUM_K_SPLITS * B * HIDDEN * 4  # f32 partial outputs
        ),
    )

    partials = pl.pallas_call(
        _omic_l1_kernel,
        out_shape=jax.ShapeDtypeStruct((NUM_K_SPLITS, B, HIDDEN), jnp.float32),
        grid_spec=pltpu.PrefetchScalarGridSpec(
            num_scalar_prefetch=0,
            grid=(NUM_K_SPLITS,),
            in_specs=[
                # x K-half: (B, 10240) bf16, last dim 128-aligned.
                pl.BlockSpec((B, K_HALF), lambda h: (0, h)),
                # W1 K-half: (10240, 256) bf16 -> fully contiguous HBM slab.
                pl.BlockSpec((K_HALF, HIDDEN), lambda h: (h, 0)),
            ],
            out_specs=pl.BlockSpec((1, B, HIDDEN), lambda h: (h, 0, 0)),
        ),
        compiler_params=pltpu.CompilerParams(
            dimension_semantics=("parallel",),
        ),
        cost_estimate=cost,
    )(x_p, w1_padded_bf16)

    # Tiny epilogue as XLA ops (exact f32): sum K-halves, bias, ReLU, second Linear.
    pre = partials.sum(axis=0)
    hidden = jnp.maximum(pre + b1[None, :].astype(jnp.float32), 0.0)
    out = jnp.dot(hidden, w2.astype(jnp.float32),
                  precision=jax.lax.Precision.HIGHEST)
    return out + b2[None, :].astype(jnp.float32)


def init_params(key, embedding_dim):
    """Deterministic synthetic parameters matching the PyTorch module's shapes
    (weights stored transposed vs. nn.Linear: W1 [19962,256], W2 [256,E])."""
    k1, k2, k3, k4 = jax.random.split(key, 4)
    # PyTorch Linear default init scale: U(-1/sqrt(fan_in), 1/sqrt(fan_in)).
    s1 = 1.0 / jnp.sqrt(IN_FEATURES)
    s2 = 1.0 / jnp.sqrt(HIDDEN)
    w1 = jax.random.uniform(k1, (IN_FEATURES, HIDDEN), jnp.float32, -s1, s1)
    b1 = jax.random.uniform(k2, (HIDDEN,), jnp.float32, -s1, s1)
    w2 = jax.random.uniform(k3, (HIDDEN, embedding_dim), jnp.float32, -s2, s2)
    b2 = jax.random.uniform(k4, (embedding_dim,), jnp.float32, -s2, s2)
    return w1, b1, w2, b2


if __name__ == "__main__":
    embedding_dim = 32
    batch = 2

    key = jax.random.PRNGKey(0)
    kx, kp = jax.random.split(key)
    x = jax.random.normal(kx, (batch, IN_FEATURES), jnp.float32)
    w1, b1, w2, b2 = init_params(kp, embedding_dim)

    # One-time weight prep (padding + bf16 cast) outside the jitted forward path.
    w1_prepped = jax.block_until_ready(prepare_w1(w1))

    out = omic_network_forward(x, w1_prepped, b1, w2, b2)
    out = jax.block_until_ready(out)

    # Pure-JAX reference using the same bf16-rounded x/W1 stream (f32 accumulation).
    x_bf = x.astype(jnp.bfloat16).astype(jnp.float32)
    w1_bf = w1.astype(jnp.bfloat16).astype(jnp.float32)
    hidden_ref = jnp.maximum(
        jnp.dot(x_bf, w1_bf, precision=jax.lax.Precision.HIGHEST) + b1, 0.0
    )
    ref = jnp.dot(hidden_ref, w2, precision=jax.lax.Precision.HIGHEST) + b2

    assert out.shape == (batch, embedding_dim)
    assert jnp.allclose(out, ref, atol=1e-2, rtol=1e-2), "mismatch vs reference"

    print("KERNEL_OK")
</pallas_src>

<mosaic_0001>
module attributes {stable_mosaic.version = 11 : i64} {
  func.func @_omic_l1_kernel(%arg0: i32, %arg1: memref<2x10240xbf16, #tpu.memory_space<vmem>>, %arg2: memref<10240x256xbf16, #tpu.memory_space<vmem>>, %arg3: memref<1x2x256xf32, #tpu.memory_space<vmem>>) attributes {dimension_semantics = [#tpu.dimension_semantics<parallel>], iteration_bounds = array<i64: 2>, scalar_prefetch = 0 : i64, scratch_operands = 0 : i64, tpu.core_type = #tpu.core_type<tc>, window_params = [{transform_indices = @transform_0, window_bounds = array<i64: 2, 10240>}, {transform_indices = @transform_1, window_bounds = array<i64: 10240, 256>}, {transform_indices = @transform_2, window_bounds = array<i64: 1, 2, 256>}]} {
    %c0 = arith.constant 0 : index
    %c0_0 = arith.constant 0 : index
    %0 = vector.load %arg1[%c0, %c0_0] : memref<2x10240xbf16, #tpu.memory_space<vmem>>, vector<2x10240xbf16>
    %c0_1 = arith.constant 0 : index
    %c0_2 = arith.constant 0 : index
    %1 = vector.load %arg2[%c0_1, %c0_2] : memref<10240x256xbf16, #tpu.memory_space<vmem>>, vector<10240x256xbf16>
    %cst = arith.constant dense<0.000000e+00> : vector<2x256xf32>
    %2 = tpu.matmul %0, %1, %cst {dimension_numbers = #tpu.dot_dimension_numbers<[1], [0], [0], [1], [0, 0, 1, 1], [], []>} : vector<2x10240xbf16>, vector<10240x256xbf16>, vector<2x256xf32> -> vector<2x256xf32>
    %c0_3 = arith.constant 0 : index
    %c0_4 = arith.constant 0 : index
    %c0_5 = arith.constant 0 : index
    %3 = vector.load %arg3[%c0_3, %c0_4, %c0_5] : memref<1x2x256xf32, #tpu.memory_space<vmem>>, vector<1x2x256xf32>
    %4 = vector.shape_cast %3 : vector<1x2x256xf32> to vector<2x256xf32>
    %5 = vector.shape_cast %2 : vector<2x256xf32> to vector<1x2x256xf32>
    tpu.vector_store %arg3[%c0_3, %c0_4, %c0_5], %5 {strides = array<i32>} : memref<1x2x256xf32, #tpu.memory_space<vmem>>, vector<1x2x256xf32>,
    return
  }
  func.func @transform_0(%arg0: i32) -> (i32, i32) {
    %c0_i32 = arith.constant 0 : i32
    %c0_i32_0 = arith.constant 0 : i32
    return %c0_i32, %arg0 : i32, i32
  }
  func.func @transform_1(%arg0: i32) -> (i32, i32) {
    %c0_i32 = arith.constant 0 : i32
    %c0_i32_0 = arith.constant 0 : i32
    return %arg0, %c0_i32 : i32, i32
  }
  func.func @transform_2(%arg0: i32) -> (i32, i32, i32) {
    %c0_i32 = arith.constant 0 : i32
    %c0_i32_0 = arith.constant 0 : i32
    %c0_i32_1 = arith.constant 0 : i32
    return %arg0, %c0_i32, %c0_i32_0 : i32, i32, i32
  }
}

</mosaic_0001>

<llo_original>
// kernel: omic_network_forward.1
$region0: #{omic_network_forward.1}
  #allocation0 [shape = 'u32[]', space=smem, size = 0x4, offset = 0x4, fixed_abs, tag = 'smem constant byte address 0x4 - core index']
  #allocation1 [shape = 'u32[144,128]{1,0:T(1,128)}', space=vmem, size = 0x12000, scoped, tag = 'internal scratch']
  %s0 = inlined_call_operand.vmem [shape: bf16[2,20480], index: 0, kind: input, shape index: {}]
  %s1 = inlined_call_operand.hbm [shape: bf16[20480,256], index: 1, kind: input, shape index: {}]
  %s2 = inlined_call_operand.vmem [shape: f32[2,2,256], index: 2, kind: output, shape index: {}]
  %s3 = sld [smem:[#allocation0]]
  $region45: #{omic_network_forward.1} parent=0
    _
  %s5 = ssub.s32 1, %s3
  %s6 = scalar_select 0, %s5, %s3
  $region1: #{omic_network_forward.1} parent=0
    #allocation2 [shape = 'u8[10485760]{0}', space=vmem, size = 0xa00000, scoped, tag = 'input window, operand 1']
    #allocation3 [shape = 's32[2]{0}', space=sflag, size = 0x8, scoped, tag = 'scoped memory for omic_network_forward.1']
    %7 = vsyncpa [#allocation3], 0
    %s8 = scalar_lea.sflag [#allocation3], 1
    %9 = vsyncpa %s8, 0
    loop: start=0, step=1, limit=4
    $region2: #{omic_network_forward.1} parent=1 // loop_pre_header
      _
    $region3: #{omic_network_forward.1} parent=1 // loop_header
      %s11 = sphi 0, %s15
      %p12 = scmp.ge.s32.totalorder %s11, 4
      %s21 = sphi 0, %s23
      %s24 = sphi 0, %s21
      %s25 = sphi 0, %s24
      %s41 = sphi 0, %s25
      %s47 = sphi 0, %s49
      %s50 = sphi 0, %s47
      %s51 = sphi 0, %s50
      %s67 = sphi 0, %s51
      %s73 = sphi 0, %s75
      %s76 = sphi 0, %s73
      %s77 = sphi 0, %s76
      %s93 = sphi 0, %s77
    $region4: #{omic_network_forward.1} parent=1 // loop_header_branch
      %14 = sbr.rel (%p12) target = $region8
    $region5: #{omic_network_forward.1} parent=1 // loop_body
      %s16 = ssub.s32 %s11, 1
      %s17 = ssub.s32 %s11, 2
      %s18 = sadd.s32 %s11, 1
      %s19 = ssub.s32 %s11, %s18
      %p20 = scmp.eq.s32.totalorder %s19, 0
      %s22 = sadd.s32 %s21, 1
      %s23 = scalar_select %p20, %s21, %s22
      %p26 = pneg %p20
      %p27 = scmp.eq.s32.totalorder %s11, 1
      %p28 = por %p26, %p27
      %p29 = scmp.ne.s32.totalorder %s21, %s24
      %p30 = scmp.eq.s32.totalorder %s11, 0
      %p31 = por %p29, %p30
      %p32 = scmp.ne.s32.totalorder %s21, %s24
      %p33 = scmp.eq.s32.totalorder %s16, 1
      %p34 = por %p32, %p33
      %p35 = scmp.ne.s32.totalorder %s24, %s25
      %p36 = scmp.eq.s32.totalorder %s16, 0
      %p37 = por %p35, %p36
      %p38 = scmp.ne.s32.totalorder %s24, %s25
      %p39 = scmp.eq.s32.totalorder %s17, 1
      %p40 = por %p38, %p39
      %p42 = scmp.ne.s32.totalorder %s25, %s41
      %p43 = scmp.eq.s32.totalorder %s17, 0
      %p44 = por %p42, %p43
      %s45 = ssub.s32 %s11, %s18
      %p46 = scmp.eq.s32.totalorder %s45, 0
      %s48 = sadd.s32 %s47, 1
      %s49 = scalar_select %p46, %s47, %s48
      %p52 = pneg %p46
      %p53 = scmp.eq.s32.totalorder %s11, 1
      %p54 = por %p52, %p53
      %p55 = scmp.ne.s32.totalorder %s47, %s50
      %p56 = scmp.eq.s32.totalorder %s11, 0
      %p57 = por %p55, %p56
      %p58 = scmp.ne.s32.totalorder %s47, %s50
      %p59 = scmp.eq.s32.totalorder %s16, 1
      %p60 = por %p58, %p59
      %p61 = scmp.ne.s32.totalorder %s50, %s51
      %p62 = scmp.eq.s32.totalorder %s16, 0
      %p63 = por %p61, %p62
      %p64 = scmp.ne.s32.totalorder %s50, %s51
      %p65 = scmp.eq.s32.totalorder %s17, 1
      %p66 = por %p64, %p65
      %p68 = scmp.ne.s32.totalorder %s51, %s67
      %p69 = scmp.eq.s32.totalorder %s17, 0
      %p70 = por %p68, %p69
      %s71 = ssub.s32 %s11, %s18
      %p72 = scmp.eq.s32.totalorder %s71, 0
      %s74 = sadd.s32 %s73, 1
      %s75 = scalar_select %p72, %s73, %s74
      %p78 = pneg %p72
      %p79 = scmp.eq.s32.totalorder %s11, 1
      %p80 = por %p78, %p79
      %p81 = scmp.ne.s32.totalorder %s73, %s76
      %p82 = scmp.eq.s32.totalorder %s11, 0
      %p83 = por %p81, %p82
      %p84 = scmp.ne.s32.totalorder %s73, %s76
      %p85 = scmp.eq.s32.totalorder %s16, 1
      %p86 = por %p84, %p85
      %p87 = scmp.ne.s32.totalorder %s76, %s77
      %p88 = scmp.eq.s32.totalorder %s16, 0
      %p89 = por %p87, %p88
      %p90 = scmp.ne.s32.totalorder %s76, %s77
      %p91 = scmp.eq.s32.totalorder %s17, 1
      %p92 = por %p90, %p91
      %p94 = scmp.ne.s32.totalorder %s77, %s93
      %p95 = scmp.eq.s32.totalorder %s17, 0
      %p96 = por %p94, %p95
      %p97 = scmp.le.s32.totalorder 1, %s11
      %p98 = scmp.lt.s32.totalorder %s11, 3
      %p99 = pnand %p97, %p98
      %p100 = pneg %p99
      // Predicated region
      $region9: #{omic_network_forward.1} parent=5 // pred_check
        _
      $region10: #{omic_network_forward.1} parent=5 // pred_check_branch
        %102 = sbr.rel (%p99) target = $region12
      $region11: #{omic_network_forward.1} parent=5 // pred_region
        %s103 = ssub.s32 %s11, 1
      $region12: #{omic_network_forward.1} parent=5 // pred_fallthru
        _
      %p104 = scmp.lt.s32.totalorder %s11, 2
      // Predicated region
      $region13: #{omic_network_forward.1} parent=5 // pred_check
        %p105 = pneg %p104
      $region14: #{omic_network_forward.1} parent=5 // pred_check_branch
        %107 = sbr.rel (%p105) target = $region16
      $region15: #{omic_network_forward.1} parent=5 // pred_region
        // Predicated region
        $region17: #{omic_network_forward.1} parent=15 // pred_check
          %p108 = pneg %p31
        $region18: #{omic_network_forward.1} parent=15 // pred_check_branch
          %110 = sbr.rel (%p108) target = $region20
        $region19: #{omic_network_forward.1} parent=15 // pred_region
          %s111 = smul.u32 80, %s11
          %p112 = scmp.lt.s32.totalorder %s111, 159
          %s113 = scalar_select %p112, %s111, 159
          %s114 = scalar_lea.vmem %s0, %s113
          %s115 = smul.u32 80, %s11
        $region20: #{omic_network_forward.1} parent=15 // pred_fallthru
          _
        // Predicated region
        $region21: #{omic_network_forward.1} parent=15 // pred_check
          %p116 = pneg %p57
        $region22: #{omic_network_forward.1} parent=15 // pred_check_branch
          %118 = sbr.rel (%p116) target = $region24
        $region23: #{omic_network_forward.1} parent=15 // pred_region
          %s119 = sand.u32 %s47, 1
          %s120 = scalar_lea.sflag [#allocation3], %s119
          %s121 = sand.u32 %s47, 1
          %s122 = smul.addr %s121, 10240
          %s123 = scalar_lea.vmem [#allocation2], %s122
          %s124 = smul.u32 1280, %s11
          %s126 = ssub.s32 163840, 163840
          %127 = vsyncadd %s120, %s126
          %s128 = smul.addr %s124, 2
          %s129 = smul.addr %s128, 64
          %s130 = scalar_lea.hbm %s1, %s129
          %s131 = sshll.u32 %s123, 4
          %s132 = int_to_ptr.vmem [resolvable:$true] %s131
          %137 = dma.hbm_to_vmem [thread:$0]  %s130, 163840, %s132, %s120, 128, 128, 8
        $region24: #{omic_network_forward.1} parent=15 // pred_fallthru
          _
      $region16: #{omic_network_forward.1} parent=5 // pred_fallthru
        _
      %p138 = scmp.le.s32.totalorder 1, %s11
      %p139 = scmp.lt.s32.totalorder %s11, 3
      %p140 = pnand %p138, %p139
      %p141 = pneg %p140
      // Predicated region
      $region25: #{omic_network_forward.1} parent=5 // pred_check
        _
      $region26: #{omic_network_forward.1} parent=5 // pred_check_branch
        %143 = sbr.rel (%p140) target = $region28
      $region27: #{omic_network_forward.1} parent=5 // pred_region
        %s144 = ssub.s32 %s11, 1
        %s145 = sand.u32 %s50, 1
        %s146 = scalar_lea.sflag [#allocation3], %s145
        %s147 = sand.u32 %s50, 1
        %s148 = smul.addr %s147, 10240
        %s149 = scalar_lea.vmem [#allocation2], %s148
        // Predicated region
        $region29: #{omic_network_forward.1} parent=27 // pred_check
          %p150 = pneg %p63
        $region30: #{omic_network_forward.1} parent=27 // pred_check_branch
          %152 = sbr.rel (%p150) target = $region32
        $region31: #{omic_network_forward.1} parent=27 // pred_region
          %153 = dma.done %s146, 163840
        $region32: #{omic_network_forward.1} parent=27 // pred_fallthru
          _
        %s154 = smul.u32 80, %s16
        %p155 = scmp.lt.s32.totalorder %s154, 159
        %s156 = scalar_select %p155, %s154, 159
        %s157 = scalar_lea.vmem %s0, %s156
        %p158 = pneg %p37
        %p159 = pneg %p34
        %s160 = sand.u32 %s50, 1
        %s161 = scalar_lea.sflag [#allocation3], %s160
        %s162 = sand.u32 %s50, 1
        %s163 = smul.addr %s162, 10240
        %s164 = scalar_lea.vmem [#allocation2], %s163
        %p165 = pneg %p63
        %p166 = pneg %p60
        %p167 = pneg %p89
        %p168 = pneg %p86
        %p169 = scmp.lt.s32.totalorder %s16, 1
        %s170 = scalar_select %p169, %s16, 1
        %s171 = smul.addr %s170, 2
        %s172 = smul.addr %s171, 2
        %s173 = scalar_lea.vmem %s2, %s172
        %s174 = smul.u32 80, %s16
        %p175 = scmp.lt.s32.totalorder %s174, 159
        %s176 = scalar_select %p175, %s174, 159
        %s177 = scalar_lea.vmem %s0, %s176
        %s178 = smul.u32 80, %s16
        %s179 = smul.u32 1280, %s16
        %p180 = scmp.lt.s32.totalorder %s16, 1
        %s181 = scalar_select %p180, %s16, 1
        %s182 = smul.addr %s181, 2
        %s183 = smul.addr %s182, 2
        %s184 = scalar_lea.vmem %s2, %s183
        %v185 = vld [vmem:[%s177] sm:$0xff]
        %v186 = vld [vmem:[%s177 + $0x8] sm:$0xff]
        %v187 = vld [vmem:[%s177 + $0x10] sm:$0xff]
        %v188 = vld [vmem:[%s177 + $0x18] sm:$0xff]
        %v189 = vld [vmem:[%s177 + $0x20] sm:$0xff]
        %v190 = vld [vmem:[%s177 + $0x28] sm:$0xff]
        %v191 = vld [vmem:[%s177 + $0x30] sm:$0xff]
        %v192 = vld [vmem:[%s177 + $0x38] sm:$0xff]
        %v193 = vld [vmem:[%s177 + $0x40] sm:$0xff]
        %v194 = vld [vmem:[%s177 + $0x48] sm:$0xff]
        %v195 = vld [vmem:[%s149] sm:$0xff]
        %v196 = vld [vmem:[%s149 + $0x8] sm:$0xff]
        %v197 = vld [vmem:[%s149 + $0x10] sm:$0xff]
        %v198 = vld [vmem:[%s149 + $0x18] sm:$0xff]
        %v199 = vld [vmem:[%s149 + $0x20] sm:$0xff]
        %v200 = vld [vmem:[%s149 + $0x28] sm:$0xff]
        %v201 = vld [vmem:[%s149 + $0x30] sm:$0xff]
        %v202 = vld [vmem:[%s149 + $0x38] sm:$0xff]
        %v203 = vld [vmem:[%s149 + $0x40] sm:$0xff]
        %v204 = vld [vmem:[%s149 + $0x48] sm:$0xff]
        %v205 = vld [vmem:[%s149 + $0x50] sm:$0xff]
        %v206 = vld [vmem:[%s149 + $0x58] sm:$0xff]
        %v207 = vld [vmem:[%s149 + $0x60] sm:$0xff]
        %v208 = vld [vmem:[%s149 + $0x68] sm:$0xff]
        %v209 = vld [vmem:[%s149 + $0x70] sm:$0xff]
        %v210 = vld [vmem:[%s149 + $0x78] sm:$0xff]
        %v211 = vld [vmem:[%s149 + $0x80] sm:$0xff]
        %v212 = vld [vmem:[%s149 + $0x88] sm:$0xff]
        %v213 = vld [vmem:[%s149 + $0x90] sm:$0xff]
        %v214 = vld [vmem:[%s149 + $0x98] sm:$0xff]
        %v215 = vld [vmem:[%s149 + $0xa0] sm:$0xff]
        %v216 = vld [vmem:[%s149 + $0xa8] sm:$0xff]
        %v217 = vld [vmem:[%s149 + $0xb0] sm:$0xff]
        %v218 = vld [vmem:[%s149 + $0xb8] sm:$0xff]
        %v219 = vld [vmem:[%s149 + $0xc0] sm:$0xff]
        %v220 = vld [vmem:[%s149 + $0xc8] sm:$0xff]
        %v221 = vld [vmem:[%s149 + $0xd0] sm:$0xff]
        %v222 = vld [vmem:[%s149 + $0xd8] sm:$0xff]
        %v223 = vld [vmem:[%s149 + $0xe0] sm:$0xff]
        %v224 = vld [vmem:[%s149 + $0xe8] sm:$0xff]
        %v225 = vld [vmem:[%s149 + $0xf0] sm:$0xff]
        %v226 = vld [vmem:[%s149 + $0xf8] sm:$0xff]
        %v227 = vld [vmem:[%s149 + $0x100] sm:$0xff]
        %v228 = vld [vmem:[%s149 + $0x108] sm:$0xff]
        %v229 = vld [vmem:[%s149 + $0x110] sm:$0xff]
        %v230 = vld [vmem:[%s149 + $0x118] sm:$0xff]
        %v231 = vld [vmem:[%s149 + $0x120] sm:$0xff]
        %v232 = vld [vmem:[%s149 + $0x128] sm:$0xff]
        %v233 = vld [vmem:[%s149 + $0x130] sm:$0xff]
        %v234 = vld [vmem:[%s149 + $0x138] sm:$0xff]
        %v235 = vld [vmem:[%s149 + $0x140] sm:$0xff]
        %v236 = vld [vmem:[%s149 + $0x148] sm:$0xff]
        %v237 = vld [vmem:[%s149 + $0x150] sm:$0xff]
        %v238 = vld [vmem:[%s149 + $0x158] sm:$0xff]
        %v239 = vld [vmem:[%s149 + $0x160] sm:$0xff]
        %v240 = vld [vmem:[%s149 + $0x168] sm:$0xff]
        %v241 = vld [vmem:[%s149 + $0x170] sm:$0xff]
        %v242 = vld [vmem:[%s149 + $0x178] sm:$0xff]
        %v243 = vld [vmem:[%s149 + $0x180] sm:$0xff]
        %v244 = vld [vmem:[%s149 + $0x188] sm:$0xff]
        %v245 = vld [vmem:[%s149 + $0x190] sm:$0xff]
        %v246 = vld [vmem:[%s149 + $0x198] sm:$0xff]
        %v247 = vld [vmem:[%s149 + $0x1a0] sm:$0xff]
        %v248 = vld [vmem:[%s149 + $0x1a8] sm:$0xff]
        %v249 = vld [vmem:[%s149 + $0x1b0] sm:$0xff]
        %v250 = vld [vmem:[%s149 + $0x1b8] sm:$0xff]
        %v251 = vld [vmem:[%s149 + $0x1c0] sm:$0xff]
        %v252 = vld [vmem:[%s149 + $0x1c8] sm:$0xff]
        %v253 = vld [vmem:[%s149 + $0x1d0] sm:$0xff]
        %v254 = vld [vmem:[%s149 + $0x1d8] sm:$0xff]
        %v255 = vld [vmem:[%s149 + $0x1e0] sm:$0xff]
        %v256 = vld [vmem:[%s149 + $0x1e8] sm:$0xff]
        %v257 = vld [vmem:[%s149 + $0x1f0] sm:$0xff]
        %v258 = vld [vmem:[%s149 + $0x1f8] sm:$0xff]
        %v259 = vld [vmem:[%s149 + $0x200] sm:$0xff]
        %v260 = vld [vmem:[%s149 + $0x208] sm:$0xff]
        %v261 = vld [vmem:[%s149 + $0x210] sm:$0xff]
        %v262 = vld [vmem:[%s149 + $0x218] sm:$0xff]
        %v263 = vld [vmem:[%s149 + $0x220] sm:$0xff]
        %v264 = vld [vmem:[%s149 + $0x228] sm:$0xff]
        %v265 = vld [vmem:[%s149 + $0x230] sm:$0xff]
        %v266 = vld [vmem:[%s149 + $0x238] sm:$0xff]
        %v267 = vld [vmem:[%s149 + $0x240] sm:$0xff]
        %v268 = vld [vmem:[%s149 + $0x248] sm:$0xff]
        %v269 = vld [vmem:[%s149 + $0x250] sm:$0xff]
        %v270 = vld [vmem:[%s149 + $0x258] sm:$0xff]
        %v271 = vld [vmem:[%s149 + $0x260] sm:$0xff]
        %v272 = vld [vmem:[%s149 + $0x268] sm:$0xff]
        %v273 = vld [vmem:[%s149 + $0x270] sm:$0xff]
        %v274 = vld [vmem:[%s149 + $0x278] sm:$0xff]
        %v275 = vld [vmem:[%s149 + $0x280] sm:$0xff]
        %v276 = vld [vmem:[%s149 + $0x288] sm:$0xff]
        %v277 = vld [vmem:[%s149 + $0x290] sm:$0xff]
        %v278 = vld [vmem:[%s149 + $0x298] sm:$0xff]
        %v279 = vld [vmem:[%s149 + $0x2a0] sm:$0xff]
        %v280 = vld [vmem:[%s149 + $0x2a8] sm:$0xff]
        %v281 = vld [vmem:[%s149 + $0x2b0] sm:$0xff]
        %v282 = vld [vmem:[%s149 + $0x2b8] sm:$0xff]
        %v283 = vld [vmem:[%s149 + $0x2c0] sm:$0xff]
        %v284 = vld [vmem:[%s149 + $0x2c8] sm:$0xff]
        %v285 = vld [vmem:[%s149 + $0x2d0] sm:$0xff]
        %v286 = vld [vmem:[%s149 + $0x2d8] sm:$0xff]
        %v287 = vld [vmem:[%s149 + $0x2e0] sm:$0xff]
        %v288 = vld [vmem:[%s149 + $0x2e8] sm:$0xff]
        %v289 = vld [vmem:[%s149 + $0x2f0] sm:$0xff]
        %v290 = vld [vmem:[%s149 + $0x2f8] sm:$0xff]
        %v291 = vld [vmem:[%s149 + $0x300] sm:$0xff]
        %v292 = vld [vmem:[%s149 + $0x308] sm:$0xff]
        %v293 = vld [vmem:[%s149 + $0x310] sm:$0xff]
        %v294 = vld [vmem:[%s149 + $0x318] sm:$0xff]
        %v295 = vld [vmem:[%s149 + $0x320] sm:$0xff]
        %v296 = vld [vmem:[%s149 + $0x328] sm:$0xff]
        %v297 = vld [vmem:[%s149 + $0x330] sm:$0xff]
        %v298 = vld [vmem:[%s149 + $0x338] sm:$0xff]
        %v299 = vld [vmem:[%s149 + $0x340] sm:$0xff]
        %v300 = vld [vmem:[%s149 + $0x348] sm:$0xff]
        %v301 = vld [vmem:[%s149 + $0x350] sm:$0xff]
        %v302 = vld [vmem:[%s149 + $0x358] sm:$0xff]
        %v303 = vld [vmem:[%s149 + $0x360] sm:$0xff]
        %v304 = vld [vmem:[%s149 + $0x368] sm:$0xff]
        %v305 = vld [vmem:[%s149 + $0x370] sm:$0xff]
        %v306 = vld [vmem:[%s149 + $0x378] sm:$0xff]
        %v307 = vld [vmem:[%s149 + $0x380] sm:$0xff]
        %v308 = vld [vmem:[%s149 + $0x388] sm:$0xff]
        %v309 = vld [vmem:[%s149 + $0x390] sm:$0xff]
        %v310 = vld [vmem:[%s149 + $0x398] sm:$0xff]
        %v311 = vld [vmem:[%s149 + $0x3a0] sm:$0xff]
        %v312 = vld [vmem:[%s149 + $0x3a8] sm:$0xff]
        %v313 = vld [vmem:[%s149 + $0x3b0] sm:$0xff]
        %v314 = vld [vmem:[%s149 + $0x3b8] sm:$0xff]
        %v315 = vld [vmem:[%s149 + $0x3c0] sm:$0xff]
        %v316 = vld [vmem:[%s149 + $0x3c8] sm:$0xff]
        %v317 = vld [vmem:[%s149 + $0x3d0] sm:$0xff]
        %v318 = vld [vmem:[%s149 + $0x3d8] sm:$0xff]
        %v319 = vld [vmem:[%s149 + $0x3e0] sm:$0xff]
        %v320 = vld [vmem:[%s149 + $0x3e8] sm:$0xff]
        %v321 = vld [vmem:[%s149 + $0x3f0] sm:$0xff]
        %v322 = vld [vmem:[%s149 + $0x3f8] sm:$0xff]
        %v323 = vld [vmem:[%s149 + $0x400] sm:$0xff]
        %v324 = vld [vmem:[%s149 + $0x408] sm:$0xff]
        %v325 = vld [vmem:[%s149 + $0x410] sm:$0xff]
        %v326 = vld [vmem:[%s149 + $0x418] sm:$0xff]
        %v327 = vld [vmem:[%s149 + $0x420] sm:$0xff]
        %v328 = vld [vmem:[%s149 + $0x428] sm:$0xff]
        %v329 = vld [vmem:[%s149 + $0x430] sm:$0xff]
        %v330 = vld [vmem:[%s149 + $0x438] sm:$0xff]
        %v331 = vld [vmem:[%s149 + $0x440] sm:$0xff]
        %v332 = vld [vmem:[%s149 + $0x448] sm:$0xff]
        %v333 = vld [vmem:[%s149 + $0x450] sm:$0xff]
        %v334 = vld [vmem:[%s149 + $0x458] sm:$0xff]
        %v335 = vld [vmem:[%s149 + $0x460] sm:$0xff]
        %v336 = vld [vmem:[%s149 + $0x468] sm:$0xff]
        %v337 = vld [vmem:[%s149 + $0x470] sm:$0xff]
        %v338 = vld [vmem:[%s149 + $0x478] sm:$0xff]
        %v339 = vld [vmem:[%s149 + $0x480] sm:$0xff]
        %v340 = vld [vmem:[%s149 + $0x488] sm:$0xff]
        %v341 = vld [vmem:[%s149 + $0x490] sm:$0xff]
        %v342 = vld [vmem:[%s149 + $0x498] sm:$0xff]
        %v343 = vld [vmem:[%s149 + $0x4a0] sm:$0xff]
        %v344 = vld [vmem:[%s149 + $0x4a8] sm:$0xff]
        %v345 = vld [vmem:[%s149 + $0x4b0] sm:$0xff]
        %v346 = vld [vmem:[%s149 + $0x4b8] sm:$0xff]
        %v347 = vld [vmem:[%s149 + $0x4c0] sm:$0xff]
        %v348 = vld [vmem:[%s149 + $0x4c8] sm:$0xff]
        %v349 = vld [vmem:[%s149 + $0x4d0] sm:$0xff]
        %v350 = vld [vmem:[%s149 + $0x4d8] sm:$0xff]
        %v351 = vld [vmem:[%s149 + $0x4e0] sm:$0xff]
        %v352 = vld [vmem:[%s149 + $0x4e8] sm:$0xff]
        %v353 = vld [vmem:[%s149 + $0x4f0] sm:$0xff]
        %v354 = vld [vmem:[%s149 + $0x4f8] sm:$0xff]
        %v355 = vld [vmem:[%s149 + $0x500] sm:$0xff]
        %v356 = vld [vmem:[%s149 + $0x508] sm:$0xff]
        %v357 = vld [vmem:[%s149 + $0x510] sm:$0xff]
        %v358 = vld [vmem:[%s149 + $0x518] sm:$0xff]
        %v359 = vld [vmem:[%s149 + $0x520] sm:$0xff]
        %v360 = vld [vmem:[%s149 + $0x528] sm:$0xff]
        %v361 = vld [vmem:[%s149 + $0x530] sm:$0xff]
        %v362 = vld [vmem:[%s149 + $0x538] sm:$0xff]
        %v363 = vld [vmem:[%s149 + $0x540] sm:$0xff]
        %v364 = vld [vmem:[%s149 + $0x548] sm:$0xff]
        %v365 = vld [vmem:[%s149 + $0x550] sm:$0xff]
        %v366 = vld [vmem:[%s149 + $0x558] sm:$0xff]
        %v367 = vld [vmem:[%s149 + $0x560] sm:$0xff]
        %v368 = vld [vmem:[%s149 + $0x568] sm:$0xff]
        %v369 = vld [vmem:[%s149 + $0x570] sm:$0xff]
        %v370 = vld [vmem:[%s149 + $0x578] sm:$0xff]
        %v371 = vld [vmem:[%s149 + $0x580] sm:$0xff]
        %v372 = vld [vmem:[%s149 + $0x588] sm:$0xff]
        %v373 = vld [vmem:[%s149 + $0x590] sm:$0xff]
        %v374 = vld [vmem:[%s149 + $0x598] sm:$0xff]
        %v375 = vld [vmem:[%s149 + $0x5a0] sm:$0xff]
        %v376 = vld [vmem:[%s149 + $0x5a8] sm:$0xff]
        %v377 = vld [vmem:[%s149 + $0x5b0] sm:$0xff]
        %v378 = vld [vmem:[%s149 + $0x5b8] sm:$0xff]
        %v379 = vld [vmem:[%s149 + $0x5c0] sm:$0xff]
        %v380 = vld [vmem:[%s149 + $0x5c8] sm:$0xff]
        %v381 = vld [vmem:[%s149 + $0x5d0] sm:$0xff]
        %v382 = vld [vmem:[%s149 + $0x5d8] sm:$0xff]
        %v383 = vld [vmem:[%s149 + $0x5e0] sm:$0xff]
        %v384 = vld [vmem:[%s149 + $0x5e8] sm:$0xff]
        %v385 = vld [vmem:[%s149 + $0x5f0] sm:$0xff]
        %v386 = vld [vmem:[%s149 + $0x5f8] sm:$0xff]
        %v387 = vld [vmem:[%s149 + $0x600] sm:$0xff]
        %v388 = vld [vmem:[%s149 + $0x608] sm:$0xff]
        %v389 = vld [vmem:[%s149 + $0x610] sm:$0xff]
        %v390 = vld [vmem:[%s149 + $0x618] sm:$0xff]
        %v391 = vld [vmem:[%s149 + $0x620] sm:$0xff]
        %v392 = vld [vmem:[%s149 + $0x628] sm:$0xff]
        %v393 = vld [vmem:[%s149 + $0x630] sm:$0xff]
        %v394 = vld [vmem:[%s149 + $0x638] sm:$0xff]
        %v395 = vld [vmem:[%s149 + $0x640] sm:$0xff]
        %v396 = vld [vmem:[%s149 + $0x648] sm:$0xff]
        %v397 = vld [vmem:[%s149 + $0x650] sm:$0xff]
        %v398 = vld [vmem:[%s149 + $0x658] sm:$0xff]
        %v399 = vld [vmem:[%s149 + $0x660] sm:$0xff]
        %v400 = vld [vmem:[%s149 + $0x668] sm:$0xff]
        %v401 = vld [vmem:[%s149 + $0x670] sm:$0xff]
        %v402 = vld [vmem:[%s149 + $0x678] sm:$0xff]
        %v403 = vld [vmem:[%s149 + $0x680] sm:$0xff]
        %v404 = vld [vmem:[%s149 + $0x688] sm:$0xff]
        %v405 = vld [vmem:[%s149 + $0x690] sm:$0xff]
        %v406 = vld [vmem:[%s149 + $0x698] sm:$0xff]
        %v407 = vld [vmem:[%s149 + $0x6a0] sm:$0xff]
        %v408 = vld [vmem:[%s149 + $0x6a8] sm:$0xff]
        %v409 = vld [vmem:[%s149 + $0x6b0] sm:$0xff]
        %v410 = vld [vmem:[%s149 + $0x6b8] sm:$0xff]
        %v411 = vld [vmem:[%s149 + $0x6c0] sm:$0xff]
        %v412 = vld [vmem:[%s149 + $0x6c8] sm:$0xff]
        %v413 = vld [vmem:[%s149 + $0x6d0] sm:$0xff]
        %v414 = vld [vmem:[%s149 + $0x6d8] sm:$0xff]
        %v415 = vld [vmem:[%s149 + $0x6e0] sm:$0xff]
        %v416 = vld [vmem:[%s149 + $0x6e8] sm:$0xff]
        %v417 = vld [vmem:[%s149 + $0x6f0] sm:$0xff]
        %v418 = vld [vmem:[%s149 + $0x6f8] sm:$0xff]
        %v419 = vld [vmem:[%s149 + $0x700] sm:$0xff]
        %v420 = vld [vmem:[%s149 + $0x708] sm:$0xff]
        %v421 = vld [vmem:[%s149 + $0x710] sm:$0xff]
        %v422 = vld [vmem:[%s149 + $0x718] sm:$0xff]
        %v423 = vld [vmem:[%s149 + $0x720] sm:$0xff]
        %v424 = vld [vmem:[%s149 + $0x728] sm:$0xff]
        %v425 = vld [vmem:[%s149 + $0x730] sm:$0xff]
        %v426 = vld [vmem:[%s149 + $0x738] sm:$0xff]
        %v427 = vld [vmem:[%s149 + $0x740] sm:$0xff]
        %v428 = vld [vmem:[%s149 + $0x748] sm:$0xff]
        %v429 = vld [vmem:[%s149 + $0x750] sm:$0xff]
        %v430 = vld [vmem:[%s149 + $0x758] sm:$0xff]
        %v431 = vld [vmem:[%s149 + $0x760] sm:$0xff]
        %v432 = vld [vmem:[%s149 + $0x768] sm:$0xff]
        %v433 = vld [vmem:[%s149 + $0x770] sm:$0xff]
        %v434 = vld [vmem:[%s149 + $0x778] sm:$0xff]
        %v435 = vld [vmem:[%s149 + $0x780] sm:$0xff]
        %v436 = vld [vmem:[%s149 + $0x788] sm:$0xff]
        %v437 = vld [vmem:[%s149 + $0x790] sm:$0xff]
        %v438 = vld [vmem:[%s149 + $0x798] sm:$0xff]
        %v439 = vld [vmem:[%s149 + $0x7a0] sm:$0xff]
        %v440 = vld [vmem:[%s149 + $0x7a8] sm:$0xff]
        %v441 = vld [vmem:[%s149 + $0x7b0] sm:$0xff]
        %v442 = vld [vmem:[%s149 + $0x7b8] sm:$0xff]
        %v443 = vld [vmem:[%s149 + $0x7c0] sm:$0xff]
        %v444 = vld [vmem:[%s149 + $0x7c8] sm:$0xff]
        %v445 = vld [vmem:[%s149 + $0x7d0] sm:$0xff]
        %v446 = vld [vmem:[%s149 + $0x7d8] sm:$0xff]
        %v447 = vld [vmem:[%s149 + $0x7e0] sm:$0xff]
        %v448 = vld [vmem:[%s149 + $0x7e8] sm:$0xff]
        %v449 = vld [vmem:[%s149 + $0x7f0] sm:$0xff]
        %v450 = vld [vmem:[%s149 + $0x7f8] sm:$0xff]
        %v451 = vld [vmem:[%s149 + $0x800] sm:$0xff]
        %v452 = vld [vmem:[%s149 + $0x808] sm:$0xff]
        %v453 = vld [vmem:[%s149 + $0x810] sm:$0xff]
        %v454 = vld [vmem:[%s149 + $0x818] sm:$0xff]
        %v455 = vld [vmem:[%s149 + $0x820] sm:$0xff]
        %v456 = vld [vmem:[%s149 + $0x828] sm:$0xff]
        %v457 = vld [vmem:[%s149 + $0x830] sm:$0xff]
        %v458 = vld [vmem:[%s149 + $0x838] sm:$0xff]
        %v459 = vld [vmem:[%s149 + $0x840] sm:$0xff]
        %v460 = vld [vmem:[%s149 + $0x848] sm:$0xff]
        %v461 = vld [vmem:[%s149 + $0x850] sm:$0xff]
        %v462 = vld [vmem:[%s149 + $0x858] sm:$0xff]
        %v463 = vld [vmem:[%s149 + $0x860] sm:$0xff]
        %v464 = vld [vmem:[%s149 + $0x868] sm:$0xff]
        %v465 = vld [vmem:[%s149 + $0x870] sm:$0xff]
        %v466 = vld [vmem:[%s149 + $0x878] sm:$0xff]
        %v467 = vld [vmem:[%s149 + $0x880] sm:$0xff]
        %v468 = vld [vmem:[%s149 + $0x888] sm:$0xff]
        %v469 = vld [vmem:[%s149 + $0x890] sm:$0xff]
        %v470 = vld [vmem:[%s149 + $0x898] sm:$0xff]
        %v471 = vld [vmem:[%s149 + $0x8a0] sm:$0xff]
        %v472 = vld [vmem:[%s149 + $0x8a8] sm:$0xff]
        %v473 = vld [vmem:[%s149 + $0x8b0] sm:$0xff]
        %v474 = vld [vmem:[%s149 + $0x8b8] sm:$0xff]
        %v475 = vld [vmem:[%s149 + $0x8c0] sm:$0xff]
        %v476 = vld [vmem:[%s149 + $0x8c8] sm:$0xff]
        %v477 = vld [vmem:[%s149 + $0x8d0] sm:$0xff]
        %v478 = vld [vmem:[%s149 + $0x8d8] sm:$0xff]
        %v479 = vld [vmem:[%s149 + $0x8e0] sm:$0xff]
        %v480 = vld [vmem:[%s149 + $0x8e8] sm:$0xff]
        %v481 = vld [vmem:[%s149 + $0x8f0] sm:$0xff]
        %v482 = vld [vmem:[%s149 + $0x8f8] sm:$0xff]
        %v483 = vld [vmem:[%s149 + $0x900] sm:$0xff]
        %v484 = vld [vmem:[%s149 + $0x908] sm:$0xff]
        %v485 = vld [vmem:[%s149 + $0x910] sm:$0xff]
        %v486 = vld [vmem:[%s149 + $0x918] sm:$0xff]
        %v487 = vld [vmem:[%s149 + $0x920] sm:$0xff]
        %v488 = vld [vmem:[%s149 + $0x928] sm:$0xff]
        %v489 = vld [vmem:[%s149 + $0x930] sm:$0xff]
        %v490 = vld [vmem:[%s149 + $0x938] sm:$0xff]
        %v491 = vld [vmem:[%s149 + $0x940] sm:$0xff]
        %v492 = vld [vmem:[%s149 + $0x948] sm:$0xff]
        %v493 = vld [vmem:[%s149 + $0x950] sm:$0xff]
        %v494 = vld [vmem:[%s149 + $0x958] sm:$0xff]
        %v495 = vld [vmem:[%s149 + $0x960] sm:$0xff]
        %v496 = vld [vmem:[%s149 + $0x968] sm:$0xff]
        %v497 = vld [vmem:[%s149 + $0x970] sm:$0xff]
        %v498 = vld [vmem:[%s149 + $0x978] sm:$0xff]
        %v499 = vld [vmem:[%s149 + $0x980] sm:$0xff]
        %v500 = vld [vmem:[%s149 + $0x988] sm:$0xff]
        %v501 = vld [vmem:[%s149 + $0x990] sm:$0xff]
        %v502 = vld [vmem:[%s149 + $0x998] sm:$0xff]
        %v503 = vld [vmem:[%s149 + $0x9a0] sm:$0xff]
        %v504 = vld [vmem:[%s149 + $0x9a8] sm:$0xff]
        %v505 = vld [vmem:[%s149 + $0x9b0] sm:$0xff]
        %v506 = vld [vmem:[%s149 + $0x9b8] sm:$0xff]
        %v507 = vld [vmem:[%s149 + $0x9c0] sm:$0xff]
        %v508 = vld [vmem:[%s149 + $0x9c8] sm:$0xff]
        %v509 = vld [vmem:[%s149 + $0x9d0] sm:$0xff]
        %v510 = vld [vmem:[%s149 + $0x9d8] sm:$0xff]
        %v511 = vld [vmem:[%s149 + $0x9e0] sm:$0xff]
        %v512 = vld [vmem:[%s149 + $0x9e8] sm:$0xff]
        %v513 = vld [vmem:[%s149 + $0x9f0] sm:$0xff]
        %v514 = vld [vmem:[%s149 + $0x9f8] sm:$0xff]
        %v515 = vld [vmem:[%s149 + $0xa00] sm:$0xff]
        %v516 = vld [vmem:[%s149 + $0xa08] sm:$0xff]
        %v517 = vld [vmem:[%s149 + $0xa10] sm:$0xff]
        %v518 = vld [vmem:[%s149 + $0xa18] sm:$0xff]
        %v519 = vld [vmem:[%s149 + $0xa20] sm:$0xff]
        %v520 = vld [vmem:[%s149 + $0xa28] sm:$0xff]
        %v521 = vld [vmem:[%s149 + $0xa30] sm:$0xff]
        %v522 = vld [vmem:[%s149 + $0xa38] sm:$0xff]
        %v523 = vld [vmem:[%s149 + $0xa40] sm:$0xff]
        %v524 = vld [vmem:[%s149 + $0xa48] sm:$0xff]
        %v525 = vld [vmem:[%s149 + $0xa50] sm:$0xff]
        %v526 = vld [vmem:[%s149 + $0xa58] sm:$0xff]
        %v527 = vld [vmem:[%s149 + $0xa60] sm:$0xff]
        %v528 = vld [vmem:[%s149 + $0xa68] sm:$0xff]
        %v529 = vld [vmem:[%s149 + $0xa70] sm:$0xff]
        %v530 = vld [vmem:[%s149 + $0xa78] sm:$0xff]
        %v531 = vld [vmem:[%s149 + $0xa80] sm:$0xff]
        %v532 = vld [vmem:[%s149 + $0xa88] sm:$0xff]
        %v533 = vld [vmem:[%s149 + $0xa90] sm:$0xff]
        %v534 = vld [vmem:[%s149 + $0xa98] sm:$0xff]
        %v535 = vld [vmem:[%s149 + $0xaa0] sm:$0xff]
        %v536 = vld [vmem:[%s149 + $0xaa8] sm:$0xff]
        %v537 = vld [vmem:[%s149 + $0xab0] sm:$0xff]
        %v538 = vld [vmem:[%s149 + $0xab8] sm:$0xff]
        %v539 = vld [vmem:[%s149 + $0xac0] sm:$0xff]
        %v540 = vld [vmem:[%s149 + $0xac8] sm:$0xff]
        %v541 = vld [vmem:[%s149 + $0xad0] sm:$0xff]
        %v542 = vld [vmem:[%s149 + $0xad8] sm:$0xff]
        %v543 = vld [vmem:[%s149 + $0xae0] sm:$0xff]
        %v544 = vld [vmem:[%s149 + $0xae8] sm:$0xff]
        %v545 = vld [vmem:[%s149 + $0xaf0] sm:$0xff]
        %v546 = vld [vmem:[%s149 + $0xaf8] sm:$0xff]
        %v547 = vld [vmem:[%s149 + $0xb00] sm:$0xff]
        %v548 = vld [vmem:[%s149 + $0xb08] sm:$0xff]
        %v549 = vld [vmem:[%s149 + $0xb10] sm:$0xff]
        %v550 = vld [vmem:[%s149 + $0xb18] sm:$0xff]
        %v551 = vld [vmem:[%s149 + $0xb20] sm:$0xff]
        %v552 = vld [vmem:[%s149 + $0xb28] sm:$0xff]
        %v553 = vld [vmem:[%s149 + $0xb30] sm:$0xff]
        %v554 = vld [vmem:[%s149 + $0xb38] sm:$0xff]
        %v555 = vld [vmem:[%s149 + $0xb40] sm:$0xff]
        %v556 = vld [vmem:[%s149 + $0xb48] sm:$0xff]
        %v557 = vld [vmem:[%s149 + $0xb50] sm:$0xff]
        %v558 = vld [vmem:[%s149 + $0xb58] sm:$0xff]
        %v559 = vld [vmem:[%s149 + $0xb60] sm:$0xff]
        %v560 = vld [vmem:[%s149 + $0xb68] sm:$0xff]
        %v561 = vld [vmem:[%s149 + $0xb70] sm:$0xff]
        %v562 = vld [vmem:[%s149 + $0xb78] sm:$0xff]
        %v563 = vld [vmem:[%s149 + $0xb80] sm:$0xff]
        %v564 = vld [vmem:[%s149 + $0xb88] sm:$0xff]
        %v565 = vld [vmem:[%s149 + $0xb90] sm:$0xff]
        %v566 = vld [vmem:[%s149 + $0xb98] sm:$0xff]
        %v567 = vld [vmem:[%s149 + $0xba0] sm:$0xff]
        %v568 = vld [vmem:[%s149 + $0xba8] sm:$0xff]
        %v569 = vld [vmem:[%s149 + $0xbb0] sm:$0xff]
        %v570 = vld [vmem:[%s149 + $0xbb8] sm:$0xff]
        %v571 = vld [vmem:[%s149 + $0xbc0] sm:$0xff]
        %v572 = vld [vmem:[%s149 + $0xbc8] sm:$0xff]
        %v573 = vld [vmem:[%s149 + $0xbd0] sm:$0xff]
        %v574 = vld [vmem:[%s149 + $0xbd8] sm:$0xff]
        %v575 = vld [vmem:[%s149 + $0xbe0] sm:$0xff]
        %v576 = vld [vmem:[%s149 + $0xbe8] sm:$0xff]
        %v577 = vld [vmem:[%s149 + $0xbf0] sm:$0xff]
        %v578 = vld [vmem:[%s149 + $0xbf8] sm:$0xff]
        %v579 = vld [vmem:[%s149 + $0xc00] sm:$0xff]
        %v580 = vld [vmem:[%s149 + $0xc08] sm:$0xff]
        %v581 = vld [vmem:[%s149 + $0xc10] sm:$0xff]
        %v582 = vld [vmem:[%s149 + $0xc18] sm:$0xff]
        %v583 = vld [vmem:[%s149 + $0xc20] sm:$0xff]
        %v584 = vld [vmem:[%s149 + $0xc28] sm:$0xff]
        %v585 = vld [vmem:[%s149 + $0xc30] sm:$0xff]
        %v586 = vld [vmem:[%s149 + $0xc38] sm:$0xff]
        %v587 = vld [vmem:[%s149 + $0xc40] sm:$0xff]
        %v588 = vld [vmem:[%s149 + $0xc48] sm:$0xff]
        %v589 = vld [vmem:[%s149 + $0xc50] sm:$0xff]
        %v590 = vld [vmem:[%s149 + $0xc58] sm:$0xff]
        %v591 = vld [vmem:[%s149 + $0xc60] sm:$0xff]
        %v592 = vld [vmem:[%s149 + $0xc68] sm:$0xff]
        %v593 = vld [vmem:[%s149 + $0xc70] sm:$0xff]
        %v594 = vld [vmem:[%s149 + $0xc78] sm:$0xff]
        %v595 = vld [vmem:[%s149 + $0xc80] sm:$0xff]
        %v596 = vld [vmem:[%s149 + $0xc88] sm:$0xff]
        %v597 = vld [vmem:[%s149 + $0xc90] sm:$0xff]
        %v598 = vld [vmem:[%s149 + $0xc98] sm:$0xff]
        %v599 = vld [vmem:[%s149 + $0xca0] sm:$0xff]
        %v600 = vld [vmem:[%s149 + $0xca8] sm:$0xff]
        %v601 = vld [vmem:[%s149 + $0xcb0] sm:$0xff]
        %v602 = vld [vmem:[%s149 + $0xcb8] sm:$0xff]
        %v603 = vld [vmem:[%s149 + $0xcc0] sm:$0xff]
        %v604 = vld [vmem:[%s149 + $0xcc8] sm:$0xff]
        %v605 = vld [vmem:[%s149 + $0xcd0] sm:$0xff]
        %v606 = vld [vmem:[%s149 + $0xcd8] sm:$0xff]
        %v607 = vld [vmem:[%s149 + $0xce0] sm:$0xff]
        %v608 = vld [vmem:[%s149 + $0xce8] sm:$0xff]
        %v609 = vld [vmem:[%s149 + $0xcf0] sm:$0xff]
        %v610 = vld [vmem:[%s149 + $0xcf8] sm:$0xff]
        %v611 = vld [vmem:[%s149 + $0xd00] sm:$0xff]
        %v612 = vld [vmem:[%s149 + $0xd08] sm:$0xff]
        %v613 = vld [vmem:[%s149 + $0xd10] sm:$0xff]
        %v614 = vld [vmem:[%s149 + $0xd18] sm:$0xff]
        %v615 = vld [vmem:[%s149 + $0xd20] sm:$0xff]
        %v616 = vld [vmem:[%s149 + $0xd28] sm:$0xff]
        %v617 = vld [vmem:[%s149 + $0xd30] sm:$0xff]
        %v618 = vld [vmem:[%s149 + $0xd38] sm:$0xff]
        %v619 = vld [vmem:[%s149 + $0xd40] sm:$0xff]
        %v620 = vld [vmem:[%s149 + $0xd48] sm:$0xff]
        %v621 = vld [vmem:[%s149 + $0xd50] sm:$0xff]
        %v622 = vld [vmem:[%s149 + $0xd58] sm:$0xff]
        %v623 = vld [vmem:[%s149 + $0xd60] sm:$0xff]
        %v624 = vld [vmem:[%s149 + $0xd68] sm:$0xff]
        %v625 = vld [vmem:[%s149 + $0xd70] sm:$0xff]
        %v626 = vld [vmem:[%s149 + $0xd78] sm:$0xff]
        %v627 = vld [vmem:[%s149 + $0xd80] sm:$0xff]
        %v628 = vld [vmem:[%s149 + $0xd88] sm:$0xff]
        %v629 = vld [vmem:[%s149 + $0xd90] sm:$0xff]
        %v630 = vld [vmem:[%s149 + $0xd98] sm:$0xff]
        %v631 = vld [vmem:[%s149 + $0xda0] sm:$0xff]
        %v632 = vld [vmem:[%s149 + $0xda8] sm:$0xff]
        %v633 = vld [vmem:[%s149 + $0xdb0] sm:$0xff]
        %v634 = vld [vmem:[%s149 + $0xdb8] sm:$0xff]
        %v635 = vld [vmem:[%s149 + $0xdc0] sm:$0xff]
        %v636 = vld [vmem:[%s149 + $0xdc8] sm:$0xff]
        %v637 = vld [vmem:[%s149 + $0xdd0] sm:$0xff]
        %v638 = vld [vmem:[%s149 + $0xdd8] sm:$0xff]
        %v639 = vld [vmem:[%s149 + $0xde0] sm:$0xff]
        %v640 = vld [vmem:[%s149 + $0xde8] sm:$0xff]
        %v641 = vld [vmem:[%s149 + $0xdf0] sm:$0xff]
        %v642 = vld [vmem:[%s149 + $0xdf8] sm:$0xff]
        %v643 = vld [vmem:[%s149 + $0xe00] sm:$0xff]
        %v644 = vld [vmem:[%s149 + $0xe08] sm:$0xff]
        %v645 = vld [vmem:[%s149 + $0xe10] sm:$0xff]
        %v646 = vld [vmem:[%s149 + $0xe18] sm:$0xff]
        %v647 = vld [vmem:[%s149 + $0xe20] sm:$0xff]
        %v648 = vld [vmem:[%s149 + $0xe28] sm:$0xff]
        %v649 = vld [vmem:[%s149 + $0xe30] sm:$0xff]
        %v650 = vld [vmem:[%s149 + $0xe38] sm:$0xff]
        %v651 = vld [vmem:[%s149 + $0xe40] sm:$0xff]
        %v652 = vld [vmem:[%s149 + $0xe48] sm:$0xff]
        %v653 = vld [vmem:[%s149 + $0xe50] sm:$0xff]
        %v654 = vld [vmem:[%s149 + $0xe58] sm:$0xff]
        %v655 = vld [vmem:[%s149 + $0xe60] sm:$0xff]
        %v656 = vld [vmem:[%s149 + $0xe68] sm:$0xff]
        %v657 = vld [vmem:[%s149 + $0xe70] sm:$0xff]
        %v658 = vld [vmem:[%s149 + $0xe78] sm:$0xff]
        %v659 = vld [vmem:[%s149 + $0xe80] sm:$0xff]
        %v660 = vld [vmem:[%s149 + $0xe88] sm:$0xff]
        %v661 = vld [vmem:[%s149 + $0xe90] sm:$0xff]
        %v662 = vld [vmem:[%s149 + $0xe98] sm:$0xff]
        %v663 = vld [vmem:[%s149 + $0xea0] sm:$0xff]
        %v664 = vld [vmem:[%s149 + $0xea8] sm:$0xff]
        %v665 = vld [vmem:[%s149 + $0xeb0] sm:$0xff]
        %v666 = vld [vmem:[%s149 + $0xeb8] sm:$0xff]
        %v667 = vld [vmem:[%s149 + $0xec0] sm:$0xff]
        %v668 = vld [vmem:[%s149 + $0xec8] sm:$0xff]
        %v669 = vld [vmem:[%s149 + $0xed0] sm:$0xff]
        %v670 = vld [vmem:[%s149 + $0xed8] sm:$0xff]
        %v671 = vld [vmem:[%s149 + $0xee0] sm:$0xff]
        %v672 = vld [vmem:[%s149 + $0xee8] sm:$0xff]
        %v673 = vld [vmem:[%s149 + $0xef0] sm:$0xff]
        %v674 = vld [vmem:[%s149 + $0xef8] sm:$0xff]
        %v675 = vld [vmem:[%s149 + $0xf00] sm:$0xff]
        %v676 = vld [vmem:[%s149 + $0xf08] sm:$0xff]
        %v677 = vld [vmem:[%s149 + $0xf10] sm:$0xff]
        %v678 = vld [vmem:[%s149 + $0xf18] sm:$0xff]
        %v679 = vld [vmem:[%s149 + $0xf20] sm:$0xff]
        %v680 = vld [vmem:[%s149 + $0xf28] sm:$0xff]
        %v681 = vld [vmem:[%s149 + $0xf30] sm:$0xff]
        %v682 = vld [vmem:[%s149 + $0xf38] sm:$0xff]
        %v683 = vld [vmem:[%s149 + $0xf40] sm:$0xff]
        %v684 = vld [vmem:[%s149 + $0xf48] sm:$0xff]
        %v685 = vld [vmem:[%s149 + $0xf50] sm:$0xff]
        %v686 = vld [vmem:[%s149 + $0xf58] sm:$0xff]
        %v687 = vld [vmem:[%s149 + $0xf60] sm:$0xff]
        %v688 = vld [vmem:[%s149 + $0xf68] sm:$0xff]
        %v689 = vld [vmem:[%s149 + $0xf70] sm:$0xff]
        %v690 = vld [vmem:[%s149 + $0xf78] sm:$0xff]
        %v691 = vld [vmem:[%s149 + $0xf80] sm:$0xff]
        %v692 = vld [vmem:[%s149 + $0xf88] sm:$0xff]
        %v693 = vld [vmem:[%s149 + $0xf90] sm:$0xff]
        %v694 = vld [vmem:[%s149 + $0xf98] sm:$0xff]
        %v695 = vld [vmem:[%s149 + $0xfa0] sm:$0xff]
        %v696 = vld [vmem:[%s149 + $0xfa8] sm:$0xff]
        %v697 = vld [vmem:[%s149 + $0xfb0] sm:$0xff]
        %v698 = vld [vmem:[%s149 + $0xfb8] sm:$0xff]
        %v699 = vld [vmem:[%s149 + $0xfc0] sm:$0xff]
        %v700 = vld [vmem:[%s149 + $0xfc8] sm:$0xff]
        %v701 = vld [vmem:[%s149 + $0xfd0] sm:$0xff]
        %v702 = vld [vmem:[%s149 + $0xfd8] sm:$0xff]
        %v703 = vld [vmem:[%s149 + $0xfe0] sm:$0xff]
        %v704 = vld [vmem:[%s149 + $0xfe8] sm:$0xff]
        %v705 = vld [vmem:[%s149 + $0xff0] sm:$0xff]
        %v706 = vld [vmem:[%s149 + $0xff8] sm:$0xff]
        %v707 = vld [vmem:[%s149 + $0x1000] sm:$0xff]
        %v708 = vld [vmem:[%s149 + $0x1008] sm:$0xff]
        %v709 = vld [vmem:[%s149 + $0x1010] sm:$0xff]
        %v710 = vld [vmem:[%s149 + $0x1018] sm:$0xff]
        %v711 = vld [vmem:[%s149 + $0x1020] sm:$0xff]
        %v712 = vld [vmem:[%s149 + $0x1028] sm:$0xff]
        %v713 = vld [vmem:[%s149 + $0x1030] sm:$0xff]
        %v714 = vld [vmem:[%s149 + $0x1038] sm:$0xff]
        %v715 = vld [vmem:[%s149 + $0x1040] sm:$0xff]
        %v716 = vld [vmem:[%s149 + $0x1048] sm:$0xff]
        %v717 = vld [vmem:[%s149 + $0x1050] sm:$0xff]
        %v718 = vld [vmem:[%s149 + $0x1058] sm:$0xff]
        %v719 = vld [vmem:[%s149 + $0x1060] sm:$0xff]
        %v720 = vld [vmem:[%s149 + $0x1068] sm:$0xff]
        %v721 = vld [vmem:[%s149 + $0x1070] sm:$0xff]
        %v722 = vld [vmem:[%s149 + $0x1078] sm:$0xff]
        %v723 = vld [vmem:[%s149 + $0x1080] sm:$0xff]
        %v724 = vld [vmem:[%s149 + $0x1088] sm:$0xff]
        %v725 = vld [vmem:[%s149 + $0x1090] sm:$0xff]
        %v726 = vld [vmem:[%s149 + $0x1098] sm:$0xff]
        %v727 = vld [vmem:[%s149 + $0x10a0] sm:$0xff]
        %v728 = vld [vmem:[%s149 + $0x10a8] sm:$0xff]
        %v729 = vld [vmem:[%s149 + $0x10b0] sm:$0xff]
        %v730 = vld [vmem:[%s149 + $0x10b8] sm:$0xff]
        %v731 = vld [vmem:[%s149 + $0x10c0] sm:$0xff]
        %v732 = vld [vmem:[%s149 + $0x10c8] sm:$0xff]
        %v733 = vld [vmem:[%s149 + $0x10d0] sm:$0xff]
        %v734 = vld [vmem:[%s149 + $0x10d8] sm:$0xff]
        %v735 = vld [vmem:[%s149 + $0x10e0] sm:$0xff]
        %v736 = vld [vmem:[%s149 + $0x10e8] sm:$0xff]
        %v737 = vld [vmem:[%s149 + $0x10f0] sm:$0xff]
        %v738 = vld [vmem:[%s149 + $0x10f8] sm:$0xff]
        %v739 = vld [vmem:[%s149 + $0x1100] sm:$0xff]
        %v740 = vld [vmem:[%s149 + $0x1108] sm:$0xff]
        %v741 = vld [vmem:[%s149 + $0x1110] sm:$0xff]
        %v742 = vld [vmem:[%s149 + $0x1118] sm:$0xff]
        %v743 = vld [vmem:[%s149 + $0x1120] sm:$0xff]
        %v744 = vld [vmem:[%s149 + $0x1128] sm:$0xff]
        %v745 = vld [vmem:[%s149 + $0x1130] sm:$0xff]
        %v746 = vld [vmem:[%s149 + $0x1138] sm:$0xff]
        %v747 = vld [vmem:[%s149 + $0x1140] sm:$0xff]
        %v748 = vld [vmem:[%s149 + $0x1148] sm:$0xff]
        %v749 = vld [vmem:[%s149 + $0x1150] sm:$0xff]
        %v750 = vld [vmem:[%s149 + $0x1158] sm:$0xff]
        %v751 = vld [vmem:[%s149 + $0x1160] sm:$0xff]
        %v752 = vld [vmem:[%s149 + $0x1168] sm:$0xff]
        %v753 = vld [vmem:[%s149 + $0x1170] sm:$0xff]
        %v754 = vld [vmem:[%s149 + $0x1178] sm:$0xff]
        %v755 = vld [vmem:[%s149 + $0x1180] sm:$0xff]
        %v756 = vld [vmem:[%s149 + $0x1188] sm:$0xff]
        %v757 = vld [vmem:[%s149 + $0x1190] sm:$0xff]
        %v758 = vld [vmem:[%s149 + $0x1198] sm:$0xff]
        %v759 = vld [vmem:[%s149 + $0x11a0] sm:$0xff]
        %v760 = vld [vmem:[%s149 + $0x11a8] sm:$0xff]
        %v761 = vld [vmem:[%s149 + $0x11b0] sm:$0xff]
        %v762 = vld [vmem:[%s149 + $0x11b8] sm:$0xff]
        %v763 = vld [vmem:[%s149 + $0x11c0] sm:$0xff]
        %v764 = vld [vmem:[%s149 + $0x11c8] sm:$0xff]
        %v765 = vld [vmem:[%s149 + $0x11d0] sm:$0xff]
        %v766 = vld [vmem:[%s149 + $0x11d8] sm:$0xff]
        %v767 = vld [vmem:[%s149 + $0x11e0] sm:$0xff]
        %v768 = vld [vmem:[%s149 + $0x11e8] sm:$0xff]
        %v769 = vld [vmem:[%s149 + $0x11f0] sm:$0xff]
        %v770 = vld [vmem:[%s149 + $0x11f8] sm:$0xff]
        %v771 = vld [vmem:[%s149 + $0x1200] sm:$0xff]
        %v772 = vld [vmem:[%s149 + $0x1208] sm:$0xff]
        %v773 = vld [vmem:[%s149 + $0x1210] sm:$0xff]
        %v774 = vld [vmem:[%s149 + $0x1218] sm:$0xff]
        %v775 = vld [vmem:[%s149 + $0x1220] sm:$0xff]
        %v776 = vld [vmem:[%s149 + $0x1228] sm:$0xff]
        %v777 = vld [vmem:[%s149 + $0x1230] sm:$0xff]
        %v778 = vld [vmem:[%s149 + $0x1238] sm:$0xff]
        %v779 = vld [vmem:[%s149 + $0x1240] sm:$0xff]
        %v780 = vld [vmem:[%s149 + $0x1248] sm:$0xff]
        %v781 = vld [vmem:[%s149 + $0x1250] sm:$0xff]
        %v782 = vld [vmem:[%s149 + $0x1258] sm:$0xff]
        %v783 = vld [vmem:[%s149 + $0x1260] sm:$0xff]
        %v784 = vld [vmem:[%s149 + $0x1268] sm:$0xff]
        %v785 = vld [vmem:[%s149 + $0x1270] sm:$0xff]
        %v786 = vld [vmem:[%s149 + $0x1278] sm:$0xff]
        %v787 = vld [vmem:[%s149 + $0x1280] sm:$0xff]
        %v788 = vld [vmem:[%s149 + $0x1288] sm:$0xff]
        %v789 = vld [vmem:[%s149 + $0x1290] sm:$0xff]
        %v790 = vld [vmem:[%s149 + $0x1298] sm:$0xff]
        %v791 = vld [vmem:[%s149 + $0x12a0] sm:$0xff]
        %v792 = vld [vmem:[%s149 + $0x12a8] sm:$0xff]
        %v793 = vld [vmem:[%s149 + $0x12b0] sm:$0xff]
        %v794 = vld [vmem:[%s149 + $0x12b8] sm:$0xff]
        %v795 = vld [vmem:[%s149 + $0x12c0] sm:$0xff]
        %v796 = vld [vmem:[%s149 + $0x12c8] sm:$0xff]
        %v797 = vld [vmem:[%s149 + $0x12d0] sm:$0xff]
        %v798 = vld [vmem:[%s149 + $0x12d8] sm:$0xff]
        %v799 = vld [vmem:[%s149 + $0x12e0] sm:$0xff]
        %v800 = vld [vmem:[%s149 + $0x12e8] sm:$0xff]
        %v801 = vld [vmem:[%s149 + $0x12f0] sm:$0xff]
        %v802 = vld [vmem:[%s149 + $0x12f8] sm:$0xff]
        %v803 = vld [vmem:[%s149 + $0x1300] sm:$0xff]
        %v804 = vld [vmem:[%s149 + $0x1308] sm:$0xff]
        %v805 = vld [vmem:[%s149 + $0x1310] sm:$0xff]
        %v806 = vld [vmem:[%s149 + $0x1318] sm:$0xff]
        %v807 = vld [vmem:[%s149 + $0x1320] sm:$0xff]
        %v808 = vld [vmem:[%s149 + $0x1328] sm:$0xff]
        %v809 = vld [vmem:[%s149 + $0x1330] sm:$0xff]
        %v810 = vld [vmem:[%s149 + $0x1338] sm:$0xff]
        %v811 = vld [vmem:[%s149 + $0x1340] sm:$0xff]
        %v812 = vld [vmem:[%s149 + $0x1348] sm:$0xff]
        %v813 = vld [vmem:[%s149 + $0x1350] sm:$0xff]
        %v814 = vld [vmem:[%s149 + $0x1358] sm:$0xff]
        %v815 = vld [vmem:[%s149 + $0x1360] sm:$0xff]
        %v816 = vld [vmem:[%s149 + $0x1368] sm:$0xff]
        %v817 = vld [vmem:[%s149 + $0x1370] sm:$0xff]
        %v818 = vld [vmem:[%s149 + $0x1378] sm:$0xff]
        %v819 = vld [vmem:[%s149 + $0x1380] sm:$0xff]
        %v820 = vld [vmem:[%s149 + $0x1388] sm:$0xff]
        %v821 = vld [vmem:[%s149 + $0x1390] sm:$0xff]
        %v822 = vld [vmem:[%s149 + $0x1398] sm:$0xff]
        %v823 = vld [vmem:[%s149 + $0x13a0] sm:$0xff]
        %v824 = vld [vmem:[%s149 + $0x13a8] sm:$0xff]
        %v825 = vld [vmem:[%s149 + $0x13b0] sm:$0xff]
        %v826 = vld [vmem:[%s149 + $0x13b8] sm:$0xff]
        %v827 = vld [vmem:[%s149 + $0x13c0] sm:$0xff]
        %v828 = vld [vmem:[%s149 + $0x13c8] sm:$0xff]
        %v829 = vld [vmem:[%s149 + $0x13d0] sm:$0xff]
        %v830 = vld [vmem:[%s149 + $0x13d8] sm:$0xff]
        %v831 = vld [vmem:[%s149 + $0x13e0] sm:$0xff]
        %v832 = vld [vmem:[%s149 + $0x13e8] sm:$0xff]
        %v833 = vld [vmem:[%s149 + $0x13f0] sm:$0xff]
        %v834 = vld [vmem:[%s149 + $0x13f8] sm:$0xff]
        %v835 = vld [vmem:[%s149 + $0x1400] sm:$0xff]
        %v836 = vld [vmem:[%s149 + $0x1408] sm:$0xff]
        %v837 = vld [vmem:[%s149 + $0x1410] sm:$0xff]
        %v838 = vld [vmem:[%s149 + $0x1418] sm:$0xff]
        %v839 = vld [vmem:[%s149 + $0x1420] sm:$0xff]
        %v840 = vld [vmem:[%s149 + $0x1428] sm:$0xff]
        %v841 = vld [vmem:[%s149 + $0x1430] sm:$0xff]
        %v842 = vld [vmem:[%s149 + $0x1438] sm:$0xff]
        %v843 = vld [vmem:[%s149 + $0x1440] sm:$0xff]
        %v844 = vld [vmem:[%s149 + $0x1448] sm:$0xff]
        %v845 = vld [vmem:[%s149 + $0x1450] sm:$0xff]
        %v846 = vld [vmem:[%s149 + $0x1458] sm:$0xff]
        %v847 = vld [vmem:[%s149 + $0x1460] sm:$0xff]
        %v848 = vld [vmem:[%s149 + $0x1468] sm:$0xff]
        %v849 = vld [vmem:[%s149 + $0x1470] sm:$0xff]
        %v850 = vld [vmem:[%s149 + $0x1478] sm:$0xff]
        %v851 = vld [vmem:[%s149 + $0x1480] sm:$0xff]
        %v852 = vld [vmem:[%s149 + $0x1488] sm:$0xff]
        %v853 = vld [vmem:[%s149 + $0x1490] sm:$0xff]
        %v854 = vld [vmem:[%s149 + $0x1498] sm:$0xff]
        %v855 = vld [vmem:[%s149 + $0x14a0] sm:$0xff]
        %v856 = vld [vmem:[%s149 + $0x14a8] sm:$0xff]
        %v857 = vld [vmem:[%s149 + $0x14b0] sm:$0xff]
        %v858 = vld [vmem:[%s149 + $0x14b8] sm:$0xff]
        %v859 = vld [vmem:[%s149 + $0x14c0] sm:$0xff]
        %v860 = vld [vmem:[%s149 + $0x14c8] sm:$0xff]
        %v861 = vld [vmem:[%s149 + $0x14d0] sm:$0xff]
        %v862 = vld [vmem:[%s149 + $0x14d8] sm:$0xff]
        %v863 = vld [vmem:[%s149 + $0x14e0] sm:$0xff]
        %v864 = vld [vmem:[%s149 + $0x14e8] sm:$0xff]
        %v865 = vld [vmem:[%s149 + $0x14f0] sm:$0xff]
        %v866 = vld [vmem:[%s149 + $0x14f8] sm:$0xff]
        %v867 = vld [vmem:[%s149 + $0x1500] sm:$0xff]
        %v868 = vld [vmem:[%s149 + $0x1508] sm:$0xff]
        %v869 = vld [vmem:[%s149 + $0x1510] sm:$0xff]
        %v870 = vld [vmem:[%s149 + $0x1518] sm:$0xff]
        %v871 = vld [vmem:[%s149 + $0x1520] sm:$0xff]
        %v872 = vld [vmem:[%s149 + $0x1528] sm:$0xff]
        %v873 = vld [vmem:[%s149 + $0x1530] sm:$0xff]
        %v874 = vld [vmem:[%s149 + $0x1538] sm:$0xff]
        %v875 = vld [vmem:[%s149 + $0x1540] sm:$0xff]
        %v876 = vld [vmem:[%s149 + $0x1548] sm:$0xff]
        %v877 = vld [vmem:[%s149 + $0x1550] sm:$0xff]
        %v878 = vld [vmem:[%s149 + $0x1558] sm:$0xff]
        %v879 = vld [vmem:[%s149 + $0x1560] sm:$0xff]
        %v880 = vld [vmem:[%s149 + $0x1568] sm:$0xff]
        %v881 = vld [vmem:[%s149 + $0x1570] sm:$0xff]
        %v882 = vld [vmem:[%s149 + $0x1578] sm:$0xff]
        %v883 = vld [vmem:[%s149 + $0x1580] sm:$0xff]
        %v884 = vld [vmem:[%s149 + $0x1588] sm:$0xff]
        %v885 = vld [vmem:[%s149 + $0x1590] sm:$0xff]
        %v886 = vld [vmem:[%s149 + $0x1598] sm:$0xff]
        %v887 = vld [vmem:[%s149 + $0x15a0] sm:$0xff]
        %v888 = vld [vmem:[%s149 + $0x15a8] sm:$0xff]
        %v889 = vld [vmem:[%s149 + $0x15b0] sm:$0xff]
        %v890 = vld [vmem:[%s149 + $0x15b8] sm:$0xff]
        %v891 = vld [vmem:[%s149 + $0x15c0] sm:$0xff]
        %v892 = vld [vmem:[%s149 + $0x15c8] sm:$0xff]
        %v893 = vld [vmem:[%s149 + $0x15d0] sm:$0xff]
        %v894 = vld [vmem:[%s149 + $0x15d8] sm:$0xff]
        %v895 = vld [vmem:[%s149 + $0x15e0] sm:$0xff]
        %v896 = vld [vmem:[%s149 + $0x15e8] sm:$0xff]
        %v897 = vld [vmem:[%s149 + $0x15f0] sm:$0xff]
        %v898 = vld [vmem:[%s149 + $0x15f8] sm:$0xff]
        %v899 = vld [vmem:[%s149 + $0x1600] sm:$0xff]
        %v900 = vld [vmem:[%s149 + $0x1608] sm:$0xff]
        %v901 = vld [vmem:[%s149 + $0x1610] sm:$0xff]
        %v902 = vld [vmem:[%s149 + $0x1618] sm:$0xff]
        %v903 = vld [vmem:[%s149 + $0x1620] sm:$0xff]
        %v904 = vld [vmem:[%s149 + $0x1628] sm:$0xff]
        %v905 = vld [vmem:[%s149 + $0x1630] sm:$0xff]
        %v906 = vld [vmem:[%s149 + $0x1638] sm:$0xff]
        %v907 = vld [vmem:[%s149 + $0x1640] sm:$0xff]
        %v908 = vld [vmem:[%s149 + $0x1648] sm:$0xff]
        %v909 = vld [vmem:[%s149 + $0x1650] sm:$0xff]
        %v910 = vld [vmem:[%s149 + $0x1658] sm:$0xff]
        %v911 = vld [vmem:[%s149 + $0x1660] sm:$0xff]
        %v912 = vld [vmem:[%s149 + $0x1668] sm:$0xff]
        %v913 = vld [vmem:[%s149 + $0x1670] sm:$0xff]
        %v914 = vld [vmem:[%s149 + $0x1678] sm:$0xff]
        %v915 = vld [vmem:[%s149 + $0x1680] sm:$0xff]
        %v916 = vld [vmem:[%s149 + $0x1688] sm:$0xff]
        %v917 = vld [vmem:[%s149 + $0x1690] sm:$0xff]
        %v918 = vld [vmem:[%s149 + $0x1698] sm:$0xff]
        %v919 = vld [vmem:[%s149 + $0x16a0] sm:$0xff]
        %v920 = vld [vmem:[%s149 + $0x16a8] sm:$0xff]
        %v921 = vld [vmem:[%s149 + $0x16b0] sm:$0xff]
        %v922 = vld [vmem:[%s149 + $0x16b8] sm:$0xff]
        %v923 = vld [vmem:[%s149 + $0x16c0] sm:$0xff]
        %v924 = vld [vmem:[%s149 + $0x16c8] sm:$0xff]
        %v925 = vld [vmem:[%s149 + $0x16d0] sm:$0xff]
        %v926 = vld [vmem:[%s149 + $0x16d8] sm:$0xff]
        %v927 = vld [vmem:[%s149 + $0x16e0] sm:$0xff]
        %v928 = vld [vmem:[%s149 + $0x16e8] sm:$0xff]
        %v929 = vld [vmem:[%s149 + $0x16f0] sm:$0xff]
        %v930 = vld [vmem:[%s149 + $0x16f8] sm:$0xff]
        %v931 = vld [vmem:[%s149 + $0x1700] sm:$0xff]
        %v932 = vld [vmem:[%s149 + $0x1708] sm:$0xff]
        %v933 = vld [vmem:[%s149 + $0x1710] sm:$0xff]
        %v934 = vld [vmem:[%s149 + $0x1718] sm:$0xff]
        %v935 = vld [vmem:[%s149 + $0x1720] sm:$0xff]
        %v936 = vld [vmem:[%s149 + $0x1728] sm:$0xff]
        %v937 = vld [vmem:[%s149 + $0x1730] sm:$0xff]
        %v938 = vld [vmem:[%s149 + $0x1738] sm:$0xff]
        %v939 = vld [vmem:[%s149 + $0x1740] sm:$0xff]
        %v940 = vld [vmem:[%s149 + $0x1748] sm:$0xff]
        %v941 = vld [vmem:[%s149 + $0x1750] sm:$0xff]
        %v942 = vld [vmem:[%s149 + $0x1758] sm:$0xff]
        %v943 = vld [vmem:[%s149 + $0x1760] sm:$0xff]
        %v944 = vld [vmem:[%s149 + $0x1768] sm:$0xff]
        %v945 = vld [vmem:[%s149 + $0x1770] sm:$0xff]
        %v946 = vld [vmem:[%s149 + $0x1778] sm:$0xff]
        %v947 = vld [vmem:[%s149 + $0x1780] sm:$0xff]
        %v948 = vld [vmem:[%s149 + $0x1788] sm:$0xff]
        %v949 = vld [vmem:[%s149 + $0x1790] sm:$0xff]
        %v950 = vld [vmem:[%s149 + $0x1798] sm:$0xff]
        %v951 = vld [vmem:[%s149 + $0x17a0] sm:$0xff]
        %v952 = vld [vmem:[%s149 + $0x17a8] sm:$0xff]
        %v953 = vld [vmem:[%s149 + $0x17b0] sm:$0xff]
        %v954 = vld [vmem:[%s149 + $0x17b8] sm:$0xff]
        %v955 = vld [vmem:[%s149 + $0x17c0] sm:$0xff]
        %v956 = vld [vmem:[%s149 + $0x17c8] sm:$0xff]
        %v957 = vld [vmem:[%s149 + $0x17d0] sm:$0xff]
        %v958 = vld [vmem:[%s149 + $0x17d8] sm:$0xff]
        %v959 = vld [vmem:[%s149 + $0x17e0] sm:$0xff]
        %v960 = vld [vmem:[%s149 + $0x17e8] sm:$0xff]
        %v961 = vld [vmem:[%s149 + $0x17f0] sm:$0xff]
        %v962 = vld [vmem:[%s149 + $0x17f8] sm:$0xff]
        %v963 = vld [vmem:[%s149 + $0x1800] sm:$0xff]
        %v964 = vld [vmem:[%s149 + $0x1808] sm:$0xff]
        %v965 = vld [vmem:[%s149 + $0x1810] sm:$0xff]
        %v966 = vld [vmem:[%s149 + $0x1818] sm:$0xff]
        %v967 = vld [vmem:[%s149 + $0x1820] sm:$0xff]
        %v968 = vld [vmem:[%s149 + $0x1828] sm:$0xff]
        %v969 = vld [vmem:[%s149 + $0x1830] sm:$0xff]
        %v970 = vld [vmem:[%s149 + $0x1838] sm:$0xff]
        %v971 = vld [vmem:[%s149 + $0x1840] sm:$0xff]
        %v972 = vld [vmem:[%s149 + $0x1848] sm:$0xff]
        %v973 = vld [vmem:[%s149 + $0x1850] sm:$0xff]
        %v974 = vld [vmem:[%s149 + $0x1858] sm:$0xff]
        %v975 = vld [vmem:[%s149 + $0x1860] sm:$0xff]
        %v976 = vld [vmem:[%s149 + $0x1868] sm:$0xff]
        %v977 = vld [vmem:[%s149 + $0x1870] sm:$0xff]
        %v978 = vld [vmem:[%s149 + $0x1878] sm:$0xff]
        %v979 = vld [vmem:[%s149 + $0x1880] sm:$0xff]
        %v980 = vld [vmem:[%s149 + $0x1888] sm:$0xff]
        %v981 = vld [vmem:[%s149 + $0x1890] sm:$0xff]
        %v982 = vld [vmem:[%s149 + $0x1898] sm:$0xff]
        %v983 = vld [vmem:[%s149 + $0x18a0] sm:$0xff]
        %v984 = vld [vmem:[%s149 + $0x18a8] sm:$0xff]
        %v985 = vld [vmem:[%s149 + $0x18b0] sm:$0xff]
        %v986 = vld [vmem:[%s149 + $0x18b8] sm:$0xff]
        %v987 = vld [vmem:[%s149 + $0x18c0] sm:$0xff]
        %v988 = vld [vmem:[%s149 + $0x18c8] sm:$0xff]
        %v989 = vld [vmem:[%s149 + $0x18d0] sm:$0xff]
        %v990 = vld [vmem:[%s149 + $0x18d8] sm:$0xff]
        %v991 = vld [vmem:[%s149 + $0x18e0] sm:$0xff]
        %v992 = vld [vmem:[%s149 + $0x18e8] sm:$0xff]
        %v993 = vld [vmem:[%s149 + $0x18f0] sm:$0xff]
        %v994 = vld [vmem:[%s149 + $0x18f8] sm:$0xff]
        %v995 = vld [vmem:[%s149 + $0x1900] sm:$0xff]
        %v996 = vld [vmem:[%s149 + $0x1908] sm:$0xff]
        %v997 = vld [vmem:[%s149 + $0x1910] sm:$0xff]
        %v998 = vld [vmem:[%s149 + $0x1918] sm:$0xff]
        %v999 = vld [vmem:[%s149 + $0x1920] sm:$0xff]
        %v1000 = vld [vmem:[%s149 + $0x1928] sm:$0xff]
        %v1001 = vld [vmem:[%s149 + $0x1930] sm:$0xff]
        %v1002 = vld [vmem:[%s149 + $0x1938] sm:$0xff]
        %v1003 = vld [vmem:[%s149 + $0x1940] sm:$0xff]
        %v1004 = vld [vmem:[%s149 + $0x1948] sm:$0xff]
        %v1005 = vld [vmem:[%s149 + $0x1950] sm:$0xff]
        %v1006 = vld [vmem:[%s149 + $0x1958] sm:$0xff]
        %v1007 = vld [vmem:[%s149 + $0x1960] sm:$0xff]
        %v1008 = vld [vmem:[%s149 + $0x1968] sm:$0xff]
        %v1009 = vld [vmem:[%s149 + $0x1970] sm:$0xff]
        %v1010 = vld [vmem:[%s149 + $0x1978] sm:$0xff]
        %v1011 = vld [vmem:[%s149 + $0x1980] sm:$0xff]
        %v1012 = vld [vmem:[%s149 + $0x1988] sm:$0xff]
        %v1013 = vld [vmem:[%s149 + $0x1990] sm:$0xff]
        %v1014 = vld [vmem:[%s149 + $0x1998] sm:$0xff]
        %v1015 = vld [vmem:[%s149 + $0x19a0] sm:$0xff]
        %v1016 = vld [vmem:[%s149 + $0x19a8] sm:$0xff]
        %v1017 = vld [vmem:[%s149 + $0x19b0] sm:$0xff]
        %v1018 = vld [vmem:[%s149 + $0x19b8] sm:$0xff]
        %v1019 = vld [vmem:[%s149 + $0x19c0] sm:$0xff]
        %v1020 = vld [vmem:[%s149 + $0x19c8] sm:$0xff]
        %v1021 = vld [vmem:[%s149 + $0x19d0] sm:$0xff]
        %v1022 = vld [vmem:[%s149 + $0x19d8] sm:$0xff]
        %v1023 = vld [vmem:[%s149 + $0x19e0] sm:$0xff]
        %v1024 = vld [vmem:[%s149 + $0x19e8] sm:$0xff]
        %v1025 = vld [vmem:[%s149 + $0x19f0] sm:$0xff]
        %v1026 = vld [vmem:[%s149 + $0x19f8] sm:$0xff]
        %v1027 = vld [vmem:[%s149 + $0x1a00] sm:$0xff]
        %v1028 = vld [vmem:[%s149 + $0x1a08] sm:$0xff]
        %v1029 = vld [vmem:[%s149 + $0x1a10] sm:$0xff]
        %v1030 = vld [vmem:[%s149 + $0x1a18] sm:$0xff]
        %v1031 = vld [vmem:[%s149 + $0x1a20] sm:$0xff]
        %v1032 = vld [vmem:[%s149 + $0x1a28] sm:$0xff]
        %v1033 = vld [vmem:[%s149 + $0x1a30] sm:$0xff]
        %v1034 = vld [vmem:[%s149 + $0x1a38] sm:$0xff]
        %v1035 = vld [vmem:[%s149 + $0x1a40] sm:$0xff]
        %v1036 = vld [vmem:[%s149 + $0x1a48] sm:$0xff]
        %v1037 = vld [vmem:[%s149 + $0x1a50] sm:$0xff]
        %v1038 = vld [vmem:[%s149 + $0x1a58] sm:$0xff]
        %v1039 = vld [vmem:[%s149 + $0x1a60] sm:$0xff]
        %v1040 = vld [vmem:[%s149 + $0x1a68] sm:$0xff]
        %v1041 = vld [vmem:[%s149 + $0x1a70] sm:$0xff]
        %v1042 = vld [vmem:[%s149 + $0x1a78] sm:$0xff]
        %v1043 = vld [vmem:[%s149 + $0x1a80] sm:$0xff]
        %v1044 = vld [vmem:[%s149 + $0x1a88] sm:$0xff]
        %v1045 = vld [vmem:[%s149 + $0x1a90] sm:$0xff]
        %v1046 = vld [vmem:[%s149 + $0x1a98] sm:$0xff]
        %v1047 = vld [vmem:[%s149 + $0x1aa0] sm:$0xff]
        %v1048 = vld [vmem:[%s149 + $0x1aa8] sm:$0xff]
        %v1049 = vld [vmem:[%s149 + $0x1ab0] sm:$0xff]
        %v1050 = vld [vmem:[%s149 + $0x1ab8] sm:$0xff]
        %v1051 = vld [vmem:[%s149 + $0x1ac0] sm:$0xff]
        %v1052 = vld [vmem:[%s149 + $0x1ac8] sm:$0xff]
        %v1053 = vld [vmem:[%s149 + $0x1ad0] sm:$0xff]
        %v1054 = vld [vmem:[%s149 + $0x1ad8] sm:$0xff]
        %v1055 = vld [vmem:[%s149 + $0x1ae0] sm:$0xff]
        %v1056 = vld [vmem:[%s149 + $0x1ae8] sm:$0xff]
        %v1057 = vld [vmem:[%s149 + $0x1af0] sm:$0xff]
        %v1058 = vld [vmem:[%s149 + $0x1af8] sm:$0xff]
        %v1059 = vld [vmem:[%s149 + $0x1b00] sm:$0xff]
        %v1060 = vld [vmem:[%s149 + $0x1b08] sm:$0xff]
        %v1061 = vld [vmem:[%s149 + $0x1b10] sm:$0xff]
        %v1062 = vld [vmem:[%s149 + $0x1b18] sm:$0xff]
        %v1063 = vld [vmem:[%s149 + $0x1b20] sm:$0xff]
        %v1064 = vld [vmem:[%s149 + $0x1b28] sm:$0xff]
        %v1065 = vld [vmem:[%s149 + $0x1b30] sm:$0xff]
        %v1066 = vld [vmem:[%s149 + $0x1b38] sm:$0xff]
        %v1067 = vld [vmem:[%s149 + $0x1b40] sm:$0xff]
        %v1068 = vld [vmem:[%s149 + $0x1b48] sm:$0xff]
        %v1069 = vld [vmem:[%s149 + $0x1b50] sm:$0xff]
        %v1070 = vld [vmem:[%s149 + $0x1b58] sm:$0xff]
        %v1071 = vld [vmem:[%s149 + $0x1b60] sm:$0xff]
        %v1072 = vld [vmem:[%s149 + $0x1b68] sm:$0xff]
        %v1073 = vld [vmem:[%s149 + $0x1b70] sm:$0xff]
        %v1074 = vld [vmem:[%s149 + $0x1b78] sm:$0xff]
        %v1075 = vld [vmem:[%s149 + $0x1b80] sm:$0xff]
        %v1076 = vld [vmem:[%s149 + $0x1b88] sm:$0xff]
        %v1077 = vld [vmem:[%s149 + $0x1b90] sm:$0xff]
        %v1078 = vld [vmem:[%s149 + $0x1b98] sm:$0xff]
        %v1079 = vld [vmem:[%s149 + $0x1ba0] sm:$0xff]
        %v1080 = vld [vmem:[%s149 + $0x1ba8] sm:$0xff]
        %v1081 = vld [vmem:[%s149 + $0x1bb0] sm:$0xff]
        %v1082 = vld [vmem:[%s149 + $0x1bb8] sm:$0xff]
        %v1083 = vld [vmem:[%s149 + $0x1bc0] sm:$0xff]
        %v1084 = vld [vmem:[%s149 + $0x1bc8] sm:$0xff]
        %v1085 = vld [vmem:[%s149 + $0x1bd0] sm:$0xff]
        %v1086 = vld [vmem:[%s149 + $0x1bd8] sm:$0xff]
        %v1087 = vld [vmem:[%s149 + $0x1be0] sm:$0xff]
        %v1088 = vld [vmem:[%s149 + $0x1be8] sm:$0xff]
        %v1089 = vld [vmem:[%s149 + $0x1bf0] sm:$0xff]
        %v1090 = vld [vmem:[%s149 + $0x1bf8] sm:$0xff]
        %v1091 = vld [vmem:[%s149 + $0x1c00] sm:$0xff]
        %v1092 = vld [vmem:[%s149 + $0x1c08] sm:$0xff]
        %v1093 = vld [vmem:[%s149 + $0x1c10] sm:$0xff]
        %v1094 = vld [vmem:[%s149 + $0x1c18] sm:$0xff]
        %v1095 = vld [vmem:[%s149 + $0x1c20] sm:$0xff]
        %v1096 = vld [vmem:[%s149 + $0x1c28] sm:$0xff]
        %v1097 = vld [vmem:[%s149 + $0x1c30] sm:$0xff]
        %v1098 = vld [vmem:[%s149 + $0x1c38] sm:$0xff]
        %v1099 = vld [vmem:[%s149 + $0x1c40] sm:$0xff]
        %v1100 = vld [vmem:[%s149 + $0x1c48] sm:$0xff]
        %v1101 = vld [vmem:[%s149 + $0x1c50] sm:$0xff]
        %v1102 = vld [vmem:[%s149 + $0x1c58] sm:$0xff]
        %v1103 = vld [vmem:[%s149 + $0x1c60] sm:$0xff]
        %v1104 = vld [vmem:[%s149 + $0x1c68] sm:$0xff]
        %v1105 = vld [vmem:[%s149 + $0x1c70] sm:$0xff]
        %v1106 = vld [vmem:[%s149 + $0x1c78] sm:$0xff]
        %v1107 = vld [vmem:[%s149 + $0x1c80] sm:$0xff]
        %v1108 = vld [vmem:[%s149 + $0x1c88] sm:$0xff]
        %v1109 = vld [vmem:[%s149 + $0x1c90] sm:$0xff]
        %v1110 = vld [vmem:[%s149 + $0x1c98] sm:$0xff]
        %v1111 = vld [vmem:[%s149 + $0x1ca0] sm:$0xff]
        %v1112 = vld [vmem:[%s149 + $0x1ca8] sm:$0xff]
        %v1113 = vld [vmem:[%s149 + $0x1cb0] sm:$0xff]
        %v1114 = vld [vmem:[%s149 + $0x1cb8] sm:$0xff]
        %v1115 = vld [vmem:[%s149 + $0x1cc0] sm:$0xff]
        %v1116 = vld [vmem:[%s149 + $0x1cc8] sm:$0xff]
        %v1117 = vld [vmem:[%s149 + $0x1cd0] sm:$0xff]
        %v1118 = vld [vmem:[%s149 + $0x1cd8] sm:$0xff]
        %v1119 = vld [vmem:[%s149 + $0x1ce0] sm:$0xff]
        %v1120 = vld [vmem:[%s149 + $0x1ce8] sm:$0xff]
        %v1121 = vld [vmem:[%s149 + $0x1cf0] sm:$0xff]
        %v1122 = vld [vmem:[%s149 + $0x1cf8] sm:$0xff]
        %v1123 = vld [vmem:[%s149 + $0x1d00] sm:$0xff]
        %v1124 = vld [vmem:[%s149 + $0x1d08] sm:$0xff]
        %v1125 = vld [vmem:[%s149 + $0x1d10] sm:$0xff]
        %v1126 = vld [vmem:[%s149 + $0x1d18] sm:$0xff]
        %v1127 = vld [vmem:[%s149 + $0x1d20] sm:$0xff]
        %v1128 = vld [vmem:[%s149 + $0x1d28] sm:$0xff]
        %v1129 = vld [vmem:[%s149 + $0x1d30] sm:$0xff]
        %v1130 = vld [vmem:[%s149 + $0x1d38] sm:$0xff]
        %v1131 = vld [vmem:[%s149 + $0x1d40] sm:$0xff]
        %v1132 = vld [vmem:[%s149 + $0x1d48] sm:$0xff]
        %v1133 = vld [vmem:[%s149 + $0x1d50] sm:$0xff]
        %v1134 = vld [vmem:[%s149 + $0x1d58] sm:$0xff]
        %v1135 = vld [vmem:[%s149 + $0x1d60] sm:$0xff]
        %v1136 = vld [vmem:[%s149 + $0x1d68] sm:$0xff]
        %v1137 = vld [vmem:[%s149 + $0x1d70] sm:$0xff]
        %v1138 = vld [vmem:[%s149 + $0x1d78] sm:$0xff]
        %v1139 = vld [vmem:[%s149 + $0x1d80] sm:$0xff]
        %v1140 = vld [vmem:[%s149 + $0x1d88] sm:$0xff]
        %v1141 = vld [vmem:[%s149 + $0x1d90] sm:$0xff]
        %v1142 = vld [vmem:[%s149 + $0x1d98] sm:$0xff]
        %v1143 = vld [vmem:[%s149 + $0x1da0] sm:$0xff]
        %v1144 = vld [vmem:[%s149 + $0x1da8] sm:$0xff]
        %v1145 = vld [vmem:[%s149 + $0x1db0] sm:$0xff]
        %v1146 = vld [vmem:[%s149 + $0x1db8] sm:$0xff]
        %v1147 = vld [vmem:[%s149 + $0x1dc0] sm:$0xff]
        %v1148 = vld [vmem:[%s149 + $0x1dc8] sm:$0xff]
        %v1149 = vld [vmem:[%s149 + $0x1dd0] sm:$0xff]
        %v1150 = vld [vmem:[%s149 + $0x1dd8] sm:$0xff]
        %v1151 = vld [vmem:[%s149 + $0x1de0] sm:$0xff]
        %v1152 = vld [vmem:[%s149 + $0x1de8] sm:$0xff]
        %v1153 = vld [vmem:[%s149 + $0x1df0] sm:$0xff]
        %v1154 = vld [vmem:[%s149 + $0x1df8] sm:$0xff]
        %v1155 = vld [vmem:[%s149 + $0x1e00] sm:$0xff]
        %v1156 = vld [vmem:[%s149 + $0x1e08] sm:$0xff]
        %v1157 = vld [vmem:[%s149 + $0x1e10] sm:$0xff]
        %v1158 = vld [vmem:[%s149 + $0x1e18] sm:$0xff]
        %v1159 = vld [vmem:[%s149 + $0x1e20] sm:$0xff]
        %v1160 = vld [vmem:[%s149 + $0x1e28] sm:$0xff]
        %v1161 = vld [vmem:[%s149 + $0x1e30] sm:$0xff]
        %v1162 = vld [vmem:[%s149 + $0x1e38] sm:$0xff]
        %v1163 = vld [vmem:[%s149 + $0x1e40] sm:$0xff]
        %v1164 = vld [vmem:[%s149 + $0x1e48] sm:$0xff]
        %v1165 = vld [vmem:[%s149 + $0x1e50] sm:$0xff]
        %v1166 = vld [vmem:[%s149 + $0x1e58] sm:$0xff]
        %v1167 = vld [vmem:[%s149 + $0x1e60] sm:$0xff]
        %v1168 = vld [vmem:[%s149 + $0x1e68] sm:$0xff]
        %v1169 = vld [vmem:[%s149 + $0x1e70] sm:$0xff]
        %v1170 = vld [vmem:[%s149 + $0x1e78] sm:$0xff]
        %v1171 = vld [vmem:[%s149 + $0x1e80] sm:$0xff]
        %v1172 = vld [vmem:[%s149 + $0x1e88] sm:$0xff]
        %v1173 = vld [vmem:[%s149 + $0x1e90] sm:$0xff]
        %v1174 = vld [vmem:[%s149 + $0x1e98] sm:$0xff]
        %v1175 = vld [vmem:[%s149 + $0x1ea0] sm:$0xff]
        %v1176 = vld [vmem:[%s149 + $0x1ea8] sm:$0xff]
        %v1177 = vld [vmem:[%s149 + $0x1eb0] sm:$0xff]
        %v1178 = vld [vmem:[%s149 + $0x1eb8] sm:$0xff]
        %v1179 = vld [vmem:[%s149 + $0x1ec0] sm:$0xff]
        %v1180 = vld [vmem:[%s149 + $0x1ec8] sm:$0xff]
        %v1181 = vld [vmem:[%s149 + $0x1ed0] sm:$0xff]
        %v1182 = vld [vmem:[%s149 + $0x1ed8] sm:$0xff]
        %v1183 = vld [vmem:[%s149 + $0x1ee0] sm:$0xff]
        %v1184 = vld [vmem:[%s149 + $0x1ee8] sm:$0xff]
        %v1185 = vld [vmem:[%s149 + $0x1ef0] sm:$0xff]
        %v1186 = vld [vmem:[%s149 + $0x1ef8] sm:$0xff]
        %v1187 = vld [vmem:[%s149 + $0x1f00] sm:$0xff]
        %v1188 = vld [vmem:[%s149 + $0x1f08] sm:$0xff]
        %v1189 = vld [vmem:[%s149 + $0x1f10] sm:$0xff]
        %v1190 = vld [vmem:[%s149 + $0x1f18] sm:$0xff]
        %v1191 = vld [vmem:[%s149 + $0x1f20] sm:$0xff]
        %v1192 = vld [vmem:[%s149 + $0x1f28] sm:$0xff]
        %v1193 = vld [vmem:[%s149 + $0x1f30] sm:$0xff]
        %v1194 = vld [vmem:[%s149 + $0x1f38] sm:$0xff]
        %v1195 = vld [vmem:[%s149 + $0x1f40] sm:$0xff]
        %v1196 = vld [vmem:[%s149 + $0x1f48] sm:$0xff]
        %v1197 = vld [vmem:[%s149 + $0x1f50] sm:$0xff]
        %v1198 = vld [vmem:[%s149 + $0x1f58] sm:$0xff]
        %v1199 = vld [vmem:[%s149 + $0x1f60] sm:$0xff]
        %v1200 = vld [vmem:[%s149 + $0x1f68] sm:$0xff]
        %v1201 = vld [vmem:[%s149 + $0x1f70] sm:$0xff]
        %v1202 = vld [vmem:[%s149 + $0x1f78] sm:$0xff]
        %v1203 = vld [vmem:[%s149 + $0x1f80] sm:$0xff]
        %v1204 = vld [vmem:[%s149 + $0x1f88] sm:$0xff]
        %v1205 = vld [vmem:[%s149 + $0x1f90] sm:$0xff]
        %v1206 = vld [vmem:[%s149 + $0x1f98] sm:$0xff]
        %v1207 = vld [vmem:[%s149 + $0x1fa0] sm:$0xff]
        %v1208 = vld [vmem:[%s149 + $0x1fa8] sm:$0xff]
        %v1209 = vld [vmem:[%s149 + $0x1fb0] sm:$0xff]
        %v1210 = vld [vmem:[%s149 + $0x1fb8] sm:$0xff]
        %v1211 = vld [vmem:[%s149 + $0x1fc0] sm:$0xff]
        %v1212 = vld [vmem:[%s149 + $0x1fc8] sm:$0xff]
        %v1213 = vld [vmem:[%s149 + $0x1fd0] sm:$0xff]
        %v1214 = vld [vmem:[%s149 + $0x1fd8] sm:$0xff]
        %v1215 = vld [vmem:[%s149 + $0x1fe0] sm:$0xff]
        %v1216 = vld [vmem:[%s149 + $0x1fe8] sm:$0xff]
        %v1217 = vld [vmem:[%s149 + $0x1ff0] sm:$0xff]
        %v1218 = vld [vmem:[%s149 + $0x1ff8] sm:$0xff]
        %v1219 = vld [vmem:[%s149 + $0x2000] sm:$0xff]
        %v1220 = vld [vmem:[%s149 + $0x2008] sm:$0xff]
        %v1221 = vld [vmem:[%s149 + $0x2010] sm:$0xff]
        %v1222 = vld [vmem:[%s149 + $0x2018] sm:$0xff]
        %v1223 = vld [vmem:[%s149 + $0x2020] sm:$0xff]
        %v1224 = vld [vmem:[%s149 + $0x2028] sm:$0xff]
        %v1225 = vld [vmem:[%s149 + $0x2030] sm:$0xff]
        %v1226 = vld [vmem:[%s149 + $0x2038] sm:$0xff]
        %v1227 = vld [vmem:[%s149 + $0x2040] sm:$0xff]
        %v1228 = vld [vmem:[%s149 + $0x2048] sm:$0xff]
        %v1229 = vld [vmem:[%s149 + $0x2050] sm:$0xff]
        %v1230 = vld [vmem:[%s149 + $0x2058] sm:$0xff]
        %v1231 = vld [vmem:[%s149 + $0x2060] sm:$0xff]
        %v1232 = vld [vmem:[%s149 + $0x2068] sm:$0xff]
        %v1233 = vld [vmem:[%s149 + $0x2070] sm:$0xff]
        %v1234 = vld [vmem:[%s149 + $0x2078] sm:$0xff]
        %v1235 = vld [vmem:[%s149 + $0x2080] sm:$0xff]
        %v1236 = vld [vmem:[%s149 + $0x2088] sm:$0xff]
        %v1237 = vld [vmem:[%s149 + $0x2090] sm:$0xff]
        %v1238 = vld [vmem:[%s149 + $0x2098] sm:$0xff]
        %v1239 = vld [vmem:[%s149 + $0x20a0] sm:$0xff]
        %v1240 = vld [vmem:[%s149 + $0x20a8] sm:$0xff]
        %v1241 = vld [vmem:[%s149 + $0x20b0] sm:$0xff]
        %v1242 = vld [vmem:[%s149 + $0x20b8] sm:$0xff]
        %v1243 = vld [vmem:[%s149 + $0x20c0] sm:$0xff]
        %v1244 = vld [vmem:[%s149 + $0x20c8] sm:$0xff]
        %v1245 = vld [vmem:[%s149 + $0x20d0] sm:$0xff]
        %v1246 = vld [vmem:[%s149 + $0x20d8] sm:$0xff]
        %v1247 = vld [vmem:[%s149 + $0x20e0] sm:$0xff]
        %v1248 = vld [vmem:[%s149 + $0x20e8] sm:$0xff]
        %v1249 = vld [vmem:[%s149 + $0x20f0] sm:$0xff]
        %v1250 = vld [vmem:[%s149 + $0x20f8] sm:$0xff]
        %v1251 = vld [vmem:[%s149 + $0x2100] sm:$0xff]
        %v1252 = vld [vmem:[%s149 + $0x2108] sm:$0xff]
        %v1253 = vld [vmem:[%s149 + $0x2110] sm:$0xff]
        %v1254 = vld [vmem:[%s149 + $0x2118] sm:$0xff]
        %v1255 = vld [vmem:[%s149 + $0x2120] sm:$0xff]
        %v1256 = vld [vmem:[%s149 + $0x2128] sm:$0xff]
        %v1257 = vld [vmem:[%s149 + $0x2130] sm:$0xff]
        %v1258 = vld [vmem:[%s149 + $0x2138] sm:$0xff]
        %v1259 = vld [vmem:[%s149 + $0x2140] sm:$0xff]
        %v1260 = vld [vmem:[%s149 + $0x2148] sm:$0xff]
        %v1261 = vld [vmem:[%s149 + $0x2150] sm:$0xff]
        %v1262 = vld [vmem:[%s149 + $0x2158] sm:$0xff]
        %v1263 = vld [vmem:[%s149 + $0x2160] sm:$0xff]
        %v1264 = vld [vmem:[%s149 + $0x2168] sm:$0xff]
        %v1265 = vld [vmem:[%s149 + $0x2170] sm:$0xff]
        %v1266 = vld [vmem:[%s149 + $0x2178] sm:$0xff]
        %v1267 = vld [vmem:[%s149 + $0x2180] sm:$0xff]
        %v1268 = vld [vmem:[%s149 + $0x2188] sm:$0xff]
        %v1269 = vld [vmem:[%s149 + $0x2190] sm:$0xff]
        %v1270 = vld [vmem:[%s149 + $0x2198] sm:$0xff]
        %v1271 = vld [vmem:[%s149 + $0x21a0] sm:$0xff]
        %v1272 = vld [vmem:[%s149 + $0x21a8] sm:$0xff]
        %v1273 = vld [vmem:[%s149 + $0x21b0] sm:$0xff]
        %v1274 = vld [vmem:[%s149 + $0x21b8] sm:$0xff]
        %v1275 = vld [vmem:[%s149 + $0x21c0] sm:$0xff]
        %v1276 = vld [vmem:[%s149 + $0x21c8] sm:$0xff]
        %v1277 = vld [vmem:[%s149 + $0x21d0] sm:$0xff]
        %v1278 = vld [vmem:[%s149 + $0x21d8] sm:$0xff]
        %v1279 = vld [vmem:[%s149 + $0x21e0] sm:$0xff]
        %v1280 = vld [vmem:[%s149 + $0x21e8] sm:$0xff]
        %v1281 = vld [vmem:[%s149 + $0x21f0] sm:$0xff]
        %v1282 = vld [vmem:[%s149 + $0x21f8] sm:$0xff]
        %v1283 = vld [vmem:[%s149 + $0x2200] sm:$0xff]
        %v1284 = vld [vmem:[%s149 + $0x2208] sm:$0xff]
        %v1285 = vld [vmem:[%s149 + $0x2210] sm:$0xff]
        %v1286 = vld [vmem:[%s149 + $0x2218] sm:$0xff]
        %v1287 = vld [vmem:[%s149 + $0x2220] sm:$0xff]
        %v1288 = vld [vmem:[%s149 + $0x2228] sm:$0xff]
        %v1289 = vld [vmem:[%s149 + $0x2230] sm:$0xff]
        %v1290 = vld [vmem:[%s149 + $0x2238] sm:$0xff]
        %v1291 = vld [vmem:[%s149 + $0x2240] sm:$0xff]
        %v1292 = vld [vmem:[%s149 + $0x2248] sm:$0xff]
        %v1293 = vld [vmem:[%s149 + $0x2250] sm:$0xff]
        %v1294 = vld [vmem:[%s149 + $0x2258] sm:$0xff]
        %v1295 = vld [vmem:[%s149 + $0x2260] sm:$0xff]
        %v1296 = vld [vmem:[%s149 + $0x2268] sm:$0xff]
        %v1297 = vld [vmem:[%s149 + $0x2270] sm:$0xff]
        %v1298 = vld [vmem:[%s149 + $0x2278] sm:$0xff]
        %v1299 = vld [vmem:[%s149 + $0x2280] sm:$0xff]
        %v1300 = vld [vmem:[%s149 + $0x2288] sm:$0xff]
        %v1301 = vld [vmem:[%s149 + $0x2290] sm:$0xff]
        %v1302 = vld [vmem:[%s149 + $0x2298] sm:$0xff]
        %v1303 = vld [vmem:[%s149 + $0x22a0] sm:$0xff]
        %v1304 = vld [vmem:[%s149 + $0x22a8] sm:$0xff]
        %v1305 = vld [vmem:[%s149 + $0x22b0] sm:$0xff]
        %v1306 = vld [vmem:[%s149 + $0x22b8] sm:$0xff]
        %v1307 = vld [vmem:[%s149 + $0x22c0] sm:$0xff]
        %v1308 = vld [vmem:[%s149 + $0x22c8] sm:$0xff]
        %v1309 = vld [vmem:[%s149 + $0x22d0] sm:$0xff]
        %v1310 = vld [vmem:[%s149 + $0x22d8] sm:$0xff]
        %v1311 = vld [vmem:[%s149 + $0x22e0] sm:$0xff]
        %v1312 = vld [vmem:[%s149 + $0x22e8] sm:$0xff]
        %v1313 = vld [vmem:[%s149 + $0x22f0] sm:$0xff]
        %v1314 = vld [vmem:[%s149 + $0x22f8] sm:$0xff]
        %v1315 = vld [vmem:[%s149 + $0x2300] sm:$0xff]
        %v1316 = vld [vmem:[%s149 + $0x2308] sm:$0xff]
        %v1317 = vld [vmem:[%s149 + $0x2310] sm:$0xff]
        %v1318 = vld [vmem:[%s149 + $0x2318] sm:$0xff]
        %v1319 = vld [vmem:[%s149 + $0x2320] sm:$0xff]
        %v1320 = vld [vmem:[%s149 + $0x2328] sm:$0xff]
        %v1321 = vld [vmem:[%s149 + $0x2330] sm:$0xff]
        %v1322 = vld [vmem:[%s149 + $0x2338] sm:$0xff]
        %v1323 = vld [vmem:[%s149 + $0x2340] sm:$0xff]
        %v1324 = vld [vmem:[%s149 + $0x2348] sm:$0xff]
        %v1325 = vld [vmem:[%s149 + $0x2350] sm:$0xff]
        %v1326 = vld [vmem:[%s149 + $0x2358] sm:$0xff]
        %v1327 = vld [vmem:[%s149 + $0x2360] sm:$0xff]
        %v1328 = vld [vmem:[%s149 + $0x2368] sm:$0xff]
        %v1329 = vld [vmem:[%s149 + $0x2370] sm:$0xff]
        %v1330 = vld [vmem:[%s149 + $0x2378] sm:$0xff]
        %v1331 = vld [vmem:[%s149 + $0x2380] sm:$0xff]
        %v1332 = vld [vmem:[%s149 + $0x2388] sm:$0xff]
        %v1333 = vld [vmem:[%s149 + $0x2390] sm:$0xff]
        %v1334 = vld [vmem:[%s149 + $0x2398] sm:$0xff]
        %v1335 = vld [vmem:[%s149 + $0x23a0] sm:$0xff]
        %v1336 = vld [vmem:[%s149 + $0x23a8] sm:$0xff]
        %v1337 = vld [vmem:[%s149 + $0x23b0] sm:$0xff]
        %v1338 = vld [vmem:[%s149 + $0x23b8] sm:$0xff]
        %v1339 = vld [vmem:[%s149 + $0x23c0] sm:$0xff]
        %v1340 = vld [vmem:[%s149 + $0x23c8] sm:$0xff]
        %v1341 = vld [vmem:[%s149 + $0x23d0] sm:$0xff]
        %v1342 = vld [vmem:[%s149 + $0x23d8] sm:$0xff]
        %v1343 = vld [vmem:[%s149 + $0x23e0] sm:$0xff]
        %v1344 = vld [vmem:[%s149 + $0x23e8] sm:$0xff]
        %v1345 = vld [vmem:[%s149 + $0x23f0] sm:$0xff]
        %v1346 = vld [vmem:[%s149 + $0x23f8] sm:$0xff]
        %v1347 = vld [vmem:[%s149 + $0x2400] sm:$0xff]
        %v1348 = vld [vmem:[%s149 + $0x2408] sm:$0xff]
        %v1349 = vld [vmem:[%s149 + $0x2410] sm:$0xff]
        %v1350 = vld [vmem:[%s149 + $0x2418] sm:$0xff]
        %v1351 = vld [vmem:[%s149 + $0x2420] sm:$0xff]
        %v1352 = vld [vmem:[%s149 + $0x2428] sm:$0xff]
        %v1353 = vld [vmem:[%s149 + $0x2430] sm:$0xff]
        %v1354 = vld [vmem:[%s149 + $0x2438] sm:$0xff]
        %v1355 = vld [vmem:[%s149 + $0x2440] sm:$0xff]
        %v1356 = vld [vmem:[%s149 + $0x2448] sm:$0xff]
        %v1357 = vld [vmem:[%s149 + $0x2450] sm:$0xff]
        %v1358 = vld [vmem:[%s149 + $0x2458] sm:$0xff]
        %v1359 = vld [vmem:[%s149 + $0x2460] sm:$0xff]
        %v1360 = vld [vmem:[%s149 + $0x2468] sm:$0xff]
        %v1361 = vld [vmem:[%s149 + $0x2470] sm:$0xff]
        %v1362 = vld [vmem:[%s149 + $0x2478] sm:$0xff]
        %v1363 = vld [vmem:[%s149 + $0x2480] sm:$0xff]
        %v1364 = vld [vmem:[%s149 + $0x2488] sm:$0xff]
        %v1365 = vld [vmem:[%s149 + $0x2490] sm:$0xff]
        %v1366 = vld [vmem:[%s149 + $0x2498] sm:$0xff]
        %v1367 = vld [vmem:[%s149 + $0x24a0] sm:$0xff]
        %v1368 = vld [vmem:[%s149 + $0x24a8] sm:$0xff]
        %v1369 = vld [vmem:[%s149 + $0x24b0] sm:$0xff]
        %v1370 = vld [vmem:[%s149 + $0x24b8] sm:$0xff]
        %v1371 = vld [vmem:[%s149 + $0x24c0] sm:$0xff]
        %v1372 = vld [vmem:[%s149 + $0x24c8] sm:$0xff]
        %v1373 = vld [vmem:[%s149 + $0x24d0] sm:$0xff]
        %v1374 = vld [vmem:[%s149 + $0x24d8] sm:$0xff]
        %v1375 = vld [vmem:[%s149 + $0x24e0] sm:$0xff]
        %v1376 = vld [vmem:[%s149 + $0x24e8] sm:$0xff]
        %v1377 = vld [vmem:[%s149 + $0x24f0] sm:$0xff]
        %v1378 = vld [vmem:[%s149 + $0x24f8] sm:$0xff]
        %v1379 = vld [vmem:[%s149 + $0x2500] sm:$0xff]
        %v1380 = vld [vmem:[%s149 + $0x2508] sm:$0xff]
        %v1381 = vld [vmem:[%s149 + $0x2510] sm:$0xff]
        %v1382 = vld [vmem:[%s149 + $0x2518] sm:$0xff]
        %v1383 = vld [vmem:[%s149 + $0x2520] sm:$0xff]
        %v1384 = vld [vmem:[%s149 + $0x2528] sm:$0xff]
        %v1385 = vld [vmem:[%s149 + $0x2530] sm:$0xff]
        %v1386 = vld [vmem:[%s149 + $0x2538] sm:$0xff]
        %v1387 = vld [vmem:[%s149 + $0x2540] sm:$0xff]
        %v1388 = vld [vmem:[%s149 + $0x2548] sm:$0xff]
        %v1389 = vld [vmem:[%s149 + $0x2550] sm:$0xff]
        %v1390 = vld [vmem:[%s149 + $0x2558] sm:$0xff]
        %v1391 = vld [vmem:[%s149 + $0x2560] sm:$0xff]
        %v1392 = vld [vmem:[%s149 + $0x2568] sm:$0xff]
        %v1393 = vld [vmem:[%s149 + $0x2570] sm:$0xff]
        %v1394 = vld [vmem:[%s149 + $0x2578] sm:$0xff]
        %v1395 = vld [vmem:[%s149 + $0x2580] sm:$0xff]
        %v1396 = vld [vmem:[%s149 + $0x2588] sm:$0xff]
        %v1397 = vld [vmem:[%s149 + $0x2590] sm:$0xff]
        %v1398 = vld [vmem:[%s149 + $0x2598] sm:$0xff]
        %v1399 = vld [vmem:[%s149 + $0x25a0] sm:$0xff]
        %v1400 = vld [vmem:[%s149 + $0x25a8] sm:$0xff]
        %v1401 = vld [vmem:[%s149 + $0x25b0] sm:$0xff]
        %v1402 = vld [vmem:[%s149 + $0x25b8] sm:$0xff]
        %v1403 = vld [vmem:[%s149 + $0x25c0] sm:$0xff]
        %v1404 = vld [vmem:[%s149 + $0x25c8] sm:$0xff]
        %v1405 = vld [vmem:[%s149 + $0x25d0] sm:$0xff]
        %v1406 = vld [vmem:[%s149 + $0x25d8] sm:$0xff]
        %v1407 = vld [vmem:[%s149 + $0x25e0] sm:$0xff]
        %v1408 = vld [vmem:[%s149 + $0x25e8] sm:$0xff]
        %v1409 = vld [vmem:[%s149 + $0x25f0] sm:$0xff]
        %v1410 = vld [vmem:[%s149 + $0x25f8] sm:$0xff]
        %v1411 = vld [vmem:[%s149 + $0x2600] sm:$0xff]
        %v1412 = vld [vmem:[%s149 + $0x2608] sm:$0xff]
        %v1413 = vld [vmem:[%s149 + $0x2610] sm:$0xff]
        %v1414 = vld [vmem:[%s149 + $0x2618] sm:$0xff]
        %v1415 = vld [vmem:[%s149 + $0x2620] sm:$0xff]
        %v1416 = vld [vmem:[%s149 + $0x2628] sm:$0xff]
        %v1417 = vld [vmem:[%s149 + $0x2630] sm:$0xff]
        %v1418 = vld [vmem:[%s149 + $0x2638] sm:$0xff]
        %v1419 = vld [vmem:[%s149 + $0x2640] sm:$0xff]
        %v1420 = vld [vmem:[%s149 + $0x2648] sm:$0xff]
        %v1421 = vld [vmem:[%s149 + $0x2650] sm:$0xff]
        %v1422 = vld [vmem:[%s149 + $0x2658] sm:$0xff]
        %v1423 = vld [vmem:[%s149 + $0x2660] sm:$0xff]
        %v1424 = vld [vmem:[%s149 + $0x2668] sm:$0xff]
        %v1425 = vld [vmem:[%s149 + $0x2670] sm:$0xff]
        %v1426 = vld [vmem:[%s149 + $0x2678] sm:$0xff]
        %v1427 = vld [vmem:[%s149 + $0x2680] sm:$0xff]
        %v1428 = vld [vmem:[%s149 + $0x2688] sm:$0xff]
        %v1429 = vld [vmem:[%s149 + $0x2690] sm:$0xff]
        %v1430 = vld [vmem:[%s149 + $0x2698] sm:$0xff]
        %v1431 = vld [vmem:[%s149 + $0x26a0] sm:$0xff]
        %v1432 = vld [vmem:[%s149 + $0x26a8] sm:$0xff]
        %v1433 = vld [vmem:[%s149 + $0x26b0] sm:$0xff]
        %v1434 = vld [vmem:[%s149 + $0x26b8] sm:$0xff]
        %v1435 = vld [vmem:[%s149 + $0x26c0] sm:$0xff]
        %v1436 = vld [vmem:[%s149 + $0x26c8] sm:$0xff]
        %v1437 = vld [vmem:[%s149 + $0x26d0] sm:$0xff]
        %v1438 = vld [vmem:[%s149 + $0x26d8] sm:$0xff]
        %v1439 = vld [vmem:[%s149 + $0x26e0] sm:$0xff]
        %v1440 = vld [vmem:[%s149 + $0x26e8] sm:$0xff]
        %v1441 = vld [vmem:[%s149 + $0x26f0] sm:$0xff]
        %v1442 = vld [vmem:[%s149 + $0x26f8] sm:$0xff]
        %v1443 = vld [vmem:[%s149 + $0x2700] sm:$0xff]
        %v1444 = vld [vmem:[%s149 + $0x2708] sm:$0xff]
        %v1445 = vld [vmem:[%s149 + $0x2710] sm:$0xff]
        %v1446 = vld [vmem:[%s149 + $0x2718] sm:$0xff]
        %v1447 = vld [vmem:[%s149 + $0x2720] sm:$0xff]
        %v1448 = vld [vmem:[%s149 + $0x2728] sm:$0xff]
        %v1449 = vld [vmem:[%s149 + $0x2730] sm:$0xff]
        %v1450 = vld [vmem:[%s149 + $0x2738] sm:$0xff]
        %v1451 = vld [vmem:[%s149 + $0x2740] sm:$0xff]
        %v1452 = vld [vmem:[%s149 + $0x2748] sm:$0xff]
        %v1453 = vld [vmem:[%s149 + $0x2750] sm:$0xff]
        %v1454 = vld [vmem:[%s149 + $0x2758] sm:$0xff]
        %v1455 = vld [vmem:[%s149 + $0x2760] sm:$0xff]
        %v1456 = vld [vmem:[%s149 + $0x2768] sm:$0xff]
        %v1457 = vld [vmem:[%s149 + $0x2770] sm:$0xff]
        %v1458 = vld [vmem:[%s149 + $0x2778] sm:$0xff]
        %v1459 = vld [vmem:[%s149 + $0x2780] sm:$0xff]
        %v1460 = vld [vmem:[%s149 + $0x2788] sm:$0xff]
        %v1461 = vld [vmem:[%s149 + $0x2790] sm:$0xff]
        %v1462 = vld [vmem:[%s149 + $0x2798] sm:$0xff]
        %v1463 = vld [vmem:[%s149 + $0x27a0] sm:$0xff]
        %v1464 = vld [vmem:[%s149 + $0x27a8] sm:$0xff]
        %v1465 = vld [vmem:[%s149 + $0x27b0] sm:$0xff]
        %v1466 = vld [vmem:[%s149 + $0x27b8] sm:$0xff]
        %v1467 = vld [vmem:[%s149 + $0x27c0] sm:$0xff]
        %v1468 = vld [vmem:[%s149 + $0x27c8] sm:$0xff]
        %v1469 = vld [vmem:[%s149 + $0x27d0] sm:$0xff]
        %v1470 = vld [vmem:[%s149 + $0x27d8] sm:$0xff]
        %v1471 = vld [vmem:[%s149 + $0x27e0] sm:$0xff]
        %v1472 = vld [vmem:[%s149 + $0x27e8] sm:$0xff]
        %v1473 = vld [vmem:[%s149 + $0x27f0] sm:$0xff]
        %v1474 = vld [vmem:[%s149 + $0x27f8] sm:$0xff]
        %v1485 = vcombine.high %v185, %v185
        %v1487 = vunpack.c.l.s4 1966171168
        %v1488 = vunpack.c.0.s8 %v1487
        %v1489 = vlaneseq
        %v1490 = vshrl.u32 %v1489, 7
        %v1491 = vsub.s32 %v1488, %v1490
        %v1492 = vrot.slane %v185, %v1491
        %v1494 = vunpack.c.l.s4 1966171168
        %v1495 = vunpack.c.0.s8 %v1494
        %v1496 = vlaneseq
        %v1497 = vshrl.u32 %v1496, 7
        %v1498 = vsub.s32 %v1495, %v1497
        %v1499 = vrot.slane %v1485, %v1498
        %v1500 = vcombine.high %v1492, %v1492
        %v1501 = vcombine.high %v1499, %v1499
        %v1503 = vunpack.c.l.s4 1966171168
        %v1504 = vunpack.c.0.s8 %v1503
        %v1505 = vlaneseq
        %v1506 = vshrl.u32 %v1505, 7
        %v1507 = vsub.s32 %v1504, %v1506
        %v1508 = vrot.slane %v1492, %v1507
        %v1510 = vunpack.c.l.s4 1966171168
        %v1511 = vunpack.c.0.s8 %v1510
        %v1512 = vlaneseq
        %v1513 = vshrl.u32 %v1512, 7
        %v1514 = vsub.s32 %v1511, %v1513
        %v1515 = vrot.slane %v1499, %v1514
        %v1517 = vunpack.c.l.s4 1966171168
        %v1518 = vunpack.c.0.s8 %v1517
        %v1519 = vlaneseq
        %v1520 = vshrl.u32 %v1519, 7
        %v1521 = vsub.s32 %v1518, %v1520
        %v1522 = vrot.slane %v1500, %v1521
        %v1524 = vunpack.c.l.s4 1966171168
        %v1525 = vunpack.c.0.s8 %v1524
        %v1526 = vlaneseq
        %v1527 = vshrl.u32 %v1526, 7
        %v1528 = vsub.s32 %v1525, %v1527
        %v1529 = vrot.slane %v1501, %v1528
        %v1530 = vcombine.high %v1508, %v1508
        %v1531 = vcombine.high %v1515, %v1515
        %v1532 = vcombine.high %v1522, %v1522
        %v1533 = vcombine.high %v1529, %v1529
        %v1534 = vcombine.high %v186, %v186
        %v1536 = vunpack.c.l.s4 1966171168
        %v1537 = vunpack.c.0.s8 %v1536
        %v1538 = vlaneseq
        %v1539 = vshrl.u32 %v1538, 7
        %v1540 = vsub.s32 %v1537, %v1539
        %v1541 = vrot.slane %v186, %v1540
        %v1543 = vunpack.c.l.s4 1966171168
        %v1544 = vunpack.c.0.s8 %v1543
        %v1545 = vlaneseq
        %v1546 = vshrl.u32 %v1545, 7
        %v1547 = vsub.s32 %v1544, %v1546
        %v1548 = vrot.slane %v1534, %v1547
        %v1549 = vcombine.high %v1541, %v1541
        %v1550 = vcombine.high %v1548, %v1548
        %v1552 = vunpack.c.l.s4 1966171168
        %v1553 = vunpack.c.0.s8 %v1552
        %v1554 = vlaneseq
        %v1555 = vshrl.u32 %v1554, 7
        %v1556 = vsub.s32 %v1553, %v1555
        %v1557 = vrot.slane %v1541, %v1556
        %v1559 = vunpack.c.l.s4 1966171168
        %v1560 = vunpack.c.0.s8 %v1559
        %v1561 = vlaneseq
        %v1562 = vshrl.u32 %v1561, 7
        %v1563 = vsub.s32 %v1560, %v1562
        %v1564 = vrot.slane %v1548, %v1563
        %v1566 = vunpack.c.l.s4 1966171168
        %v1567 = vunpack.c.0.s8 %v1566
        %v1568 = vlaneseq
        %v1569 = vshrl.u32 %v1568, 7
        %v1570 = vsub.s32 %v1567, %v1569
        %v1571 = vrot.slane %v1549, %v1570
        %v1573 = vunpack.c.l.s4 1966171168
        %v1574 = vunpack.c.0.s8 %v1573
        %v1575 = vlaneseq
        %v1576 = vshrl.u32 %v1575, 7
        %v1577 = vsub.s32 %v1574, %v1576
        %v1578 = vrot.slane %v1550, %v1577
        %v1579 = vcombine.high %v1557, %v1557
        %v1580 = vcombine.high %v1564, %v1564
        %v1581 = vcombine.high %v1571, %v1571
        %v1582 = vcombine.high %v1578, %v1578
        %v1583 = vcombine.high %v187, %v187
        %v1585 = vunpack.c.l.s4 1966171168
        %v1586 = vunpack.c.0.s8 %v1585
        %v1587 = vlaneseq
        %v1588 = vshrl.u32 %v1587, 7
        %v1589 = vsub.s32 %v1586, %v1588
        %v1590 = vrot.slane %v187, %v1589
        %v1592 = vunpack.c.l.s4 1966171168
        %v1593 = vunpack.c.0.s8 %v1592
        %v1594 = vlaneseq
        %v1595 = vshrl.u32 %v1594, 7
        %v1596 = vsub.s32 %v1593, %v1595
        %v1597 = vrot.slane %v1583, %v1596
        %v1598 = vcombine.high %v1590, %v1590
        %v1599 = vcombine.high %v1597, %v1597
        %v1601 = vunpack.c.l.s4 1966171168
        %v1602 = vunpack.c.0.s8 %v1601
        %v1603 = vlaneseq
        %v1604 = vshrl.u32 %v1603, 7
        %v1605 = vsub.s32 %v1602, %v1604
        %v1606 = vrot.slane %v1590, %v1605
        %v1608 = vunpack.c.l.s4 1966171168
        %v1609 = vunpack.c.0.s8 %v1608
        %v1610 = vlaneseq
        %v1611 = vshrl.u32 %v1610, 7
        %v1612 = vsub.s32 %v1609, %v1611
        %v1613 = vrot.slane %v1597, %v1612
        %v1615 = vunpack.c.l.s4 1966171168
        %v1616 = vunpack.c.0.s8 %v1615
        %v1617 = vlaneseq
        %v1618 = vshrl.u32 %v1617, 7
        %v1619 = vsub.s32 %v1616, %v1618
        %v1620 = vrot.slane %v1598, %v1619
        %v1622 = vunpack.c.l.s4 1966171168
        %v1623 = vunpack.c.0.s8 %v1622
        %v1624 = vlaneseq
        %v1625 = vshrl.u32 %v1624, 7
        %v1626 = vsub.s32 %v1623, %v1625
        %v1627 = vrot.slane %v1599, %v1626
        %v1628 = vcombine.high %v1606, %v1606
        %v1629 = vcombine.high %v1613, %v1613
        %v1630 = vcombine.high %v1620, %v1620
        %v1631 = vcombine.high %v1627, %v1627
        %v1632 = vcombine.high %v188, %v188
        %v1634 = vunpack.c.l.s4 1966171168
        %v1635 = vunpack.c.0.s8 %v1634
        %v1636 = vlaneseq
        %v1637 = vshrl.u32 %v1636, 7
        %v1638 = vsub.s32 %v1635, %v1637
        %v1639 = vrot.slane %v188, %v1638
        %v1641 = vunpack.c.l.s4 1966171168
        %v1642 = vunpack.c.0.s8 %v1641
        %v1643 = vlaneseq
        %v1644 = vshrl.u32 %v1643, 7
        %v1645 = vsub.s32 %v1642, %v1644
        %v1646 = vrot.slane %v1632, %v1645
        %v1647 = vcombine.high %v1639, %v1639
        %v1648 = vcombine.high %v1646, %v1646
        %v1650 = vunpack.c.l.s4 1966171168
        %v1651 = vunpack.c.0.s8 %v1650
        %v1652 = vlaneseq
        %v1653 = vshrl.u32 %v1652, 7
        %v1654 = vsub.s32 %v1651, %v1653
        %v1655 = vrot.slane %v1639, %v1654
        %v1657 = vunpack.c.l.s4 1966171168
        %v1658 = vunpack.c.0.s8 %v1657
        %v1659 = vlaneseq
        %v1660 = vshrl.u32 %v1659, 7
        %v1661 = vsub.s32 %v1658, %v1660
        %v1662 = vrot.slane %v1646, %v1661
        %v1664 = vunpack.c.l.s4 1966171168
        %v1665 = vunpack.c.0.s8 %v1664
        %v1666 = vlaneseq
        %v1667 = vshrl.u32 %v1666, 7
        %v1668 = vsub.s32 %v1665, %v1667
        %v1669 = vrot.slane %v1647, %v1668
        %v1671 = vunpack.c.l.s4 1966171168
        %v1672 = vunpack.c.0.s8 %v1671
        %v1673 = vlaneseq
        %v1674 = vshrl.u32 %v1673, 7
        %v1675 = vsub.s32 %v1672, %v1674
        %v1676 = vrot.slane %v1648, %v1675
        %v1677 = vcombine.high %v1655, %v1655
        %v1678 = vcombine.high %v1662, %v1662
        %v1679 = vcombine.high %v1669, %v1669
        %v1680 = vcombine.high %v1676, %v1676
        %v1681 = vcombine.high %v189, %v189
        %v1683 = vunpack.c.l.s4 1966171168
        %v1684 = vunpack.c.0.s8 %v1683
        %v1685 = vlaneseq
        %v1686 = vshrl.u32 %v1685, 7
        %v1687 = vsub.s32 %v1684, %v1686
        %v1688 = vrot.slane %v189, %v1687
        %v1690 = vunpack.c.l.s4 1966171168
        %v1691 = vunpack.c.0.s8 %v1690
        %v1692 = vlaneseq
        %v1693 = vshrl.u32 %v1692, 7
        %v1694 = vsub.s32 %v1691, %v1693
        %v1695 = vrot.slane %v1681, %v1694
        %v1696 = vcombine.high %v1688, %v1688
        %v1697 = vcombine.high %v1695, %v1695
        %v1699 = vunpack.c.l.s4 1966171168
        %v1700 = vunpack.c.0.s8 %v1699
        %v1701 = vlaneseq
        %v1702 = vshrl.u32 %v1701, 7
        %v1703 = vsub.s32 %v1700, %v1702
        %v1704 = vrot.slane %v1688, %v1703
        %v1706 = vunpack.c.l.s4 1966171168
        %v1707 = vunpack.c.0.s8 %v1706
        %v1708 = vlaneseq
        %v1709 = vshrl.u32 %v1708, 7
        %v1710 = vsub.s32 %v1707, %v1709
        %v1711 = vrot.slane %v1695, %v1710
        %v1713 = vunpack.c.l.s4 1966171168
        %v1714 = vunpack.c.0.s8 %v1713
        %v1715 = vlaneseq
        %v1716 = vshrl.u32 %v1715, 7
        %v1717 = vsub.s32 %v1714, %v1716
        %v1718 = vrot.slane %v1696, %v1717
        %v1720 = vunpack.c.l.s4 1966171168
        %v1721 = vunpack.c.0.s8 %v1720
        %v1722 = vlaneseq
        %v1723 = vshrl.u32 %v1722, 7
        %v1724 = vsub.s32 %v1721, %v1723
        %v1725 = vrot.slane %v1697, %v1724
        %v1726 = vcombine.high %v1704, %v1704
        %v1727 = vcombine.high %v1711, %v1711
        %v1728 = vcombine.high %v1718, %v1718
        %v1729 = vcombine.high %v1725, %v1725
        %v1730 = vcombine.high %v190, %v190
        %v1732 = vunpack.c.l.s4 1966171168
        %v1733 = vunpack.c.0.s8 %v1732
        %v1734 = vlaneseq
        %v1735 = vshrl.u32 %v1734, 7
        %v1736 = vsub.s32 %v1733, %v1735
        %v1737 = vrot.slane %v190, %v1736
        %v1739 = vunpack.c.l.s4 1966171168
        %v1740 = vunpack.c.0.s8 %v1739
        %v1741 = vlaneseq
        %v1742 = vshrl.u32 %v1741, 7
        %v1743 = vsub.s32 %v1740, %v1742
        %v1744 = vrot.slane %v1730, %v1743
        %v1745 = vcombine.high %v1737, %v1737
        %v1746 = vcombine.high %v1744, %v1744
        %v1748 = vunpack.c.l.s4 1966171168
        %v1749 = vunpack.c.0.s8 %v1748
        %v1750 = vlaneseq
        %v1751 = vshrl.u32 %v1750, 7
        %v1752 = vsub.s32 %v1749, %v1751
        %v1753 = vrot.slane %v1737, %v1752
        %v1755 = vunpack.c.l.s4 1966171168
        %v1756 = vunpack.c.0.s8 %v1755
        %v1757 = vlaneseq
        %v1758 = vshrl.u32 %v1757, 7
        %v1759 = vsub.s32 %v1756, %v1758
        %v1760 = vrot.slane %v1744, %v1759
        %v1762 = vunpack.c.l.s4 1966171168
        %v1763 = vunpack.c.0.s8 %v1762
        %v1764 = vlaneseq
        %v1765 = vshrl.u32 %v1764, 7
        %v1766 = vsub.s32 %v1763, %v1765
        %v1767 = vrot.slane %v1745, %v1766
        %v1769 = vunpack.c.l.s4 1966171168
        %v1770 = vunpack.c.0.s8 %v1769
        %v1771 = vlaneseq
        %v1772 = vshrl.u32 %v1771, 7
        %v1773 = vsub.s32 %v1770, %v1772
        %v1774 = vrot.slane %v1746, %v1773
        %v1775 = vcombine.high %v1753, %v1753
        %v1776 = vcombine.high %v1760, %v1760
        %v1777 = vcombine.high %v1767, %v1767
        %v1778 = vcombine.high %v1774, %v1774
        %v1779 = vcombine.high %v191, %v191
        %v1781 = vunpack.c.l.s4 1966171168
        %v1782 = vunpack.c.0.s8 %v1781
        %v1783 = vlaneseq
        %v1784 = vshrl.u32 %v1783, 7
        %v1785 = vsub.s32 %v1782, %v1784
        %v1786 = vrot.slane %v191, %v1785
        %v1788 = vunpack.c.l.s4 1966171168
        %v1789 = vunpack.c.0.s8 %v1788
        %v1790 = vlaneseq
        %v1791 = vshrl.u32 %v1790, 7
        %v1792 = vsub.s32 %v1789, %v1791
        %v1793 = vrot.slane %v1779, %v1792
        %v1794 = vcombine.high %v1786, %v1786
        %v1795 = vcombine.high %v1793, %v1793
        %v1797 = vunpack.c.l.s4 1966171168
        %v1798 = vunpack.c.0.s8 %v1797
        %v1799 = vlaneseq
        %v1800 = vshrl.u32 %v1799, 7
        %v1801 = vsub.s32 %v1798, %v1800
        %v1802 = vrot.slane %v1786, %v1801
        %v1804 = vunpack.c.l.s4 1966171168
        %v1805 = vunpack.c.0.s8 %v1804
        %v1806 = vlaneseq
        %v1807 = vshrl.u32 %v1806, 7
        %v1808 = vsub.s32 %v1805, %v1807
        %v1809 = vrot.slane %v1793, %v1808
        %v1811 = vunpack.c.l.s4 1966171168
        %v1812 = vunpack.c.0.s8 %v1811
        %v1813 = vlaneseq
        %v1814 = vshrl.u32 %v1813, 7
        %v1815 = vsub.s32 %v1812, %v1814
        %v1816 = vrot.slane %v1794, %v1815
        %v1818 = vunpack.c.l.s4 1966171168
        %v1819 = vunpack.c.0.s8 %v1818
        %v1820 = vlaneseq
        %v1821 = vshrl.u32 %v1820, 7
        %v1822 = vsub.s32 %v1819, %v1821
        %v1823 = vrot.slane %v1795, %v1822
        %v1824 = vcombine.high %v1802, %v1802
        %v1825 = vcombine.high %v1809, %v1809
        %v1826 = vcombine.high %v1816, %v1816
        %v1827 = vcombine.high %v1823, %v1823
        %v1828 = vcombine.high %v192, %v192
        %v1830 = vunpack.c.l.s4 1966171168
        %v1831 = vunpack.c.0.s8 %v1830
        %v1832 = vlaneseq
        %v1833 = vshrl.u32 %v1832, 7
        %v1834 = vsub.s32 %v1831, %v1833
        %v1835 = vrot.slane %v192, %v1834
        %v1837 = vunpack.c.l.s4 1966171168
        %v1838 = vunpack.c.0.s8 %v1837
        %v1839 = vlaneseq
        %v1840 = vshrl.u32 %v1839, 7
        %v1841 = vsub.s32 %v1838, %v1840
        %v1842 = vrot.slane %v1828, %v1841
        %v1843 = vcombine.high %v1835, %v1835
        %v1844 = vcombine.high %v1842, %v1842
        %v1846 = vunpack.c.l.s4 1966171168
        %v1847 = vunpack.c.0.s8 %v1846
        %v1848 = vlaneseq
        %v1849 = vshrl.u32 %v1848, 7
        %v1850 = vsub.s32 %v1847, %v1849
        %v1851 = vrot.slane %v1835, %v1850
        %v1853 = vunpack.c.l.s4 1966171168
        %v1854 = vunpack.c.0.s8 %v1853
        %v1855 = vlaneseq
        %v1856 = vshrl.u32 %v1855, 7
        %v1857 = vsub.s32 %v1854, %v1856
        %v1858 = vrot.slane %v1842, %v1857
        %v1860 = vunpack.c.l.s4 1966171168
        %v1861 = vunpack.c.0.s8 %v1860
        %v1862 = vlaneseq
        %v1863 = vshrl.u32 %v1862, 7
        %v1864 = vsub.s32 %v1861, %v1863
        %v1865 = vrot.slane %v1843, %v1864
        %v1867 = vunpack.c.l.s4 1966171168
        %v1868 = vunpack.c.0.s8 %v1867
        %v1869 = vlaneseq
        %v1870 = vshrl.u32 %v1869, 7
        %v1871 = vsub.s32 %v1868, %v1870
        %v1872 = vrot.slane %v1844, %v1871
        %v1873 = vcombine.high %v1851, %v1851
        %v1874 = vcombine.high %v1858, %v1858
        %v1875 = vcombine.high %v1865, %v1865
        %v1876 = vcombine.high %v1872, %v1872
        %v1877 = vcombine.high %v193, %v193
        %v1879 = vunpack.c.l.s4 1966171168
        %v1880 = vunpack.c.0.s8 %v1879
        %v1881 = vlaneseq
        %v1882 = vshrl.u32 %v1881, 7
        %v1883 = vsub.s32 %v1880, %v1882
        %v1884 = vrot.slane %v193, %v1883
        %v1886 = vunpack.c.l.s4 1966171168
        %v1887 = vunpack.c.0.s8 %v1886
        %v1888 = vlaneseq
        %v1889 = vshrl.u32 %v1888, 7
        %v1890 = vsub.s32 %v1887, %v1889
        %v1891 = vrot.slane %v1877, %v1890
        %v1892 = vcombine.high %v1884, %v1884
        %v1893 = vcombine.high %v1891, %v1891
        %v1895 = vunpack.c.l.s4 1966171168
        %v1896 = vunpack.c.0.s8 %v1895
        %v1897 = vlaneseq
        %v1898 = vshrl.u32 %v1897, 7
        %v1899 = vsub.s32 %v1896, %v1898
        %v1900 = vrot.slane %v1884, %v1899
        %v1902 = vunpack.c.l.s4 1966171168
        %v1903 = vunpack.c.0.s8 %v1902
        %v1904 = vlaneseq
        %v1905 = vshrl.u32 %v1904, 7
        %v1906 = vsub.s32 %v1903, %v1905
        %v1907 = vrot.slane %v1891, %v1906
        %v1909 = vunpack.c.l.s4 1966171168
        %v1910 = vunpack.c.0.s8 %v1909
        %v1911 = vlaneseq
        %v1912 = vshrl.u32 %v1911, 7
        %v1913 = vsub.s32 %v1910, %v1912
        %v1914 = vrot.slane %v1892, %v1913
        %v1916 = vunpack.c.l.s4 1966171168
        %v1917 = vunpack.c.0.s8 %v1916
        %v1918 = vlaneseq
        %v1919 = vshrl.u32 %v1918, 7
        %v1920 = vsub.s32 %v1917, %v1919
        %v1921 = vrot.slane %v1893, %v1920
        %v1922 = vcombine.high %v1900, %v1900
        %v1923 = vcombine.high %v1907, %v1907
        %v1924 = vcombine.high %v1914, %v1914
        %v1925 = vcombine.high %v1921, %v1921
        %v1926 = vcombine.high %v194, %v194
        %v1928 = vunpack.c.l.s4 1966171168
        %v1929 = vunpack.c.0.s8 %v1928
        %v1930 = vlaneseq
        %v1931 = vshrl.u32 %v1930, 7
        %v1932 = vsub.s32 %v1929, %v1931
        %v1933 = vrot.slane %v194, %v1932
        %v1935 = vunpack.c.l.s4 1966171168
        %v1936 = vunpack.c.0.s8 %v1935
        %v1937 = vlaneseq
        %v1938 = vshrl.u32 %v1937, 7
        %v1939 = vsub.s32 %v1936, %v1938
        %v1940 = vrot.slane %v1926, %v1939
        %v1941 = vcombine.high %v1933, %v1933
        %v1942 = vcombine.high %v1940, %v1940
        %v1944 = vunpack.c.l.s4 1966171168
        %v1945 = vunpack.c.0.s8 %v1944
        %v1946 = vlaneseq
        %v1947 = vshrl.u32 %v1946, 7
        %v1948 = vsub.s32 %v1945, %v1947
        %v1949 = vrot.slane %v1933, %v1948
        %v1951 = vunpack.c.l.s4 1966171168
        %v1952 = vunpack.c.0.s8 %v1951
        %v1953 = vlaneseq
        %v1954 = vshrl.u32 %v1953, 7
        %v1955 = vsub.s32 %v1952, %v1954
        %v1956 = vrot.slane %v1940, %v1955
        %v1958 = vunpack.c.l.s4 1966171168
        %v1959 = vunpack.c.0.s8 %v1958
        %v1960 = vlaneseq
        %v1961 = vshrl.u32 %v1960, 7
        %v1962 = vsub.s32 %v1959, %v1961
        %v1963 = vrot.slane %v1941, %v1962
        %v1965 = vunpack.c.l.s4 1966171168
        %v1966 = vunpack.c.0.s8 %v1965
        %v1967 = vlaneseq
        %v1968 = vshrl.u32 %v1967, 7
        %v1969 = vsub.s32 %v1966, %v1968
        %v1970 = vrot.slane %v1942, %v1969
        %v1971 = vcombine.high %v1949, %v1949
        %v1972 = vcombine.high %v1956, %v1956
        %v1973 = vcombine.high %v1963, %v1963
        %v1974 = vcombine.high %v1970, %v1970
        %v3335 = vunpack.c.l.b16 %v195
        %v3336 = vunpack.c.h.b16 %v195
        %v3337 = vunpack.c.l.b16 %v196
        %v3338 = vunpack.c.h.b16 %v196
        %v3339 = vunpack.c.l.b16 %v197
        %v3340 = vunpack.c.h.b16 %v197
        %v3341 = vunpack.c.l.b16 %v198
        %v3342 = vunpack.c.h.b16 %v198
        %v3343 = vunpack.c.l.b16 %v199
        %v3344 = vunpack.c.h.b16 %v199
        %v3345 = vunpack.c.l.b16 %v200
        %v3346 = vunpack.c.h.b16 %v200
        %v3347 = vunpack.c.l.b16 %v201
        %v3348 = vunpack.c.h.b16 %v201
        %v3349 = vunpack.c.l.b16 %v202
        %v3350 = vunpack.c.h.b16 %v202
        %v3351 = vunpack.c.l.b16 %v203
        %v3352 = vunpack.c.h.b16 %v203
        %v3353 = vunpack.c.l.b16 %v204
        %v3354 = vunpack.c.h.b16 %v204
        %v3355 = vunpack.c.l.b16 %v205
        %v3356 = vunpack.c.h.b16 %v205
        %v3357 = vunpack.c.l.b16 %v206
        %v3358 = vunpack.c.h.b16 %v206
        %v3359 = vunpack.c.l.b16 %v207
        %v3360 = vunpack.c.h.b16 %v207
        %v3361 = vunpack.c.l.b16 %v208
        %v3362 = vunpack.c.h.b16 %v208
        %v3363 = vunpack.c.l.b16 %v209
        %v3364 = vunpack.c.h.b16 %v209
        %v3365 = vunpack.c.l.b16 %v210
        %v3366 = vunpack.c.h.b16 %v210
        %v3367 = vunpack.c.l.b16 %v211
        %v3368 = vunpack.c.h.b16 %v211
        %v3369 = vunpack.c.l.b16 %v212
        %v3370 = vunpack.c.h.b16 %v212
        %v3371 = vunpack.c.l.b16 %v213
        %v3372 = vunpack.c.h.b16 %v213
        %v3373 = vunpack.c.l.b16 %v214
        %v3374 = vunpack.c.h.b16 %v214
        %v3375 = vunpack.c.l.b16 %v215
        %v3376 = vunpack.c.h.b16 %v215
        %v3377 = vunpack.c.l.b16 %v216
        %v3378 = vunpack.c.h.b16 %v216
        %v3379 = vunpack.c.l.b16 %v217
        %v3380 = vunpack.c.h.b16 %v217
        %v3381 = vunpack.c.l.b16 %v218
        %v3382 = vunpack.c.h.b16 %v218
        %v3383 = vunpack.c.l.b16 %v219
        %v3384 = vunpack.c.h.b16 %v219
        %v3385 = vunpack.c.l.b16 %v220
        %v3386 = vunpack.c.h.b16 %v220
        %v3387 = vunpack.c.l.b16 %v221
        %v3388 = vunpack.c.h.b16 %v221
        %v3389 = vunpack.c.l.b16 %v222
        %v3390 = vunpack.c.h.b16 %v222
        %v3391 = vunpack.c.l.b16 %v223
        %v3392 = vunpack.c.h.b16 %v223
        %v3393 = vunpack.c.l.b16 %v224
        %v3394 = vunpack.c.h.b16 %v224
        %v3395 = vunpack.c.l.b16 %v225
        %v3396 = vunpack.c.h.b16 %v225
        %v3397 = vunpack.c.l.b16 %v226
        %v3398 = vunpack.c.h.b16 %v226
        %v3399 = vunpack.c.l.b16 %v227
        %v3400 = vunpack.c.h.b16 %v227
        %v3401 = vunpack.c.l.b16 %v228
        %v3402 = vunpack.c.h.b16 %v228
        %v3403 = vunpack.c.l.b16 %v229
        %v3404 = vunpack.c.h.b16 %v229
        %v3405 = vunpack.c.l.b16 %v230
        %v3406 = vunpack.c.h.b16 %v230
        %v3407 = vunpack.c.l.b16 %v231
        %v3408 = vunpack.c.h.b16 %v231
        %v3409 = vunpack.c.l.b16 %v232
        %v3410 = vunpack.c.h.b16 %v232
        %v3411 = vunpack.c.l.b16 %v233
        %v3412 = vunpack.c.h.b16 %v233
        %v3413 = vunpack.c.l.b16 %v234
        %v3414 = vunpack.c.h.b16 %v234
        %v3415 = vunpack.c.l.b16 %v235
        %v3416 = vunpack.c.h.b16 %v235
        %v3417 = vunpack.c.l.b16 %v236
        %v3418 = vunpack.c.h.b16 %v236
        %v3419 = vunpack.c.l.b16 %v237
        %v3420 = vunpack.c.h.b16 %v237
        %v3421 = vunpack.c.l.b16 %v238
        %v3422 = vunpack.c.h.b16 %v238
        %v3423 = vunpack.c.l.b16 %v239
        %v3424 = vunpack.c.h.b16 %v239
        %v3425 = vunpack.c.l.b16 %v240
        %v3426 = vunpack.c.h.b16 %v240
        %v3427 = vunpack.c.l.b16 %v241
        %v3428 = vunpack.c.h.b16 %v241
        %v3429 = vunpack.c.l.b16 %v242
        %v3430 = vunpack.c.h.b16 %v242
        %v3431 = vunpack.c.l.b16 %v243
        %v3432 = vunpack.c.h.b16 %v243
        %v3433 = vunpack.c.l.b16 %v244
        %v3434 = vunpack.c.h.b16 %v244
        %v3435 = vunpack.c.l.b16 %v245
        %v3436 = vunpack.c.h.b16 %v245
        %v3437 = vunpack.c.l.b16 %v246
        %v3438 = vunpack.c.h.b16 %v246
        %v3439 = vunpack.c.l.b16 %v247
        %v3440 = vunpack.c.h.b16 %v247
        %v3441 = vunpack.c.l.b16 %v248
        %v3442 = vunpack.c.h.b16 %v248
        %v3443 = vunpack.c.l.b16 %v249
        %v3444 = vunpack.c.h.b16 %v249
        %v3445 = vunpack.c.l.b16 %v250
        %v3446 = vunpack.c.h.b16 %v250
        %v3447 = vunpack.c.l.b16 %v251
        %v3448 = vunpack.c.h.b16 %v251
        %v3449 = vunpack.c.l.b16 %v252
        %v3450 = vunpack.c.h.b16 %v252
        %v3451 = vunpack.c.l.b16 %v253
        %v3452 = vunpack.c.h.b16 %v253
        %v3453 = vunpack.c.l.b16 %v254
        %v3454 = vunpack.c.h.b16 %v254
        %v3455 = vunpack.c.l.b16 %v255
        %v3456 = vunpack.c.h.b16 %v255
        %v3457 = vunpack.c.l.b16 %v256
        %v3458 = vunpack.c.h.b16 %v256
        %v3459 = vunpack.c.l.b16 %v257
        %v3460 = vunpack.c.h.b16 %v257
        %v3461 = vunpack.c.l.b16 %v258
        %v3462 = vunpack.c.h.b16 %v258
        %v3463 = vunpack.c.l.b16 %v259
        %v3464 = vunpack.c.h.b16 %v259
        %v3465 = vunpack.c.l.b16 %v260
        %v3466 = vunpack.c.h.b16 %v260
        %v3467 = vunpack.c.l.b16 %v261
        %v3468 = vunpack.c.h.b16 %v261
        %v3469 = vunpack.c.l.b16 %v262
        %v3470 = vunpack.c.h.b16 %v262
        %v3471 = vunpack.c.l.b16 %v263
        %v3472 = vunpack.c.h.b16 %v263
        %v3473 = vunpack.c.l.b16 %v264
        %v3474 = vunpack.c.h.b16 %v264
        %v3475 = vunpack.c.l.b16 %v265
        %v3476 = vunpack.c.h.b16 %v265
        %v3477 = vunpack.c.l.b16 %v266
        %v3478 = vunpack.c.h.b16 %v266
        %v3479 = vunpack.c.l.b16 %v267
        %v3480 = vunpack.c.h.b16 %v267
        %v3481 = vunpack.c.l.b16 %v268
        %v3482 = vunpack.c.h.b16 %v268
        %v3483 = vunpack.c.l.b16 %v269
        %v3484 = vunpack.c.h.b16 %v269
        %v3485 = vunpack.c.l.b16 %v270
        %v3486 = vunpack.c.h.b16 %v270
        %v3487 = vunpack.c.l.b16 %v271
        %v3488 = vunpack.c.h.b16 %v271
        %v3489 = vunpack.c.l.b16 %v272
        %v3490 = vunpack.c.h.b16 %v272
        %v3491 = vunpack.c.l.b16 %v273
        %v3492 = vunpack.c.h.b16 %v273
        %v3493 = vunpack.c.l.b16 %v274
        %v3494 = vunpack.c.h.b16 %v274
        %v3495 = vunpack.c.l.b16 %v275
        %v3496 = vunpack.c.h.b16 %v275
        %v3497 = vunpack.c.l.b16 %v276
        %v3498 = vunpack.c.h.b16 %v276
        %v3499 = vunpack.c.l.b16 %v277
        %v3500 = vunpack.c.h.b16 %v277
        %v3501 = vunpack.c.l.b16 %v278
        %v3502 = vunpack.c.h.b16 %v278
        %v3503 = vunpack.c.l.b16 %v279
        %v3504 = vunpack.c.h.b16 %v279
        %v3505 = vunpack.c.l.b16 %v280
        %v3506 = vunpack.c.h.b16 %v280
        %v3507 = vunpack.c.l.b16 %v281
        %v3508 = vunpack.c.h.b16 %v281
        %v3509 = vunpack.c.l.b16 %v282
        %v3510 = vunpack.c.h.b16 %v282
        %v3511 = vunpack.c.l.b16 %v283
        %v3512 = vunpack.c.h.b16 %v283
        %v3513 = vunpack.c.l.b16 %v284
        %v3514 = vunpack.c.h.b16 %v284
        %v3515 = vunpack.c.l.b16 %v285
        %v3516 = vunpack.c.h.b16 %v285
        %v3517 = vunpack.c.l.b16 %v286
        %v3518 = vunpack.c.h.b16 %v286
        %v3519 = vunpack.c.l.b16 %v287
        %v3520 = vunpack.c.h.b16 %v287
        %v3521 = vunpack.c.l.b16 %v288
        %v3522 = vunpack.c.h.b16 %v288
        %v3523 = vunpack.c.l.b16 %v289
        %v3524 = vunpack.c.h.b16 %v289
        %v3525 = vunpack.c.l.b16 %v290
        %v3526 = vunpack.c.h.b16 %v290
        %v3527 = vunpack.c.l.b16 %v291
        %v3528 = vunpack.c.h.b16 %v291
        %v3529 = vunpack.c.l.b16 %v292
        %v3530 = vunpack.c.h.b16 %v292
        %v3531 = vunpack.c.l.b16 %v293
        %v3532 = vunpack.c.h.b16 %v293
        %v3533 = vunpack.c.l.b16 %v294
        %v3534 = vunpack.c.h.b16 %v294
        %v3535 = vunpack.c.l.b16 %v295
        %v3536 = vunpack.c.h.b16 %v295
        %v3537 = vunpack.c.l.b16 %v296
        %v3538 = vunpack.c.h.b16 %v296
        %v3539 = vunpack.c.l.b16 %v297
        %v3540 = vunpack.c.h.b16 %v297
        %v3541 = vunpack.c.l.b16 %v298
        %v3542 = vunpack.c.h.b16 %v298
        %v3543 = vunpack.c.l.b16 %v299
        %v3544 = vunpack.c.h.b16 %v299
        %v3545 = vunpack.c.l.b16 %v300
        %v3546 = vunpack.c.h.b16 %v300
        %v3547 = vunpack.c.l.b16 %v301
        %v3548 = vunpack.c.h.b16 %v301
        %v3549 = vunpack.c.l.b16 %v302
        %v3550 = vunpack.c.h.b16 %v302
        %v3551 = vunpack.c.l.b16 %v303
        %v3552 = vunpack.c.h.b16 %v303
        %v3553 = vunpack.c.l.b16 %v304
        %v3554 = vunpack.c.h.b16 %v304
        %v3555 = vunpack.c.l.b16 %v305
        %v3556 = vunpack.c.h.b16 %v305
        %v3557 = vunpack.c.l.b16 %v306
        %v3558 = vunpack.c.h.b16 %v306
        %v3559 = vunpack.c.l.b16 %v307
        %v3560 = vunpack.c.h.b16 %v307
        %v3561 = vunpack.c.l.b16 %v308
        %v3562 = vunpack.c.h.b16 %v308
        %v3563 = vunpack.c.l.b16 %v309
        %v3564 = vunpack.c.h.b16 %v309
        %v3565 = vunpack.c.l.b16 %v310
        %v3566 = vunpack.c.h.b16 %v310
        %v3567 = vunpack.c.l.b16 %v311
        %v3568 = vunpack.c.h.b16 %v311
        %v3569 = vunpack.c.l.b16 %v312
        %v3570 = vunpack.c.h.b16 %v312
        %v3571 = vunpack.c.l.b16 %v313
        %v3572 = vunpack.c.h.b16 %v313
        %v3573 = vunpack.c.l.b16 %v314
        %v3574 = vunpack.c.h.b16 %v314
        %v3575 = vunpack.c.l.b16 %v315
        %v3576 = vunpack.c.h.b16 %v315
        %v3577 = vunpack.c.l.b16 %v316
        %v3578 = vunpack.c.h.b16 %v316
        %v3579 = vunpack.c.l.b16 %v317
        %v3580 = vunpack.c.h.b16 %v317
        %v3581 = vunpack.c.l.b16 %v318
        %v3582 = vunpack.c.h.b16 %v318
        %v3583 = vunpack.c.l.b16 %v319
        %v3584 = vunpack.c.h.b16 %v319
        %v3585 = vunpack.c.l.b16 %v320
        %v3586 = vunpack.c.h.b16 %v320
        %v3587 = vunpack.c.l.b16 %v321
        %v3588 = vunpack.c.h.b16 %v321
        %v3589 = vunpack.c.l.b16 %v322
        %v3590 = vunpack.c.h.b16 %v322
        %v3591 = vunpack.c.l.b16 %v323
        %v3592 = vunpack.c.h.b16 %v323
        %v3593 = vunpack.c.l.b16 %v324
        %v3594 = vunpack.c.h.b16 %v324
        %v3595 = vunpack.c.l.b16 %v325
        %v3596 = vunpack.c.h.b16 %v325
        %v3597 = vunpack.c.l.b16 %v326
        %v3598 = vunpack.c.h.b16 %v326
        %v3599 = vunpack.c.l.b16 %v327
        %v3600 = vunpack.c.h.b16 %v327
        %v3601 = vunpack.c.l.b16 %v328
        %v3602 = vunpack.c.h.b16 %v328
        %v3603 = vunpack.c.l.b16 %v329
        %v3604 = vunpack.c.h.b16 %v329
        %v3605 = vunpack.c.l.b16 %v330
        %v3606 = vunpack.c.h.b16 %v330
        %v3607 = vunpack.c.l.b16 %v331
        %v3608 = vunpack.c.h.b16 %v331
        %v3609 = vunpack.c.l.b16 %v332
        %v3610 = vunpack.c.h.b16 %v332
        %v3611 = vunpack.c.l.b16 %v333
        %v3612 = vunpack.c.h.b16 %v333
        %v3613 = vunpack.c.l.b16 %v334
        %v3614 = vunpack.c.h.b16 %v334
        %v3615 = vunpack.c.l.b16 %v335
        %v3616 = vunpack.c.h.b16 %v335
        %v3617 = vunpack.c.l.b16 %v336
        %v3618 = vunpack.c.h.b16 %v336
        %v3619 = vunpack.c.l.b16 %v337
        %v3620 = vunpack.c.h.b16 %v337
        %v3621 = vunpack.c.l.b16 %v338
        %v3622 = vunpack.c.h.b16 %v338
        %v3623 = vunpack.c.l.b16 %v339
        %v3624 = vunpack.c.h.b16 %v339
        %v3625 = vunpack.c.l.b16 %v340
        %v3626 = vunpack.c.h.b16 %v340
        %v3627 = vunpack.c.l.b16 %v341
        %v3628 = vunpack.c.h.b16 %v341
        %v3629 = vunpack.c.l.b16 %v342
        %v3630 = vunpack.c.h.b16 %v342
        %v3631 = vunpack.c.l.b16 %v343
        %v3632 = vunpack.c.h.b16 %v343
        %v3633 = vunpack.c.l.b16 %v344
        %v3634 = vunpack.c.h.b16 %v344
        %v3635 = vunpack.c.l.b16 %v345
        %v3636 = vunpack.c.h.b16 %v345
        %v3637 = vunpack.c.l.b16 %v346
        %v3638 = vunpack.c.h.b16 %v346
        %v3639 = vunpack.c.l.b16 %v347
        %v3640 = vunpack.c.h.b16 %v347
        %v3641 = vunpack.c.l.b16 %v348
        %v3642 = vunpack.c.h.b16 %v348
        %v3643 = vunpack.c.l.b16 %v349
        %v3644 = vunpack.c.h.b16 %v349
        %v3645 = vunpack.c.l.b16 %v350
        %v3646 = vunpack.c.h.b16 %v350
        %v3647 = vunpack.c.l.b16 %v351
        %v3648 = vunpack.c.h.b16 %v351
        %v3649 = vunpack.c.l.b16 %v352
        %v3650 = vunpack.c.h.b16 %v352
        %v3651 = vunpack.c.l.b16 %v353
        %v3652 = vunpack.c.h.b16 %v353
        %v3653 = vunpack.c.l.b16 %v354
        %v3654 = vunpack.c.h.b16 %v354
        %v3655 = vunpack.c.l.b16 %v355
        %v3656 = vunpack.c.h.b16 %v355
        %v3657 = vunpack.c.l.b16 %v356
        %v3658 = vunpack.c.h.b16 %v356
        %v3659 = vunpack.c.l.b16 %v357
        %v3660 = vunpack.c.h.b16 %v357
        %v3661 = vunpack.c.l.b16 %v358
        %v3662 = vunpack.c.h.b16 %v358
        %v3663 = vunpack.c.l.b16 %v359
        %v3664 = vunpack.c.h.b16 %v359
        %v3665 = vunpack.c.l.b16 %v360
        %v3666 = vunpack.c.h.b16 %v360
        %v3667 = vunpack.c.l.b16 %v361
        %v3668 = vunpack.c.h.b16 %v361
        %v3669 = vunpack.c.l.b16 %v362
        %v3670 = vunpack.c.h.b16 %v362
        %v3671 = vunpack.c.l.b16 %v363
        %v3672 = vunpack.c.h.b16 %v363
        %v3673 = vunpack.c.l.b16 %v364
        %v3674 = vunpack.c.h.b16 %v364
        %v3675 = vunpack.c.l.b16 %v365
        %v3676 = vunpack.c.h.b16 %v365
        %v3677 = vunpack.c.l.b16 %v366
        %v3678 = vunpack.c.h.b16 %v366
        %v3679 = vunpack.c.l.b16 %v367
        %v3680 = vunpack.c.h.b16 %v367
        %v3681 = vunpack.c.l.b16 %v368
        %v3682 = vunpack.c.h.b16 %v368
        %v3683 = vunpack.c.l.b16 %v369
        %v3684 = vunpack.c.h.b16 %v369
        %v3685 = vunpack.c.l.b16 %v370
        %v3686 = vunpack.c.h.b16 %v370
        %v3687 = vunpack.c.l.b16 %v371
        %v3688 = vunpack.c.h.b16 %v371
        %v3689 = vunpack.c.l.b16 %v372
        %v3690 = vunpack.c.h.b16 %v372
        %v3691 = vunpack.c.l.b16 %v373
        %v3692 = vunpack.c.h.b16 %v373
        %v3693 = vunpack.c.l.b16 %v374
        %v3694 = vunpack.c.h.b16 %v374
        %v3695 = vunpack.c.l.b16 %v375
        %v3696 = vunpack.c.h.b16 %v375
        %v3697 = vunpack.c.l.b16 %v376
        %v3698 = vunpack.c.h.b16 %v376
        %v3699 = vunpack.c.l.b16 %v377
        %v3700 = vunpack.c.h.b16 %v377
        %v3701 = vunpack.c.l.b16 %v378
        %v3702 = vunpack.c.h.b16 %v378
        %v3703 = vunpack.c.l.b16 %v379
        %v3704 = vunpack.c.h.b16 %v379
        %v3705 = vunpack.c.l.b16 %v380
        %v3706 = vunpack.c.h.b16 %v380
        %v3707 = vunpack.c.l.b16 %v381
        %v3708 = vunpack.c.h.b16 %v381
        %v3709 = vunpack.c.l.b16 %v382
        %v3710 = vunpack.c.h.b16 %v382
        %v3711 = vunpack.c.l.b16 %v383
        %v3712 = vunpack.c.h.b16 %v383
        %v3713 = vunpack.c.l.b16 %v384
        %v3714 = vunpack.c.h.b16 %v384
        %v3715 = vunpack.c.l.b16 %v385
        %v3716 = vunpack.c.h.b16 %v385
        %v3717 = vunpack.c.l.b16 %v386
        %v3718 = vunpack.c.h.b16 %v386
        %v3719 = vunpack.c.l.b16 %v387
        %v3720 = vunpack.c.h.b16 %v387
        %v3721 = vunpack.c.l.b16 %v388
        %v3722 = vunpack.c.h.b16 %v388
        %v3723 = vunpack.c.l.b16 %v389
        %v3724 = vunpack.c.h.b16 %v389
        %v3725 = vunpack.c.l.b16 %v390
        %v3726 = vunpack.c.h.b16 %v390
        %v3727 = vunpack.c.l.b16 %v391
        %v3728 = vunpack.c.h.b16 %v391
        %v3729 = vunpack.c.l.b16 %v392
        %v3730 = vunpack.c.h.b16 %v392
        %v3731 = vunpack.c.l.b16 %v393
        %v3732 = vunpack.c.h.b16 %v393
        %v3733 = vunpack.c.l.b16 %v394
        %v3734 = vunpack.c.h.b16 %v394
        %v3735 = vunpack.c.l.b16 %v395
        %v3736 = vunpack.c.h.b16 %v395
        %v3737 = vunpack.c.l.b16 %v396
        %v3738 = vunpack.c.h.b16 %v396
        %v3739 = vunpack.c.l.b16 %v397
        %v3740 = vunpack.c.h.b16 %v397
        %v3741 = vunpack.c.l.b16 %v398
        %v3742 = vunpack.c.h.b16 %v398
        %v3743 = vunpack.c.l.b16 %v399
        %v3744 = vunpack.c.h.b16 %v399
        %v3745 = vunpack.c.l.b16 %v400
        %v3746 = vunpack.c.h.b16 %v400
        %v3747 = vunpack.c.l.b16 %v401
        %v3748 = vunpack.c.h.b16 %v401
        %v3749 = vunpack.c.l.b16 %v402
        %v3750 = vunpack.c.h.b16 %v402
        %v3751 = vunpack.c.l.b16 %v403
        %v3752 = vunpack.c.h.b16 %v403
        %v3753 = vunpack.c.l.b16 %v404
        %v3754 = vunpack.c.h.b16 %v404
        %v3755 = vunpack.c.l.b16 %v405
        %v3756 = vunpack.c.h.b16 %v405
        %v3757 = vunpack.c.l.b16 %v406
        %v3758 = vunpack.c.h.b16 %v406
        %v3759 = vunpack.c.l.b16 %v407
        %v3760 = vunpack.c.h.b16 %v407
        %v3761 = vunpack.c.l.b16 %v408
        %v3762 = vunpack.c.h.b16 %v408
        %v3763 = vunpack.c.l.b16 %v409
        %v3764 = vunpack.c.h.b16 %v409
        %v3765 = vunpack.c.l.b16 %v410
        %v3766 = vunpack.c.h.b16 %v410
        %v3767 = vunpack.c.l.b16 %v411
        %v3768 = vunpack.c.h.b16 %v411
        %v3769 = vunpack.c.l.b16 %v412
        %v3770 = vunpack.c.h.b16 %v412
        %v3771 = vunpack.c.l.b16 %v413
        %v3772 = vunpack.c.h.b16 %v413
        %v3773 = vunpack.c.l.b16 %v414
        %v3774 = vunpack.c.h.b16 %v414
        %v3775 = vunpack.c.l.b16 %v415
        %v3776 = vunpack.c.h.b16 %v415
        %v3777 = vunpack.c.l.b16 %v416
        %v3778 = vunpack.c.h.b16 %v416
        %v3779 = vunpack.c.l.b16 %v417
        %v3780 = vunpack.c.h.b16 %v417
        %v3781 = vunpack.c.l.b16 %v418
        %v3782 = vunpack.c.h.b16 %v418
        %v3783 = vunpack.c.l.b16 %v419
        %v3784 = vunpack.c.h.b16 %v419
        %v3785 = vunpack.c.l.b16 %v420
        %v3786 = vunpack.c.h.b16 %v420
        %v3787 = vunpack.c.l.b16 %v421
        %v3788 = vunpack.c.h.b16 %v421
        %v3789 = vunpack.c.l.b16 %v422
        %v3790 = vunpack.c.h.b16 %v422
        %v3791 = vunpack.c.l.b16 %v423
        %v3792 = vunpack.c.h.b16 %v423
        %v3793 = vunpack.c.l.b16 %v424
        %v3794 = vunpack.c.h.b16 %v424
        %v3795 = vunpack.c.l.b16 %v425
        %v3796 = vunpack.c.h.b16 %v425
        %v3797 = vunpack.c.l.b16 %v426
        %v3798 = vunpack.c.h.b16 %v426
        %v3799 = vunpack.c.l.b16 %v427
        %v3800 = vunpack.c.h.b16 %v427
        %v3801 = vunpack.c.l.b16 %v428
        %v3802 = vunpack.c.h.b16 %v428
        %v3803 = vunpack.c.l.b16 %v429
        %v3804 = vunpack.c.h.b16 %v429
        %v3805 = vunpack.c.l.b16 %v430
        %v3806 = vunpack.c.h.b16 %v430
        %v3807 = vunpack.c.l.b16 %v431
        %v3808 = vunpack.c.h.b16 %v431
        %v3809 = vunpack.c.l.b16 %v432
        %v3810 = vunpack.c.h.b16 %v432
        %v3811 = vunpack.c.l.b16 %v433
        %v3812 = vunpack.c.h.b16 %v433
        %v3813 = vunpack.c.l.b16 %v434
        %v3814 = vunpack.c.h.b16 %v434
        %v3815 = vunpack.c.l.b16 %v435
        %v3816 = vunpack.c.h.b16 %v435
        %v3817 = vunpack.c.l.b16 %v436
        %v3818 = vunpack.c.h.b16 %v436
        %v3819 = vunpack.c.l.b16 %v437
        %v3820 = vunpack.c.h.b16 %v437
        %v3821 = vunpack.c.l.b16 %v438
        %v3822 = vunpack.c.h.b16 %v438
        %v3823 = vunpack.c.l.b16 %v439
        %v3824 = vunpack.c.h.b16 %v439
        %v3825 = vunpack.c.l.b16 %v440
        %v3826 = vunpack.c.h.b16 %v440
        %v3827 = vunpack.c.l.b16 %v441
        %v3828 = vunpack.c.h.b16 %v441
        %v3829 = vunpack.c.l.b16 %v442
        %v3830 = vunpack.c.h.b16 %v442
        %v3831 = vunpack.c.l.b16 %v443
        %v3832 = vunpack.c.h.b16 %v443
        %v3833 = vunpack.c.l.b16 %v444
        %v3834 = vunpack.c.h.b16 %v444
        %v3835 = vunpack.c.l.b16 %v445
        %v3836 = vunpack.c.h.b16 %v445
        %v3837 = vunpack.c.l.b16 %v446
        %v3838 = vunpack.c.h.b16 %v446
        %v3839 = vunpack.c.l.b16 %v447
        %v3840 = vunpack.c.h.b16 %v447
        %v3841 = vunpack.c.l.b16 %v448
        %v3842 = vunpack.c.h.b16 %v448
        %v3843 = vunpack.c.l.b16 %v449
        %v3844 = vunpack.c.h.b16 %v449
        %v3845 = vunpack.c.l.b16 %v450
        %v3846 = vunpack.c.h.b16 %v450
        %v3847 = vunpack.c.l.b16 %v451
        %v3848 = vunpack.c.h.b16 %v451
        %v3849 = vunpack.c.l.b16 %v452
        %v3850 = vunpack.c.h.b16 %v452
        %v3851 = vunpack.c.l.b16 %v453
        %v3852 = vunpack.c.h.b16 %v453
        %v3853 = vunpack.c.l.b16 %v454
        %v3854 = vunpack.c.h.b16 %v454
        %v3855 = vunpack.c.l.b16 %v455
        %v3856 = vunpack.c.h.b16 %v455
        %v3857 = vunpack.c.l.b16 %v456
        %v3858 = vunpack.c.h.b16 %v456
        %v3859 = vunpack.c.l.b16 %v457
        %v3860 = vunpack.c.h.b16 %v457
        %v3861 = vunpack.c.l.b16 %v458
        %v3862 = vunpack.c.h.b16 %v458
        %v3863 = vunpack.c.l.b16 %v459
        %v3864 = vunpack.c.h.b16 %v459
        %v3865 = vunpack.c.l.b16 %v460
        %v3866 = vunpack.c.h.b16 %v460
        %v3867 = vunpack.c.l.b16 %v461
        %v3868 = vunpack.c.h.b16 %v461
        %v3869 = vunpack.c.l.b16 %v462
        %v3870 = vunpack.c.h.b16 %v462
        %v3871 = vunpack.c.l.b16 %v463
        %v3872 = vunpack.c.h.b16 %v463
        %v3873 = vunpack.c.l.b16 %v464
        %v3874 = vunpack.c.h.b16 %v464
        %v3875 = vunpack.c.l.b16 %v465
        %v3876 = vunpack.c.h.b16 %v465
        %v3877 = vunpack.c.l.b16 %v466
        %v3878 = vunpack.c.h.b16 %v466
        %v3879 = vunpack.c.l.b16 %v467
        %v3880 = vunpack.c.h.b16 %v467
        %v3881 = vunpack.c.l.b16 %v468
        %v3882 = vunpack.c.h.b16 %v468
        %v3883 = vunpack.c.l.b16 %v469
        %v3884 = vunpack.c.h.b16 %v469
        %v3885 = vunpack.c.l.b16 %v470
        %v3886 = vunpack.c.h.b16 %v470
        %v3887 = vunpack.c.l.b16 %v471
        %v3888 = vunpack.c.h.b16 %v471
        %v3889 = vunpack.c.l.b16 %v472
        %v3890 = vunpack.c.h.b16 %v472
        %v3891 = vunpack.c.l.b16 %v473
        %v3892 = vunpack.c.h.b16 %v473
        %v3893 = vunpack.c.l.b16 %v474
        %v3894 = vunpack.c.h.b16 %v474
        %v3895 = vunpack.c.l.b16 %v475
        %v3896 = vunpack.c.h.b16 %v475
        %v3897 = vunpack.c.l.b16 %v476
        %v3898 = vunpack.c.h.b16 %v476
        %v3899 = vunpack.c.l.b16 %v477
        %v3900 = vunpack.c.h.b16 %v477
        %v3901 = vunpack.c.l.b16 %v478
        %v3902 = vunpack.c.h.b16 %v478
        %v3903 = vunpack.c.l.b16 %v479
        %v3904 = vunpack.c.h.b16 %v479
        %v3905 = vunpack.c.l.b16 %v480
        %v3906 = vunpack.c.h.b16 %v480
        %v3907 = vunpack.c.l.b16 %v481
        %v3908 = vunpack.c.h.b16 %v481
        %v3909 = vunpack.c.l.b16 %v482
        %v3910 = vunpack.c.h.b16 %v482
        %v3911 = vunpack.c.l.b16 %v483
        %v3912 = vunpack.c.h.b16 %v483
        %v3913 = vunpack.c.l.b16 %v484
        %v3914 = vunpack.c.h.b16 %v484
        %v3915 = vunpack.c.l.b16 %v485
        %v3916 = vunpack.c.h.b16 %v485
        %v3917 = vunpack.c.l.b16 %v486
        %v3918 = vunpack.c.h.b16 %v486
        %v3919 = vunpack.c.l.b16 %v487
        %v3920 = vunpack.c.h.b16 %v487
        %v3921 = vunpack.c.l.b16 %v488
        %v3922 = vunpack.c.h.b16 %v488
        %v3923 = vunpack.c.l.b16 %v489
        %v3924 = vunpack.c.h.b16 %v489
        %v3925 = vunpack.c.l.b16 %v490
        %v3926 = vunpack.c.h.b16 %v490
        %v3927 = vunpack.c.l.b16 %v491
        %v3928 = vunpack.c.h.b16 %v491
        %v3929 = vunpack.c.l.b16 %v492
        %v3930 = vunpack.c.h.b16 %v492
        %v3931 = vunpack.c.l.b16 %v493
        %v3932 = vunpack.c.h.b16 %v493
        %v3933 = vunpack.c.l.b16 %v494
        %v3934 = vunpack.c.h.b16 %v494
        %v3935 = vunpack.c.l.b16 %v495
        %v3936 = vunpack.c.h.b16 %v495
        %v3937 = vunpack.c.l.b16 %v496
        %v3938 = vunpack.c.h.b16 %v496
        %v3939 = vunpack.c.l.b16 %v497
        %v3940 = vunpack.c.h.b16 %v497
        %v3941 = vunpack.c.l.b16 %v498
        %v3942 = vunpack.c.h.b16 %v498
        %v3943 = vunpack.c.l.b16 %v499
        %v3944 = vunpack.c.h.b16 %v499
        %v3945 = vunpack.c.l.b16 %v500
        %v3946 = vunpack.c.h.b16 %v500
        %v3947 = vunpack.c.l.b16 %v501
        %v3948 = vunpack.c.h.b16 %v501
        %v3949 = vunpack.c.l.b16 %v502
        %v3950 = vunpack.c.h.b16 %v502
        %v3951 = vunpack.c.l.b16 %v503
        %v3952 = vunpack.c.h.b16 %v503
        %v3953 = vunpack.c.l.b16 %v504
        %v3954 = vunpack.c.h.b16 %v504
        %v3955 = vunpack.c.l.b16 %v505
        %v3956 = vunpack.c.h.b16 %v505
        %v3957 = vunpack.c.l.b16 %v506
        %v3958 = vunpack.c.h.b16 %v506
        %v3959 = vunpack.c.l.b16 %v507
        %v3960 = vunpack.c.h.b16 %v507
        %v3961 = vunpack.c.l.b16 %v508
        %v3962 = vunpack.c.h.b16 %v508
        %v3963 = vunpack.c.l.b16 %v509
        %v3964 = vunpack.c.h.b16 %v509
        %v3965 = vunpack.c.l.b16 %v510
        %v3966 = vunpack.c.h.b16 %v510
        %v3967 = vunpack.c.l.b16 %v511
        %v3968 = vunpack.c.h.b16 %v511
        %v3969 = vunpack.c.l.b16 %v512
        %v3970 = vunpack.c.h.b16 %v512
        %v3971 = vunpack.c.l.b16 %v513
        %v3972 = vunpack.c.h.b16 %v513
        %v3973 = vunpack.c.l.b16 %v514
        %v3974 = vunpack.c.h.b16 %v514
        %v3975 = vunpack.c.l.b16 %v515
        %v3976 = vunpack.c.h.b16 %v515
        %v3977 = vunpack.c.l.b16 %v516
        %v3978 = vunpack.c.h.b16 %v516
        %v3979 = vunpack.c.l.b16 %v517
        %v3980 = vunpack.c.h.b16 %v517
        %v3981 = vunpack.c.l.b16 %v518
        %v3982 = vunpack.c.h.b16 %v518
        %v3983 = vunpack.c.l.b16 %v519
        %v3984 = vunpack.c.h.b16 %v519
        %v3985 = vunpack.c.l.b16 %v520
        %v3986 = vunpack.c.h.b16 %v520
        %v3987 = vunpack.c.l.b16 %v521
        %v3988 = vunpack.c.h.b16 %v521
        %v3989 = vunpack.c.l.b16 %v522
        %v3990 = vunpack.c.h.b16 %v522
        %v3991 = vunpack.c.l.b16 %v523
        %v3992 = vunpack.c.h.b16 %v523
        %v3993 = vunpack.c.l.b16 %v524
        %v3994 = vunpack.c.h.b16 %v524
        %v3995 = vunpack.c.l.b16 %v525
        %v3996 = vunpack.c.h.b16 %v525
        %v3997 = vunpack.c.l.b16 %v526
        %v3998 = vunpack.c.h.b16 %v526
        %v3999 = vunpack.c.l.b16 %v527
        %v4000 = vunpack.c.h.b16 %v527
        %v4001 = vunpack.c.l.b16 %v528
        %v4002 = vunpack.c.h.b16 %v528
        %v4003 = vunpack.c.l.b16 %v529
        %v4004 = vunpack.c.h.b16 %v529
        %v4005 = vunpack.c.l.b16 %v530
        %v4006 = vunpack.c.h.b16 %v530
        %v4007 = vunpack.c.l.b16 %v531
        %v4008 = vunpack.c.h.b16 %v531
        %v4009 = vunpack.c.l.b16 %v532
        %v4010 = vunpack.c.h.b16 %v532
        %v4011 = vunpack.c.l.b16 %v533
        %v4012 = vunpack.c.h.b16 %v533
        %v4013 = vunpack.c.l.b16 %v534
        %v4014 = vunpack.c.h.b16 %v534
        %v4015 = vunpack.c.l.b16 %v535
        %v4016 = vunpack.c.h.b16 %v535
        %v4017 = vunpack.c.l.b16 %v536
        %v4018 = vunpack.c.h.b16 %v536
        %v4019 = vunpack.c.l.b16 %v537
        %v4020 = vunpack.c.h.b16 %v537
        %v4021 = vunpack.c.l.b16 %v538
        %v4022 = vunpack.c.h.b16 %v538
        %v4023 = vunpack.c.l.b16 %v539
        %v4024 = vunpack.c.h.b16 %v539
        %v4025 = vunpack.c.l.b16 %v540
        %v4026 = vunpack.c.h.b16 %v540
        %v4027 = vunpack.c.l.b16 %v541
        %v4028 = vunpack.c.h.b16 %v541
        %v4029 = vunpack.c.l.b16 %v542
        %v4030 = vunpack.c.h.b16 %v542
        %v4031 = vunpack.c.l.b16 %v543
        %v4032 = vunpack.c.h.b16 %v543
        %v4033 = vunpack.c.l.b16 %v544
        %v4034 = vunpack.c.h.b16 %v544
        %v4035 = vunpack.c.l.b16 %v545
        %v4036 = vunpack.c.h.b16 %v545
        %v4037 = vunpack.c.l.b16 %v546
        %v4038 = vunpack.c.h.b16 %v546
        %v4039 = vunpack.c.l.b16 %v547
        %v4040 = vunpack.c.h.b16 %v547
        %v4041 = vunpack.c.l.b16 %v548
        %v4042 = vunpack.c.h.b16 %v548
        %v4043 = vunpack.c.l.b16 %v549
        %v4044 = vunpack.c.h.b16 %v549
        %v4045 = vunpack.c.l.b16 %v550
        %v4046 = vunpack.c.h.b16 %v550
        %v4047 = vunpack.c.l.b16 %v551
        %v4048 = vunpack.c.h.b16 %v551
        %v4049 = vunpack.c.l.b16 %v552
        %v4050 = vunpack.c.h.b16 %v552
        %v4051 = vunpack.c.l.b16 %v553
        %v4052 = vunpack.c.h.b16 %v553
        %v4053 = vunpack.c.l.b16 %v554
        %v4054 = vunpack.c.h.b16 %v554
        %v4055 = vunpack.c.l.b16 %v555
        %v4056 = vunpack.c.h.b16 %v555
        %v4057 = vunpack.c.l.b16 %v556
        %v4058 = vunpack.c.h.b16 %v556
        %v4059 = vunpack.c.l.b16 %v557
        %v4060 = vunpack.c.h.b16 %v557
        %v4061 = vunpack.c.l.b16 %v558
        %v4062 = vunpack.c.h.b16 %v558
        %v4063 = vunpack.c.l.b16 %v559
        %v4064 = vunpack.c.h.b16 %v559
        %v4065 = vunpack.c.l.b16 %v560
        %v4066 = vunpack.c.h.b16 %v560
        %v4067 = vunpack.c.l.b16 %v561
        %v4068 = vunpack.c.h.b16 %v561
        %v4069 = vunpack.c.l.b16 %v562
        %v4070 = vunpack.c.h.b16 %v562
        %v4071 = vunpack.c.l.b16 %v563
        %v4072 = vunpack.c.h.b16 %v563
        %v4073 = vunpack.c.l.b16 %v564
        %v4074 = vunpack.c.h.b16 %v564
        %v4075 = vunpack.c.l.b16 %v565
        %v4076 = vunpack.c.h.b16 %v565
        %v4077 = vunpack.c.l.b16 %v566
        %v4078 = vunpack.c.h.b16 %v566
        %v4079 = vunpack.c.l.b16 %v567
        %v4080 = vunpack.c.h.b16 %v567
        %v4081 = vunpack.c.l.b16 %v568
        %v4082 = vunpack.c.h.b16 %v568
        %v4083 = vunpack.c.l.b16 %v569
        %v4084 = vunpack.c.h.b16 %v569
        %v4085 = vunpack.c.l.b16 %v570
        %v4086 = vunpack.c.h.b16 %v570
        %v4087 = vunpack.c.l.b16 %v571
        %v4088 = vunpack.c.h.b16 %v571
        %v4089 = vunpack.c.l.b16 %v572
        %v4090 = vunpack.c.h.b16 %v572
        %v4091 = vunpack.c.l.b16 %v573
        %v4092 = vunpack.c.h.b16 %v573
        %v4093 = vunpack.c.l.b16 %v574
        %v4094 = vunpack.c.h.b16 %v574
        %v4095 = vunpack.c.l.b16 %v575
        %v4096 = vunpack.c.h.b16 %v575
        %v4097 = vunpack.c.l.b16 %v576
        %v4098 = vunpack.c.h.b16 %v576
        %v4099 = vunpack.c.l.b16 %v577
        %v4100 = vunpack.c.h.b16 %v577
        %v4101 = vunpack.c.l.b16 %v578
        %v4102 = vunpack.c.h.b16 %v578
        %v4103 = vunpack.c.l.b16 %v579
        %v4104 = vunpack.c.h.b16 %v579
        %v4105 = vunpack.c.l.b16 %v580
        %v4106 = vunpack.c.h.b16 %v580
        %v4107 = vunpack.c.l.b16 %v581
        %v4108 = vunpack.c.h.b16 %v581
        %v4109 = vunpack.c.l.b16 %v582
        %v4110 = vunpack.c.h.b16 %v582
        %v4111 = vunpack.c.l.b16 %v583
        %v4112 = vunpack.c.h.b16 %v583
        %v4113 = vunpack.c.l.b16 %v584
        %v4114 = vunpack.c.h.b16 %v584
        %v4115 = vunpack.c.l.b16 %v585
        %v4116 = vunpack.c.h.b16 %v585
        %v4117 = vunpack.c.l.b16 %v586
        %v4118 = vunpack.c.h.b16 %v586
        %v4119 = vunpack.c.l.b16 %v587
        %v4120 = vunpack.c.h.b16 %v587
        %v4121 = vunpack.c.l.b16 %v588
        %v4122 = vunpack.c.h.b16 %v588
        %v4123 = vunpack.c.l.b16 %v589
        %v4124 = vunpack.c.h.b16 %v589
        %v4125 = vunpack.c.l.b16 %v590
        %v4126 = vunpack.c.h.b16 %v590
        %v4127 = vunpack.c.l.b16 %v591
        %v4128 = vunpack.c.h.b16 %v591
        %v4129 = vunpack.c.l.b16 %v592
        %v4130 = vunpack.c.h.b16 %v592
        %v4131 = vunpack.c.l.b16 %v593
        %v4132 = vunpack.c.h.b16 %v593
        %v4133 = vunpack.c.l.b16 %v594
        %v4134 = vunpack.c.h.b16 %v594
        %v4135 = vunpack.c.l.b16 %v595
        %v4136 = vunpack.c.h.b16 %v595
        %v4137 = vunpack.c.l.b16 %v596
        %v4138 = vunpack.c.h.b16 %v596
        %v4139 = vunpack.c.l.b16 %v597
        %v4140 = vunpack.c.h.b16 %v597
        %v4141 = vunpack.c.l.b16 %v598
        %v4142 = vunpack.c.h.b16 %v598
        %v4143 = vunpack.c.l.b16 %v599
        %v4144 = vunpack.c.h.b16 %v599
        %v4145 = vunpack.c.l.b16 %v600
        %v4146 = vunpack.c.h.b16 %v600
        %v4147 = vunpack.c.l.b16 %v601
        %v4148 = vunpack.c.h.b16 %v601
        %v4149 = vunpack.c.l.b16 %v602
        %v4150 = vunpack.c.h.b16 %v602
        %v4151 = vunpack.c.l.b16 %v603
        %v4152 = vunpack.c.h.b16 %v603
        %v4153 = vunpack.c.l.b16 %v604
        %v4154 = vunpack.c.h.b16 %v604
        %v4155 = vunpack.c.l.b16 %v605
        %v4156 = vunpack.c.h.b16 %v605
        %v4157 = vunpack.c.l.b16 %v606
        %v4158 = vunpack.c.h.b16 %v606
        %v4159 = vunpack.c.l.b16 %v607
        %v4160 = vunpack.c.h.b16 %v607
        %v4161 = vunpack.c.l.b16 %v608
        %v4162 = vunpack.c.h.b16 %v608
        %v4163 = vunpack.c.l.b16 %v609
        %v4164 = vunpack.c.h.b16 %v609
        %v4165 = vunpack.c.l.b16 %v610
        %v4166 = vunpack.c.h.b16 %v610
        %v4167 = vunpack.c.l.b16 %v611
        %v4168 = vunpack.c.h.b16 %v611
        %v4169 = vunpack.c.l.b16 %v612
        %v4170 = vunpack.c.h.b16 %v612
        %v4171 = vunpack.c.l.b16 %v613
        %v4172 = vunpack.c.h.b16 %v613
        %v4173 = vunpack.c.l.b16 %v614
        %v4174 = vunpack.c.h.b16 %v614
        %v4175 = vunpack.c.l.b16 %v615
        %v4176 = vunpack.c.h.b16 %v615
        %v4177 = vunpack.c.l.b16 %v616
        %v4178 = vunpack.c.h.b16 %v616
        %v4179 = vunpack.c.l.b16 %v617
        %v4180 = vunpack.c.h.b16 %v617
        %v4181 = vunpack.c.l.b16 %v618
        %v4182 = vunpack.c.h.b16 %v618
        %v4183 = vunpack.c.l.b16 %v619
        %v4184 = vunpack.c.h.b16 %v619
        %v4185 = vunpack.c.l.b16 %v620
        %v4186 = vunpack.c.h.b16 %v620
        %v4187 = vunpack.c.l.b16 %v621
        %v4188 = vunpack.c.h.b16 %v621
        %v4189 = vunpack.c.l.b16 %v622
        %v4190 = vunpack.c.h.b16 %v622
        %v4191 = vunpack.c.l.b16 %v623
        %v4192 = vunpack.c.h.b16 %v623
        %v4193 = vunpack.c.l.b16 %v624
        %v4194 = vunpack.c.h.b16 %v624
        %v4195 = vunpack.c.l.b16 %v625
        %v4196 = vunpack.c.h.b16 %v625
        %v4197 = vunpack.c.l.b16 %v626
        %v4198 = vunpack.c.h.b16 %v626
        %v4199 = vunpack.c.l.b16 %v627
        %v4200 = vunpack.c.h.b16 %v627
        %v4201 = vunpack.c.l.b16 %v628
        %v4202 = vunpack.c.h.b16 %v628
        %v4203 = vunpack.c.l.b16 %v629
        %v4204 = vunpack.c.h.b16 %v629
        %v4205 = vunpack.c.l.b16 %v630
        %v4206 = vunpack.c.h.b16 %v630
        %v4207 = vunpack.c.l.b16 %v631
        %v4208 = vunpack.c.h.b16 %v631
        %v4209 = vunpack.c.l.b16 %v632
        %v4210 = vunpack.c.h.b16 %v632
        %v4211 = vunpack.c.l.b16 %v633
        %v4212 = vunpack.c.h.b16 %v633
        %v4213 = vunpack.c.l.b16 %v634
        %v4214 = vunpack.c.h.b16 %v634
        %v4215 = vunpack.c.l.b16 %v635
        %v4216 = vunpack.c.h.b16 %v635
        %v4217 = vunpack.c.l.b16 %v636
        %v4218 = vunpack.c.h.b16 %v636
        %v4219 = vunpack.c.l.b16 %v637
        %v4220 = vunpack.c.h.b16 %v637
        %v4221 = vunpack.c.l.b16 %v638
        %v4222 = vunpack.c.h.b16 %v638
        %v4223 = vunpack.c.l.b16 %v639
        %v4224 = vunpack.c.h.b16 %v639
        %v4225 = vunpack.c.l.b16 %v640
        %v4226 = vunpack.c.h.b16 %v640
        %v4227 = vunpack.c.l.b16 %v641
        %v4228 = vunpack.c.h.b16 %v641
        %v4229 = vunpack.c.l.b16 %v642
        %v4230 = vunpack.c.h.b16 %v642
        %v4231 = vunpack.c.l.b16 %v643
        %v4232 = vunpack.c.h.b16 %v643
        %v4233 = vunpack.c.l.b16 %v644
        %v4234 = vunpack.c.h.b16 %v644
        %v4235 = vunpack.c.l.b16 %v645
        %v4236 = vunpack.c.h.b16 %v645
        %v4237 = vunpack.c.l.b16 %v646
        %v4238 = vunpack.c.h.b16 %v646
        %v4239 = vunpack.c.l.b16 %v647
        %v4240 = vunpack.c.h.b16 %v647
        %v4241 = vunpack.c.l.b16 %v648
        %v4242 = vunpack.c.h.b16 %v648
        %v4243 = vunpack.c.l.b16 %v649
        %v4244 = vunpack.c.h.b16 %v649
        %v4245 = vunpack.c.l.b16 %v650
        %v4246 = vunpack.c.h.b16 %v650
        %v4247 = vunpack.c.l.b16 %v651
        %v4248 = vunpack.c.h.b16 %v651
        %v4249 = vunpack.c.l.b16 %v652
        %v4250 = vunpack.c.h.b16 %v652
        %v4251 = vunpack.c.l.b16 %v653
        %v4252 = vunpack.c.h.b16 %v653
        %v4253 = vunpack.c.l.b16 %v654
        %v4254 = vunpack.c.h.b16 %v654
        %v4255 = vunpack.c.l.b16 %v655
        %v4256 = vunpack.c.h.b16 %v655
        %v4257 = vunpack.c.l.b16 %v656
        %v4258 = vunpack.c.h.b16 %v656
        %v4259 = vunpack.c.l.b16 %v657
        %v4260 = vunpack.c.h.b16 %v657
        %v4261 = vunpack.c.l.b16 %v658
        %v4262 = vunpack.c.h.b16 %v658
        %v4263 = vunpack.c.l.b16 %v659
        %v4264 = vunpack.c.h.b16 %v659
        %v4265 = vunpack.c.l.b16 %v660
        %v4266 = vunpack.c.h.b16 %v660
        %v4267 = vunpack.c.l.b16 %v661
        %v4268 = vunpack.c.h.b16 %v661
        %v4269 = vunpack.c.l.b16 %v662
        %v4270 = vunpack.c.h.b16 %v662
        %v4271 = vunpack.c.l.b16 %v663
        %v4272 = vunpack.c.h.b16 %v663
        %v4273 = vunpack.c.l.b16 %v664
        %v4274 = vunpack.c.h.b16 %v664
        %v4275 = vunpack.c.l.b16 %v665
        %v4276 = vunpack.c.h.b16 %v665
        %v4277 = vunpack.c.l.b16 %v666
        %v4278 = vunpack.c.h.b16 %v666
        %v4279 = vunpack.c.l.b16 %v667
        %v4280 = vunpack.c.h.b16 %v667
        %v4281 = vunpack.c.l.b16 %v668
        %v4282 = vunpack.c.h.b16 %v668
        %v4283 = vunpack.c.l.b16 %v669
        %v4284 = vunpack.c.h.b16 %v669
        %v4285 = vunpack.c.l.b16 %v670
        %v4286 = vunpack.c.h.b16 %v670
        %v4287 = vunpack.c.l.b16 %v671
        %v4288 = vunpack.c.h.b16 %v671
        %v4289 = vunpack.c.l.b16 %v672
        %v4290 = vunpack.c.h.b16 %v672
        %v4291 = vunpack.c.l.b16 %v673
        %v4292 = vunpack.c.h.b16 %v673
        %v4293 = vunpack.c.l.b16 %v674
        %v4294 = vunpack.c.h.b16 %v674
        %v4295 = vunpack.c.l.b16 %v675
        %v4296 = vunpack.c.h.b16 %v675
        %v4297 = vunpack.c.l.b16 %v676
        %v4298 = vunpack.c.h.b16 %v676
        %v4299 = vunpack.c.l.b16 %v677
        %v4300 = vunpack.c.h.b16 %v677
        %v4301 = vunpack.c.l.b16 %v678
        %v4302 = vunpack.c.h.b16 %v678
        %v4303 = vunpack.c.l.b16 %v679
        %v4304 = vunpack.c.h.b16 %v679
        %v4305 = vunpack.c.l.b16 %v680
        %v4306 = vunpack.c.h.b16 %v680
        %v4307 = vunpack.c.l.b16 %v681
        %v4308 = vunpack.c.h.b16 %v681
        %v4309 = vunpack.c.l.b16 %v682
        %v4310 = vunpack.c.h.b16 %v682
        %v4311 = vunpack.c.l.b16 %v683
        %v4312 = vunpack.c.h.b16 %v683
        %v4313 = vunpack.c.l.b16 %v684
        %v4314 = vunpack.c.h.b16 %v684
        %v4315 = vunpack.c.l.b16 %v685
        %v4316 = vunpack.c.h.b16 %v685
        %v4317 = vunpack.c.l.b16 %v686
        %v4318 = vunpack.c.h.b16 %v686
        %v4319 = vunpack.c.l.b16 %v687
        %v4320 = vunpack.c.h.b16 %v687
        %v4321 = vunpack.c.l.b16 %v688
        %v4322 = vunpack.c.h.b16 %v688
        %v4323 = vunpack.c.l.b16 %v689
        %v4324 = vunpack.c.h.b16 %v689
        %v4325 = vunpack.c.l.b16 %v690
        %v4326 = vunpack.c.h.b16 %v690
        %v4327 = vunpack.c.l.b16 %v691
        %v4328 = vunpack.c.h.b16 %v691
        %v4329 = vunpack.c.l.b16 %v692
        %v4330 = vunpack.c.h.b16 %v692
        %v4331 = vunpack.c.l.b16 %v693
        %v4332 = vunpack.c.h.b16 %v693
        %v4333 = vunpack.c.l.b16 %v694
        %v4334 = vunpack.c.h.b16 %v694
        %v4335 = vunpack.c.l.b16 %v695
        %v4336 = vunpack.c.h.b16 %v695
        %v4337 = vunpack.c.l.b16 %v696
        %v4338 = vunpack.c.h.b16 %v696
        %v4339 = vunpack.c.l.b16 %v697
        %v4340 = vunpack.c.h.b16 %v697
        %v4341 = vunpack.c.l.b16 %v698
        %v4342 = vunpack.c.h.b16 %v698
        %v4343 = vunpack.c.l.b16 %v699
        %v4344 = vunpack.c.h.b16 %v699
        %v4345 = vunpack.c.l.b16 %v700
        %v4346 = vunpack.c.h.b16 %v700
        %v4347 = vunpack.c.l.b16 %v701
        %v4348 = vunpack.c.h.b16 %v701
        %v4349 = vunpack.c.l.b16 %v702
        %v4350 = vunpack.c.h.b16 %v702
        %v4351 = vunpack.c.l.b16 %v703
        %v4352 = vunpack.c.h.b16 %v703
        %v4353 = vunpack.c.l.b16 %v704
        %v4354 = vunpack.c.h.b16 %v704
        %v4355 = vunpack.c.l.b16 %v705
        %v4356 = vunpack.c.h.b16 %v705
        %v4357 = vunpack.c.l.b16 %v706
        %v4358 = vunpack.c.h.b16 %v706
        %v4359 = vunpack.c.l.b16 %v707
        %v4360 = vunpack.c.h.b16 %v707
        %v4361 = vunpack.c.l.b16 %v708
        %v4362 = vunpack.c.h.b16 %v708
        %v4363 = vunpack.c.l.b16 %v709
        %v4364 = vunpack.c.h.b16 %v709
        %v4365 = vunpack.c.l.b16 %v710
        %v4366 = vunpack.c.h.b16 %v710
        %v4367 = vunpack.c.l.b16 %v711
        %v4368 = vunpack.c.h.b16 %v711
        %v4369 = vunpack.c.l.b16 %v712
        %v4370 = vunpack.c.h.b16 %v712
        %v4371 = vunpack.c.l.b16 %v713
        %v4372 = vunpack.c.h.b16 %v713
        %v4373 = vunpack.c.l.b16 %v714
        %v4374 = vunpack.c.h.b16 %v714
        %v4375 = vunpack.c.l.b16 %v715
        %v4376 = vunpack.c.h.b16 %v715
        %v4377 = vunpack.c.l.b16 %v716
        %v4378 = vunpack.c.h.b16 %v716
        %v4379 = vunpack.c.l.b16 %v717
        %v4380 = vunpack.c.h.b16 %v717
        %v4381 = vunpack.c.l.b16 %v718
        %v4382 = vunpack.c.h.b16 %v718
        %v4383 = vunpack.c.l.b16 %v719
        %v4384 = vunpack.c.h.b16 %v719
        %v4385 = vunpack.c.l.b16 %v720
        %v4386 = vunpack.c.h.b16 %v720
        %v4387 = vunpack.c.l.b16 %v721
        %v4388 = vunpack.c.h.b16 %v721
        %v4389 = vunpack.c.l.b16 %v722
        %v4390 = vunpack.c.h.b16 %v722
        %v4391 = vunpack.c.l.b16 %v723
        %v4392 = vunpack.c.h.b16 %v723
        %v4393 = vunpack.c.l.b16 %v724
        %v4394 = vunpack.c.h.b16 %v724
        %v4395 = vunpack.c.l.b16 %v725
        %v4396 = vunpack.c.h.b16 %v725
        %v4397 = vunpack.c.l.b16 %v726
        %v4398 = vunpack.c.h.b16 %v726
        %v4399 = vunpack.c.l.b16 %v727
        %v4400 = vunpack.c.h.b16 %v727
        %v4401 = vunpack.c.l.b16 %v728
        %v4402 = vunpack.c.h.b16 %v728
        %v4403 = vunpack.c.l.b16 %v729
        %v4404 = vunpack.c.h.b16 %v729
        %v4405 = vunpack.c.l.b16 %v730
        %v4406 = vunpack.c.h.b16 %v730
        %v4407 = vunpack.c.l.b16 %v731
        %v4408 = vunpack.c.h.b16 %v731
        %v4409 = vunpack.c.l.b16 %v732
        %v4410 = vunpack.c.h.b16 %v732
        %v4411 = vunpack.c.l.b16 %v733
        %v4412 = vunpack.c.h.b16 %v733
        %v4413 = vunpack.c.l.b16 %v734
        %v4414 = vunpack.c.h.b16 %v734
        %v4415 = vunpack.c.l.b16 %v735
        %v4416 = vunpack.c.h.b16 %v735
        %v4417 = vunpack.c.l.b16 %v736
        %v4418 = vunpack.c.h.b16 %v736
        %v4419 = vunpack.c.l.b16 %v737
        %v4420 = vunpack.c.h.b16 %v737
        %v4421 = vunpack.c.l.b16 %v738
        %v4422 = vunpack.c.h.b16 %v738
        %v4423 = vunpack.c.l.b16 %v739
        %v4424 = vunpack.c.h.b16 %v739
        %v4425 = vunpack.c.l.b16 %v740
        %v4426 = vunpack.c.h.b16 %v740
        %v4427 = vunpack.c.l.b16 %v741
        %v4428 = vunpack.c.h.b16 %v741
        %v4429 = vunpack.c.l.b16 %v742
        %v4430 = vunpack.c.h.b16 %v742
        %v4431 = vunpack.c.l.b16 %v743
        %v4432 = vunpack.c.h.b16 %v743
        %v4433 = vunpack.c.l.b16 %v744
        %v4434 = vunpack.c.h.b16 %v744
        %v4435 = vunpack.c.l.b16 %v745
        %v4436 = vunpack.c.h.b16 %v745
        %v4437 = vunpack.c.l.b16 %v746
        %v4438 = vunpack.c.h.b16 %v746
        %v4439 = vunpack.c.l.b16 %v747
        %v4440 = vunpack.c.h.b16 %v747
        %v4441 = vunpack.c.l.b16 %v748
        %v4442 = vunpack.c.h.b16 %v748
        %v4443 = vunpack.c.l.b16 %v749
        %v4444 = vunpack.c.h.b16 %v749
        %v4445 = vunpack.c.l.b16 %v750
        %v4446 = vunpack.c.h.b16 %v750
        %v4447 = vunpack.c.l.b16 %v751
        %v4448 = vunpack.c.h.b16 %v751
        %v4449 = vunpack.c.l.b16 %v752
        %v4450 = vunpack.c.h.b16 %v752
        %v4451 = vunpack.c.l.b16 %v753
        %v4452 = vunpack.c.h.b16 %v753
        %v4453 = vunpack.c.l.b16 %v754
        %v4454 = vunpack.c.h.b16 %v754
        %v4455 = vunpack.c.l.b16 %v755
        %v4456 = vunpack.c.h.b16 %v755
        %v4457 = vunpack.c.l.b16 %v756
        %v4458 = vunpack.c.h.b16 %v756
        %v4459 = vunpack.c.l.b16 %v757
        %v4460 = vunpack.c.h.b16 %v757
        %v4461 = vunpack.c.l.b16 %v758
        %v4462 = vunpack.c.h.b16 %v758
        %v4463 = vunpack.c.l.b16 %v759
        %v4464 = vunpack.c.h.b16 %v759
        %v4465 = vunpack.c.l.b16 %v760
        %v4466 = vunpack.c.h.b16 %v760
        %v4467 = vunpack.c.l.b16 %v761
        %v4468 = vunpack.c.h.b16 %v761
        %v4469 = vunpack.c.l.b16 %v762
        %v4470 = vunpack.c.h.b16 %v762
        %v4471 = vunpack.c.l.b16 %v763
        %v4472 = vunpack.c.h.b16 %v763
        %v4473 = vunpack.c.l.b16 %v764
        %v4474 = vunpack.c.h.b16 %v764
        %v4475 = vunpack.c.l.b16 %v765
        %v4476 = vunpack.c.h.b16 %v765
        %v4477 = vunpack.c.l.b16 %v766
        %v4478 = vunpack.c.h.b16 %v766
        %v4479 = vunpack.c.l.b16 %v767
        %v4480 = vunpack.c.h.b16 %v767
        %v4481 = vunpack.c.l.b16 %v768
        %v4482 = vunpack.c.h.b16 %v768
        %v4483 = vunpack.c.l.b16 %v769
        %v4484 = vunpack.c.h.b16 %v769
        %v4485 = vunpack.c.l.b16 %v770
        %v4486 = vunpack.c.h.b16 %v770
        %v4487 = vunpack.c.l.b16 %v771
        %v4488 = vunpack.c.h.b16 %v771
        %v4489 = vunpack.c.l.b16 %v772
        %v4490 = vunpack.c.h.b16 %v772
        %v4491 = vunpack.c.l.b16 %v773
        %v4492 = vunpack.c.h.b16 %v773
        %v4493 = vunpack.c.l.b16 %v774
        %v4494 = vunpack.c.h.b16 %v774
        %v4495 = vunpack.c.l.b16 %v775
        %v4496 = vunpack.c.h.b16 %v775
        %v4497 = vunpack.c.l.b16 %v776
        %v4498 = vunpack.c.h.b16 %v776
        %v4499 = vunpack.c.l.b16 %v777
        %v4500 = vunpack.c.h.b16 %v777
        %v4501 = vunpack.c.l.b16 %v778
        %v4502 = vunpack.c.h.b16 %v778
        %v4503 = vunpack.c.l.b16 %v779
        %v4504 = vunpack.c.h.b16 %v779
        %v4505 = vunpack.c.l.b16 %v780
        %v4506 = vunpack.c.h.b16 %v780
        %v4507 = vunpack.c.l.b16 %v781
        %v4508 = vunpack.c.h.b16 %v781
        %v4509 = vunpack.c.l.b16 %v782
        %v4510 = vunpack.c.h.b16 %v782
        %v4511 = vunpack.c.l.b16 %v783
        %v4512 = vunpack.c.h.b16 %v783
        %v4513 = vunpack.c.l.b16 %v784
        %v4514 = vunpack.c.h.b16 %v784
        %v4515 = vunpack.c.l.b16 %v785
        %v4516 = vunpack.c.h.b16 %v785
        %v4517 = vunpack.c.l.b16 %v786
        %v4518 = vunpack.c.h.b16 %v786
        %v4519 = vunpack.c.l.b16 %v787
        %v4520 = vunpack.c.h.b16 %v787
        %v4521 = vunpack.c.l.b16 %v788
        %v4522 = vunpack.c.h.b16 %v788
        %v4523 = vunpack.c.l.b16 %v789
        %v4524 = vunpack.c.h.b16 %v789
        %v4525 = vunpack.c.l.b16 %v790
        %v4526 = vunpack.c.h.b16 %v790
        %v4527 = vunpack.c.l.b16 %v791
        %v4528 = vunpack.c.h.b16 %v791
        %v4529 = vunpack.c.l.b16 %v792
        %v4530 = vunpack.c.h.b16 %v792
        %v4531 = vunpack.c.l.b16 %v793
        %v4532 = vunpack.c.h.b16 %v793
        %v4533 = vunpack.c.l.b16 %v794
        %v4534 = vunpack.c.h.b16 %v794
        %v4535 = vunpack.c.l.b16 %v795
        %v4536 = vunpack.c.h.b16 %v795
        %v4537 = vunpack.c.l.b16 %v796
        %v4538 = vunpack.c.h.b16 %v796
        %v4539 = vunpack.c.l.b16 %v797
        %v4540 = vunpack.c.h.b16 %v797
        %v4541 = vunpack.c.l.b16 %v798
        %v4542 = vunpack.c.h.b16 %v798
        %v4543 = vunpack.c.l.b16 %v799
        %v4544 = vunpack.c.h.b16 %v799
        %v4545 = vunpack.c.l.b16 %v800
        %v4546 = vunpack.c.h.b16 %v800
        %v4547 = vunpack.c.l.b16 %v801
        %v4548 = vunpack.c.h.b16 %v801
        %v4549 = vunpack.c.l.b16 %v802
        %v4550 = vunpack.c.h.b16 %v802
        %v4551 = vunpack.c.l.b16 %v803
        %v4552 = vunpack.c.h.b16 %v803
        %v4553 = vunpack.c.l.b16 %v804
        %v4554 = vunpack.c.h.b16 %v804
        %v4555 = vunpack.c.l.b16 %v805
        %v4556 = vunpack.c.h.b16 %v805
        %v4557 = vunpack.c.l.b16 %v806
        %v4558 = vunpack.c.h.b16 %v806
        %v4559 = vunpack.c.l.b16 %v807
        %v4560 = vunpack.c.h.b16 %v807
        %v4561 = vunpack.c.l.b16 %v808
        %v4562 = vunpack.c.h.b16 %v808
        %v4563 = vunpack.c.l.b16 %v809
        %v4564 = vunpack.c.h.b16 %v809
        %v4565 = vunpack.c.l.b16 %v810
        %v4566 = vunpack.c.h.b16 %v810
        %v4567 = vunpack.c.l.b16 %v811
        %v4568 = vunpack.c.h.b16 %v811
        %v4569 = vunpack.c.l.b16 %v812
        %v4570 = vunpack.c.h.b16 %v812
        %v4571 = vunpack.c.l.b16 %v813
        %v4572 = vunpack.c.h.b16 %v813
        %v4573 = vunpack.c.l.b16 %v814
        %v4574 = vunpack.c.h.b16 %v814
        %v4575 = vunpack.c.l.b16 %v815
        %v4576 = vunpack.c.h.b16 %v815
        %v4577 = vunpack.c.l.b16 %v816
        %v4578 = vunpack.c.h.b16 %v816
        %v4579 = vunpack.c.l.b16 %v817
        %v4580 = vunpack.c.h.b16 %v817
        %v4581 = vunpack.c.l.b16 %v818
        %v4582 = vunpack.c.h.b16 %v818
        %v4583 = vunpack.c.l.b16 %v819
        %v4584 = vunpack.c.h.b16 %v819
        %v4585 = vunpack.c.l.b16 %v820
        %v4586 = vunpack.c.h.b16 %v820
        %v4587 = vunpack.c.l.b16 %v821
        %v4588 = vunpack.c.h.b16 %v821
        %v4589 = vunpack.c.l.b16 %v822
        %v4590 = vunpack.c.h.b16 %v822
        %v4591 = vunpack.c.l.b16 %v823
        %v4592 = vunpack.c.h.b16 %v823
        %v4593 = vunpack.c.l.b16 %v824
        %v4594 = vunpack.c.h.b16 %v824
        %v4595 = vunpack.c.l.b16 %v825
        %v4596 = vunpack.c.h.b16 %v825
        %v4597 = vunpack.c.l.b16 %v826
        %v4598 = vunpack.c.h.b16 %v826
        %v4599 = vunpack.c.l.b16 %v827
        %v4600 = vunpack.c.h.b16 %v827
        %v4601 = vunpack.c.l.b16 %v828
        %v4602 = vunpack.c.h.b16 %v828
        %v4603 = vunpack.c.l.b16 %v829
        %v4604 = vunpack.c.h.b16 %v829
        %v4605 = vunpack.c.l.b16 %v830
        %v4606 = vunpack.c.h.b16 %v830
        %v4607 = vunpack.c.l.b16 %v831
        %v4608 = vunpack.c.h.b16 %v831
        %v4609 = vunpack.c.l.b16 %v832
        %v4610 = vunpack.c.h.b16 %v832
        %v4611 = vunpack.c.l.b16 %v833
        %v4612 = vunpack.c.h.b16 %v833
        %v4613 = vunpack.c.l.b16 %v834
        %v4614 = vunpack.c.h.b16 %v834
        %v4615 = vunpack.c.l.b16 %v835
        %v4616 = vunpack.c.h.b16 %v835
        %v4617 = vunpack.c.l.b16 %v836
        %v4618 = vunpack.c.h.b16 %v836
        %v4619 = vunpack.c.l.b16 %v837
        %v4620 = vunpack.c.h.b16 %v837
        %v4621 = vunpack.c.l.b16 %v838
        %v4622 = vunpack.c.h.b16 %v838
        %v4623 = vunpack.c.l.b16 %v839
        %v4624 = vunpack.c.h.b16 %v839
        %v4625 = vunpack.c.l.b16 %v840
        %v4626 = vunpack.c.h.b16 %v840
        %v4627 = vunpack.c.l.b16 %v841
        %v4628 = vunpack.c.h.b16 %v841
        %v4629 = vunpack.c.l.b16 %v842
        %v4630 = vunpack.c.h.b16 %v842
        %v4631 = vunpack.c.l.b16 %v843
        %v4632 = vunpack.c.h.b16 %v843
        %v4633 = vunpack.c.l.b16 %v844
        %v4634 = vunpack.c.h.b16 %v844
        %v4635 = vunpack.c.l.b16 %v845
        %v4636 = vunpack.c.h.b16 %v845
        %v4637 = vunpack.c.l.b16 %v846
        %v4638 = vunpack.c.h.b16 %v846
        %v4639 = vunpack.c.l.b16 %v847
        %v4640 = vunpack.c.h.b16 %v847
        %v4641 = vunpack.c.l.b16 %v848
        %v4642 = vunpack.c.h.b16 %v848
        %v4643 = vunpack.c.l.b16 %v849
        %v4644 = vunpack.c.h.b16 %v849
        %v4645 = vunpack.c.l.b16 %v850
        %v4646 = vunpack.c.h.b16 %v850
        %v4647 = vunpack.c.l.b16 %v851
        %v4648 = vunpack.c.h.b16 %v851
        %v4649 = vunpack.c.l.b16 %v852
        %v4650 = vunpack.c.h.b16 %v852
        %v4651 = vunpack.c.l.b16 %v853
        %v4652 = vunpack.c.h.b16 %v853
        %v4653 = vunpack.c.l.b16 %v854
        %v4654 = vunpack.c.h.b16 %v854
        %v4655 = vunpack.c.l.b16 %v855
        %v4656 = vunpack.c.h.b16 %v855
        %v4657 = vunpack.c.l.b16 %v856
        %v4658 = vunpack.c.h.b16 %v856
        %v4659 = vunpack.c.l.b16 %v857
        %v4660 = vunpack.c.h.b16 %v857
        %v4661 = vunpack.c.l.b16 %v858
        %v4662 = vunpack.c.h.b16 %v858
        %v4663 = vunpack.c.l.b16 %v859
        %v4664 = vunpack.c.h.b16 %v859
        %v4665 = vunpack.c.l.b16 %v860
        %v4666 = vunpack.c.h.b16 %v860
        %v4667 = vunpack.c.l.b16 %v861
        %v4668 = vunpack.c.h.b16 %v861
        %v4669 = vunpack.c.l.b16 %v862
        %v4670 = vunpack.c.h.b16 %v862
        %v4671 = vunpack.c.l.b16 %v863
        %v4672 = vunpack.c.h.b16 %v863
        %v4673 = vunpack.c.l.b16 %v864
        %v4674 = vunpack.c.h.b16 %v864
        %v4675 = vunpack.c.l.b16 %v865
        %v4676 = vunpack.c.h.b16 %v865
        %v4677 = vunpack.c.l.b16 %v866
        %v4678 = vunpack.c.h.b16 %v866
        %v4679 = vunpack.c.l.b16 %v867
        %v4680 = vunpack.c.h.b16 %v867
        %v4681 = vunpack.c.l.b16 %v868
        %v4682 = vunpack.c.h.b16 %v868
        %v4683 = vunpack.c.l.b16 %v869
        %v4684 = vunpack.c.h.b16 %v869
        %v4685 = vunpack.c.l.b16 %v870
        %v4686 = vunpack.c.h.b16 %v870
        %v4687 = vunpack.c.l.b16 %v871
        %v4688 = vunpack.c.h.b16 %v871
        %v4689 = vunpack.c.l.b16 %v872
        %v4690 = vunpack.c.h.b16 %v872
        %v4691 = vunpack.c.l.b16 %v873
        %v4692 = vunpack.c.h.b16 %v873
        %v4693 = vunpack.c.l.b16 %v874
        %v4694 = vunpack.c.h.b16 %v874
        %v4695 = vunpack.c.l.b16 %v875
        %v4696 = vunpack.c.h.b16 %v875
        %v4697 = vunpack.c.l.b16 %v876
        %v4698 = vunpack.c.h.b16 %v876
        %v4699 = vunpack.c.l.b16 %v877
        %v4700 = vunpack.c.h.b16 %v877
        %v4701 = vunpack.c.l.b16 %v878
        %v4702 = vunpack.c.h.b16 %v878
        %v4703 = vunpack.c.l.b16 %v879
        %v4704 = vunpack.c.h.b16 %v879
        %v4705 = vunpack.c.l.b16 %v880
        %v4706 = vunpack.c.h.b16 %v880
        %v4707 = vunpack.c.l.b16 %v881
        %v4708 = vunpack.c.h.b16 %v881
        %v4709 = vunpack.c.l.b16 %v882
        %v4710 = vunpack.c.h.b16 %v882
        %v4711 = vunpack.c.l.b16 %v883
        %v4712 = vunpack.c.h.b16 %v883
        %v4713 = vunpack.c.l.b16 %v884
        %v4714 = vunpack.c.h.b16 %v884
        %v4715 = vunpack.c.l.b16 %v885
        %v4716 = vunpack.c.h.b16 %v885
        %v4717 = vunpack.c.l.b16 %v886
        %v4718 = vunpack.c.h.b16 %v886
        %v4719 = vunpack.c.l.b16 %v887
        %v4720 = vunpack.c.h.b16 %v887
        %v4721 = vunpack.c.l.b16 %v888
        %v4722 = vunpack.c.h.b16 %v888
        %v4723 = vunpack.c.l.b16 %v889
        %v4724 = vunpack.c.h.b16 %v889
        %v4725 = vunpack.c.l.b16 %v890
        %v4726 = vunpack.c.h.b16 %v890
        %v4727 = vunpack.c.l.b16 %v891
        %v4728 = vunpack.c.h.b16 %v891
        %v4729 = vunpack.c.l.b16 %v892
        %v4730 = vunpack.c.h.b16 %v892
        %v4731 = vunpack.c.l.b16 %v893
        %v4732 = vunpack.c.h.b16 %v893
        %v4733 = vunpack.c.l.b16 %v894
        %v4734 = vunpack.c.h.b16 %v894
        %v4735 = vunpack.c.l.b16 %v895
        %v4736 = vunpack.c.h.b16 %v895
        %v4737 = vunpack.c.l.b16 %v896
        %v4738 = vunpack.c.h.b16 %v896
        %v4739 = vunpack.c.l.b16 %v897
        %v4740 = vunpack.c.h.b16 %v897
        %v4741 = vunpack.c.l.b16 %v898
        %v4742 = vunpack.c.h.b16 %v898
        %v4743 = vunpack.c.l.b16 %v899
        %v4744 = vunpack.c.h.b16 %v899
        %v4745 = vunpack.c.l.b16 %v900
        %v4746 = vunpack.c.h.b16 %v900
        %v4747 = vunpack.c.l.b16 %v901
        %v4748 = vunpack.c.h.b16 %v901
        %v4749 = vunpack.c.l.b16 %v902
        %v4750 = vunpack.c.h.b16 %v902
        %v4751 = vunpack.c.l.b16 %v903
        %v4752 = vunpack.c.h.b16 %v903
        %v4753 = vunpack.c.l.b16 %v904
        %v4754 = vunpack.c.h.b16 %v904
        %v4755 = vunpack.c.l.b16 %v905
        %v4756 = vunpack.c.h.b16 %v905
        %v4757 = vunpack.c.l.b16 %v906
        %v4758 = vunpack.c.h.b16 %v906
        %v4759 = vunpack.c.l.b16 %v907
        %v4760 = vunpack.c.h.b16 %v907
        %v4761 = vunpack.c.l.b16 %v908
        %v4762 = vunpack.c.h.b16 %v908
        %v4763 = vunpack.c.l.b16 %v909
        %v4764 = vunpack.c.h.b16 %v909
        %v4765 = vunpack.c.l.b16 %v910
        %v4766 = vunpack.c.h.b16 %v910
        %v4767 = vunpack.c.l.b16 %v911
        %v4768 = vunpack.c.h.b16 %v911
        %v4769 = vunpack.c.l.b16 %v912
        %v4770 = vunpack.c.h.b16 %v912
        %v4771 = vunpack.c.l.b16 %v913
        %v4772 = vunpack.c.h.b16 %v913
        %v4773 = vunpack.c.l.b16 %v914
        %v4774 = vunpack.c.h.b16 %v914
        %v4775 = vunpack.c.l.b16 %v915
        %v4776 = vunpack.c.h.b16 %v915
        %v4777 = vunpack.c.l.b16 %v916
        %v4778 = vunpack.c.h.b16 %v916
        %v4779 = vunpack.c.l.b16 %v917
        %v4780 = vunpack.c.h.b16 %v917
        %v4781 = vunpack.c.l.b16 %v918
        %v4782 = vunpack.c.h.b16 %v918
        %v4783 = vunpack.c.l.b16 %v919
        %v4784 = vunpack.c.h.b16 %v919
        %v4785 = vunpack.c.l.b16 %v920
        %v4786 = vunpack.c.h.b16 %v920
        %v4787 = vunpack.c.l.b16 %v921
        %v4788 = vunpack.c.h.b16 %v921
        %v4789 = vunpack.c.l.b16 %v922
        %v4790 = vunpack.c.h.b16 %v922
        %v4791 = vunpack.c.l.b16 %v923
        %v4792 = vunpack.c.h.b16 %v923
        %v4793 = vunpack.c.l.b16 %v924
        %v4794 = vunpack.c.h.b16 %v924
        %v4795 = vunpack.c.l.b16 %v925
        %v4796 = vunpack.c.h.b16 %v925
        %v4797 = vunpack.c.l.b16 %v926
        %v4798 = vunpack.c.h.b16 %v926
        %v4799 = vunpack.c.l.b16 %v927
        %v4800 = vunpack.c.h.b16 %v927
        %v4801 = vunpack.c.l.b16 %v928
        %v4802 = vunpack.c.h.b16 %v928
        %v4803 = vunpack.c.l.b16 %v929
        %v4804 = vunpack.c.h.b16 %v929
        %v4805 = vunpack.c.l.b16 %v930
        %v4806 = vunpack.c.h.b16 %v930
        %v4807 = vunpack.c.l.b16 %v931
        %v4808 = vunpack.c.h.b16 %v931
        %v4809 = vunpack.c.l.b16 %v932
        %v4810 = vunpack.c.h.b16 %v932
        %v4811 = vunpack.c.l.b16 %v933
        %v4812 = vunpack.c.h.b16 %v933
        %v4813 = vunpack.c.l.b16 %v934
        %v4814 = vunpack.c.h.b16 %v934
        %v4815 = vunpack.c.l.b16 %v935
        %v4816 = vunpack.c.h.b16 %v935
        %v4817 = vunpack.c.l.b16 %v936
        %v4818 = vunpack.c.h.b16 %v936
        %v4819 = vunpack.c.l.b16 %v937
        %v4820 = vunpack.c.h.b16 %v937
        %v4821 = vunpack.c.l.b16 %v938
        %v4822 = vunpack.c.h.b16 %v938
        %v4823 = vunpack.c.l.b16 %v939
        %v4824 = vunpack.c.h.b16 %v939
        %v4825 = vunpack.c.l.b16 %v940
        %v4826 = vunpack.c.h.b16 %v940
        %v4827 = vunpack.c.l.b16 %v941
        %v4828 = vunpack.c.h.b16 %v941
        %v4829 = vunpack.c.l.b16 %v942
        %v4830 = vunpack.c.h.b16 %v942
        %v4831 = vunpack.c.l.b16 %v943
        %v4832 = vunpack.c.h.b16 %v943
        %v4833 = vunpack.c.l.b16 %v944
        %v4834 = vunpack.c.h.b16 %v944
        %v4835 = vunpack.c.l.b16 %v945
        %v4836 = vunpack.c.h.b16 %v945
        %v4837 = vunpack.c.l.b16 %v946
        %v4838 = vunpack.c.h.b16 %v946
        %v4839 = vunpack.c.l.b16 %v947
        %v4840 = vunpack.c.h.b16 %v947
        %v4841 = vunpack.c.l.b16 %v948
        %v4842 = vunpack.c.h.b16 %v948
        %v4843 = vunpack.c.l.b16 %v949
        %v4844 = vunpack.c.h.b16 %v949
        %v4845 = vunpack.c.l.b16 %v950
        %v4846 = vunpack.c.h.b16 %v950
        %v4847 = vunpack.c.l.b16 %v951
        %v4848 = vunpack.c.h.b16 %v951
        %v4849 = vunpack.c.l.b16 %v952
        %v4850 = vunpack.c.h.b16 %v952
        %v4851 = vunpack.c.l.b16 %v953
        %v4852 = vunpack.c.h.b16 %v953
        %v4853 = vunpack.c.l.b16 %v954
        %v4854 = vunpack.c.h.b16 %v954
        %v4855 = vunpack.c.l.b16 %v955
        %v4856 = vunpack.c.h.b16 %v955
        %v4857 = vunpack.c.l.b16 %v956
        %v4858 = vunpack.c.h.b16 %v956
        %v4859 = vunpack.c.l.b16 %v957
        %v4860 = vunpack.c.h.b16 %v957
        %v4861 = vunpack.c.l.b16 %v958
        %v4862 = vunpack.c.h.b16 %v958
        %v4863 = vunpack.c.l.b16 %v959
        %v4864 = vunpack.c.h.b16 %v959
        %v4865 = vunpack.c.l.b16 %v960
        %v4866 = vunpack.c.h.b16 %v960
        %v4867 = vunpack.c.l.b16 %v961
        %v4868 = vunpack.c.h.b16 %v961
        %v4869 = vunpack.c.l.b16 %v962
        %v4870 = vunpack.c.h.b16 %v962
        %v4871 = vunpack.c.l.b16 %v963
        %v4872 = vunpack.c.h.b16 %v963
        %v4873 = vunpack.c.l.b16 %v964
        %v4874 = vunpack.c.h.b16 %v964
        %v4875 = vunpack.c.l.b16 %v965
        %v4876 = vunpack.c.h.b16 %v965
        %v4877 = vunpack.c.l.b16 %v966
        %v4878 = vunpack.c.h.b16 %v966
        %v4879 = vunpack.c.l.b16 %v967
        %v4880 = vunpack.c.h.b16 %v967
        %v4881 = vunpack.c.l.b16 %v968
        %v4882 = vunpack.c.h.b16 %v968
        %v4883 = vunpack.c.l.b16 %v969
        %v4884 = vunpack.c.h.b16 %v969
        %v4885 = vunpack.c.l.b16 %v970
        %v4886 = vunpack.c.h.b16 %v970
        %v4887 = vunpack.c.l.b16 %v971
        %v4888 = vunpack.c.h.b16 %v971
        %v4889 = vunpack.c.l.b16 %v972
        %v4890 = vunpack.c.h.b16 %v972
        %v4891 = vunpack.c.l.b16 %v973
        %v4892 = vunpack.c.h.b16 %v973
        %v4893 = vunpack.c.l.b16 %v974
        %v4894 = vunpack.c.h.b16 %v974
        %v4895 = vunpack.c.l.b16 %v975
        %v4896 = vunpack.c.h.b16 %v975
        %v4897 = vunpack.c.l.b16 %v976
        %v4898 = vunpack.c.h.b16 %v976
        %v4899 = vunpack.c.l.b16 %v977
        %v4900 = vunpack.c.h.b16 %v977
        %v4901 = vunpack.c.l.b16 %v978
        %v4902 = vunpack.c.h.b16 %v978
        %v4903 = vunpack.c.l.b16 %v979
        %v4904 = vunpack.c.h.b16 %v979
        %v4905 = vunpack.c.l.b16 %v980
        %v4906 = vunpack.c.h.b16 %v980
        %v4907 = vunpack.c.l.b16 %v981
        %v4908 = vunpack.c.h.b16 %v981
        %v4909 = vunpack.c.l.b16 %v982
        %v4910 = vunpack.c.h.b16 %v982
        %v4911 = vunpack.c.l.b16 %v983
        %v4912 = vunpack.c.h.b16 %v983
        %v4913 = vunpack.c.l.b16 %v984
        %v4914 = vunpack.c.h.b16 %v984
        %v4915 = vunpack.c.l.b16 %v985
        %v4916 = vunpack.c.h.b16 %v985
        %v4917 = vunpack.c.l.b16 %v986
        %v4918 = vunpack.c.h.b16 %v986
        %v4919 = vunpack.c.l.b16 %v987
        %v4920 = vunpack.c.h.b16 %v987
        %v4921 = vunpack.c.l.b16 %v988
        %v4922 = vunpack.c.h.b16 %v988
        %v4923 = vunpack.c.l.b16 %v989
        %v4924 = vunpack.c.h.b16 %v989
        %v4925 = vunpack.c.l.b16 %v990
        %v4926 = vunpack.c.h.b16 %v990
        %v4927 = vunpack.c.l.b16 %v991
        %v4928 = vunpack.c.h.b16 %v991
        %v4929 = vunpack.c.l.b16 %v992
        %v4930 = vunpack.c.h.b16 %v992
        %v4931 = vunpack.c.l.b16 %v993
        %v4932 = vunpack.c.h.b16 %v993
        %v4933 = vunpack.c.l.b16 %v994
        %v4934 = vunpack.c.h.b16 %v994
        %v4935 = vunpack.c.l.b16 %v995
        %v4936 = vunpack.c.h.b16 %v995
        %v4937 = vunpack.c.l.b16 %v996
        %v4938 = vunpack.c.h.b16 %v996
        %v4939 = vunpack.c.l.b16 %v997
        %v4940 = vunpack.c.h.b16 %v997
        %v4941 = vunpack.c.l.b16 %v998
        %v4942 = vunpack.c.h.b16 %v998
        %v4943 = vunpack.c.l.b16 %v999
        %v4944 = vunpack.c.h.b16 %v999
        %v4945 = vunpack.c.l.b16 %v1000
        %v4946 = vunpack.c.h.b16 %v1000
        %v4947 = vunpack.c.l.b16 %v1001
        %v4948 = vunpack.c.h.b16 %v1001
        %v4949 = vunpack.c.l.b16 %v1002
        %v4950 = vunpack.c.h.b16 %v1002
        %v4951 = vunpack.c.l.b16 %v1003
        %v4952 = vunpack.c.h.b16 %v1003
        %v4953 = vunpack.c.l.b16 %v1004
        %v4954 = vunpack.c.h.b16 %v1004
        %v4955 = vunpack.c.l.b16 %v1005
        %v4956 = vunpack.c.h.b16 %v1005
        %v4957 = vunpack.c.l.b16 %v1006
        %v4958 = vunpack.c.h.b16 %v1006
        %v4959 = vunpack.c.l.b16 %v1007
        %v4960 = vunpack.c.h.b16 %v1007
        %v4961 = vunpack.c.l.b16 %v1008
        %v4962 = vunpack.c.h.b16 %v1008
        %v4963 = vunpack.c.l.b16 %v1009
        %v4964 = vunpack.c.h.b16 %v1009
        %v4965 = vunpack.c.l.b16 %v1010
        %v4966 = vunpack.c.h.b16 %v1010
        %v4967 = vunpack.c.l.b16 %v1011
        %v4968 = vunpack.c.h.b16 %v1011
        %v4969 = vunpack.c.l.b16 %v1012
        %v4970 = vunpack.c.h.b16 %v1012
        %v4971 = vunpack.c.l.b16 %v1013
        %v4972 = vunpack.c.h.b16 %v1013
        %v4973 = vunpack.c.l.b16 %v1014
        %v4974 = vunpack.c.h.b16 %v1014
        %v4975 = vunpack.c.l.b16 %v1015
        %v4976 = vunpack.c.h.b16 %v1015
        %v4977 = vunpack.c.l.b16 %v1016
        %v4978 = vunpack.c.h.b16 %v1016
        %v4979 = vunpack.c.l.b16 %v1017
        %v4980 = vunpack.c.h.b16 %v1017
        %v4981 = vunpack.c.l.b16 %v1018
        %v4982 = vunpack.c.h.b16 %v1018
        %v4983 = vunpack.c.l.b16 %v1019
        %v4984 = vunpack.c.h.b16 %v1019
        %v4985 = vunpack.c.l.b16 %v1020
        %v4986 = vunpack.c.h.b16 %v1020
        %v4987 = vunpack.c.l.b16 %v1021
        %v4988 = vunpack.c.h.b16 %v1021
        %v4989 = vunpack.c.l.b16 %v1022
        %v4990 = vunpack.c.h.b16 %v1022
        %v4991 = vunpack.c.l.b16 %v1023
        %v4992 = vunpack.c.h.b16 %v1023
        %v4993 = vunpack.c.l.b16 %v1024
        %v4994 = vunpack.c.h.b16 %v1024
        %v4995 = vunpack.c.l.b16 %v1025
        %v4996 = vunpack.c.h.b16 %v1025
        %v4997 = vunpack.c.l.b16 %v1026
        %v4998 = vunpack.c.h.b16 %v1026
        %v4999 = vunpack.c.l.b16 %v1027
        %v5000 = vunpack.c.h.b16 %v1027
        %v5001 = vunpack.c.l.b16 %v1028
        %v5002 = vunpack.c.h.b16 %v1028
        %v5003 = vunpack.c.l.b16 %v1029
        %v5004 = vunpack.c.h.b16 %v1029
        %v5005 = vunpack.c.l.b16 %v1030
        %v5006 = vunpack.c.h.b16 %v1030
        %v5007 = vunpack.c.l.b16 %v1031
        %v5008 = vunpack.c.h.b16 %v1031
        %v5009 = vunpack.c.l.b16 %v1032
        %v5010 = vunpack.c.h.b16 %v1032
        %v5011 = vunpack.c.l.b16 %v1033
        %v5012 = vunpack.c.h.b16 %v1033
        %v5013 = vunpack.c.l.b16 %v1034
        %v5014 = vunpack.c.h.b16 %v1034
        %v5015 = vunpack.c.l.b16 %v1035
        %v5016 = vunpack.c.h.b16 %v1035
        %v5017 = vunpack.c.l.b16 %v1036
        %v5018 = vunpack.c.h.b16 %v1036
        %v5019 = vunpack.c.l.b16 %v1037
        %v5020 = vunpack.c.h.b16 %v1037
        %v5021 = vunpack.c.l.b16 %v1038
        %v5022 = vunpack.c.h.b16 %v1038
        %v5023 = vunpack.c.l.b16 %v1039
        %v5024 = vunpack.c.h.b16 %v1039
        %v5025 = vunpack.c.l.b16 %v1040
        %v5026 = vunpack.c.h.b16 %v1040
        %v5027 = vunpack.c.l.b16 %v1041
        %v5028 = vunpack.c.h.b16 %v1041
        %v5029 = vunpack.c.l.b16 %v1042
        %v5030 = vunpack.c.h.b16 %v1042
        %v5031 = vunpack.c.l.b16 %v1043
        %v5032 = vunpack.c.h.b16 %v1043
        %v5033 = vunpack.c.l.b16 %v1044
        %v5034 = vunpack.c.h.b16 %v1044
        %v5035 = vunpack.c.l.b16 %v1045
        %v5036 = vunpack.c.h.b16 %v1045
        %v5037 = vunpack.c.l.b16 %v1046
        %v5038 = vunpack.c.h.b16 %v1046
        %v5039 = vunpack.c.l.b16 %v1047
        %v5040 = vunpack.c.h.b16 %v1047
        %v5041 = vunpack.c.l.b16 %v1048
        %v5042 = vunpack.c.h.b16 %v1048
        %v5043 = vunpack.c.l.b16 %v1049
        %v5044 = vunpack.c.h.b16 %v1049
        %v5045 = vunpack.c.l.b16 %v1050
        %v5046 = vunpack.c.h.b16 %v1050
        %v5047 = vunpack.c.l.b16 %v1051
        %v5048 = vunpack.c.h.b16 %v1051
        %v5049 = vunpack.c.l.b16 %v1052
        %v5050 = vunpack.c.h.b16 %v1052
        %v5051 = vunpack.c.l.b16 %v1053
        %v5052 = vunpack.c.h.b16 %v1053
        %v5053 = vunpack.c.l.b16 %v1054
        %v5054 = vunpack.c.h.b16 %v1054
        %v5055 = vunpack.c.l.b16 %v1055
        %v5056 = vunpack.c.h.b16 %v1055
        %v5057 = vunpack.c.l.b16 %v1056
        %v5058 = vunpack.c.h.b16 %v1056
        %v5059 = vunpack.c.l.b16 %v1057
        %v5060 = vunpack.c.h.b16 %v1057
        %v5061 = vunpack.c.l.b16 %v1058
        %v5062 = vunpack.c.h.b16 %v1058
        %v5063 = vunpack.c.l.b16 %v1059
        %v5064 = vunpack.c.h.b16 %v1059
        %v5065 = vunpack.c.l.b16 %v1060
        %v5066 = vunpack.c.h.b16 %v1060
        %v5067 = vunpack.c.l.b16 %v1061
        %v5068 = vunpack.c.h.b16 %v1061
        %v5069 = vunpack.c.l.b16 %v1062
        %v5070 = vunpack.c.h.b16 %v1062
        %v5071 = vunpack.c.l.b16 %v1063
        %v5072 = vunpack.c.h.b16 %v1063
        %v5073 = vunpack.c.l.b16 %v1064
        %v5074 = vunpack.c.h.b16 %v1064
        %v5075 = vunpack.c.l.b16 %v1065
        %v5076 = vunpack.c.h.b16 %v1065
        %v5077 = vunpack.c.l.b16 %v1066
        %v5078 = vunpack.c.h.b16 %v1066
        %v5079 = vunpack.c.l.b16 %v1067
        %v5080 = vunpack.c.h.b16 %v1067
        %v5081 = vunpack.c.l.b16 %v1068
        %v5082 = vunpack.c.h.b16 %v1068
        %v5083 = vunpack.c.l.b16 %v1069
        %v5084 = vunpack.c.h.b16 %v1069
        %v5085 = vunpack.c.l.b16 %v1070
        %v5086 = vunpack.c.h.b16 %v1070
        %v5087 = vunpack.c.l.b16 %v1071
        %v5088 = vunpack.c.h.b16 %v1071
        %v5089 = vunpack.c.l.b16 %v1072
        %v5090 = vunpack.c.h.b16 %v1072
        %v5091 = vunpack.c.l.b16 %v1073
        %v5092 = vunpack.c.h.b16 %v1073
        %v5093 = vunpack.c.l.b16 %v1074
        %v5094 = vunpack.c.h.b16 %v1074
        %v5095 = vunpack.c.l.b16 %v1075
        %v5096 = vunpack.c.h.b16 %v1075
        %v5097 = vunpack.c.l.b16 %v1076
        %v5098 = vunpack.c.h.b16 %v1076
        %v5099 = vunpack.c.l.b16 %v1077
        %v5100 = vunpack.c.h.b16 %v1077
        %v5101 = vunpack.c.l.b16 %v1078
        %v5102 = vunpack.c.h.b16 %v1078
        %v5103 = vunpack.c.l.b16 %v1079
        %v5104 = vunpack.c.h.b16 %v1079
        %v5105 = vunpack.c.l.b16 %v1080
        %v5106 = vunpack.c.h.b16 %v1080
        %v5107 = vunpack.c.l.b16 %v1081
        %v5108 = vunpack.c.h.b16 %v1081
        %v5109 = vunpack.c.l.b16 %v1082
        %v5110 = vunpack.c.h.b16 %v1082
        %v5111 = vunpack.c.l.b16 %v1083
        %v5112 = vunpack.c.h.b16 %v1083
        %v5113 = vunpack.c.l.b16 %v1084
        %v5114 = vunpack.c.h.b16 %v1084
        %v5115 = vunpack.c.l.b16 %v1085
        %v5116 = vunpack.c.h.b16 %v1085
        %v5117 = vunpack.c.l.b16 %v1086
        %v5118 = vunpack.c.h.b16 %v1086
        %v5119 = vunpack.c.l.b16 %v1087
        %v5120 = vunpack.c.h.b16 %v1087
        %v5121 = vunpack.c.l.b16 %v1088
        %v5122 = vunpack.c.h.b16 %v1088
        %v5123 = vunpack.c.l.b16 %v1089
        %v5124 = vunpack.c.h.b16 %v1089
        %v5125 = vunpack.c.l.b16 %v1090
        %v5126 = vunpack.c.h.b16 %v1090
        %v5127 = vunpack.c.l.b16 %v1091
        %v5128 = vunpack.c.h.b16 %v1091
        %v5129 = vunpack.c.l.b16 %v1092
        %v5130 = vunpack.c.h.b16 %v1092
        %v5131 = vunpack.c.l.b16 %v1093
        %v5132 = vunpack.c.h.b16 %v1093
        %v5133 = vunpack.c.l.b16 %v1094
        %v5134 = vunpack.c.h.b16 %v1094
        %v5135 = vunpack.c.l.b16 %v1095
        %v5136 = vunpack.c.h.b16 %v1095
        %v5137 = vunpack.c.l.b16 %v1096
        %v5138 = vunpack.c.h.b16 %v1096
        %v5139 = vunpack.c.l.b16 %v1097
        %v5140 = vunpack.c.h.b16 %v1097
        %v5141 = vunpack.c.l.b16 %v1098
        %v5142 = vunpack.c.h.b16 %v1098
        %v5143 = vunpack.c.l.b16 %v1099
        %v5144 = vunpack.c.h.b16 %v1099
        %v5145 = vunpack.c.l.b16 %v1100
        %v5146 = vunpack.c.h.b16 %v1100
        %v5147 = vunpack.c.l.b16 %v1101
        %v5148 = vunpack.c.h.b16 %v1101
        %v5149 = vunpack.c.l.b16 %v1102
        %v5150 = vunpack.c.h.b16 %v1102
        %v5151 = vunpack.c.l.b16 %v1103
        %v5152 = vunpack.c.h.b16 %v1103
        %v5153 = vunpack.c.l.b16 %v1104
        %v5154 = vunpack.c.h.b16 %v1104
        %v5155 = vunpack.c.l.b16 %v1105
        %v5156 = vunpack.c.h.b16 %v1105
        %v5157 = vunpack.c.l.b16 %v1106
        %v5158 = vunpack.c.h.b16 %v1106
        %v5159 = vunpack.c.l.b16 %v1107
        %v5160 = vunpack.c.h.b16 %v1107
        %v5161 = vunpack.c.l.b16 %v1108
        %v5162 = vunpack.c.h.b16 %v1108
        %v5163 = vunpack.c.l.b16 %v1109
        %v5164 = vunpack.c.h.b16 %v1109
        %v5165 = vunpack.c.l.b16 %v1110
        %v5166 = vunpack.c.h.b16 %v1110
        %v5167 = vunpack.c.l.b16 %v1111
        %v5168 = vunpack.c.h.b16 %v1111
        %v5169 = vunpack.c.l.b16 %v1112
        %v5170 = vunpack.c.h.b16 %v1112
        %v5171 = vunpack.c.l.b16 %v1113
        %v5172 = vunpack.c.h.b16 %v1113
        %v5173 = vunpack.c.l.b16 %v1114
        %v5174 = vunpack.c.h.b16 %v1114
        %v5175 = vunpack.c.l.b16 %v1115
        %v5176 = vunpack.c.h.b16 %v1115
        %v5177 = vunpack.c.l.b16 %v1116
        %v5178 = vunpack.c.h.b16 %v1116
        %v5179 = vunpack.c.l.b16 %v1117
        %v5180 = vunpack.c.h.b16 %v1117
        %v5181 = vunpack.c.l.b16 %v1118
        %v5182 = vunpack.c.h.b16 %v1118
        %v5183 = vunpack.c.l.b16 %v1119
        %v5184 = vunpack.c.h.b16 %v1119
        %v5185 = vunpack.c.l.b16 %v1120
        %v5186 = vunpack.c.h.b16 %v1120
        %v5187 = vunpack.c.l.b16 %v1121
        %v5188 = vunpack.c.h.b16 %v1121
        %v5189 = vunpack.c.l.b16 %v1122
        %v5190 = vunpack.c.h.b16 %v1122
        %v5191 = vunpack.c.l.b16 %v1123
        %v5192 = vunpack.c.h.b16 %v1123
        %v5193 = vunpack.c.l.b16 %v1124
        %v5194 = vunpack.c.h.b16 %v1124
        %v5195 = vunpack.c.l.b16 %v1125
        %v5196 = vunpack.c.h.b16 %v1125
        %v5197 = vunpack.c.l.b16 %v1126
        %v5198 = vunpack.c.h.b16 %v1126
        %v5199 = vunpack.c.l.b16 %v1127
        %v5200 = vunpack.c.h.b16 %v1127
        %v5201 = vunpack.c.l.b16 %v1128
        %v5202 = vunpack.c.h.b16 %v1128
        %v5203 = vunpack.c.l.b16 %v1129
        %v5204 = vunpack.c.h.b16 %v1129
        %v5205 = vunpack.c.l.b16 %v1130
        %v5206 = vunpack.c.h.b16 %v1130
        %v5207 = vunpack.c.l.b16 %v1131
        %v5208 = vunpack.c.h.b16 %v1131
        %v5209 = vunpack.c.l.b16 %v1132
        %v5210 = vunpack.c.h.b16 %v1132
        %v5211 = vunpack.c.l.b16 %v1133
        %v5212 = vunpack.c.h.b16 %v1133
        %v5213 = vunpack.c.l.b16 %v1134
        %v5214 = vunpack.c.h.b16 %v1134
        %v5215 = vunpack.c.l.b16 %v1135
        %v5216 = vunpack.c.h.b16 %v1135
        %v5217 = vunpack.c.l.b16 %v1136
        %v5218 = vunpack.c.h.b16 %v1136
        %v5219 = vunpack.c.l.b16 %v1137
        %v5220 = vunpack.c.h.b16 %v1137
        %v5221 = vunpack.c.l.b16 %v1138
        %v5222 = vunpack.c.h.b16 %v1138
        %v5223 = vunpack.c.l.b16 %v1139
        %v5224 = vunpack.c.h.b16 %v1139
        %v5225 = vunpack.c.l.b16 %v1140
        %v5226 = vunpack.c.h.b16 %v1140
        %v5227 = vunpack.c.l.b16 %v1141
        %v5228 = vunpack.c.h.b16 %v1141
        %v5229 = vunpack.c.l.b16 %v1142
        %v5230 = vunpack.c.h.b16 %v1142
        %v5231 = vunpack.c.l.b16 %v1143
        %v5232 = vunpack.c.h.b16 %v1143
        %v5233 = vunpack.c.l.b16 %v1144
        %v5234 = vunpack.c.h.b16 %v1144
        %v5235 = vunpack.c.l.b16 %v1145
        %v5236 = vunpack.c.h.b16 %v1145
        %v5237 = vunpack.c.l.b16 %v1146
        %v5238 = vunpack.c.h.b16 %v1146
        %v5239 = vunpack.c.l.b16 %v1147
        %v5240 = vunpack.c.h.b16 %v1147
        %v5241 = vunpack.c.l.b16 %v1148
        %v5242 = vunpack.c.h.b16 %v1148
        %v5243 = vunpack.c.l.b16 %v1149
        %v5244 = vunpack.c.h.b16 %v1149
        %v5245 = vunpack.c.l.b16 %v1150
        %v5246 = vunpack.c.h.b16 %v1150
        %v5247 = vunpack.c.l.b16 %v1151
        %v5248 = vunpack.c.h.b16 %v1151
        %v5249 = vunpack.c.l.b16 %v1152
        %v5250 = vunpack.c.h.b16 %v1152
        %v5251 = vunpack.c.l.b16 %v1153
        %v5252 = vunpack.c.h.b16 %v1153
        %v5253 = vunpack.c.l.b16 %v1154
        %v5254 = vunpack.c.h.b16 %v1154
        %v5255 = vunpack.c.l.b16 %v1155
        %v5256 = vunpack.c.h.b16 %v1155
        %v5257 = vunpack.c.l.b16 %v1156
        %v5258 = vunpack.c.h.b16 %v1156
        %v5259 = vunpack.c.l.b16 %v1157
        %v5260 = vunpack.c.h.b16 %v1157
        %v5261 = vunpack.c.l.b16 %v1158
        %v5262 = vunpack.c.h.b16 %v1158
        %v5263 = vunpack.c.l.b16 %v1159
        %v5264 = vunpack.c.h.b16 %v1159
        %v5265 = vunpack.c.l.b16 %v1160
        %v5266 = vunpack.c.h.b16 %v1160
        %v5267 = vunpack.c.l.b16 %v1161
        %v5268 = vunpack.c.h.b16 %v1161
        %v5269 = vunpack.c.l.b16 %v1162
        %v5270 = vunpack.c.h.b16 %v1162
        %v5271 = vunpack.c.l.b16 %v1163
        %v5272 = vunpack.c.h.b16 %v1163
        %v5273 = vunpack.c.l.b16 %v1164
        %v5274 = vunpack.c.h.b16 %v1164
        %v5275 = vunpack.c.l.b16 %v1165
        %v5276 = vunpack.c.h.b16 %v1165
        %v5277 = vunpack.c.l.b16 %v1166
        %v5278 = vunpack.c.h.b16 %v1166
        %v5279 = vunpack.c.l.b16 %v1167
        %v5280 = vunpack.c.h.b16 %v1167
        %v5281 = vunpack.c.l.b16 %v1168
        %v5282 = vunpack.c.h.b16 %v1168
        %v5283 = vunpack.c.l.b16 %v1169
        %v5284 = vunpack.c.h.b16 %v1169
        %v5285 = vunpack.c.l.b16 %v1170
        %v5286 = vunpack.c.h.b16 %v1170
        %v5287 = vunpack.c.l.b16 %v1171
        %v5288 = vunpack.c.h.b16 %v1171
        %v5289 = vunpack.c.l.b16 %v1172
        %v5290 = vunpack.c.h.b16 %v1172
        %v5291 = vunpack.c.l.b16 %v1173
        %v5292 = vunpack.c.h.b16 %v1173
        %v5293 = vunpack.c.l.b16 %v1174
        %v5294 = vunpack.c.h.b16 %v1174
        %v5295 = vunpack.c.l.b16 %v1175
        %v5296 = vunpack.c.h.b16 %v1175
        %v5297 = vunpack.c.l.b16 %v1176
        %v5298 = vunpack.c.h.b16 %v1176
        %v5299 = vunpack.c.l.b16 %v1177
        %v5300 = vunpack.c.h.b16 %v1177
        %v5301 = vunpack.c.l.b16 %v1178
        %v5302 = vunpack.c.h.b16 %v1178
        %v5303 = vunpack.c.l.b16 %v1179
        %v5304 = vunpack.c.h.b16 %v1179
        %v5305 = vunpack.c.l.b16 %v1180
        %v5306 = vunpack.c.h.b16 %v1180
        %v5307 = vunpack.c.l.b16 %v1181
        %v5308 = vunpack.c.h.b16 %v1181
        %v5309 = vunpack.c.l.b16 %v1182
        %v5310 = vunpack.c.h.b16 %v1182
        %v5311 = vunpack.c.l.b16 %v1183
        %v5312 = vunpack.c.h.b16 %v1183
        %v5313 = vunpack.c.l.b16 %v1184
        %v5314 = vunpack.c.h.b16 %v1184
        %v5315 = vunpack.c.l.b16 %v1185
        %v5316 = vunpack.c.h.b16 %v1185
        %v5317 = vunpack.c.l.b16 %v1186
        %v5318 = vunpack.c.h.b16 %v1186
        %v5319 = vunpack.c.l.b16 %v1187
        %v5320 = vunpack.c.h.b16 %v1187
        %v5321 = vunpack.c.l.b16 %v1188
        %v5322 = vunpack.c.h.b16 %v1188
        %v5323 = vunpack.c.l.b16 %v1189
        %v5324 = vunpack.c.h.b16 %v1189
        %v5325 = vunpack.c.l.b16 %v1190
        %v5326 = vunpack.c.h.b16 %v1190
        %v5327 = vunpack.c.l.b16 %v1191
        %v5328 = vunpack.c.h.b16 %v1191
        %v5329 = vunpack.c.l.b16 %v1192
        %v5330 = vunpack.c.h.b16 %v1192
        %v5331 = vunpack.c.l.b16 %v1193
        %v5332 = vunpack.c.h.b16 %v1193
        %v5333 = vunpack.c.l.b16 %v1194
        %v5334 = vunpack.c.h.b16 %v1194
        %v5335 = vunpack.c.l.b16 %v1195
        %v5336 = vunpack.c.h.b16 %v1195
        %v5337 = vunpack.c.l.b16 %v1196
        %v5338 = vunpack.c.h.b16 %v1196
        %v5339 = vunpack.c.l.b16 %v1197
        %v5340 = vunpack.c.h.b16 %v1197
        %v5341 = vunpack.c.l.b16 %v1198
        %v5342 = vunpack.c.h.b16 %v1198
        %v5343 = vunpack.c.l.b16 %v1199
        %v5344 = vunpack.c.h.b16 %v1199
        %v5345 = vunpack.c.l.b16 %v1200
        %v5346 = vunpack.c.h.b16 %v1200
        %v5347 = vunpack.c.l.b16 %v1201
        %v5348 = vunpack.c.h.b16 %v1201
        %v5349 = vunpack.c.l.b16 %v1202
        %v5350 = vunpack.c.h.b16 %v1202
        %v5351 = vunpack.c.l.b16 %v1203
        %v5352 = vunpack.c.h.b16 %v1203
        %v5353 = vunpack.c.l.b16 %v1204
        %v5354 = vunpack.c.h.b16 %v1204
        %v5355 = vunpack.c.l.b16 %v1205
        %v5356 = vunpack.c.h.b16 %v1205
        %v5357 = vunpack.c.l.b16 %v1206
        %v5358 = vunpack.c.h.b16 %v1206
        %v5359 = vunpack.c.l.b16 %v1207
        %v5360 = vunpack.c.h.b16 %v1207
        %v5361 = vunpack.c.l.b16 %v1208
        %v5362 = vunpack.c.h.b16 %v1208
        %v5363 = vunpack.c.l.b16 %v1209
        %v5364 = vunpack.c.h.b16 %v1209
        %v5365 = vunpack.c.l.b16 %v1210
        %v5366 = vunpack.c.h.b16 %v1210
        %v5367 = vunpack.c.l.b16 %v1211
        %v5368 = vunpack.c.h.b16 %v1211
        %v5369 = vunpack.c.l.b16 %v1212
        %v5370 = vunpack.c.h.b16 %v1212
        %v5371 = vunpack.c.l.b16 %v1213
        %v5372 = vunpack.c.h.b16 %v1213
        %v5373 = vunpack.c.l.b16 %v1214
        %v5374 = vunpack.c.h.b16 %v1214
        %v5375 = vunpack.c.l.b16 %v1215
        %v5376 = vunpack.c.h.b16 %v1215
        %v5377 = vunpack.c.l.b16 %v1216
        %v5378 = vunpack.c.h.b16 %v1216
        %v5379 = vunpack.c.l.b16 %v1217
        %v5380 = vunpack.c.h.b16 %v1217
        %v5381 = vunpack.c.l.b16 %v1218
        %v5382 = vunpack.c.h.b16 %v1218
        %v5383 = vunpack.c.l.b16 %v1219
        %v5384 = vunpack.c.h.b16 %v1219
        %v5385 = vunpack.c.l.b16 %v1220
        %v5386 = vunpack.c.h.b16 %v1220
        %v5387 = vunpack.c.l.b16 %v1221
        %v5388 = vunpack.c.h.b16 %v1221
        %v5389 = vunpack.c.l.b16 %v1222
        %v5390 = vunpack.c.h.b16 %v1222
        %v5391 = vunpack.c.l.b16 %v1223
        %v5392 = vunpack.c.h.b16 %v1223
        %v5393 = vunpack.c.l.b16 %v1224
        %v5394 = vunpack.c.h.b16 %v1224
        %v5395 = vunpack.c.l.b16 %v1225
        %v5396 = vunpack.c.h.b16 %v1225
        %v5397 = vunpack.c.l.b16 %v1226
        %v5398 = vunpack.c.h.b16 %v1226
        %v5399 = vunpack.c.l.b16 %v1227
        %v5400 = vunpack.c.h.b16 %v1227
        %v5401 = vunpack.c.l.b16 %v1228
        %v5402 = vunpack.c.h.b16 %v1228
        %v5403 = vunpack.c.l.b16 %v1229
        %v5404 = vunpack.c.h.b16 %v1229
        %v5405 = vunpack.c.l.b16 %v1230
        %v5406 = vunpack.c.h.b16 %v1230
        %v5407 = vunpack.c.l.b16 %v1231
        %v5408 = vunpack.c.h.b16 %v1231
        %v5409 = vunpack.c.l.b16 %v1232
        %v5410 = vunpack.c.h.b16 %v1232
        %v5411 = vunpack.c.l.b16 %v1233
        %v5412 = vunpack.c.h.b16 %v1233
        %v5413 = vunpack.c.l.b16 %v1234
        %v5414 = vunpack.c.h.b16 %v1234
        %v5415 = vunpack.c.l.b16 %v1235
        %v5416 = vunpack.c.h.b16 %v1235
        %v5417 = vunpack.c.l.b16 %v1236
        %v5418 = vunpack.c.h.b16 %v1236
        %v5419 = vunpack.c.l.b16 %v1237
        %v5420 = vunpack.c.h.b16 %v1237
        %v5421 = vunpack.c.l.b16 %v1238
        %v5422 = vunpack.c.h.b16 %v1238
        %v5423 = vunpack.c.l.b16 %v1239
        %v5424 = vunpack.c.h.b16 %v1239
        %v5425 = vunpack.c.l.b16 %v1240
        %v5426 = vunpack.c.h.b16 %v1240
        %v5427 = vunpack.c.l.b16 %v1241
        %v5428 = vunpack.c.h.b16 %v1241
        %v5429 = vunpack.c.l.b16 %v1242
        %v5430 = vunpack.c.h.b16 %v1242
        %v5431 = vunpack.c.l.b16 %v1243
        %v5432 = vunpack.c.h.b16 %v1243
        %v5433 = vunpack.c.l.b16 %v1244
        %v5434 = vunpack.c.h.b16 %v1244
        %v5435 = vunpack.c.l.b16 %v1245
        %v5436 = vunpack.c.h.b16 %v1245
        %v5437 = vunpack.c.l.b16 %v1246
        %v5438 = vunpack.c.h.b16 %v1246
        %v5439 = vunpack.c.l.b16 %v1247
        %v5440 = vunpack.c.h.b16 %v1247
        %v5441 = vunpack.c.l.b16 %v1248
        %v5442 = vunpack.c.h.b16 %v1248
        %v5443 = vunpack.c.l.b16 %v1249
        %v5444 = vunpack.c.h.b16 %v1249
        %v5445 = vunpack.c.l.b16 %v1250
        %v5446 = vunpack.c.h.b16 %v1250
        %v5447 = vunpack.c.l.b16 %v1251
        %v5448 = vunpack.c.h.b16 %v1251
        %v5449 = vunpack.c.l.b16 %v1252
        %v5450 = vunpack.c.h.b16 %v1252
        %v5451 = vunpack.c.l.b16 %v1253
        %v5452 = vunpack.c.h.b16 %v1253
        %v5453 = vunpack.c.l.b16 %v1254
        %v5454 = vunpack.c.h.b16 %v1254
        %v5455 = vunpack.c.l.b16 %v1255
        %v5456 = vunpack.c.h.b16 %v1255
        %v5457 = vunpack.c.l.b16 %v1256
        %v5458 = vunpack.c.h.b16 %v1256
        %v5459 = vunpack.c.l.b16 %v1257
        %v5460 = vunpack.c.h.b16 %v1257
        %v5461 = vunpack.c.l.b16 %v1258
        %v5462 = vunpack.c.h.b16 %v1258
        %v5463 = vunpack.c.l.b16 %v1259
        %v5464 = vunpack.c.h.b16 %v1259
        %v5465 = vunpack.c.l.b16 %v1260
        %v5466 = vunpack.c.h.b16 %v1260
        %v5467 = vunpack.c.l.b16 %v1261
        %v5468 = vunpack.c.h.b16 %v1261
        %v5469 = vunpack.c.l.b16 %v1262
        %v5470 = vunpack.c.h.b16 %v1262
        %v5471 = vunpack.c.l.b16 %v1263
        %v5472 = vunpack.c.h.b16 %v1263
        %v5473 = vunpack.c.l.b16 %v1264
        %v5474 = vunpack.c.h.b16 %v1264
        %v5475 = vunpack.c.l.b16 %v1265
        %v5476 = vunpack.c.h.b16 %v1265
        %v5477 = vunpack.c.l.b16 %v1266
        %v5478 = vunpack.c.h.b16 %v1266
        %v5479 = vunpack.c.l.b16 %v1267
        %v5480 = vunpack.c.h.b16 %v1267
        %v5481 = vunpack.c.l.b16 %v1268
        %v5482 = vunpack.c.h.b16 %v1268
        %v5483 = vunpack.c.l.b16 %v1269
        %v5484 = vunpack.c.h.b16 %v1269
        %v5485 = vunpack.c.l.b16 %v1270
        %v5486 = vunpack.c.h.b16 %v1270
        %v5487 = vunpack.c.l.b16 %v1271
        %v5488 = vunpack.c.h.b16 %v1271
        %v5489 = vunpack.c.l.b16 %v1272
        %v5490 = vunpack.c.h.b16 %v1272
        %v5491 = vunpack.c.l.b16 %v1273
        %v5492 = vunpack.c.h.b16 %v1273
        %v5493 = vunpack.c.l.b16 %v1274
        %v5494 = vunpack.c.h.b16 %v1274
        %v5495 = vunpack.c.l.b16 %v1275
        %v5496 = vunpack.c.h.b16 %v1275
        %v5497 = vunpack.c.l.b16 %v1276
        %v5498 = vunpack.c.h.b16 %v1276
        %v5499 = vunpack.c.l.b16 %v1277
        %v5500 = vunpack.c.h.b16 %v1277
        %v5501 = vunpack.c.l.b16 %v1278
        %v5502 = vunpack.c.h.b16 %v1278
        %v5503 = vunpack.c.l.b16 %v1279
        %v5504 = vunpack.c.h.b16 %v1279
        %v5505 = vunpack.c.l.b16 %v1280
        %v5506 = vunpack.c.h.b16 %v1280
        %v5507 = vunpack.c.l.b16 %v1281
        %v5508 = vunpack.c.h.b16 %v1281
        %v5509 = vunpack.c.l.b16 %v1282
        %v5510 = vunpack.c.h.b16 %v1282
        %v5511 = vunpack.c.l.b16 %v1283
        %v5512 = vunpack.c.h.b16 %v1283
        %v5513 = vunpack.c.l.b16 %v1284
        %v5514 = vunpack.c.h.b16 %v1284
        %v5515 = vunpack.c.l.b16 %v1285
        %v5516 = vunpack.c.h.b16 %v1285
        %v5517 = vunpack.c.l.b16 %v1286
        %v5518 = vunpack.c.h.b16 %v1286
        %v5519 = vunpack.c.l.b16 %v1287
        %v5520 = vunpack.c.h.b16 %v1287
        %v5521 = vunpack.c.l.b16 %v1288
        %v5522 = vunpack.c.h.b16 %v1288
        %v5523 = vunpack.c.l.b16 %v1289
        %v5524 = vunpack.c.h.b16 %v1289
        %v5525 = vunpack.c.l.b16 %v1290
        %v5526 = vunpack.c.h.b16 %v1290
        %v5527 = vunpack.c.l.b16 %v1291
        %v5528 = vunpack.c.h.b16 %v1291
        %v5529 = vunpack.c.l.b16 %v1292
        %v5530 = vunpack.c.h.b16 %v1292
        %v5531 = vunpack.c.l.b16 %v1293
        %v5532 = vunpack.c.h.b16 %v1293
        %v5533 = vunpack.c.l.b16 %v1294
        %v5534 = vunpack.c.h.b16 %v1294
        %v5535 = vunpack.c.l.b16 %v1295
        %v5536 = vunpack.c.h.b16 %v1295
        %v5537 = vunpack.c.l.b16 %v1296
        %v5538 = vunpack.c.h.b16 %v1296
        %v5539 = vunpack.c.l.b16 %v1297
        %v5540 = vunpack.c.h.b16 %v1297
        %v5541 = vunpack.c.l.b16 %v1298
        %v5542 = vunpack.c.h.b16 %v1298
        %v5543 = vunpack.c.l.b16 %v1299
        %v5544 = vunpack.c.h.b16 %v1299
        %v5545 = vunpack.c.l.b16 %v1300
        %v5546 = vunpack.c.h.b16 %v1300
        %v5547 = vunpack.c.l.b16 %v1301
        %v5548 = vunpack.c.h.b16 %v1301
        %v5549 = vunpack.c.l.b16 %v1302
        %v5550 = vunpack.c.h.b16 %v1302
        %v5551 = vunpack.c.l.b16 %v1303
        %v5552 = vunpack.c.h.b16 %v1303
        %v5553 = vunpack.c.l.b16 %v1304
        %v5554 = vunpack.c.h.b16 %v1304
        %v5555 = vunpack.c.l.b16 %v1305
        %v5556 = vunpack.c.h.b16 %v1305
        %v5557 = vunpack.c.l.b16 %v1306
        %v5558 = vunpack.c.h.b16 %v1306
        %v5559 = vunpack.c.l.b16 %v1307
        %v5560 = vunpack.c.h.b16 %v1307
        %v5561 = vunpack.c.l.b16 %v1308
        %v5562 = vunpack.c.h.b16 %v1308
        %v5563 = vunpack.c.l.b16 %v1309
        %v5564 = vunpack.c.h.b16 %v1309
        %v5565 = vunpack.c.l.b16 %v1310
        %v5566 = vunpack.c.h.b16 %v1310
        %v5567 = vunpack.c.l.b16 %v1311
        %v5568 = vunpack.c.h.b16 %v1311
        %v5569 = vunpack.c.l.b16 %v1312
        %v5570 = vunpack.c.h.b16 %v1312
        %v5571 = vunpack.c.l.b16 %v1313
        %v5572 = vunpack.c.h.b16 %v1313
        %v5573 = vunpack.c.l.b16 %v1314
        %v5574 = vunpack.c.h.b16 %v1314
        %v5575 = vunpack.c.l.b16 %v1315
        %v5576 = vunpack.c.h.b16 %v1315
        %v5577 = vunpack.c.l.b16 %v1316
        %v5578 = vunpack.c.h.b16 %v1316
        %v5579 = vunpack.c.l.b16 %v1317
        %v5580 = vunpack.c.h.b16 %v1317
        %v5581 = vunpack.c.l.b16 %v1318
        %v5582 = vunpack.c.h.b16 %v1318
        %v5583 = vunpack.c.l.b16 %v1319
        %v5584 = vunpack.c.h.b16 %v1319
        %v5585 = vunpack.c.l.b16 %v1320
        %v5586 = vunpack.c.h.b16 %v1320
        %v5587 = vunpack.c.l.b16 %v1321
        %v5588 = vunpack.c.h.b16 %v1321
        %v5589 = vunpack.c.l.b16 %v1322
        %v5590 = vunpack.c.h.b16 %v1322
        %v5591 = vunpack.c.l.b16 %v1323
        %v5592 = vunpack.c.h.b16 %v1323
        %v5593 = vunpack.c.l.b16 %v1324
        %v5594 = vunpack.c.h.b16 %v1324
        %v5595 = vunpack.c.l.b16 %v1325
        %v5596 = vunpack.c.h.b16 %v1325
        %v5597 = vunpack.c.l.b16 %v1326
        %v5598 = vunpack.c.h.b16 %v1326
        %v5599 = vunpack.c.l.b16 %v1327
        %v5600 = vunpack.c.h.b16 %v1327
        %v5601 = vunpack.c.l.b16 %v1328
        %v5602 = vunpack.c.h.b16 %v1328
        %v5603 = vunpack.c.l.b16 %v1329
        %v5604 = vunpack.c.h.b16 %v1329
        %v5605 = vunpack.c.l.b16 %v1330
        %v5606 = vunpack.c.h.b16 %v1330
        %v5607 = vunpack.c.l.b16 %v1331
        %v5608 = vunpack.c.h.b16 %v1331
        %v5609 = vunpack.c.l.b16 %v1332
        %v5610 = vunpack.c.h.b16 %v1332
        %v5611 = vunpack.c.l.b16 %v1333
        %v5612 = vunpack.c.h.b16 %v1333
        %v5613 = vunpack.c.l.b16 %v1334
        %v5614 = vunpack.c.h.b16 %v1334
        %v5615 = vunpack.c.l.b16 %v1335
        %v5616 = vunpack.c.h.b16 %v1335
        %v5617 = vunpack.c.l.b16 %v1336
        %v5618 = vunpack.c.h.b16 %v1336
        %v5619 = vunpack.c.l.b16 %v1337
        %v5620 = vunpack.c.h.b16 %v1337
        %v5621 = vunpack.c.l.b16 %v1338
        %v5622 = vunpack.c.h.b16 %v1338
        %v5623 = vunpack.c.l.b16 %v1339
        %v5624 = vunpack.c.h.b16 %v1339
        %v5625 = vunpack.c.l.b16 %v1340
        %v5626 = vunpack.c.h.b16 %v1340
        %v5627 = vunpack.c.l.b16 %v1341
        %v5628 = vunpack.c.h.b16 %v1341
        %v5629 = vunpack.c.l.b16 %v1342
        %v5630 = vunpack.c.h.b16 %v1342
        %v5631 = vunpack.c.l.b16 %v1343
        %v5632 = vunpack.c.h.b16 %v1343
        %v5633 = vunpack.c.l.b16 %v1344
        %v5634 = vunpack.c.h.b16 %v1344
        %v5635 = vunpack.c.l.b16 %v1345
        %v5636 = vunpack.c.h.b16 %v1345
        %v5637 = vunpack.c.l.b16 %v1346
        %v5638 = vunpack.c.h.b16 %v1346
        %v5639 = vunpack.c.l.b16 %v1347
        %v5640 = vunpack.c.h.b16 %v1347
        %v5641 = vunpack.c.l.b16 %v1348
        %v5642 = vunpack.c.h.b16 %v1348
        %v5643 = vunpack.c.l.b16 %v1349
        %v5644 = vunpack.c.h.b16 %v1349
        %v5645 = vunpack.c.l.b16 %v1350
        %v5646 = vunpack.c.h.b16 %v1350
        %v5647 = vunpack.c.l.b16 %v1351
        %v5648 = vunpack.c.h.b16 %v1351
        %v5649 = vunpack.c.l.b16 %v1352
        %v5650 = vunpack.c.h.b16 %v1352
        %v5651 = vunpack.c.l.b16 %v1353
        %v5652 = vunpack.c.h.b16 %v1353
        %v5653 = vunpack.c.l.b16 %v1354
        %v5654 = vunpack.c.h.b16 %v1354
        %v5655 = vunpack.c.l.b16 %v1355
        %v5656 = vunpack.c.h.b16 %v1355
        %v5657 = vunpack.c.l.b16 %v1356
        %v5658 = vunpack.c.h.b16 %v1356
        %v5659 = vunpack.c.l.b16 %v1357
        %v5660 = vunpack.c.h.b16 %v1357
        %v5661 = vunpack.c.l.b16 %v1358
        %v5662 = vunpack.c.h.b16 %v1358
        %v5663 = vunpack.c.l.b16 %v1359
        %v5664 = vunpack.c.h.b16 %v1359
        %v5665 = vunpack.c.l.b16 %v1360
        %v5666 = vunpack.c.h.b16 %v1360
        %v5667 = vunpack.c.l.b16 %v1361
        %v5668 = vunpack.c.h.b16 %v1361
        %v5669 = vunpack.c.l.b16 %v1362
        %v5670 = vunpack.c.h.b16 %v1362
        %v5671 = vunpack.c.l.b16 %v1363
        %v5672 = vunpack.c.h.b16 %v1363
        %v5673 = vunpack.c.l.b16 %v1364
        %v5674 = vunpack.c.h.b16 %v1364
        %v5675 = vunpack.c.l.b16 %v1365
        %v5676 = vunpack.c.h.b16 %v1365
        %v5677 = vunpack.c.l.b16 %v1366
        %v5678 = vunpack.c.h.b16 %v1366
        %v5679 = vunpack.c.l.b16 %v1367
        %v5680 = vunpack.c.h.b16 %v1367
        %v5681 = vunpack.c.l.b16 %v1368
        %v5682 = vunpack.c.h.b16 %v1368
        %v5683 = vunpack.c.l.b16 %v1369
        %v5684 = vunpack.c.h.b16 %v1369
        %v5685 = vunpack.c.l.b16 %v1370
        %v5686 = vunpack.c.h.b16 %v1370
        %v5687 = vunpack.c.l.b16 %v1371
        %v5688 = vunpack.c.h.b16 %v1371
        %v5689 = vunpack.c.l.b16 %v1372
        %v5690 = vunpack.c.h.b16 %v1372
        %v5691 = vunpack.c.l.b16 %v1373
        %v5692 = vunpack.c.h.b16 %v1373
        %v5693 = vunpack.c.l.b16 %v1374
        %v5694 = vunpack.c.h.b16 %v1374
        %v5695 = vunpack.c.l.b16 %v1375
        %v5696 = vunpack.c.h.b16 %v1375
        %v5697 = vunpack.c.l.b16 %v1376
        %v5698 = vunpack.c.h.b16 %v1376
        %v5699 = vunpack.c.l.b16 %v1377
        %v5700 = vunpack.c.h.b16 %v1377
        %v5701 = vunpack.c.l.b16 %v1378
        %v5702 = vunpack.c.h.b16 %v1378
        %v5703 = vunpack.c.l.b16 %v1379
        %v5704 = vunpack.c.h.b16 %v1379
        %v5705 = vunpack.c.l.b16 %v1380
        %v5706 = vunpack.c.h.b16 %v1380
        %v5707 = vunpack.c.l.b16 %v1381
        %v5708 = vunpack.c.h.b16 %v1381
        %v5709 = vunpack.c.l.b16 %v1382
        %v5710 = vunpack.c.h.b16 %v1382
        %v5711 = vunpack.c.l.b16 %v1383
        %v5712 = vunpack.c.h.b16 %v1383
        %v5713 = vunpack.c.l.b16 %v1384
        %v5714 = vunpack.c.h.b16 %v1384
        %v5715 = vunpack.c.l.b16 %v1385
        %v5716 = vunpack.c.h.b16 %v1385
        %v5717 = vunpack.c.l.b16 %v1386
        %v5718 = vunpack.c.h.b16 %v1386
        %v5719 = vunpack.c.l.b16 %v1387
        %v5720 = vunpack.c.h.b16 %v1387
        %v5721 = vunpack.c.l.b16 %v1388
        %v5722 = vunpack.c.h.b16 %v1388
        %v5723 = vunpack.c.l.b16 %v1389
        %v5724 = vunpack.c.h.b16 %v1389
        %v5725 = vunpack.c.l.b16 %v1390
        %v5726 = vunpack.c.h.b16 %v1390
        %v5727 = vunpack.c.l.b16 %v1391
        %v5728 = vunpack.c.h.b16 %v1391
        %v5729 = vunpack.c.l.b16 %v1392
        %v5730 = vunpack.c.h.b16 %v1392
        %v5731 = vunpack.c.l.b16 %v1393
        %v5732 = vunpack.c.h.b16 %v1393
        %v5733 = vunpack.c.l.b16 %v1394
        %v5734 = vunpack.c.h.b16 %v1394
        %v5735 = vunpack.c.l.b16 %v1395
        %v5736 = vunpack.c.h.b16 %v1395
        %v5737 = vunpack.c.l.b16 %v1396
        %v5738 = vunpack.c.h.b16 %v1396
        %v5739 = vunpack.c.l.b16 %v1397
        %v5740 = vunpack.c.h.b16 %v1397
        %v5741 = vunpack.c.l.b16 %v1398
        %v5742 = vunpack.c.h.b16 %v1398
        %v5743 = vunpack.c.l.b16 %v1399
        %v5744 = vunpack.c.h.b16 %v1399
        %v5745 = vunpack.c.l.b16 %v1400
        %v5746 = vunpack.c.h.b16 %v1400
        %v5747 = vunpack.c.l.b16 %v1401
        %v5748 = vunpack.c.h.b16 %v1401
        %v5749 = vunpack.c.l.b16 %v1402
        %v5750 = vunpack.c.h.b16 %v1402
        %v5751 = vunpack.c.l.b16 %v1403
        %v5752 = vunpack.c.h.b16 %v1403
        %v5753 = vunpack.c.l.b16 %v1404
        %v5754 = vunpack.c.h.b16 %v1404
        %v5755 = vunpack.c.l.b16 %v1405
        %v5756 = vunpack.c.h.b16 %v1405
        %v5757 = vunpack.c.l.b16 %v1406
        %v5758 = vunpack.c.h.b16 %v1406
        %v5759 = vunpack.c.l.b16 %v1407
        %v5760 = vunpack.c.h.b16 %v1407
        %v5761 = vunpack.c.l.b16 %v1408
        %v5762 = vunpack.c.h.b16 %v1408
        %v5763 = vunpack.c.l.b16 %v1409
        %v5764 = vunpack.c.h.b16 %v1409
        %v5765 = vunpack.c.l.b16 %v1410
        %v5766 = vunpack.c.h.b16 %v1410
        %v5767 = vunpack.c.l.b16 %v1411
        %v5768 = vunpack.c.h.b16 %v1411
        %v5769 = vunpack.c.l.b16 %v1412
        %v5770 = vunpack.c.h.b16 %v1412
        %v5771 = vunpack.c.l.b16 %v1413
        %v5772 = vunpack.c.h.b16 %v1413
        %v5773 = vunpack.c.l.b16 %v1414
        %v5774 = vunpack.c.h.b16 %v1414
        %v5775 = vunpack.c.l.b16 %v1415
        %v5776 = vunpack.c.h.b16 %v1415
        %v5777 = vunpack.c.l.b16 %v1416
        %v5778 = vunpack.c.h.b16 %v1416
        %v5779 = vunpack.c.l.b16 %v1417
        %v5780 = vunpack.c.h.b16 %v1417
        %v5781 = vunpack.c.l.b16 %v1418
        %v5782 = vunpack.c.h.b16 %v1418
        %v5783 = vunpack.c.l.b16 %v1419
        %v5784 = vunpack.c.h.b16 %v1419
        %v5785 = vunpack.c.l.b16 %v1420
        %v5786 = vunpack.c.h.b16 %v1420
        %v5787 = vunpack.c.l.b16 %v1421
        %v5788 = vunpack.c.h.b16 %v1421
        %v5789 = vunpack.c.l.b16 %v1422
        %v5790 = vunpack.c.h.b16 %v1422
        %v5791 = vunpack.c.l.b16 %v1423
        %v5792 = vunpack.c.h.b16 %v1423
        %v5793 = vunpack.c.l.b16 %v1424
        %v5794 = vunpack.c.h.b16 %v1424
        %v5795 = vunpack.c.l.b16 %v1425
        %v5796 = vunpack.c.h.b16 %v1425
        %v5797 = vunpack.c.l.b16 %v1426
        %v5798 = vunpack.c.h.b16 %v1426
        %v5799 = vunpack.c.l.b16 %v1427
        %v5800 = vunpack.c.h.b16 %v1427
        %v5801 = vunpack.c.l.b16 %v1428
        %v5802 = vunpack.c.h.b16 %v1428
        %v5803 = vunpack.c.l.b16 %v1429
        %v5804 = vunpack.c.h.b16 %v1429
        %v5805 = vunpack.c.l.b16 %v1430
        %v5806 = vunpack.c.h.b16 %v1430
        %v5807 = vunpack.c.l.b16 %v1431
        %v5808 = vunpack.c.h.b16 %v1431
        %v5809 = vunpack.c.l.b16 %v1432
        %v5810 = vunpack.c.h.b16 %v1432
        %v5811 = vunpack.c.l.b16 %v1433
        %v5812 = vunpack.c.h.b16 %v1433
        %v5813 = vunpack.c.l.b16 %v1434
        %v5814 = vunpack.c.h.b16 %v1434
        %v5815 = vunpack.c.l.b16 %v1435
        %v5816 = vunpack.c.h.b16 %v1435
        %v5817 = vunpack.c.l.b16 %v1436
        %v5818 = vunpack.c.h.b16 %v1436
        %v5819 = vunpack.c.l.b16 %v1437
        %v5820 = vunpack.c.h.b16 %v1437
        %v5821 = vunpack.c.l.b16 %v1438
        %v5822 = vunpack.c.h.b16 %v1438
        %v5823 = vunpack.c.l.b16 %v1439
        %v5824 = vunpack.c.h.b16 %v1439
        %v5825 = vunpack.c.l.b16 %v1440
        %v5826 = vunpack.c.h.b16 %v1440
        %v5827 = vunpack.c.l.b16 %v1441
        %v5828 = vunpack.c.h.b16 %v1441
        %v5829 = vunpack.c.l.b16 %v1442
        %v5830 = vunpack.c.h.b16 %v1442
        %v5831 = vunpack.c.l.b16 %v1443
        %v5832 = vunpack.c.h.b16 %v1443
        %v5833 = vunpack.c.l.b16 %v1444
        %v5834 = vunpack.c.h.b16 %v1444
        %v5835 = vunpack.c.l.b16 %v1445
        %v5836 = vunpack.c.h.b16 %v1445
        %v5837 = vunpack.c.l.b16 %v1446
        %v5838 = vunpack.c.h.b16 %v1446
        %v5839 = vunpack.c.l.b16 %v1447
        %v5840 = vunpack.c.h.b16 %v1447
        %v5841 = vunpack.c.l.b16 %v1448
        %v5842 = vunpack.c.h.b16 %v1448
        %v5843 = vunpack.c.l.b16 %v1449
        %v5844 = vunpack.c.h.b16 %v1449
        %v5845 = vunpack.c.l.b16 %v1450
        %v5846 = vunpack.c.h.b16 %v1450
        %v5847 = vunpack.c.l.b16 %v1451
        %v5848 = vunpack.c.h.b16 %v1451
        %v5849 = vunpack.c.l.b16 %v1452
        %v5850 = vunpack.c.h.b16 %v1452
        %v5851 = vunpack.c.l.b16 %v1453
        %v5852 = vunpack.c.h.b16 %v1453
        %v5853 = vunpack.c.l.b16 %v1454
        %v5854 = vunpack.c.h.b16 %v1454
        %v5855 = vunpack.c.l.b16 %v1455
        %v5856 = vunpack.c.h.b16 %v1455
        %v5857 = vunpack.c.l.b16 %v1456
        %v5858 = vunpack.c.h.b16 %v1456
        %v5859 = vunpack.c.l.b16 %v1457
        %v5860 = vunpack.c.h.b16 %v1457
        %v5861 = vunpack.c.l.b16 %v1458
        %v5862 = vunpack.c.h.b16 %v1458
        %v5863 = vunpack.c.l.b16 %v1459
        %v5864 = vunpack.c.h.b16 %v1459
        %v5865 = vunpack.c.l.b16 %v1460
        %v5866 = vunpack.c.h.b16 %v1460
        %v5867 = vunpack.c.l.b16 %v1461
        %v5868 = vunpack.c.h.b16 %v1461
        %v5869 = vunpack.c.l.b16 %v1462
        %v5870 = vunpack.c.h.b16 %v1462
        %v5871 = vunpack.c.l.b16 %v1463
        %v5872 = vunpack.c.h.b16 %v1463
        %v5873 = vunpack.c.l.b16 %v1464
        %v5874 = vunpack.c.h.b16 %v1464
        %v5875 = vunpack.c.l.b16 %v1465
        %v5876 = vunpack.c.h.b16 %v1465
        %v5877 = vunpack.c.l.b16 %v1466
        %v5878 = vunpack.c.h.b16 %v1466
        %v5879 = vunpack.c.l.b16 %v1467
        %v5880 = vunpack.c.h.b16 %v1467
        %v5881 = vunpack.c.l.b16 %v1468
        %v5882 = vunpack.c.h.b16 %v1468
        %v5883 = vunpack.c.l.b16 %v1469
        %v5884 = vunpack.c.h.b16 %v1469
        %v5885 = vunpack.c.l.b16 %v1470
        %v5886 = vunpack.c.h.b16 %v1470
        %v5887 = vunpack.c.l.b16 %v1471
        %v5888 = vunpack.c.h.b16 %v1471
        %v5889 = vunpack.c.l.b16 %v1472
        %v5890 = vunpack.c.h.b16 %v1472
        %v5891 = vunpack.c.l.b16 %v1473
        %v5892 = vunpack.c.h.b16 %v1473
        %v5893 = vunpack.c.l.b16 %v1474
        %v5894 = vunpack.c.h.b16 %v1474
        %v5895 = vpack.c.b16 %v3337, %v3335
        %v5896 = vpack.c.b16 %v3338, %v3336
        %v5897 = vpack.c.b16 %v3341, %v3339
        %v5898 = vpack.c.b16 %v3342, %v3340
        %v5899 = vpack.c.b16 %v3345, %v3343
        %v5900 = vpack.c.b16 %v3346, %v3344
        %v5901 = vpack.c.b16 %v3349, %v3347
        %v5902 = vpack.c.b16 %v3350, %v3348
        %v5903 = vpack.c.b16 %v3353, %v3351
        %v5904 = vpack.c.b16 %v3354, %v3352
        %v5905 = vpack.c.b16 %v3357, %v3355
        %v5906 = vpack.c.b16 %v3358, %v3356
        %v5907 = vpack.c.b16 %v3361, %v3359
        %v5908 = vpack.c.b16 %v3362, %v3360
        %v5909 = vpack.c.b16 %v3365, %v3363
        %v5910 = vpack.c.b16 %v3366, %v3364
        %v5911 = vpack.c.b16 %v3369, %v3367
        %v5912 = vpack.c.b16 %v3370, %v3368
        %v5913 = vpack.c.b16 %v3373, %v3371
        %v5914 = vpack.c.b16 %v3374, %v3372
        %v5915 = vpack.c.b16 %v3377, %v3375
        %v5916 = vpack.c.b16 %v3378, %v3376
        %v5917 = vpack.c.b16 %v3381, %v3379
        %v5918 = vpack.c.b16 %v3382, %v3380
        %v5919 = vpack.c.b16 %v3385, %v3383
        %v5920 = vpack.c.b16 %v3386, %v3384
        %v5921 = vpack.c.b16 %v3389, %v3387
        %v5922 = vpack.c.b16 %v3390, %v3388
        %v5923 = vpack.c.b16 %v3393, %v3391
        %v5924 = vpack.c.b16 %v3394, %v3392
        %v5925 = vpack.c.b16 %v3397, %v3395
        %v5926 = vpack.c.b16 %v3398, %v3396
        %v5927 = vpack.c.b16 %v3401, %v3399
        %v5928 = vpack.c.b16 %v3402, %v3400
        %v5929 = vpack.c.b16 %v3405, %v3403
        %v5930 = vpack.c.b16 %v3406, %v3404
        %v5931 = vpack.c.b16 %v3409, %v3407
        %v5932 = vpack.c.b16 %v3410, %v3408
        %v5933 = vpack.c.b16 %v3413, %v3411
        %v5934 = vpack.c.b16 %v3414, %v3412
        %v5935 = vpack.c.b16 %v3417, %v3415
        %v5936 = vpack.c.b16 %v3418, %v3416
        %v5937 = vpack.c.b16 %v3421, %v3419
        %v5938 = vpack.c.b16 %v3422, %v3420
        %v5939 = vpack.c.b16 %v3425, %v3423
        %v5940 = vpack.c.b16 %v3426, %v3424
        %v5941 = vpack.c.b16 %v3429, %v3427
        %v5942 = vpack.c.b16 %v3430, %v3428
        %v5943 = vpack.c.b16 %v3433, %v3431
        %v5944 = vpack.c.b16 %v3434, %v3432
        %v5945 = vpack.c.b16 %v3437, %v3435
        %v5946 = vpack.c.b16 %v3438, %v3436
        %v5947 = vpack.c.b16 %v3441, %v3439
        %v5948 = vpack.c.b16 %v3442, %v3440
        %v5949 = vpack.c.b16 %v3445, %v3443
        %v5950 = vpack.c.b16 %v3446, %v3444
        %v5951 = vpack.c.b16 %v3449, %v3447
        %v5952 = vpack.c.b16 %v3450, %v3448
        %v5953 = vpack.c.b16 %v3453, %v3451
        %v5954 = vpack.c.b16 %v3454, %v3452
        %v5955 = vpack.c.b16 %v3457, %v3455
        %v5956 = vpack.c.b16 %v3458, %v3456
        %v5957 = vpack.c.b16 %v3461, %v3459
        %v5958 = vpack.c.b16 %v3462, %v3460
        %v5959 = vpack.c.b16 %v3465, %v3463
        %v5960 = vpack.c.b16 %v3466, %v3464
        %v5961 = vpack.c.b16 %v3469, %v3467
        %v5962 = vpack.c.b16 %v3470, %v3468
        %v5963 = vpack.c.b16 %v3473, %v3471
        %v5964 = vpack.c.b16 %v3474, %v3472
        %v5965 = vpack.c.b16 %v3477, %v3475
        %v5966 = vpack.c.b16 %v3478, %v3476
        %v5967 = vpack.c.b16 %v3481, %v3479
        %v5968 = vpack.c.b16 %v3482, %v3480
        %v5969 = vpack.c.b16 %v3485, %v3483
        %v5970 = vpack.c.b16 %v3486, %v3484
        %v5971 = vpack.c.b16 %v3489, %v3487
        %v5972 = vpack.c.b16 %v3490, %v3488
        %v5973 = vpack.c.b16 %v3493, %v3491
        %v5974 = vpack.c.b16 %v3494, %v3492
        %v5975 = vpack.c.b16 %v3497, %v3495
        %v5976 = vpack.c.b16 %v3498, %v3496
        %v5977 = vpack.c.b16 %v3501, %v3499
        %v5978 = vpack.c.b16 %v3502, %v3500
        %v5979 = vpack.c.b16 %v3505, %v3503
        %v5980 = vpack.c.b16 %v3506, %v3504
        %v5981 = vpack.c.b16 %v3509, %v3507
        %v5982 = vpack.c.b16 %v3510, %v3508
        %v5983 = vpack.c.b16 %v3513, %v3511
        %v5984 = vpack.c.b16 %v3514, %v3512
        %v5985 = vpack.c.b16 %v3517, %v3515
        %v5986 = vpack.c.b16 %v3518, %v3516
        %v5987 = vpack.c.b16 %v3521, %v3519
        %v5988 = vpack.c.b16 %v3522, %v3520
        %v5989 = vpack.c.b16 %v3525, %v3523
        %v5990 = vpack.c.b16 %v3526, %v3524
        %v5991 = vpack.c.b16 %v3529, %v3527
        %v5992 = vpack.c.b16 %v3530, %v3528
        %v5993 = vpack.c.b16 %v3533, %v3531
        %v5994 = vpack.c.b16 %v3534, %v3532
        %v5995 = vpack.c.b16 %v3537, %v3535
        %v5996 = vpack.c.b16 %v3538, %v3536
        %v5997 = vpack.c.b16 %v3541, %v3539
        %v5998 = vpack.c.b16 %v3542, %v3540
        %v5999 = vpack.c.b16 %v3545, %v3543
        %v6000 = vpack.c.b16 %v3546, %v3544
        %v6001 = vpack.c.b16 %v3549, %v3547
        %v6002 = vpack.c.b16 %v3550, %v3548
        %v6003 = vpack.c.b16 %v3553, %v3551
        %v6004 = vpack.c.b16 %v3554, %v3552
        %v6005 = vpack.c.b16 %v3557, %v3555
        %v6006 = vpack.c.b16 %v3558, %v3556
        %v6007 = vpack.c.b16 %v3561, %v3559
        %v6008 = vpack.c.b16 %v3562, %v3560
        %v6009 = vpack.c.b16 %v3565, %v3563
        %v6010 = vpack.c.b16 %v3566, %v3564
        %v6011 = vpack.c.b16 %v3569, %v3567
        %v6012 = vpack.c.b16 %v3570, %v3568
        %v6013 = vpack.c.b16 %v3573, %v3571
        %v6014 = vpack.c.b16 %v3574, %v3572
        %v6015 = vpack.c.b16 %v3577, %v3575
        %v6016 = vpack.c.b16 %v3578, %v3576
        %v6017 = vpack.c.b16 %v3581, %v3579
        %v6018 = vpack.c.b16 %v3582, %v3580
        %v6019 = vpack.c.b16 %v3585, %v3583
        %v6020 = vpack.c.b16 %v3586, %v3584
        %v6021 = vpack.c.b16 %v3589, %v3587
        %v6022 = vpack.c.b16 %v3590, %v3588
        %v6023 = vpack.c.b16 %v3593, %v3591
        %v6024 = vpack.c.b16 %v3594, %v3592
        %v6025 = vpack.c.b16 %v3597, %v3595
        %v6026 = vpack.c.b16 %v3598, %v3596
        %v6027 = vpack.c.b16 %v3601, %v3599
        %v6028 = vpack.c.b16 %v3602, %v3600
        %v6029 = vpack.c.b16 %v3605, %v3603
        %v6030 = vpack.c.b16 %v3606, %v3604
        %v6031 = vpack.c.b16 %v3609, %v3607
        %v6032 = vpack.c.b16 %v3610, %v3608
        %v6033 = vpack.c.b16 %v3613, %v3611
        %v6034 = vpack.c.b16 %v3614, %v3612
        %v6035 = vpack.c.b16 %v3617, %v3615
        %v6036 = vpack.c.b16 %v3618, %v3616
        %v6037 = vpack.c.b16 %v3621, %v3619
        %v6038 = vpack.c.b16 %v3622, %v3620
        %v6039 = vpack.c.b16 %v3625, %v3623
        %v6040 = vpack.c.b16 %v3626, %v3624
        %v6041 = vpack.c.b16 %v3629, %v3627
        %v6042 = vpack.c.b16 %v3630, %v3628
        %v6043 = vpack.c.b16 %v3633, %v3631
        %v6044 = vpack.c.b16 %v3634, %v3632
        %v6045 = vpack.c.b16 %v3637, %v3635
        %v6046 = vpack.c.b16 %v3638, %v3636
        %v6047 = vpack.c.b16 %v3641, %v3639
        %v6048 = vpack.c.b16 %v3642, %v3640
        %v6049 = vpack.c.b16 %v3645, %v3643
        %v6050 = vpack.c.b16 %v3646, %v3644
        %v6051 = vpack.c.b16 %v3649, %v3647
        %v6052 = vpack.c.b16 %v3650, %v3648
        %v6053 = vpack.c.b16 %v3653, %v3651
        %v6054 = vpack.c.b16 %v3654, %v3652
        %v6055 = vpack.c.b16 %v3657, %v3655
        %v6056 = vpack.c.b16 %v3658, %v3656
        %v6057 = vpack.c.b16 %v3661, %v3659
        %v6058 = vpack.c.b16 %v3662, %v3660
        %v6059 = vpack.c.b16 %v3665, %v3663
        %v6060 = vpack.c.b16 %v3666, %v3664
        %v6061 = vpack.c.b16 %v3669, %v3667
        %v6062 = vpack.c.b16 %v3670, %v3668
        %v6063 = vpack.c.b16 %v3673, %v3671
        %v6064 = vpack.c.b16 %v3674, %v3672
        %v6065 = vpack.c.b16 %v3677, %v3675
        %v6066 = vpack.c.b16 %v3678, %v3676
        %v6067 = vpack.c.b16 %v3681, %v3679
        %v6068 = vpack.c.b16 %v3682, %v3680
        %v6069 = vpack.c.b16 %v3685, %v3683
        %v6070 = vpack.c.b16 %v3686, %v3684
        %v6071 = vpack.c.b16 %v3689, %v3687
        %v6072 = vpack.c.b16 %v3690, %v3688
        %v6073 = vpack.c.b16 %v3693, %v3691
        %v6074 = vpack.c.b16 %v3694, %v3692
        %v6075 = vpack.c.b16 %v3697, %v3695
        %v6076 = vpack.c.b16 %v3698, %v3696
        %v6077 = vpack.c.b16 %v3701, %v3699
        %v6078 = vpack.c.b16 %v3702, %v3700
        %v6079 = vpack.c.b16 %v3705, %v3703
        %v6080 = vpack.c.b16 %v3706, %v3704
        %v6081 = vpack.c.b16 %v3709, %v3707
        %v6082 = vpack.c.b16 %v3710, %v3708
        %v6083 = vpack.c.b16 %v3713, %v3711
        %v6084 = vpack.c.b16 %v3714, %v3712
        %v6085 = vpack.c.b16 %v3717, %v3715
        %v6086 = vpack.c.b16 %v3718, %v3716
        %v6087 = vpack.c.b16 %v3721, %v3719
        %v6088 = vpack.c.b16 %v3722, %v3720
        %v6089 = vpack.c.b16 %v3725, %v3723
        %v6090 = vpack.c.b16 %v3726, %v3724
        %v6091 = vpack.c.b16 %v3729, %v3727
        %v6092 = vpack.c.b16 %v3730, %v3728
        %v6093 = vpack.c.b16 %v3733, %v3731
        %v6094 = vpack.c.b16 %v3734, %v3732
        %v6095 = vpack.c.b16 %v3737, %v3735
        %v6096 = vpack.c.b16 %v3738, %v3736
        %v6097 = vpack.c.b16 %v3741, %v3739
        %v6098 = vpack.c.b16 %v3742, %v3740
        %v6099 = vpack.c.b16 %v3745, %v3743
        %v6100 = vpack.c.b16 %v3746, %v3744
        %v6101 = vpack.c.b16 %v3749, %v3747
        %v6102 = vpack.c.b16 %v3750, %v3748
        %v6103 = vpack.c.b16 %v3753, %v3751
        %v6104 = vpack.c.b16 %v3754, %v3752
        %v6105 = vpack.c.b16 %v3757, %v3755
        %v6106 = vpack.c.b16 %v3758, %v3756
        %v6107 = vpack.c.b16 %v3761, %v3759
        %v6108 = vpack.c.b16 %v3762, %v3760
        %v6109 = vpack.c.b16 %v3765, %v3763
        %v6110 = vpack.c.b16 %v3766, %v3764
        %v6111 = vpack.c.b16 %v3769, %v3767
        %v6112 = vpack.c.b16 %v3770, %v3768
        %v6113 = vpack.c.b16 %v3773, %v3771
        %v6114 = vpack.c.b16 %v3774, %v3772
        %v6115 = vpack.c.b16 %v3777, %v3775
        %v6116 = vpack.c.b16 %v3778, %v3776
        %v6117 = vpack.c.b16 %v3781, %v3779
        %v6118 = vpack.c.b16 %v3782, %v3780
        %v6119 = vpack.c.b16 %v3785, %v3783
        %v6120 = vpack.c.b16 %v3786, %v3784
        %v6121 = vpack.c.b16 %v3789, %v3787
        %v6122 = vpack.c.b16 %v3790, %v3788
        %v6123 = vpack.c.b16 %v3793, %v3791
        %v6124 = vpack.c.b16 %v3794, %v3792
        %v6125 = vpack.c.b16 %v3797, %v3795
        %v6126 = vpack.c.b16 %v3798, %v3796
        %v6127 = vpack.c.b16 %v3801, %v3799
        %v6128 = vpack.c.b16 %v3802, %v3800
        %v6129 = vpack.c.b16 %v3805, %v3803
        %v6130 = vpack.c.b16 %v3806, %v3804
        %v6131 = vpack.c.b16 %v3809, %v3807
        %v6132 = vpack.c.b16 %v3810, %v3808
        %v6133 = vpack.c.b16 %v3813, %v3811
        %v6134 = vpack.c.b16 %v3814, %v3812
        %v6135 = vpack.c.b16 %v3817, %v3815
        %v6136 = vpack.c.b16 %v3818, %v3816
        %v6137 = vpack.c.b16 %v3821, %v3819
        %v6138 = vpack.c.b16 %v3822, %v3820
        %v6139 = vpack.c.b16 %v3825, %v3823
        %v6140 = vpack.c.b16 %v3826, %v3824
        %v6141 = vpack.c.b16 %v3829, %v3827
        %v6142 = vpack.c.b16 %v3830, %v3828
        %v6143 = vpack.c.b16 %v3833, %v3831
        %v6144 = vpack.c.b16 %v3834, %v3832
        %v6145 = vpack.c.b16 %v3837, %v3835
        %v6146 = vpack.c.b16 %v3838, %v3836
        %v6147 = vpack.c.b16 %v3841, %v3839
        %v6148 = vpack.c.b16 %v3842, %v3840
        %v6149 = vpack.c.b16 %v3845, %v3843
        %v6150 = vpack.c.b16 %v3846, %v3844
        %v6151 = vpack.c.b16 %v3849, %v3847
        %v6152 = vpack.c.b16 %v3850, %v3848
        %v6153 = vpack.c.b16 %v3853, %v3851
        %v6154 = vpack.c.b16 %v3854, %v3852
        %v6155 = vpack.c.b16 %v3857, %v3855
        %v6156 = vpack.c.b16 %v3858, %v3856
        %v6157 = vpack.c.b16 %v3861, %v3859
        %v6158 = vpack.c.b16 %v3862, %v3860
        %v6159 = vpack.c.b16 %v3865, %v3863
        %v6160 = vpack.c.b16 %v3866, %v3864
        %v6161 = vpack.c.b16 %v3869, %v3867
        %v6162 = vpack.c.b16 %v3870, %v3868
        %v6163 = vpack.c.b16 %v3873, %v3871
        %v6164 = vpack.c.b16 %v3874, %v3872
        %v6165 = vpack.c.b16 %v3877, %v3875
        %v6166 = vpack.c.b16 %v3878, %v3876
        %v6167 = vpack.c.b16 %v3881, %v3879
        %v6168 = vpack.c.b16 %v3882, %v3880
        %v6169 = vpack.c.b16 %v3885, %v3883
        %v6170 = vpack.c.b16 %v3886, %v3884
        %v6171 = vpack.c.b16 %v3889, %v3887
        %v6172 = vpack.c.b16 %v3890, %v3888
        %v6173 = vpack.c.b16 %v3893, %v3891
        %v6174 = vpack.c.b16 %v3894, %v3892
        %v6175 = vpack.c.b16 %v3897, %v3895
        %v6176 = vpack.c.b16 %v3898, %v3896
        %v6177 = vpack.c.b16 %v3901, %v3899
        %v6178 = vpack.c.b16 %v3902, %v3900
        %v6179 = vpack.c.b16 %v3905, %v3903
        %v6180 = vpack.c.b16 %v3906, %v3904
        %v6181 = vpack.c.b16 %v3909, %v3907
        %v6182 = vpack.c.b16 %v3910, %v3908
        %v6183 = vpack.c.b16 %v3913, %v3911
        %v6184 = vpack.c.b16 %v3914, %v3912
        %v6185 = vpack.c.b16 %v3917, %v3915
        %v6186 = vpack.c.b16 %v3918, %v3916
        %v6187 = vpack.c.b16 %v3921, %v3919
        %v6188 = vpack.c.b16 %v3922, %v3920
        %v6189 = vpack.c.b16 %v3925, %v3923
        %v6190 = vpack.c.b16 %v3926, %v3924
        %v6191 = vpack.c.b16 %v3929, %v3927
        %v6192 = vpack.c.b16 %v3930, %v3928
        %v6193 = vpack.c.b16 %v3933, %v3931
        %v6194 = vpack.c.b16 %v3934, %v3932
        %v6195 = vpack.c.b16 %v3937, %v3935
        %v6196 = vpack.c.b16 %v3938, %v3936
        %v6197 = vpack.c.b16 %v3941, %v3939
        %v6198 = vpack.c.b16 %v3942, %v3940
        %v6199 = vpack.c.b16 %v3945, %v3943
        %v6200 = vpack.c.b16 %v3946, %v3944
        %v6201 = vpack.c.b16 %v3949, %v3947
        %v6202 = vpack.c.b16 %v3950, %v3948
        %v6203 = vpack.c.b16 %v3953, %v3951
        %v6204 = vpack.c.b16 %v3954, %v3952
        %v6205 = vpack.c.b16 %v3957, %v3955
        %v6206 = vpack.c.b16 %v3958, %v3956
        %v6207 = vpack.c.b16 %v3961, %v3959
        %v6208 = vpack.c.b16 %v3962, %v3960
        %v6209 = vpack.c.b16 %v3965, %v3963
        %v6210 = vpack.c.b16 %v3966, %v3964
        %v6211 = vpack.c.b16 %v3969, %v3967
        %v6212 = vpack.c.b16 %v3970, %v3968
        %v6213 = vpack.c.b16 %v3973, %v3971
        %v6214 = vpack.c.b16 %v3974, %v3972
        %v6215 = vpack.c.b16 %v3977, %v3975
        %v6216 = vpack.c.b16 %v3978, %v3976
        %v6217 = vpack.c.b16 %v3981, %v3979
        %v6218 = vpack.c.b16 %v3982, %v3980
        %v6219 = vpack.c.b16 %v3985, %v3983
        %v6220 = vpack.c.b16 %v3986, %v3984
        %v6221 = vpack.c.b16 %v3989, %v3987
        %v6222 = vpack.c.b16 %v3990, %v3988
        %v6223 = vpack.c.b16 %v3993, %v3991
        %v6224 = vpack.c.b16 %v3994, %v3992
        %v6225 = vpack.c.b16 %v3997, %v3995
        %v6226 = vpack.c.b16 %v3998, %v3996
        %v6227 = vpack.c.b16 %v4001, %v3999
        %v6228 = vpack.c.b16 %v4002, %v4000
        %v6229 = vpack.c.b16 %v4005, %v4003
        %v6230 = vpack.c.b16 %v4006, %v4004
        %v6231 = vpack.c.b16 %v4009, %v4007
        %v6232 = vpack.c.b16 %v4010, %v4008
        %v6233 = vpack.c.b16 %v4013, %v4011
        %v6234 = vpack.c.b16 %v4014, %v4012
        %v6235 = vpack.c.b16 %v4017, %v4015
        %v6236 = vpack.c.b16 %v4018, %v4016
        %v6237 = vpack.c.b16 %v4021, %v4019
        %v6238 = vpack.c.b16 %v4022, %v4020
        %v6239 = vpack.c.b16 %v4025, %v4023
        %v6240 = vpack.c.b16 %v4026, %v4024
        %v6241 = vpack.c.b16 %v4029, %v4027
        %v6242 = vpack.c.b16 %v4030, %v4028
        %v6243 = vpack.c.b16 %v4033, %v4031
        %v6244 = vpack.c.b16 %v4034, %v4032
        %v6245 = vpack.c.b16 %v4037, %v4035
        %v6246 = vpack.c.b16 %v4038, %v4036
        %v6247 = vpack.c.b16 %v4041, %v4039
        %v6248 = vpack.c.b16 %v4042, %v4040
        %v6249 = vpack.c.b16 %v4045, %v4043
        %v6250 = vpack.c.b16 %v4046, %v4044
        %v6251 = vpack.c.b16 %v4049, %v4047
        %v6252 = vpack.c.b16 %v4050, %v4048
        %v6253 = vpack.c.b16 %v4053, %v4051
        %v6254 = vpack.c.b16 %v4054, %v4052
        %v6255 = vpack.c.b16 %v4057, %v4055
        %v6256 = vpack.c.b16 %v4058, %v4056
        %v6257 = vpack.c.b16 %v4061, %v4059
        %v6258 = vpack.c.b16 %v4062, %v4060
        %v6259 = vpack.c.b16 %v4065, %v4063
        %v6260 = vpack.c.b16 %v4066, %v4064
        %v6261 = vpack.c.b16 %v4069, %v4067
        %v6262 = vpack.c.b16 %v4070, %v4068
        %v6263 = vpack.c.b16 %v4073, %v4071
        %v6264 = vpack.c.b16 %v4074, %v4072
        %v6265 = vpack.c.b16 %v4077, %v4075
        %v6266 = vpack.c.b16 %v4078, %v4076
        %v6267 = vpack.c.b16 %v4081, %v4079
        %v6268 = vpack.c.b16 %v4082, %v4080
        %v6269 = vpack.c.b16 %v4085, %v4083
        %v6270 = vpack.c.b16 %v4086, %v4084
        %v6271 = vpack.c.b16 %v4089, %v4087
        %v6272 = vpack.c.b16 %v4090, %v4088
        %v6273 = vpack.c.b16 %v4093, %v4091
        %v6274 = vpack.c.b16 %v4094, %v4092
        %v6275 = vpack.c.b16 %v4097, %v4095
        %v6276 = vpack.c.b16 %v4098, %v4096
        %v6277 = vpack.c.b16 %v4101, %v4099
        %v6278 = vpack.c.b16 %v4102, %v4100
        %v6279 = vpack.c.b16 %v4105, %v4103
        %v6280 = vpack.c.b16 %v4106, %v4104
        %v6281 = vpack.c.b16 %v4109, %v4107
        %v6282 = vpack.c.b16 %v4110, %v4108
        %v6283 = vpack.c.b16 %v4113, %v4111
        %v6284 = vpack.c.b16 %v4114, %v4112
        %v6285 = vpack.c.b16 %v4117, %v4115
        %v6286 = vpack.c.b16 %v4118, %v4116
        %v6287 = vpack.c.b16 %v4121, %v4119
        %v6288 = vpack.c.b16 %v4122, %v4120
        %v6289 = vpack.c.b16 %v4125, %v4123
        %v6290 = vpack.c.b16 %v4126, %v4124
        %v6291 = vpack.c.b16 %v4129, %v4127
        %v6292 = vpack.c.b16 %v4130, %v4128
        %v6293 = vpack.c.b16 %v4133, %v4131
        %v6294 = vpack.c.b16 %v4134, %v4132
        %v6295 = vpack.c.b16 %v4137, %v4135
        %v6296 = vpack.c.b16 %v4138, %v4136
        %v6297 = vpack.c.b16 %v4141, %v4139
        %v6298 = vpack.c.b16 %v4142, %v4140
        %v6299 = vpack.c.b16 %v4145, %v4143
        %v6300 = vpack.c.b16 %v4146, %v4144
        %v6301 = vpack.c.b16 %v4149, %v4147
        %v6302 = vpack.c.b16 %v4150, %v4148
        %v6303 = vpack.c.b16 %v4153, %v4151
        %v6304 = vpack.c.b16 %v4154, %v4152
        %v6305 = vpack.c.b16 %v4157, %v4155
        %v6306 = vpack.c.b16 %v4158, %v4156
        %v6307 = vpack.c.b16 %v4161, %v4159
        %v6308 = vpack.c.b16 %v4162, %v4160
        %v6309 = vpack.c.b16 %v4165, %v4163
        %v6310 = vpack.c.b16 %v4166, %v4164
        %v6311 = vpack.c.b16 %v4169, %v4167
        %v6312 = vpack.c.b16 %v4170, %v4168
        %v6313 = vpack.c.b16 %v4173, %v4171
        %v6314 = vpack.c.b16 %v4174, %v4172
        %v6315 = vpack.c.b16 %v4177, %v4175
        %v6316 = vpack.c.b16 %v4178, %v4176
        %v6317 = vpack.c.b16 %v4181, %v4179
        %v6318 = vpack.c.b16 %v4182, %v4180
        %v6319 = vpack.c.b16 %v4185, %v4183
        %v6320 = vpack.c.b16 %v4186, %v4184
        %v6321 = vpack.c.b16 %v4189, %v4187
        %v6322 = vpack.c.b16 %v4190, %v4188
        %v6323 = vpack.c.b16 %v4193, %v4191
        %v6324 = vpack.c.b16 %v4194, %v4192
        %v6325 = vpack.c.b16 %v4197, %v4195
        %v6326 = vpack.c.b16 %v4198, %v4196
        %v6327 = vpack.c.b16 %v4201, %v4199
        %v6328 = vpack.c.b16 %v4202, %v4200
        %v6329 = vpack.c.b16 %v4205, %v4203
        %v6330 = vpack.c.b16 %v4206, %v4204
        %v6331 = vpack.c.b16 %v4209, %v4207
        %v6332 = vpack.c.b16 %v4210, %v4208
        %v6333 = vpack.c.b16 %v4213, %v4211
        %v6334 = vpack.c.b16 %v4214, %v4212
        %v6335 = vpack.c.b16 %v4217, %v4215
        %v6336 = vpack.c.b16 %v4218, %v4216
        %v6337 = vpack.c.b16 %v4221, %v4219
        %v6338 = vpack.c.b16 %v4222, %v4220
        %v6339 = vpack.c.b16 %v4225, %v4223
        %v6340 = vpack.c.b16 %v4226, %v4224
        %v6341 = vpack.c.b16 %v4229, %v4227
        %v6342 = vpack.c.b16 %v4230, %v4228
        %v6343 = vpack.c.b16 %v4233, %v4231
        %v6344 = vpack.c.b16 %v4234, %v4232
        %v6345 = vpack.c.b16 %v4237, %v4235
        %v6346 = vpack.c.b16 %v4238, %v4236
        %v6347 = vpack.c.b16 %v4241, %v4239
        %v6348 = vpack.c.b16 %v4242, %v4240
        %v6349 = vpack.c.b16 %v4245, %v4243
        %v6350 = vpack.c.b16 %v4246, %v4244
        %v6351 = vpack.c.b16 %v4249, %v4247
        %v6352 = vpack.c.b16 %v4250, %v4248
        %v6353 = vpack.c.b16 %v4253, %v4251
        %v6354 = vpack.c.b16 %v4254, %v4252
        %v6355 = vpack.c.b16 %v4257, %v4255
        %v6356 = vpack.c.b16 %v4258, %v4256
        %v6357 = vpack.c.b16 %v4261, %v4259
        %v6358 = vpack.c.b16 %v4262, %v4260
        %v6359 = vpack.c.b16 %v4265, %v4263
        %v6360 = vpack.c.b16 %v4266, %v4264
        %v6361 = vpack.c.b16 %v4269, %v4267
        %v6362 = vpack.c.b16 %v4270, %v4268
        %v6363 = vpack.c.b16 %v4273, %v4271
        %v6364 = vpack.c.b16 %v4274, %v4272
        %v6365 = vpack.c.b16 %v4277, %v4275
        %v6366 = vpack.c.b16 %v4278, %v4276
        %v6367 = vpack.c.b16 %v4281, %v4279
        %v6368 = vpack.c.b16 %v4282, %v4280
        %v6369 = vpack.c.b16 %v4285, %v4283
        %v6370 = vpack.c.b16 %v4286, %v4284
        %v6371 = vpack.c.b16 %v4289, %v4287
        %v6372 = vpack.c.b16 %v4290, %v4288
        %v6373 = vpack.c.b16 %v4293, %v4291
        %v6374 = vpack.c.b16 %v4294, %v4292
        %v6375 = vpack.c.b16 %v4297, %v4295
        %v6376 = vpack.c.b16 %v4298, %v4296
        %v6377 = vpack.c.b16 %v4301, %v4299
        %v6378 = vpack.c.b16 %v4302, %v4300
        %v6379 = vpack.c.b16 %v4305, %v4303
        %v6380 = vpack.c.b16 %v4306, %v4304
        %v6381 = vpack.c.b16 %v4309, %v4307
        %v6382 = vpack.c.b16 %v4310, %v4308
        %v6383 = vpack.c.b16 %v4313, %v4311
        %v6384 = vpack.c.b16 %v4314, %v4312
        %v6385 = vpack.c.b16 %v4317, %v4315
        %v6386 = vpack.c.b16 %v4318, %v4316
        %v6387 = vpack.c.b16 %v4321, %v4319
        %v6388 = vpack.c.b16 %v4322, %v4320
        %v6389 = vpack.c.b16 %v4325, %v4323
        %v6390 = vpack.c.b16 %v4326, %v4324
        %v6391 = vpack.c.b16 %v4329, %v4327
        %v6392 = vpack.c.b16 %v4330, %v4328
        %v6393 = vpack.c.b16 %v4333, %v4331
        %v6394 = vpack.c.b16 %v4334, %v4332
        %v6395 = vpack.c.b16 %v4337, %v4335
        %v6396 = vpack.c.b16 %v4338, %v4336
        %v6397 = vpack.c.b16 %v4341, %v4339
        %v6398 = vpack.c.b16 %v4342, %v4340
        %v6399 = vpack.c.b16 %v4345, %v4343
        %v6400 = vpack.c.b16 %v4346, %v4344
        %v6401 = vpack.c.b16 %v4349, %v4347
        %v6402 = vpack.c.b16 %v4350, %v4348
        %v6403 = vpack.c.b16 %v4353, %v4351
        %v6404 = vpack.c.b16 %v4354, %v4352
        %v6405 = vpack.c.b16 %v4357, %v4355
        %v6406 = vpack.c.b16 %v4358, %v4356
        %v6407 = vpack.c.b16 %v4361, %v4359
        %v6408 = vpack.c.b16 %v4362, %v4360
        %v6409 = vpack.c.b16 %v4365, %v4363
        %v6410 = vpack.c.b16 %v4366, %v4364
        %v6411 = vpack.c.b16 %v4369, %v4367
        %v6412 = vpack.c.b16 %v4370, %v4368
        %v6413 = vpack.c.b16 %v4373, %v4371
        %v6414 = vpack.c.b16 %v4374, %v4372
        %v6415 = vpack.c.b16 %v4377, %v4375
        %v6416 = vpack.c.b16 %v4378, %v4376
        %v6417 = vpack.c.b16 %v4381, %v4379
        %v6418 = vpack.c.b16 %v4382, %v4380
        %v6419 = vpack.c.b16 %v4385, %v4383
        %v6420 = vpack.c.b16 %v4386, %v4384
        %v6421 = vpack.c.b16 %v4389, %v4387
        %v6422 = vpack.c.b16 %v4390, %v4388
        %v6423 = vpack.c.b16 %v4393, %v4391
        %v6424 = vpack.c.b16 %v4394, %v4392
        %v6425 = vpack.c.b16 %v4397, %v4395
        %v6426 = vpack.c.b16 %v4398, %v4396
        %v6427 = vpack.c.b16 %v4401, %v4399
        %v6428 = vpack.c.b16 %v4402, %v4400
        %v6429 = vpack.c.b16 %v4405, %v4403
        %v6430 = vpack.c.b16 %v4406, %v4404
        %v6431 = vpack.c.b16 %v4409, %v4407
        %v6432 = vpack.c.b16 %v4410, %v4408
        %v6433 = vpack.c.b16 %v4413, %v4411
        %v6434 = vpack.c.b16 %v4414, %v4412
        %v6435 = vpack.c.b16 %v4417, %v4415
        %v6436 = vpack.c.b16 %v4418, %v4416
        %v6437 = vpack.c.b16 %v4421, %v4419
        %v6438 = vpack.c.b16 %v4422, %v4420
        %v6439 = vpack.c.b16 %v4425, %v4423
        %v6440 = vpack.c.b16 %v4426, %v4424
        %v6441 = vpack.c.b16 %v4429, %v4427
        %v6442 = vpack.c.b16 %v4430, %v4428
        %v6443 = vpack.c.b16 %v4433, %v4431
        %v6444 = vpack.c.b16 %v4434, %v4432
        %v6445 = vpack.c.b16 %v4437, %v4435
        %v6446 = vpack.c.b16 %v4438, %v4436
        %v6447 = vpack.c.b16 %v4441, %v4439
        %v6448 = vpack.c.b16 %v4442, %v4440
        %v6449 = vpack.c.b16 %v4445, %v4443
        %v6450 = vpack.c.b16 %v4446, %v4444
        %v6451 = vpack.c.b16 %v4449, %v4447
        %v6452 = vpack.c.b16 %v4450, %v4448
        %v6453 = vpack.c.b16 %v4453, %v4451
        %v6454 = vpack.c.b16 %v4454, %v4452
        %v6455 = vpack.c.b16 %v4457, %v4455
        %v6456 = vpack.c.b16 %v4458, %v4456
        %v6457 = vpack.c.b16 %v4461, %v4459
        %v6458 = vpack.c.b16 %v4462, %v4460
        %v6459 = vpack.c.b16 %v4465, %v4463
        %v6460 = vpack.c.b16 %v4466, %v4464
        %v6461 = vpack.c.b16 %v4469, %v4467
        %v6462 = vpack.c.b16 %v4470, %v4468
        %v6463 = vpack.c.b16 %v4473, %v4471
        %v6464 = vpack.c.b16 %v4474, %v4472
        %v6465 = vpack.c.b16 %v4477, %v4475
        %v6466 = vpack.c.b16 %v4478, %v4476
        %v6467 = vpack.c.b16 %v4481, %v4479
        %v6468 = vpack.c.b16 %v4482, %v4480
        %v6469 = vpack.c.b16 %v4485, %v4483
        %v6470 = vpack.c.b16 %v4486, %v4484
        %v6471 = vpack.c.b16 %v4489, %v4487
        %v6472 = vpack.c.b16 %v4490, %v4488
        %v6473 = vpack.c.b16 %v4493, %v4491
        %v6474 = vpack.c.b16 %v4494, %v4492
        %v6475 = vpack.c.b16 %v4497, %v4495
        %v6476 = vpack.c.b16 %v4498, %v4496
        %v6477 = vpack.c.b16 %v4501, %v4499
        %v6478 = vpack.c.b16 %v4502, %v4500
        %v6479 = vpack.c.b16 %v4505, %v4503
        %v6480 = vpack.c.b16 %v4506, %v4504
        %v6481 = vpack.c.b16 %v4509, %v4507
        %v6482 = vpack.c.b16 %v4510, %v4508
        %v6483 = vpack.c.b16 %v4513, %v4511
        %v6484 = vpack.c.b16 %v4514, %v4512
        %v6485 = vpack.c.b16 %v4517, %v4515
        %v6486 = vpack.c.b16 %v4518, %v4516
        %v6487 = vpack.c.b16 %v4521, %v4519
        %v6488 = vpack.c.b16 %v4522, %v4520
        %v6489 = vpack.c.b16 %v4525, %v4523
        %v6490 = vpack.c.b16 %v4526, %v4524
        %v6491 = vpack.c.b16 %v4529, %v4527
        %v6492 = vpack.c.b16 %v4530, %v4528
        %v6493 = vpack.c.b16 %v4533, %v4531
        %v6494 = vpack.c.b16 %v4534, %v4532
        %v6495 = vpack.c.b16 %v4537, %v4535
        %v6496 = vpack.c.b16 %v4538, %v4536
        %v6497 = vpack.c.b16 %v4541, %v4539
        %v6498 = vpack.c.b16 %v4542, %v4540
        %v6499 = vpack.c.b16 %v4545, %v4543
        %v6500 = vpack.c.b16 %v4546, %v4544
        %v6501 = vpack.c.b16 %v4549, %v4547
        %v6502 = vpack.c.b16 %v4550, %v4548
        %v6503 = vpack.c.b16 %v4553, %v4551
        %v6504 = vpack.c.b16 %v4554, %v4552
        %v6505 = vpack.c.b16 %v4557, %v4555
        %v6506 = vpack.c.b16 %v4558, %v4556
        %v6507 = vpack.c.b16 %v4561, %v4559
        %v6508 = vpack.c.b16 %v4562, %v4560
        %v6509 = vpack.c.b16 %v4565, %v4563
        %v6510 = vpack.c.b16 %v4566, %v4564
        %v6511 = vpack.c.b16 %v4569, %v4567
        %v6512 = vpack.c.b16 %v4570, %v4568
        %v6513 = vpack.c.b16 %v4573, %v4571
        %v6514 = vpack.c.b16 %v4574, %v4572
        %v6515 = vpack.c.b16 %v4577, %v4575
        %v6516 = vpack.c.b16 %v4578, %v4576
        %v6517 = vpack.c.b16 %v4581, %v4579
        %v6518 = vpack.c.b16 %v4582, %v4580
        %v6519 = vpack.c.b16 %v4585, %v4583
        %v6520 = vpack.c.b16 %v4586, %v4584
        %v6521 = vpack.c.b16 %v4589, %v4587
        %v6522 = vpack.c.b16 %v4590, %v4588
        %v6523 = vpack.c.b16 %v4593, %v4591
        %v6524 = vpack.c.b16 %v4594, %v4592
        %v6525 = vpack.c.b16 %v4597, %v4595
        %v6526 = vpack.c.b16 %v4598, %v4596
        %v6527 = vpack.c.b16 %v4601, %v4599
        %v6528 = vpack.c.b16 %v4602, %v4600
        %v6529 = vpack.c.b16 %v4605, %v4603
        %v6530 = vpack.c.b16 %v4606, %v4604
        %v6531 = vpack.c.b16 %v4609, %v4607
        %v6532 = vpack.c.b16 %v4610, %v4608
        %v6533 = vpack.c.b16 %v4613, %v4611
        %v6534 = vpack.c.b16 %v4614, %v4612
        %v6535 = vpack.c.b16 %v4617, %v4615
        %v6536 = vpack.c.b16 %v4618, %v4616
        %v6537 = vpack.c.b16 %v4621, %v4619
        %v6538 = vpack.c.b16 %v4622, %v4620
        %v6539 = vpack.c.b16 %v4625, %v4623
        %v6540 = vpack.c.b16 %v4626, %v4624
        %v6541 = vpack.c.b16 %v4629, %v4627
        %v6542 = vpack.c.b16 %v4630, %v4628
        %v6543 = vpack.c.b16 %v4633, %v4631
        %v6544 = vpack.c.b16 %v4634, %v4632
        %v6545 = vpack.c.b16 %v4637, %v4635
        %v6546 = vpack.c.b16 %v4638, %v4636
        %v6547 = vpack.c.b16 %v4641, %v4639
        %v6548 = vpack.c.b16 %v4642, %v4640
        %v6549 = vpack.c.b16 %v4645, %v4643
        %v6550 = vpack.c.b16 %v4646, %v4644
        %v6551 = vpack.c.b16 %v4649, %v4647
        %v6552 = vpack.c.b16 %v4650, %v4648
        %v6553 = vpack.c.b16 %v4653, %v4651
        %v6554 = vpack.c.b16 %v4654, %v4652
        %v6555 = vpack.c.b16 %v4657, %v4655
        %v6556 = vpack.c.b16 %v4658, %v4656
        %v6557 = vpack.c.b16 %v4661, %v4659
        %v6558 = vpack.c.b16 %v4662, %v4660
        %v6559 = vpack.c.b16 %v4665, %v4663
        %v6560 = vpack.c.b16 %v4666, %v4664
        %v6561 = vpack.c.b16 %v4669, %v4667
        %v6562 = vpack.c.b16 %v4670, %v4668
        %v6563 = vpack.c.b16 %v4673, %v4671
        %v6564 = vpack.c.b16 %v4674, %v4672
        %v6565 = vpack.c.b16 %v4677, %v4675
        %v6566 = vpack.c.b16 %v4678, %v4676
        %v6567 = vpack.c.b16 %v4681, %v4679
        %v6568 = vpack.c.b16 %v4682, %v4680
        %v6569 = vpack.c.b16 %v4685, %v4683
        %v6570 = vpack.c.b16 %v4686, %v4684
        %v6571 = vpack.c.b16 %v4689, %v4687
        %v6572 = vpack.c.b16 %v4690, %v4688
        %v6573 = vpack.c.b16 %v4693, %v4691
        %v6574 = vpack.c.b16 %v4694, %v4692
        %v6575 = vpack.c.b16 %v4697, %v4695
        %v6576 = vpack.c.b16 %v4698, %v4696
        %v6577 = vpack.c.b16 %v4701, %v4699
        %v6578 = vpack.c.b16 %v4702, %v4700
        %v6579 = vpack.c.b16 %v4705, %v4703
        %v6580 = vpack.c.b16 %v4706, %v4704
        %v6581 = vpack.c.b16 %v4709, %v4707
        %v6582 = vpack.c.b16 %v4710, %v4708
        %v6583 = vpack.c.b16 %v4713, %v4711
        %v6584 = vpack.c.b16 %v4714, %v4712
        %v6585 = vpack.c.b16 %v4717, %v4715
        %v6586 = vpack.c.b16 %v4718, %v4716
        %v6587 = vpack.c.b16 %v4721, %v4719
        %v6588 = vpack.c.b16 %v4722, %v4720
        %v6589 = vpack.c.b16 %v4725, %v4723
        %v6590 = vpack.c.b16 %v4726, %v4724
        %v6591 = vpack.c.b16 %v4729, %v4727
        %v6592 = vpack.c.b16 %v4730, %v4728
        %v6593 = vpack.c.b16 %v4733, %v4731
        %v6594 = vpack.c.b16 %v4734, %v4732
        %v6595 = vpack.c.b16 %v4737, %v4735
        %v6596 = vpack.c.b16 %v4738, %v4736
        %v6597 = vpack.c.b16 %v4741, %v4739
        %v6598 = vpack.c.b16 %v4742, %v4740
        %v6599 = vpack.c.b16 %v4745, %v4743
        %v6600 = vpack.c.b16 %v4746, %v4744
        %v6601 = vpack.c.b16 %v4749, %v4747
        %v6602 = vpack.c.b16 %v4750, %v4748
        %v6603 = vpack.c.b16 %v4753, %v4751
        %v6604 = vpack.c.b16 %v4754, %v4752
        %v6605 = vpack.c.b16 %v4757, %v4755
        %v6606 = vpack.c.b16 %v4758, %v4756
        %v6607 = vpack.c.b16 %v4761, %v4759
        %v6608 = vpack.c.b16 %v4762, %v4760
        %v6609 = vpack.c.b16 %v4765, %v4763
        %v6610 = vpack.c.b16 %v4766, %v4764
        %v6611 = vpack.c.b16 %v4769, %v4767
        %v6612 = vpack.c.b16 %v4770, %v4768
        %v6613 = vpack.c.b16 %v4773, %v4771
        %v6614 = vpack.c.b16 %v4774, %v4772
        %v6615 = vpack.c.b16 %v4777, %v4775
        %v6616 = vpack.c.b16 %v4778, %v4776
        %v6617 = vpack.c.b16 %v4781, %v4779
        %v6618 = vpack.c.b16 %v4782, %v4780
        %v6619 = vpack.c.b16 %v4785, %v4783
        %v6620 = vpack.c.b16 %v4786, %v4784
        %v6621 = vpack.c.b16 %v4789, %v4787
        %v6622 = vpack.c.b16 %v4790, %v4788
        %v6623 = vpack.c.b16 %v4793, %v4791
        %v6624 = vpack.c.b16 %v4794, %v4792
        %v6625 = vpack.c.b16 %v4797, %v4795
        %v6626 = vpack.c.b16 %v4798, %v4796
        %v6627 = vpack.c.b16 %v4801, %v4799
        %v6628 = vpack.c.b16 %v4802, %v4800
        %v6629 = vpack.c.b16 %v4805, %v4803
        %v6630 = vpack.c.b16 %v4806, %v4804
        %v6631 = vpack.c.b16 %v4809, %v4807
        %v6632 = vpack.c.b16 %v4810, %v4808
        %v6633 = vpack.c.b16 %v4813, %v4811
        %v6634 = vpack.c.b16 %v4814, %v4812
        %v6635 = vpack.c.b16 %v4817, %v4815
        %v6636 = vpack.c.b16 %v4818, %v4816
        %v6637 = vpack.c.b16 %v4821, %v4819
        %v6638 = vpack.c.b16 %v4822, %v4820
        %v6639 = vpack.c.b16 %v4825, %v4823
        %v6640 = vpack.c.b16 %v4826, %v4824
        %v6641 = vpack.c.b16 %v4829, %v4827
        %v6642 = vpack.c.b16 %v4830, %v4828
        %v6643 = vpack.c.b16 %v4833, %v4831
        %v6644 = vpack.c.b16 %v4834, %v4832
        %v6645 = vpack.c.b16 %v4837, %v4835
        %v6646 = vpack.c.b16 %v4838, %v4836
        %v6647 = vpack.c.b16 %v4841, %v4839
        %v6648 = vpack.c.b16 %v4842, %v4840
        %v6649 = vpack.c.b16 %v4845, %v4843
        %v6650 = vpack.c.b16 %v4846, %v4844
        %v6651 = vpack.c.b16 %v4849, %v4847
        %v6652 = vpack.c.b16 %v4850, %v4848
        %v6653 = vpack.c.b16 %v4853, %v4851
        %v6654 = vpack.c.b16 %v4854, %v4852
        %v6655 = vpack.c.b16 %v4857, %v4855
        %v6656 = vpack.c.b16 %v4858, %v4856
        %v6657 = vpack.c.b16 %v4861, %v4859
        %v6658 = vpack.c.b16 %v4862, %v4860
        %v6659 = vpack.c.b16 %v4865, %v4863
        %v6660 = vpack.c.b16 %v4866, %v4864
        %v6661 = vpack.c.b16 %v4869, %v4867
        %v6662 = vpack.c.b16 %v4870, %v4868
        %v6663 = vpack.c.b16 %v4873, %v4871
        %v6664 = vpack.c.b16 %v4874, %v4872
        %v6665 = vpack.c.b16 %v4877, %v4875
        %v6666 = vpack.c.b16 %v4878, %v4876
        %v6667 = vpack.c.b16 %v4881, %v4879
        %v6668 = vpack.c.b16 %v4882, %v4880
        %v6669 = vpack.c.b16 %v4885, %v4883
        %v6670 = vpack.c.b16 %v4886, %v4884
        %v6671 = vpack.c.b16 %v4889, %v4887
        %v6672 = vpack.c.b16 %v4890, %v4888
        %v6673 = vpack.c.b16 %v4893, %v4891
        %v6674 = vpack.c.b16 %v4894, %v4892
        %v6675 = vpack.c.b16 %v4897, %v4895
        %v6676 = vpack.c.b16 %v4898, %v4896
        %v6677 = vpack.c.b16 %v4901, %v4899
        %v6678 = vpack.c.b16 %v4902, %v4900
        %v6679 = vpack.c.b16 %v4905, %v4903
        %v6680 = vpack.c.b16 %v4906, %v4904
        %v6681 = vpack.c.b16 %v4909, %v4907
        %v6682 = vpack.c.b16 %v4910, %v4908
        %v6683 = vpack.c.b16 %v4913, %v4911
        %v6684 = vpack.c.b16 %v4914, %v4912
        %v6685 = vpack.c.b16 %v4917, %v4915
        %v6686 = vpack.c.b16 %v4918, %v4916
        %v6687 = vpack.c.b16 %v4921, %v4919
        %v6688 = vpack.c.b16 %v4922, %v4920
        %v6689 = vpack.c.b16 %v4925, %v4923
        %v6690 = vpack.c.b16 %v4926, %v4924
        %v6691 = vpack.c.b16 %v4929, %v4927
        %v6692 = vpack.c.b16 %v4930, %v4928
        %v6693 = vpack.c.b16 %v4933, %v4931
        %v6694 = vpack.c.b16 %v4934, %v4932
        %v6695 = vpack.c.b16 %v4937, %v4935
        %v6696 = vpack.c.b16 %v4938, %v4936
        %v6697 = vpack.c.b16 %v4941, %v4939
        %v6698 = vpack.c.b16 %v4942, %v4940
        %v6699 = vpack.c.b16 %v4945, %v4943
        %v6700 = vpack.c.b16 %v4946, %v4944
        %v6701 = vpack.c.b16 %v4949, %v4947
        %v6702 = vpack.c.b16 %v4950, %v4948
        %v6703 = vpack.c.b16 %v4953, %v4951
        %v6704 = vpack.c.b16 %v4954, %v4952
        %v6705 = vpack.c.b16 %v4957, %v4955
        %v6706 = vpack.c.b16 %v4958, %v4956
        %v6707 = vpack.c.b16 %v4961, %v4959
        %v6708 = vpack.c.b16 %v4962, %v4960
        %v6709 = vpack.c.b16 %v4965, %v4963
        %v6710 = vpack.c.b16 %v4966, %v4964
        %v6711 = vpack.c.b16 %v4969, %v4967
        %v6712 = vpack.c.b16 %v4970, %v4968
        %v6713 = vpack.c.b16 %v4973, %v4971
        %v6714 = vpack.c.b16 %v4974, %v4972
        %v6715 = vpack.c.b16 %v4977, %v4975
        %v6716 = vpack.c.b16 %v4978, %v4976
        %v6717 = vpack.c.b16 %v4981, %v4979
        %v6718 = vpack.c.b16 %v4982, %v4980
        %v6719 = vpack.c.b16 %v4985, %v4983
        %v6720 = vpack.c.b16 %v4986, %v4984
        %v6721 = vpack.c.b16 %v4989, %v4987
        %v6722 = vpack.c.b16 %v4990, %v4988
        %v6723 = vpack.c.b16 %v4993, %v4991
        %v6724 = vpack.c.b16 %v4994, %v4992
        %v6725 = vpack.c.b16 %v4997, %v4995
        %v6726 = vpack.c.b16 %v4998, %v4996
        %v6727 = vpack.c.b16 %v5001, %v4999
        %v6728 = vpack.c.b16 %v5002, %v5000
        %v6729 = vpack.c.b16 %v5005, %v5003
        %v6730 = vpack.c.b16 %v5006, %v5004
        %v6731 = vpack.c.b16 %v5009, %v5007
        %v6732 = vpack.c.b16 %v5010, %v5008
        %v6733 = vpack.c.b16 %v5013, %v5011
        %v6734 = vpack.c.b16 %v5014, %v5012
        %v6735 = vpack.c.b16 %v5017, %v5015
        %v6736 = vpack.c.b16 %v5018, %v5016
        %v6737 = vpack.c.b16 %v5021, %v5019
        %v6738 = vpack.c.b16 %v5022, %v5020
        %v6739 = vpack.c.b16 %v5025, %v5023
        %v6740 = vpack.c.b16 %v5026, %v5024
        %v6741 = vpack.c.b16 %v5029, %v5027
        %v6742 = vpack.c.b16 %v5030, %v5028
        %v6743 = vpack.c.b16 %v5033, %v5031
        %v6744 = vpack.c.b16 %v5034, %v5032
        %v6745 = vpack.c.b16 %v5037, %v5035
        %v6746 = vpack.c.b16 %v5038, %v5036
        %v6747 = vpack.c.b16 %v5041, %v5039
        %v6748 = vpack.c.b16 %v5042, %v5040
        %v6749 = vpack.c.b16 %v5045, %v5043
        %v6750 = vpack.c.b16 %v5046, %v5044
        %v6751 = vpack.c.b16 %v5049, %v5047
        %v6752 = vpack.c.b16 %v5050, %v5048
        %v6753 = vpack.c.b16 %v5053, %v5051
        %v6754 = vpack.c.b16 %v5054, %v5052
        %v6755 = vpack.c.b16 %v5057, %v5055
        %v6756 = vpack.c.b16 %v5058, %v5056
        %v6757 = vpack.c.b16 %v5061, %v5059
        %v6758 = vpack.c.b16 %v5062, %v5060
        %v6759 = vpack.c.b16 %v5065, %v5063
        %v6760 = vpack.c.b16 %v5066, %v5064
        %v6761 = vpack.c.b16 %v5069, %v5067
        %v6762 = vpack.c.b16 %v5070, %v5068
        %v6763 = vpack.c.b16 %v5073, %v5071
        %v6764 = vpack.c.b16 %v5074, %v5072
        %v6765 = vpack.c.b16 %v5077, %v5075
        %v6766 = vpack.c.b16 %v5078, %v5076
        %v6767 = vpack.c.b16 %v5081, %v5079
        %v6768 = vpack.c.b16 %v5082, %v5080
        %v6769 = vpack.c.b16 %v5085, %v5083
        %v6770 = vpack.c.b16 %v5086, %v5084
        %v6771 = vpack.c.b16 %v5089, %v5087
        %v6772 = vpack.c.b16 %v5090, %v5088
        %v6773 = vpack.c.b16 %v5093, %v5091
        %v6774 = vpack.c.b16 %v5094, %v5092
        %v6775 = vpack.c.b16 %v5097, %v5095
        %v6776 = vpack.c.b16 %v5098, %v5096
        %v6777 = vpack.c.b16 %v5101, %v5099
        %v6778 = vpack.c.b16 %v5102, %v5100
        %v6779 = vpack.c.b16 %v5105, %v5103
        %v6780 = vpack.c.b16 %v5106, %v5104
        %v6781 = vpack.c.b16 %v5109, %v5107
        %v6782 = vpack.c.b16 %v5110, %v5108
        %v6783 = vpack.c.b16 %v5113, %v5111
        %v6784 = vpack.c.b16 %v5114, %v5112
        %v6785 = vpack.c.b16 %v5117, %v5115
        %v6786 = vpack.c.b16 %v5118, %v5116
        %v6787 = vpack.c.b16 %v5121, %v5119
        %v6788 = vpack.c.b16 %v5122, %v5120
        %v6789 = vpack.c.b16 %v5125, %v5123
        %v6790 = vpack.c.b16 %v5126, %v5124
        %v6791 = vpack.c.b16 %v5129, %v5127
        %v6792 = vpack.c.b16 %v5130, %v5128
        %v6793 = vpack.c.b16 %v5133, %v5131
        %v6794 = vpack.c.b16 %v5134, %v5132
        %v6795 = vpack.c.b16 %v5137, %v5135
        %v6796 = vpack.c.b16 %v5138, %v5136
        %v6797 = vpack.c.b16 %v5141, %v5139
        %v6798 = vpack.c.b16 %v5142, %v5140
        %v6799 = vpack.c.b16 %v5145, %v5143
        %v6800 = vpack.c.b16 %v5146, %v5144
        %v6801 = vpack.c.b16 %v5149, %v5147
        %v6802 = vpack.c.b16 %v5150, %v5148
        %v6803 = vpack.c.b16 %v5153, %v5151
        %v6804 = vpack.c.b16 %v5154, %v5152
        %v6805 = vpack.c.b16 %v5157, %v5155
        %v6806 = vpack.c.b16 %v5158, %v5156
        %v6807 = vpack.c.b16 %v5161, %v5159
        %v6808 = vpack.c.b16 %v5162, %v5160
        %v6809 = vpack.c.b16 %v5165, %v5163
        %v6810 = vpack.c.b16 %v5166, %v5164
        %v6811 = vpack.c.b16 %v5169, %v5167
        %v6812 = vpack.c.b16 %v5170, %v5168
        %v6813 = vpack.c.b16 %v5173, %v5171
        %v6814 = vpack.c.b16 %v5174, %v5172
        %v6815 = vpack.c.b16 %v5177, %v5175
        %v6816 = vpack.c.b16 %v5178, %v5176
        %v6817 = vpack.c.b16 %v5181, %v5179
        %v6818 = vpack.c.b16 %v5182, %v5180
        %v6819 = vpack.c.b16 %v5185, %v5183
        %v6820 = vpack.c.b16 %v5186, %v5184
        %v6821 = vpack.c.b16 %v5189, %v5187
        %v6822 = vpack.c.b16 %v5190, %v5188
        %v6823 = vpack.c.b16 %v5193, %v5191
        %v6824 = vpack.c.b16 %v5194, %v5192
        %v6825 = vpack.c.b16 %v5197, %v5195
        %v6826 = vpack.c.b16 %v5198, %v5196
        %v6827 = vpack.c.b16 %v5201, %v5199
        %v6828 = vpack.c.b16 %v5202, %v5200
        %v6829 = vpack.c.b16 %v5205, %v5203
        %v6830 = vpack.c.b16 %v5206, %v5204
        %v6831 = vpack.c.b16 %v5209, %v5207
        %v6832 = vpack.c.b16 %v5210, %v5208
        %v6833 = vpack.c.b16 %v5213, %v5211
        %v6834 = vpack.c.b16 %v5214, %v5212
        %v6835 = vpack.c.b16 %v5217, %v5215
        %v6836 = vpack.c.b16 %v5218, %v5216
        %v6837 = vpack.c.b16 %v5221, %v5219
        %v6838 = vpack.c.b16 %v5222, %v5220
        %v6839 = vpack.c.b16 %v5225, %v5223
        %v6840 = vpack.c.b16 %v5226, %v5224
        %v6841 = vpack.c.b16 %v5229, %v5227
        %v6842 = vpack.c.b16 %v5230, %v5228
        %v6843 = vpack.c.b16 %v5233, %v5231
        %v6844 = vpack.c.b16 %v5234, %v5232
        %v6845 = vpack.c.b16 %v5237, %v5235
        %v6846 = vpack.c.b16 %v5238, %v5236
        %v6847 = vpack.c.b16 %v5241, %v5239
        %v6848 = vpack.c.b16 %v5242, %v5240
        %v6849 = vpack.c.b16 %v5245, %v5243
        %v6850 = vpack.c.b16 %v5246, %v5244
        %v6851 = vpack.c.b16 %v5249, %v5247
        %v6852 = vpack.c.b16 %v5250, %v5248
        %v6853 = vpack.c.b16 %v5253, %v5251
        %v6854 = vpack.c.b16 %v5254, %v5252
        %v6855 = vpack.c.b16 %v5257, %v5255
        %v6856 = vpack.c.b16 %v5258, %v5256
        %v6857 = vpack.c.b16 %v5261, %v5259
        %v6858 = vpack.c.b16 %v5262, %v5260
        %v6859 = vpack.c.b16 %v5265, %v5263
        %v6860 = vpack.c.b16 %v5266, %v5264
        %v6861 = vpack.c.b16 %v5269, %v5267
        %v6862 = vpack.c.b16 %v5270, %v5268
        %v6863 = vpack.c.b16 %v5273, %v5271
        %v6864 = vpack.c.b16 %v5274, %v5272
        %v6865 = vpack.c.b16 %v5277, %v5275
        %v6866 = vpack.c.b16 %v5278, %v5276
        %v6867 = vpack.c.b16 %v5281, %v5279
        %v6868 = vpack.c.b16 %v5282, %v5280
        %v6869 = vpack.c.b16 %v5285, %v5283
        %v6870 = vpack.c.b16 %v5286, %v5284
        %v6871 = vpack.c.b16 %v5289, %v5287
        %v6872 = vpack.c.b16 %v5290, %v5288
        %v6873 = vpack.c.b16 %v5293, %v5291
        %v6874 = vpack.c.b16 %v5294, %v5292
        %v6875 = vpack.c.b16 %v5297, %v5295
        %v6876 = vpack.c.b16 %v5298, %v5296
        %v6877 = vpack.c.b16 %v5301, %v5299
        %v6878 = vpack.c.b16 %v5302, %v5300
        %v6879 = vpack.c.b16 %v5305, %v5303
        %v6880 = vpack.c.b16 %v5306, %v5304
        %v6881 = vpack.c.b16 %v5309, %v5307
        %v6882 = vpack.c.b16 %v5310, %v5308
        %v6883 = vpack.c.b16 %v5313, %v5311
        %v6884 = vpack.c.b16 %v5314, %v5312
        %v6885 = vpack.c.b16 %v5317, %v5315
        %v6886 = vpack.c.b16 %v5318, %v5316
        %v6887 = vpack.c.b16 %v5321, %v5319
        %v6888 = vpack.c.b16 %v5322, %v5320
        %v6889 = vpack.c.b16 %v5325, %v5323
        %v6890 = vpack.c.b16 %v5326, %v5324
        %v6891 = vpack.c.b16 %v5329, %v5327
        %v6892 = vpack.c.b16 %v5330, %v5328
        %v6893 = vpack.c.b16 %v5333, %v5331
        %v6894 = vpack.c.b16 %v5334, %v5332
        %v6895 = vpack.c.b16 %v5337, %v5335
        %v6896 = vpack.c.b16 %v5338, %v5336
        %v6897 = vpack.c.b16 %v5341, %v5339
        %v6898 = vpack.c.b16 %v5342, %v5340
        %v6899 = vpack.c.b16 %v5345, %v5343
        %v6900 = vpack.c.b16 %v5346, %v5344
        %v6901 = vpack.c.b16 %v5349, %v5347
        %v6902 = vpack.c.b16 %v5350, %v5348
        %v6903 = vpack.c.b16 %v5353, %v5351
        %v6904 = vpack.c.b16 %v5354, %v5352
        %v6905 = vpack.c.b16 %v5357, %v5355
        %v6906 = vpack.c.b16 %v5358, %v5356
        %v6907 = vpack.c.b16 %v5361, %v5359
        %v6908 = vpack.c.b16 %v5362, %v5360
        %v6909 = vpack.c.b16 %v5365, %v5363
        %v6910 = vpack.c.b16 %v5366, %v5364
        %v6911 = vpack.c.b16 %v5369, %v5367
        %v6912 = vpack.c.b16 %v5370, %v5368
        %v6913 = vpack.c.b16 %v5373, %v5371
        %v6914 = vpack.c.b16 %v5374, %v5372
        %v6915 = vpack.c.b16 %v5377, %v5375
        %v6916 = vpack.c.b16 %v5378, %v5376
        %v6917 = vpack.c.b16 %v5381, %v5379
        %v6918 = vpack.c.b16 %v5382, %v5380
        %v6919 = vpack.c.b16 %v5385, %v5383
        %v6920 = vpack.c.b16 %v5386, %v5384
        %v6921 = vpack.c.b16 %v5389, %v5387
        %v6922 = vpack.c.b16 %v5390, %v5388
        %v6923 = vpack.c.b16 %v5393, %v5391
        %v6924 = vpack.c.b16 %v5394, %v5392
        %v6925 = vpack.c.b16 %v5397, %v5395
        %v6926 = vpack.c.b16 %v5398, %v5396
        %v6927 = vpack.c.b16 %v5401, %v5399
        %v6928 = vpack.c.b16 %v5402, %v5400
        %v6929 = vpack.c.b16 %v5405, %v5403
        %v6930 = vpack.c.b16 %v5406, %v5404
        %v6931 = vpack.c.b16 %v5409, %v5407
        %v6932 = vpack.c.b16 %v5410, %v5408
        %v6933 = vpack.c.b16 %v5413, %v5411
        %v6934 = vpack.c.b16 %v5414, %v5412
        %v6935 = vpack.c.b16 %v5417, %v5415
        %v6936 = vpack.c.b16 %v5418, %v5416
        %v6937 = vpack.c.b16 %v5421, %v5419
        %v6938 = vpack.c.b16 %v5422, %v5420
        %v6939 = vpack.c.b16 %v5425, %v5423
        %v6940 = vpack.c.b16 %v5426, %v5424
        %v6941 = vpack.c.b16 %v5429, %v5427
        %v6942 = vpack.c.b16 %v5430, %v5428
        %v6943 = vpack.c.b16 %v5433, %v5431
        %v6944 = vpack.c.b16 %v5434, %v5432
        %v6945 = vpack.c.b16 %v5437, %v5435
        %v6946 = vpack.c.b16 %v5438, %v5436
        %v6947 = vpack.c.b16 %v5441, %v5439
        %v6948 = vpack.c.b16 %v5442, %v5440
        %v6949 = vpack.c.b16 %v5445, %v5443
        %v6950 = vpack.c.b16 %v5446, %v5444
        %v6951 = vpack.c.b16 %v5449, %v5447
        %v6952 = vpack.c.b16 %v5450, %v5448
        %v6953 = vpack.c.b16 %v5453, %v5451
        %v6954 = vpack.c.b16 %v5454, %v5452
        %v6955 = vpack.c.b16 %v5457, %v5455
        %v6956 = vpack.c.b16 %v5458, %v5456
        %v6957 = vpack.c.b16 %v5461, %v5459
        %v6958 = vpack.c.b16 %v5462, %v5460
        %v6959 = vpack.c.b16 %v5465, %v5463
        %v6960 = vpack.c.b16 %v5466, %v5464
        %v6961 = vpack.c.b16 %v5469, %v5467
        %v6962 = vpack.c.b16 %v5470, %v5468
        %v6963 = vpack.c.b16 %v5473, %v5471
        %v6964 = vpack.c.b16 %v5474, %v5472
        %v6965 = vpack.c.b16 %v5477, %v5475
        %v6966 = vpack.c.b16 %v5478, %v5476
        %v6967 = vpack.c.b16 %v5481, %v5479
        %v6968 = vpack.c.b16 %v5482, %v5480
        %v6969 = vpack.c.b16 %v5485, %v5483
        %v6970 = vpack.c.b16 %v5486, %v5484
        %v6971 = vpack.c.b16 %v5489, %v5487
        %v6972 = vpack.c.b16 %v5490, %v5488
        %v6973 = vpack.c.b16 %v5493, %v5491
        %v6974 = vpack.c.b16 %v5494, %v5492
        %v6975 = vpack.c.b16 %v5497, %v5495
        %v6976 = vpack.c.b16 %v5498, %v5496
        %v6977 = vpack.c.b16 %v5501, %v5499
        %v6978 = vpack.c.b16 %v5502, %v5500
        %v6979 = vpack.c.b16 %v5505, %v5503
        %v6980 = vpack.c.b16 %v5506, %v5504
        %v6981 = vpack.c.b16 %v5509, %v5507
        %v6982 = vpack.c.b16 %v5510, %v5508
        %v6983 = vpack.c.b16 %v5513, %v5511
        %v6984 = vpack.c.b16 %v5514, %v5512
        %v6985 = vpack.c.b16 %v5517, %v5515
        %v6986 = vpack.c.b16 %v5518, %v5516
        %v6987 = vpack.c.b16 %v5521, %v5519
        %v6988 = vpack.c.b16 %v5522, %v5520
        %v6989 = vpack.c.b16 %v5525, %v5523
        %v6990 = vpack.c.b16 %v5526, %v5524
        %v6991 = vpack.c.b16 %v5529, %v5527
        %v6992 = vpack.c.b16 %v5530, %v5528
        %v6993 = vpack.c.b16 %v5533, %v5531
        %v6994 = vpack.c.b16 %v5534, %v5532
        %v6995 = vpack.c.b16 %v5537, %v5535
        %v6996 = vpack.c.b16 %v5538, %v5536
        %v6997 = vpack.c.b16 %v5541, %v5539
        %v6998 = vpack.c.b16 %v5542, %v5540
        %v6999 = vpack.c.b16 %v5545, %v5543
        %v7000 = vpack.c.b16 %v5546, %v5544
        %v7001 = vpack.c.b16 %v5549, %v5547
        %v7002 = vpack.c.b16 %v5550, %v5548
        %v7003 = vpack.c.b16 %v5553, %v5551
        %v7004 = vpack.c.b16 %v5554, %v5552
        %v7005 = vpack.c.b16 %v5557, %v5555
        %v7006 = vpack.c.b16 %v5558, %v5556
        %v7007 = vpack.c.b16 %v5561, %v5559
        %v7008 = vpack.c.b16 %v5562, %v5560
        %v7009 = vpack.c.b16 %v5565, %v5563
        %v7010 = vpack.c.b16 %v5566, %v5564
        %v7011 = vpack.c.b16 %v5569, %v5567
        %v7012 = vpack.c.b16 %v5570, %v5568
        %v7013 = vpack.c.b16 %v5573, %v5571
        %v7014 = vpack.c.b16 %v5574, %v5572
        %v7015 = vpack.c.b16 %v5577, %v5575
        %v7016 = vpack.c.b16 %v5578, %v5576
        %v7017 = vpack.c.b16 %v5581, %v5579
        %v7018 = vpack.c.b16 %v5582, %v5580
        %v7019 = vpack.c.b16 %v5585, %v5583
        %v7020 = vpack.c.b16 %v5586, %v5584
        %v7021 = vpack.c.b16 %v5589, %v5587
        %v7022 = vpack.c.b16 %v5590, %v5588
        %v7023 = vpack.c.b16 %v5593, %v5591
        %v7024 = vpack.c.b16 %v5594, %v5592
        %v7025 = vpack.c.b16 %v5597, %v5595
        %v7026 = vpack.c.b16 %v5598, %v5596
        %v7027 = vpack.c.b16 %v5601, %v5599
        %v7028 = vpack.c.b16 %v5602, %v5600
        %v7029 = vpack.c.b16 %v5605, %v5603
        %v7030 = vpack.c.b16 %v5606, %v5604
        %v7031 = vpack.c.b16 %v5609, %v5607
        %v7032 = vpack.c.b16 %v5610, %v5608
        %v7033 = vpack.c.b16 %v5613, %v5611
        %v7034 = vpack.c.b16 %v5614, %v5612
        %v7035 = vpack.c.b16 %v5617, %v5615
        %v7036 = vpack.c.b16 %v5618, %v5616
        %v7037 = vpack.c.b16 %v5621, %v5619
        %v7038 = vpack.c.b16 %v5622, %v5620
        %v7039 = vpack.c.b16 %v5625, %v5623
        %v7040 = vpack.c.b16 %v5626, %v5624
        %v7041 = vpack.c.b16 %v5629, %v5627
        %v7042 = vpack.c.b16 %v5630, %v5628
        %v7043 = vpack.c.b16 %v5633, %v5631
        %v7044 = vpack.c.b16 %v5634, %v5632
        %v7045 = vpack.c.b16 %v5637, %v5635
        %v7046 = vpack.c.b16 %v5638, %v5636
        %v7047 = vpack.c.b16 %v5641, %v5639
        %v7048 = vpack.c.b16 %v5642, %v5640
        %v7049 = vpack.c.b16 %v5645, %v5643
        %v7050 = vpack.c.b16 %v5646, %v5644
        %v7051 = vpack.c.b16 %v5649, %v5647
        %v7052 = vpack.c.b16 %v5650, %v5648
        %v7053 = vpack.c.b16 %v5653, %v5651
        %v7054 = vpack.c.b16 %v5654, %v5652
        %v7055 = vpack.c.b16 %v5657, %v5655
        %v7056 = vpack.c.b16 %v5658, %v5656
        %v7057 = vpack.c.b16 %v5661, %v5659
        %v7058 = vpack.c.b16 %v5662, %v5660
        %v7059 = vpack.c.b16 %v5665, %v5663
        %v7060 = vpack.c.b16 %v5666, %v5664
        %v7061 = vpack.c.b16 %v5669, %v5667
        %v7062 = vpack.c.b16 %v5670, %v5668
        %v7063 = vpack.c.b16 %v5673, %v5671
        %v7064 = vpack.c.b16 %v5674, %v5672
        %v7065 = vpack.c.b16 %v5677, %v5675
        %v7066 = vpack.c.b16 %v5678, %v5676
        %v7067 = vpack.c.b16 %v5681, %v5679
        %v7068 = vpack.c.b16 %v5682, %v5680
        %v7069 = vpack.c.b16 %v5685, %v5683
        %v7070 = vpack.c.b16 %v5686, %v5684
        %v7071 = vpack.c.b16 %v5689, %v5687
        %v7072 = vpack.c.b16 %v5690, %v5688
        %v7073 = vpack.c.b16 %v5693, %v5691
        %v7074 = vpack.c.b16 %v5694, %v5692
        %v7075 = vpack.c.b16 %v5697, %v5695
        %v7076 = vpack.c.b16 %v5698, %v5696
        %v7077 = vpack.c.b16 %v5701, %v5699
        %v7078 = vpack.c.b16 %v5702, %v5700
        %v7079 = vpack.c.b16 %v5705, %v5703
        %v7080 = vpack.c.b16 %v5706, %v5704
        %v7081 = vpack.c.b16 %v5709, %v5707
        %v7082 = vpack.c.b16 %v5710, %v5708
        %v7083 = vpack.c.b16 %v5713, %v5711
        %v7084 = vpack.c.b16 %v5714, %v5712
        %v7085 = vpack.c.b16 %v5717, %v5715
        %v7086 = vpack.c.b16 %v5718, %v5716
        %v7087 = vpack.c.b16 %v5721, %v5719
        %v7088 = vpack.c.b16 %v5722, %v5720
        %v7089 = vpack.c.b16 %v5725, %v5723
        %v7090 = vpack.c.b16 %v5726, %v5724
        %v7091 = vpack.c.b16 %v5729, %v5727
        %v7092 = vpack.c.b16 %v5730, %v5728
        %v7093 = vpack.c.b16 %v5733, %v5731
        %v7094 = vpack.c.b16 %v5734, %v5732
        %v7095 = vpack.c.b16 %v5737, %v5735
        %v7096 = vpack.c.b16 %v5738, %v5736
        %v7097 = vpack.c.b16 %v5741, %v5739
        %v7098 = vpack.c.b16 %v5742, %v5740
        %v7099 = vpack.c.b16 %v5745, %v5743
        %v7100 = vpack.c.b16 %v5746, %v5744
        %v7101 = vpack.c.b16 %v5749, %v5747
        %v7102 = vpack.c.b16 %v5750, %v5748
        %v7103 = vpack.c.b16 %v5753, %v5751
        %v7104 = vpack.c.b16 %v5754, %v5752
        %v7105 = vpack.c.b16 %v5757, %v5755
        %v7106 = vpack.c.b16 %v5758, %v5756
        %v7107 = vpack.c.b16 %v5761, %v5759
        %v7108 = vpack.c.b16 %v5762, %v5760
        %v7109 = vpack.c.b16 %v5765, %v5763
        %v7110 = vpack.c.b16 %v5766, %v5764
        %v7111 = vpack.c.b16 %v5769, %v5767
        %v7112 = vpack.c.b16 %v5770, %v5768
        %v7113 = vpack.c.b16 %v5773, %v5771
        %v7114 = vpack.c.b16 %v5774, %v5772
        %v7115 = vpack.c.b16 %v5777, %v5775
        %v7116 = vpack.c.b16 %v5778, %v5776
        %v7117 = vpack.c.b16 %v5781, %v5779
        %v7118 = vpack.c.b16 %v5782, %v5780
        %v7119 = vpack.c.b16 %v5785, %v5783
        %v7120 = vpack.c.b16 %v5786, %v5784
        %v7121 = vpack.c.b16 %v5789, %v5787
        %v7122 = vpack.c.b16 %v5790, %v5788
        %v7123 = vpack.c.b16 %v5793, %v5791
        %v7124 = vpack.c.b16 %v5794, %v5792
        %v7125 = vpack.c.b16 %v5797, %v5795
        %v7126 = vpack.c.b16 %v5798, %v5796
        %v7127 = vpack.c.b16 %v5801, %v5799
        %v7128 = vpack.c.b16 %v5802, %v5800
        %v7129 = vpack.c.b16 %v5805, %v5803
        %v7130 = vpack.c.b16 %v5806, %v5804
        %v7131 = vpack.c.b16 %v5809, %v5807
        %v7132 = vpack.c.b16 %v5810, %v5808
        %v7133 = vpack.c.b16 %v5813, %v5811
        %v7134 = vpack.c.b16 %v5814, %v5812
        %v7135 = vpack.c.b16 %v5817, %v5815
        %v7136 = vpack.c.b16 %v5818, %v5816
        %v7137 = vpack.c.b16 %v5821, %v5819
        %v7138 = vpack.c.b16 %v5822, %v5820
        %v7139 = vpack.c.b16 %v5825, %v5823
        %v7140 = vpack.c.b16 %v5826, %v5824
        %v7141 = vpack.c.b16 %v5829, %v5827
        %v7142 = vpack.c.b16 %v5830, %v5828
        %v7143 = vpack.c.b16 %v5833, %v5831
        %v7144 = vpack.c.b16 %v5834, %v5832
        %v7145 = vpack.c.b16 %v5837, %v5835
        %v7146 = vpack.c.b16 %v5838, %v5836
        %v7147 = vpack.c.b16 %v5841, %v5839
        %v7148 = vpack.c.b16 %v5842, %v5840
        %v7149 = vpack.c.b16 %v5845, %v5843
        %v7150 = vpack.c.b16 %v5846, %v5844
        %v7151 = vpack.c.b16 %v5849, %v5847
        %v7152 = vpack.c.b16 %v5850, %v5848
        %v7153 = vpack.c.b16 %v5853, %v5851
        %v7154 = vpack.c.b16 %v5854, %v5852
        %v7155 = vpack.c.b16 %v5857, %v5855
        %v7156 = vpack.c.b16 %v5858, %v5856
        %v7157 = vpack.c.b16 %v5861, %v5859
        %v7158 = vpack.c.b16 %v5862, %v5860
        %v7159 = vpack.c.b16 %v5865, %v5863
        %v7160 = vpack.c.b16 %v5866, %v5864
        %v7161 = vpack.c.b16 %v5869, %v5867
        %v7162 = vpack.c.b16 %v5870, %v5868
        %v7163 = vpack.c.b16 %v5873, %v5871
        %v7164 = vpack.c.b16 %v5874, %v5872
        %v7165 = vpack.c.b16 %v5877, %v5875
        %v7166 = vpack.c.b16 %v5878, %v5876
        %v7167 = vpack.c.b16 %v5881, %v5879
        %v7168 = vpack.c.b16 %v5882, %v5880
        %v7169 = vpack.c.b16 %v5885, %v5883
        %v7170 = vpack.c.b16 %v5886, %v5884
        %v7171 = vpack.c.b16 %v5889, %v5887
        %v7172 = vpack.c.b16 %v5890, %v5888
        %v7173 = vpack.c.b16 %v5893, %v5891
        %v7174 = vpack.c.b16 %v5894, %v5892
        %8455 = vmatprep.subr.bf16.mxu0 %v5896
        %8456 = vmatpush1.bf16.msra.mxu0 %v5895
        %8457 = vmatprep.subr.bf16.mxu0 %v5898
        %8458 = vmatpush1.bf16.msra.mxu0 %v5897
        %8459 = vmatprep.subr.bf16.mxu0 %v5900
        %8460 = vmatpush1.bf16.msra.mxu0 %v5899
        %8461 = vmatprep.subr.bf16.mxu0 %v5902
        %8462 = vmatpush1.bf16.msra.mxu0 %v5901
        %8463 = vmatprep.subr.bf16.mxu0 %v5904
        %8464 = vmatpush1.bf16.msra.mxu0 %v5903
        %8465 = vmatprep.subr.bf16.mxu0 %v5906
        %8466 = vmatpush1.bf16.msra.mxu0 %v5905
        %8467 = vmatprep.subr.bf16.mxu0 %v5908
        %8468 = vmatpush1.bf16.msra.mxu0 %v5907
        %8469 = vmatprep.subr.bf16.mxu0 %v5910
        %8470 = vmatpush1.bf16.msra.mxu0 %v5909
        %8471 = vmatprep.subr.bf16.mxu0 %v5912
        %8472 = vmatpush1.bf16.msra.mxu0 %v5911
        %8473 = vmatprep.subr.bf16.mxu0 %v5914
        %8474 = vmatpush1.bf16.msra.mxu0 %v5913
        %8475 = vmatprep.subr.bf16.mxu0 %v5916
        %8476 = vmatpush1.bf16.msra.mxu0 %v5915
        %8477 = vmatprep.subr.bf16.mxu0 %v5918
        %8478 = vmatpush1.bf16.msra.mxu0 %v5917
        %8479 = vmatprep.subr.bf16.mxu0 %v5920
        %8480 = vmatpush1.bf16.msra.mxu0 %v5919
        %8481 = vmatprep.subr.bf16.mxu0 %v5922
        %8482 = vmatpush1.bf16.msra.mxu0 %v5921
        %8483 = vmatprep.subr.bf16.mxu0 %v5924
        %8484 = vmatpush1.bf16.msra.mxu0 %v5923
        %8485 = vmatprep.subr.bf16.mxu0 %v5926
        %8486 = vmatpush1.bf16.msra.mxu0 %v5925
        %8487 = vmatprep.mubr.bf16.mxu0 %v1522
        %8488 = vmatmul.mubr.bf16.gmra.mrb[0].mxu0 %v1508
        %v8489 = vpop.f32.mrb[0].mxu0
        %v8490 = vadd.f32 0.0, %v8489
        %v8491 = vpop.f32.mrb[0].mxu0
        %v8492 = vadd.f32 0.0, %v8491
        %v8493 = vpop.f32.mrb[0].mxu0
        %v8494 = vpop.f32.mrb[0].mxu0
        %8495 = vdwg.mxu0
        %8496 = vmatprep.subr.bf16.mxu0 %v5928
        %8497 = vmatpush1.bf16.msra.mxu0 %v5927
        %8498 = vmatprep.subr.bf16.mxu0 %v5930
        %8499 = vmatpush1.bf16.msra.mxu0 %v5929
        %8500 = vmatprep.subr.bf16.mxu0 %v5932
        %8501 = vmatpush1.bf16.msra.mxu0 %v5931
        %8502 = vmatprep.subr.bf16.mxu0 %v5934
        %8503 = vmatpush1.bf16.msra.mxu0 %v5933
        %8504 = vmatprep.subr.bf16.mxu0 %v5936
        %8505 = vmatpush1.bf16.msra.mxu0 %v5935
        %8506 = vmatprep.subr.bf16.mxu0 %v5938
        %8507 = vmatpush1.bf16.msra.mxu0 %v5937
        %8508 = vmatprep.subr.bf16.mxu0 %v5940
        %8509 = vmatpush1.bf16.msra.mxu0 %v5939
        %8510 = vmatprep.subr.bf16.mxu0 %v5942
        %8511 = vmatpush1.bf16.msra.mxu0 %v5941
        %8512 = vmatprep.subr.bf16.mxu0 %v5944
        %8513 = vmatpush1.bf16.msra.mxu0 %v5943
        %8514 = vmatprep.subr.bf16.mxu0 %v5946
        %8515 = vmatpush1.bf16.msra.mxu0 %v5945
        %8516 = vmatprep.subr.bf16.mxu0 %v5948
        %8517 = vmatpush1.bf16.msra.mxu0 %v5947
        %8518 = vmatprep.subr.bf16.mxu0 %v5950
        %8519 = vmatpush1.bf16.msra.mxu0 %v5949
        %8520 = vmatprep.subr.bf16.mxu0 %v5952
        %8521 = vmatpush1.bf16.msra.mxu0 %v5951
        %8522 = vmatprep.subr.bf16.mxu0 %v5954
        %8523 = vmatpush1.bf16.msra.mxu0 %v5953
        %8524 = vmatprep.subr.bf16.mxu0 %v5956
        %8525 = vmatpush1.bf16.msra.mxu0 %v5955
        %8526 = vmatprep.subr.bf16.mxu0 %v5958
        %8527 = vmatpush1.bf16.msra.mxu0 %v5957
        %8528 = vmatprep.mubr.bf16.mxu0 %v1532
        %8529 = vmatmul.mubr.bf16.gmra.mrb[0].mxu0 %v1530
        %v8530 = vpop.f32.mrb[0].mxu0
        %v8531 = vadd.f32 %v8490, %v8530
        %v8532 = vpop.f32.mrb[0].mxu0
        %v8533 = vadd.f32 %v8492, %v8532
        %v8534 = vpop.f32.mrb[0].mxu0
        %v8535 = vpop.f32.mrb[0].mxu0
        %8536 = vdwg.mxu0
        %8537 = vmatprep.subr.bf16.mxu0 %v5960
        %8538 = vmatpush1.bf16.msra.mxu0 %v5959
        %8539 = vmatprep.subr.bf16.mxu0 %v5962
        %8540 = vmatpush1.bf16.msra.mxu0 %v5961
        %8541 = vmatprep.subr.bf16.mxu0 %v5964
        %8542 = vmatpush1.bf16.msra.mxu0 %v5963
        %8543 = vmatprep.subr.bf16.mxu0 %v5966
        %8544 = vmatpush1.bf16.msra.mxu0 %v5965
        %8545 = vmatprep.subr.bf16.mxu0 %v5968
        %8546 = vmatpush1.bf16.msra.mxu0 %v5967
        %8547 = vmatprep.subr.bf16.mxu0 %v5970
        %8548 = vmatpush1.bf16.msra.mxu0 %v5969
        %8549 = vmatprep.subr.bf16.mxu0 %v5972
        %8550 = vmatpush1.bf16.msra.mxu0 %v5971
        %8551 = vmatprep.subr.bf16.mxu0 %v5974
        %8552 = vmatpush1.bf16.msra.mxu0 %v5973
        %8553 = vmatprep.subr.bf16.mxu0 %v5976
        %8554 = vmatpush1.bf16.msra.mxu0 %v5975
        %8555 = vmatprep.subr.bf16.mxu0 %v5978
        %8556 = vmatpush1.bf16.msra.mxu0 %v5977
        %8557 = vmatprep.subr.bf16.mxu0 %v5980
        %8558 = vmatpush1.bf16.msra.mxu0 %v5979
        %8559 = vmatprep.subr.bf16.mxu0 %v5982
        %8560 = vmatpush1.bf16.msra.mxu0 %v5981
        %8561 = vmatprep.subr.bf16.mxu0 %v5984
        %8562 = vmatpush1.bf16.msra.mxu0 %v5983
        %8563 = vmatprep.subr.bf16.mxu0 %v5986
        %8564 = vmatpush1.bf16.msra.mxu0 %v5985
        %8565 = vmatprep.subr.bf16.mxu0 %v5988
        %8566 = vmatpush1.bf16.msra.mxu0 %v5987
        %8567 = vmatprep.subr.bf16.mxu0 %v5990
        %8568 = vmatpush1.bf16.msra.mxu0 %v5989
        %8569 = vmatprep.mubr.bf16.mxu0 %v1529
        %8570 = vmatmul.mubr.bf16.gmra.mrb[0].mxu0 %v1515
        %v8571 = vpop.f32.mrb[0].mxu0
        %v8572 = vadd.f32 %v8531, %v8571
        %v8573 = vpop.f32.mrb[0].mxu0
        %v8574 = vadd.f32 %v8533, %v8573
        %v8575 = vpop.f32.mrb[0].mxu0
        %v8576 = vpop.f32.mrb[0].mxu0
        %8577 = vdwg.mxu0
        %8578 = vmatprep.subr.bf16.mxu0 %v5992
        %8579 = vmatpush1.bf16.msra.mxu0 %v5991
        %8580 = vmatprep.subr.bf16.mxu0 %v5994
        %8581 = vmatpush1.bf16.msra.mxu0 %v5993
        %8582 = vmatprep.subr.bf16.mxu0 %v5996
        %8583 = vmatpush1.bf16.msra.mxu0 %v5995
        %8584 = vmatprep.subr.bf16.mxu0 %v5998
        %8585 = vmatpush1.bf16.msra.mxu0 %v5997
        %8586 = vmatprep.subr.bf16.mxu0 %v6000
        %8587 = vmatpush1.bf16.msra.mxu0 %v5999
        %8588 = vmatprep.subr.bf16.mxu0 %v6002
        %8589 = vmatpush1.bf16.msra.mxu0 %v6001
        %8590 = vmatprep.subr.bf16.mxu0 %v6004
        %8591 = vmatpush1.bf16.msra.mxu0 %v6003
        %8592 = vmatprep.subr.bf16.mxu0 %v6006
        %8593 = vmatpush1.bf16.msra.mxu0 %v6005
        %8594 = vmatprep.subr.bf16.mxu0 %v6008
        %8595 = vmatpush1.bf16.msra.mxu0 %v6007
        %8596 = vmatprep.subr.bf16.mxu0 %v6010
        %8597 = vmatpush1.bf16.msra.mxu0 %v6009
        %8598 = vmatprep.subr.bf16.mxu0 %v6012
        %8599 = vmatpush1.bf16.msra.mxu0 %v6011
        %8600 = vmatprep.subr.bf16.mxu0 %v6014
        %8601 = vmatpush1.bf16.msra.mxu0 %v6013
        %8602 = vmatprep.subr.bf16.mxu0 %v6016
        %8603 = vmatpush1.bf16.msra.mxu0 %v6015
        %8604 = vmatprep.subr.bf16.mxu0 %v6018
        %8605 = vmatpush1.bf16.msra.mxu0 %v6017
        %8606 = vmatprep.subr.bf16.mxu0 %v6020
        %8607 = vmatpush1.bf16.msra.mxu0 %v6019
        %8608 = vmatprep.subr.bf16.mxu0 %v6022
        %8609 = vmatpush1.bf16.msra.mxu0 %v6021
        %8610 = vmatprep.mubr.bf16.mxu0 %v1533
        %8611 = vmatmul.mubr.bf16.gmra.mrb[0].mxu0 %v1531
        %v8612 = vpop.f32.mrb[0].mxu0
        %v8613 = vadd.f32 %v8572, %v8612
        %v8614 = vpop.f32.mrb[0].mxu0
        %v8615 = vadd.f32 %v8574, %v8614
        %v8616 = vpop.f32.mrb[0].mxu0
        %v8617 = vpop.f32.mrb[0].mxu0
        %8618 = vdwg.mxu0
        %8619 = vmatprep.subr.bf16.mxu0 %v6024
        %8620 = vmatpush1.bf16.msra.mxu0 %v6023
        %8621 = vmatprep.subr.bf16.mxu0 %v6026
        %8622 = vmatpush1.bf16.msra.mxu0 %v6025
        %8623 = vmatprep.subr.bf16.mxu0 %v6028
        %8624 = vmatpush1.bf16.msra.mxu0 %v6027
        %8625 = vmatprep.subr.bf16.mxu0 %v6030
        %8626 = vmatpush1.bf16.msra.mxu0 %v6029
        %8627 = vmatprep.subr.bf16.mxu0 %v6032
        %8628 = vmatpush1.bf16.msra.mxu0 %v6031
        %8629 = vmatprep.subr.bf16.mxu0 %v6034
        %8630 = vmatpush1.bf16.msra.mxu0 %v6033
        %8631 = vmatprep.subr.bf16.mxu0 %v6036
        %8632 = vmatpush1.bf16.msra.mxu0 %v6035
        %8633 = vmatprep.subr.bf16.mxu0 %v6038
        %8634 = vmatpush1.bf16.msra.mxu0 %v6037
        %8635 = vmatprep.subr.bf16.mxu0 %v6040
        %8636 = vmatpush1.bf16.msra.mxu0 %v6039
        %8637 = vmatprep.subr.bf16.mxu0 %v6042
        %8638 = vmatpush1.bf16.msra.mxu0 %v6041
        %8639 = vmatprep.subr.bf16.mxu0 %v6044
        %8640 = vmatpush1.bf16.msra.mxu0 %v6043
        %8641 = vmatprep.subr.bf16.mxu0 %v6046
        %8642 = vmatpush1.bf16.msra.mxu0 %v6045
        %8643 = vmatprep.subr.bf16.mxu0 %v6048
        %8644 = vmatpush1.bf16.msra.mxu0 %v6047
        %8645 = vmatprep.subr.bf16.mxu0 %v6050
        %8646 = vmatpush1.bf16.msra.mxu0 %v6049
        %8647 = vmatprep.subr.bf16.mxu0 %v6052
        %8648 = vmatpush1.bf16.msra.mxu0 %v6051
        %8649 = vmatprep.subr.bf16.mxu0 %v6054
        %8650 = vmatpush1.bf16.msra.mxu0 %v6053
        %8651 = vmatprep.mubr.bf16.mxu0 %v1571
        %8652 = vmatmul.mubr.bf16.gmra.mrb[0].mxu0 %v1557
        %v8653 = vpop.f32.mrb[0].mxu0
        %v8654 = vadd.f32 %v8613, %v8653
        %v8655 = vpop.f32.mrb[0].mxu0
        %v8656 = vadd.f32 %v8615, %v8655
        %v8657 = vpop.f32.mrb[0].mxu0
        %v8658 = vpop.f32.mrb[0].mxu0
        %8659 = vdwg.mxu0
        %8660 = vmatprep.subr.bf16.mxu0 %v6056
        %8661 = vmatpush1.bf16.msra.mxu0 %v6055
        %8662 = vmatprep.subr.bf16.mxu0 %v6058
        %8663 = vmatpush1.bf16.msra.mxu0 %v6057
        %8664 = vmatprep.subr.bf16.mxu0 %v6060
        %8665 = vmatpush1.bf16.msra.mxu0 %v6059
        %8666 = vmatprep.subr.bf16.mxu0 %v6062
        %8667 = vmatpush1.bf16.msra.mxu0 %v6061
        %8668 = vmatprep.subr.bf16.mxu0 %v6064
        %8669 = vmatpush1.bf16.msra.mxu0 %v6063
        %8670 = vmatprep.subr.bf16.mxu0 %v6066
        %8671 = vmatpush1.bf16.msra.mxu0 %v6065
        %8672 = vmatprep.subr.bf16.mxu0 %v6068
        %8673 = vmatpush1.bf16.msra.mxu0 %v6067
        %8674 = vmatprep.subr.bf16.mxu0 %v6070
        %8675 = vmatpush1.bf16.msra.mxu0 %v6069
        %8676 = vmatprep.subr.bf16.mxu0 %v6072
        %8677 = vmatpush1.bf16.msra.mxu0 %v6071
        %8678 = vmatprep.subr.bf16.mxu0 %v6074
        %8679 = vmatpush1.bf16.msra.mxu0 %v6073
        %8680 = vmatprep.subr.bf16.mxu0 %v6076
        %8681 = vmatpush1.bf16.msra.mxu0 %v6075
        %8682 = vmatprep.subr.bf16.mxu0 %v6078
        %8683 = vmatpush1.bf16.msra.mxu0 %v6077
        %8684 = vmatprep.subr.bf16.mxu0 %v6080
        %8685 = vmatpush1.bf16.msra.mxu0 %v6079
        %8686 = vmatprep.subr.bf16.mxu0 %v6082
        %8687 = vmatpush1.bf16.msra.mxu0 %v6081
        %8688 = vmatprep.subr.bf16.mxu0 %v6084
        %8689 = vmatpush1.bf16.msra.mxu0 %v6083
        %8690 = vmatprep.subr.bf16.mxu0 %v6086
        %8691 = vmatpush1.bf16.msra.mxu0 %v6085
        %8692 = vmatprep.mubr.bf16.mxu0 %v1581
        %8693 = vmatmul.mubr.bf16.gmra.mrb[0].mxu0 %v1579
        %v8694 = vpop.f32.mrb[0].mxu0
        %v8695 = vadd.f32 %v8654, %v8694
        %v8696 = vpop.f32.mrb[0].mxu0
        %v8697 = vadd.f32 %v8656, %v8696
        %v8698 = vpop.f32.mrb[0].mxu0
        %v8699 = vpop.f32.mrb[0].mxu0
        %8700 = vdwg.mxu0
        %8701 = vmatprep.subr.bf16.mxu0 %v6088
        %8702 = vmatpush1.bf16.msra.mxu0 %v6087
        %8703 = vmatprep.subr.bf16.mxu0 %v6090
        %8704 = vmatpush1.bf16.msra.mxu0 %v6089
        %8705 = vmatprep.subr.bf16.mxu0 %v6092
        %8706 = vmatpush1.bf16.msra.mxu0 %v6091
        %8707 = vmatprep.subr.bf16.mxu0 %v6094
        %8708 = vmatpush1.bf16.msra.mxu0 %v6093
        %8709 = vmatprep.subr.bf16.mxu0 %v6096
        %8710 = vmatpush1.bf16.msra.mxu0 %v6095
        %8711 = vmatprep.subr.bf16.mxu0 %v6098
        %8712 = vmatpush1.bf16.msra.mxu0 %v6097
        %8713 = vmatprep.subr.bf16.mxu0 %v6100
        %8714 = vmatpush1.bf16.msra.mxu0 %v6099
        %8715 = vmatprep.subr.bf16.mxu0 %v6102
        %8716 = vmatpush1.bf16.msra.mxu0 %v6101
        %8717 = vmatprep.subr.bf16.mxu0 %v6104
        %8718 = vmatpush1.bf16.msra.mxu0 %v6103
        %8719 = vmatprep.subr.bf16.mxu0 %v6106
        %8720 = vmatpush1.bf16.msra.mxu0 %v6105
        %8721 = vmatprep.subr.bf16.mxu0 %v6108
        %8722 = vmatpush1.bf16.msra.mxu0 %v6107
        %8723 = vmatprep.subr.bf16.mxu0 %v6110
        %8724 = vmatpush1.bf16.msra.mxu0 %v6109
        %8725 = vmatprep.subr.bf16.mxu0 %v6112
        %8726 = vmatpush1.bf16.msra.mxu0 %v6111
        %8727 = vmatprep.subr.bf16.mxu0 %v6114
        %8728 = vmatpush1.bf16.msra.mxu0 %v6113
        %8729 = vmatprep.subr.bf16.mxu0 %v6116
        %8730 = vmatpush1.bf16.msra.mxu0 %v6115
        %8731 = vmatprep.subr.bf16.mxu0 %v6118
        %8732 = vmatpush1.bf16.msra.mxu0 %v6117
        %8733 = vmatprep.mubr.bf16.mxu0 %v1578
        %8734 = vmatmul.mubr.bf16.gmra.mrb[0].mxu0 %v1564
        %v8735 = vpop.f32.mrb[0].mxu0
        %v8736 = vadd.f32 %v8695, %v8735
        %v8737 = vpop.f32.mrb[0].mxu0
        %v8738 = vadd.f32 %v8697, %v8737
        %v8739 = vpop.f32.mrb[0].mxu0
        %v8740 = vpop.f32.mrb[0].mxu0
        %8741 = vdwg.mxu0
        %8742 = vmatprep.subr.bf16.mxu0 %v6120
        %8743 = vmatpush1.bf16.msra.mxu0 %v6119
        %8744 = vmatprep.subr.bf16.mxu0 %v6122
        %8745 = vmatpush1.bf16.msra.mxu0 %v6121
        %8746 = vmatprep.subr.bf16.mxu0 %v6124
        %8747 = vmatpush1.bf16.msra.mxu0 %v6123
        %8748 = vmatprep.subr.bf16.mxu0 %v6126
        %8749 = vmatpush1.bf16.msra.mxu0 %v6125
        %8750 = vmatprep.subr.bf16.mxu0 %v6128
        %8751 = vmatpush1.bf16.msra.mxu0 %v6127
        %8752 = vmatprep.subr.bf16.mxu0 %v6130
        %8753 = vmatpush1.bf16.msra.mxu0 %v6129
        %8754 = vmatprep.subr.bf16.mxu0 %v6132
        %8755 = vmatpush1.bf16.msra.mxu0 %v6131
        %8756 = vmatprep.subr.bf16.mxu0 %v6134
        %8757 = vmatpush1.bf16.msra.mxu0 %v6133
        %8758 = vmatprep.subr.bf16.mxu0 %v6136
        %8759 = vmatpush1.bf16.msra.mxu0 %v6135
        %8760 = vmatprep.subr.bf16.mxu0 %v6138
        %8761 = vmatpush1.bf16.msra.mxu0 %v6137
        %8762 = vmatprep.subr.bf16.mxu0 %v6140
        %8763 = vmatpush1.bf16.msra.mxu0 %v6139
        %8764 = vmatprep.subr.bf16.mxu0 %v6142
        %8765 = vmatpush1.bf16.msra.mxu0 %v6141
        %8766 = vmatprep.subr.bf16.mxu0 %v6144
        %8767 = vmatpush1.bf16.msra.mxu0 %v6143
        %8768 = vmatprep.subr.bf16.mxu0 %v6146
        %8769 = vmatpush1.bf16.msra.mxu0 %v6145
        %8770 = vmatprep.subr.bf16.mxu0 %v6148
        %8771 = vmatpush1.bf16.msra.mxu0 %v6147
        %8772 = vmatprep.subr.bf16.mxu0 %v6150
        %8773 = vmatpush1.bf16.msra.mxu0 %v6149
        %8774 = vmatprep.mubr.bf16.mxu0 %v1582
        %8775 = vmatmul.mubr.bf16.gmra.mrb[0].mxu0 %v1580
        %v8776 = vpop.f32.mrb[0].mxu0
        %v8777 = vadd.f32 %v8736, %v8776
        %v8778 = vpop.f32.mrb[0].mxu0
        %v8779 = vadd.f32 %v8738, %v8778
        %v8780 = vpop.f32.mrb[0].mxu0
        %v8781 = vpop.f32.mrb[0].mxu0
        %8782 = vdwg.mxu0
        %8783 = vmatprep.subr.bf16.mxu0 %v6152
        %8784 = vmatpush1.bf16.msra.mxu0 %v6151
        %8785 = vmatprep.subr.bf16.mxu0 %v6154
        %8786 = vmatpush1.bf16.msra.mxu0 %v6153
        %8787 = vmatprep.subr.bf16.mxu0 %v6156
        %8788 = vmatpush1.bf16.msra.mxu0 %v6155
        %8789 = vmatprep.subr.bf16.mxu0 %v6158
        %8790 = vmatpush1.bf16.msra.mxu0 %v6157
        %8791 = vmatprep.subr.bf16.mxu0 %v6160
        %8792 = vmatpush1.bf16.msra.mxu0 %v6159
        %8793 = vmatprep.subr.bf16.mxu0 %v6162
        %8794 = vmatpush1.bf16.msra.mxu0 %v6161
        %8795 = vmatprep.subr.bf16.mxu0 %v6164
        %8796 = vmatpush1.bf16.msra.mxu0 %v6163
        %8797 = vmatprep.subr.bf16.mxu0 %v6166
        %8798 = vmatpush1.bf16.msra.mxu0 %v6165
        %8799 = vmatprep.subr.bf16.mxu0 %v6168
        %8800 = vmatpush1.bf16.msra.mxu0 %v6167
        %8801 = vmatprep.subr.bf16.mxu0 %v6170
        %8802 = vmatpush1.bf16.msra.mxu0 %v6169
        %8803 = vmatprep.subr.bf16.mxu0 %v6172
        %8804 = vmatpush1.bf16.msra.mxu0 %v6171
        %8805 = vmatprep.subr.bf16.mxu0 %v6174
        %8806 = vmatpush1.bf16.msra.mxu0 %v6173
        %8807 = vmatprep.subr.bf16.mxu0 %v6176
        %8808 = vmatpush1.bf16.msra.mxu0 %v6175
        %8809 = vmatprep.subr.bf16.mxu0 %v6178
        %8810 = vmatpush1.bf16.msra.mxu0 %v6177
        %8811 = vmatprep.subr.bf16.mxu0 %v6180
        %8812 = vmatpush1.bf16.msra.mxu0 %v6179
        %8813 = vmatprep.subr.bf16.mxu0 %v6182
        %8814 = vmatpush1.bf16.msra.mxu0 %v6181
        %8815 = vmatprep.mubr.bf16.mxu0 %v1620
        %8816 = vmatmul.mubr.bf16.gmra.mrb[0].mxu0 %v1606
        %v8817 = vpop.f32.mrb[0].mxu0
        %v8818 = vadd.f32 %v8777, %v8817
        %v8819 = vpop.f32.mrb[0].mxu0
        %v8820 = vadd.f32 %v8779, %v8819
        %v8821 = vpop.f32.mrb[0].mxu0
        %v8822 = vpop.f32.mrb[0].mxu0
        %8823 = vdwg.mxu0
        %8824 = vmatprep.subr.bf16.mxu0 %v6184
        %8825 = vmatpush1.bf16.msra.mxu0 %v6183
        %8826 = vmatprep.subr.bf16.mxu0 %v6186
        %8827 = vmatpush1.bf16.msra.mxu0 %v6185
        %8828 = vmatprep.subr.bf16.mxu0 %v6188
        %8829 = vmatpush1.bf16.msra.mxu0 %v6187
        %8830 = vmatprep.subr.bf16.mxu0 %v6190
        %8831 = vmatpush1.bf16.msra.mxu0 %v6189
        %8832 = vmatprep.subr.bf16.mxu0 %v6192
        %8833 = vmatpush1.bf16.msra.mxu0 %v6191
        %8834 = vmatprep.subr.bf16.mxu0 %v6194
        %8835 = vmatpush1.bf16.msra.mxu0 %v6193
        %8836 = vmatprep.subr.bf16.mxu0 %v6196
        %8837 = vmatpush1.bf16.msra.mxu0 %v6195
        %8838 = vmatprep.subr.bf16.mxu0 %v6198
        %8839 = vmatpush1.bf16.msra.mxu0 %v6197
        %8840 = vmatprep.subr.bf16.mxu0 %v6200
        %8841 = vmatpush1.bf16.msra.mxu0 %v6199
        %8842 = vmatprep.subr.bf16.mxu0 %v6202
        %8843 = vmatpush1.bf16.msra.mxu0 %v6201
        %8844 = vmatprep.subr.bf16.mxu0 %v6204
        %8845 = vmatpush1.bf16.msra.mxu0 %v6203
        %8846 = vmatprep.subr.bf16.mxu0 %v6206
        %8847 = vmatpush1.bf16.msra.mxu0 %v6205
        %8848 = vmatprep.subr.bf16.mxu0 %v6208
        %8849 = vmatpush1.bf16.msra.mxu0 %v6207
        %8850 = vmatprep.subr.bf16.mxu0 %v6210
        %8851 = vmatpush1.bf16.msra.mxu0 %v6209
        %8852 = vmatprep.subr.bf16.mxu0 %v6212
        %8853 = vmatpush1.bf16.msra.mxu0 %v6211
        %8854 = vmatprep.subr.bf16.mxu0 %v6214
        %8855 = vmatpush1.bf16.msra.mxu0 %v6213
        %8856 = vmatprep.mubr.bf16.mxu0 %v1630
        %8857 = vmatmul.mubr.bf16.gmra.mrb[0].mxu0 %v1628
        %v8858 = vpop.f32.mrb[0].mxu0
        %v8859 = vadd.f32 %v8818, %v8858
        %v8860 = vpop.f32.mrb[0].mxu0
        %v8861 = vadd.f32 %v8820, %v8860
        %v8862 = vpop.f32.mrb[0].mxu0
        %v8863 = vpop.f32.mrb[0].mxu0
        %8864 = vdwg.mxu0
        %8865 = vmatprep.subr.bf16.mxu0 %v6216
        %8866 = vmatpush1.bf16.msra.mxu0 %v6215
        %8867 = vmatprep.subr.bf16.mxu0 %v6218
        %8868 = vmatpush1.bf16.msra.mxu0 %v6217
        %8869 = vmatprep.subr.bf16.mxu0 %v6220
        %8870 = vmatpush1.bf16.msra.mxu0 %v6219
        %8871 = vmatprep.subr.bf16.mxu0 %v6222
        %8872 = vmatpush1.bf16.msra.mxu0 %v6221
        %8873 = vmatprep.subr.bf16.mxu0 %v6224
        %8874 = vmatpush1.bf16.msra.mxu0 %v6223
        %8875 = vmatprep.subr.bf16.mxu0 %v6226
        %8876 = vmatpush1.bf16.msra.mxu0 %v6225
        %8877 = vmatprep.subr.bf16.mxu0 %v6228
        %8878 = vmatpush1.bf16.msra.mxu0 %v6227
        %8879 = vmatprep.subr.bf16.mxu0 %v6230
        %8880 = vmatpush1.bf16.msra.mxu0 %v6229
        %8881 = vmatprep.subr.bf16.mxu0 %v6232
        %8882 = vmatpush1.bf16.msra.mxu0 %v6231
        %8883 = vmatprep.subr.bf16.mxu0 %v6234
        %8884 = vmatpush1.bf16.msra.mxu0 %v6233
        %8885 = vmatprep.subr.bf16.mxu0 %v6236
        %8886 = vmatpush1.bf16.msra.mxu0 %v6235
        %8887 = vmatprep.subr.bf16.mxu0 %v6238
        %8888 = vmatpush1.bf16.msra.mxu0 %v6237
        %8889 = vmatprep.subr.bf16.mxu0 %v6240
        %8890 = vmatpush1.bf16.msra.mxu0 %v6239
        %8891 = vmatprep.subr.bf16.mxu0 %v6242
        %8892 = vmatpush1.bf16.msra.mxu0 %v6241
        %8893 = vmatprep.subr.bf16.mxu0 %v6244
        %8894 = vmatpush1.bf16.msra.mxu0 %v6243
        %8895 = vmatprep.subr.bf16.mxu0 %v6246
        %8896 = vmatpush1.bf16.msra.mxu0 %v6245
        %8897 = vmatprep.mubr.bf16.mxu0 %v1627
        %8898 = vmatmul.mubr.bf16.gmra.mrb[0].mxu0 %v1613
        %v8899 = vpop.f32.mrb[0].mxu0
        %v8900 = vadd.f32 %v8859, %v8899
        %v8901 = vpop.f32.mrb[0].mxu0
        %v8902 = vadd.f32 %v8861, %v8901
        %v8903 = vpop.f32.mrb[0].mxu0
        %v8904 = vpop.f32.mrb[0].mxu0
        %8905 = vdwg.mxu0
        %8906 = vmatprep.subr.bf16.mxu0 %v6248
        %8907 = vmatpush1.bf16.msra.mxu0 %v6247
        %8908 = vmatprep.subr.bf16.mxu0 %v6250
        %8909 = vmatpush1.bf16.msra.mxu0 %v6249
        %8910 = vmatprep.subr.bf16.mxu0 %v6252
        %8911 = vmatpush1.bf16.msra.mxu0 %v6251
        %8912 = vmatprep.subr.bf16.mxu0 %v6254
        %8913 = vmatpush1.bf16.msra.mxu0 %v6253
        %8914 = vmatprep.subr.bf16.mxu0 %v6256
        %8915 = vmatpush1.bf16.msra.mxu0 %v6255
        %8916 = vmatprep.subr.bf16.mxu0 %v6258
        %8917 = vmatpush1.bf16.msra.mxu0 %v6257
        %8918 = vmatprep.subr.bf16.mxu0 %v6260
        %8919 = vmatpush1.bf16.msra.mxu0 %v6259
        %8920 = vmatprep.subr.bf16.mxu0 %v6262
        %8921 = vmatpush1.bf16.msra.mxu0 %v6261
        %8922 = vmatprep.subr.bf16.mxu0 %v6264
        %8923 = vmatpush1.bf16.msra.mxu0 %v6263
        %8924 = vmatprep.subr.bf16.mxu0 %v6266
        %8925 = vmatpush1.bf16.msra.mxu0 %v6265
        %8926 = vmatprep.subr.bf16.mxu0 %v6268
        %8927 = vmatpush1.bf16.msra.mxu0 %v6267
        %8928 = vmatprep.subr.bf16.mxu0 %v6270
        %8929 = vmatpush1.bf16.msra.mxu0 %v6269
        %8930 = vmatprep.subr.bf16.mxu0 %v6272
        %8931 = vmatpush1.bf16.msra.mxu0 %v6271
        %8932 = vmatprep.subr.bf16.mxu0 %v6274
        %8933 = vmatpush1.bf16.msra.mxu0 %v6273
        %8934 = vmatprep.subr.bf16.mxu0 %v6276
        %8935 = vmatpush1.bf16.msra.mxu0 %v6275
        %8936 = vmatprep.subr.bf16.mxu0 %v6278
        %8937 = vmatpush1.bf16.msra.mxu0 %v6277
        %8938 = vmatprep.mubr.bf16.mxu0 %v1631
        %8939 = vmatmul.mubr.bf16.gmra.mrb[0].mxu0 %v1629
        %v8940 = vpop.f32.mrb[0].mxu0
        %v8941 = vadd.f32 %v8900, %v8940
        %v8942 = vpop.f32.mrb[0].mxu0
        %v8943 = vadd.f32 %v8902, %v8942
        %v8944 = vpop.f32.mrb[0].mxu0
        %v8945 = vpop.f32.mrb[0].mxu0
        %8946 = vdwg.mxu0
        %8947 = vmatprep.subr.bf16.mxu0 %v6280
        %8948 = vmatpush1.bf16.msra.mxu0 %v6279
        %8949 = vmatprep.subr.bf16.mxu0 %v6282
        %8950 = vmatpush1.bf16.msra.mxu0 %v6281
        %8951 = vmatprep.subr.bf16.mxu0 %v6284
        %8952 = vmatpush1.bf16.msra.mxu0 %v6283
        %8953 = vmatprep.subr.bf16.mxu0 %v6286
        %8954 = vmatpush1.bf16.msra.mxu0 %v6285
        %8955 = vmatprep.subr.bf16.mxu0 %v6288
        %8956 = vmatpush1.bf16.msra.mxu0 %v6287
        %8957 = vmatprep.subr.bf16.mxu0 %v6290
        %8958 = vmatpush1.bf16.msra.mxu0 %v6289
        %8959 = vmatprep.subr.bf16.mxu0 %v6292
        %8960 = vmatpush1.bf16.msra.mxu0 %v6291
        %8961 = vmatprep.subr.bf16.mxu0 %v6294
        %8962 = vmatpush1.bf16.msra.mxu0 %v6293
        %8963 = vmatprep.subr.bf16.mxu0 %v6296
        %8964 = vmatpush1.bf16.msra.mxu0 %v6295
        %8965 = vmatprep.subr.bf16.mxu0 %v6298
        %8966 = vmatpush1.bf16.msra.mxu0 %v6297
        %8967 = vmatprep.subr.bf16.mxu0 %v6300
        %8968 = vmatpush1.bf16.msra.mxu0 %v6299
        %8969 = vmatprep.subr.bf16.mxu0 %v6302
        %8970 = vmatpush1.bf16.msra.mxu0 %v6301
        %8971 = vmatprep.subr.bf16.mxu0 %v6304
        %8972 = vmatpush1.bf16.msra.mxu0 %v6303
        %8973 = vmatprep.subr.bf16.mxu0 %v6306
        %8974 = vmatpush1.bf16.msra.mxu0 %v6305
        %8975 = vmatprep.subr.bf16.mxu0 %v6308
        %8976 = vmatpush1.bf16.msra.mxu0 %v6307
        %8977 = vmatprep.subr.bf16.mxu0 %v6310
        %8978 = vmatpush1.bf16.msra.mxu0 %v6309
        %8979 = vmatprep.mubr.bf16.mxu0 %v1669
        %8980 = vmatmul.mubr.bf16.gmra.mrb[0].mxu0 %v1655
        %v8981 = vpop.f32.mrb[0].mxu0
        %v8982 = vadd.f32 %v8941, %v8981
        %v8983 = vpop.f32.mrb[0].mxu0
        %v8984 = vadd.f32 %v8943, %v8983
        %v8985 = vpop.f32.mrb[0].mxu0
        %v8986 = vpop.f32.mrb[0].mxu0
        %8987 = vdwg.mxu0
        %8988 = vmatprep.subr.bf16.mxu0 %v6312
        %8989 = vmatpush1.bf16.msra.mxu0 %v6311
        %8990 = vmatprep.subr.bf16.mxu0 %v6314
        %8991 = vmatpush1.bf16.msra.mxu0 %v6313
        %8992 = vmatprep.subr.bf16.mxu0 %v6316
        %8993 = vmatpush1.bf16.msra.mxu0 %v6315
        %8994 = vmatprep.subr.bf16.mxu0 %v6318
        %8995 = vmatpush1.bf16.msra.mxu0 %v6317
        %8996 = vmatprep.subr.bf16.mxu0 %v6320
        %8997 = vmatpush1.bf16.msra.mxu0 %v6319
        %8998 = vmatprep.subr.bf16.mxu0 %v6322
        %8999 = vmatpush1.bf16.msra.mxu0 %v6321
        %9000 = vmatprep.subr.bf16.mxu0 %v6324
        %9001 = vmatpush1.bf16.msra.mxu0 %v6323
        %9002 = vmatprep.subr.bf16.mxu0 %v6326
        %9003 = vmatpush1.bf16.msra.mxu0 %v6325
        %9004 = vmatprep.subr.bf16.mxu0 %v6328
        %9005 = vmatpush1.bf16.msra.mxu0 %v6327
        %9006 = vmatprep.subr.bf16.mxu0 %v6330
        %9007 = vmatpush1.bf16.msra.mxu0 %v6329
        %9008 = vmatprep.subr.bf16.mxu0 %v6332
        %9009 = vmatpush1.bf16.msra.mxu0 %v6331
        %9010 = vmatprep.subr.bf16.mxu0 %v6334
        %9011 = vmatpush1.bf16.msra.mxu0 %v6333
        %9012 = vmatprep.subr.bf16.mxu0 %v6336
        %9013 = vmatpush1.bf16.msra.mxu0 %v6335
        %9014 = vmatprep.subr.bf16.mxu0 %v6338
        %9015 = vmatpush1.bf16.msra.mxu0 %v6337
        %9016 = vmatprep.subr.bf16.mxu0 %v6340
        %9017 = vmatpush1.bf16.msra.mxu0 %v6339
        %9018 = vmatprep.subr.bf16.mxu0 %v6342
        %9019 = vmatpush1.bf16.msra.mxu0 %v6341
        %9020 = vmatprep.mubr.bf16.mxu0 %v1679
        %9021 = vmatmul.mubr.bf16.gmra.mrb[0].mxu0 %v1677
        %v9022 = vpop.f32.mrb[0].mxu0
        %v9023 = vadd.f32 %v8982, %v9022
        %v9024 = vpop.f32.mrb[0].mxu0
        %v9025 = vadd.f32 %v8984, %v9024
        %v9026 = vpop.f32.mrb[0].mxu0
        %v9027 = vpop.f32.mrb[0].mxu0
        %9028 = vdwg.mxu0
        %9029 = vmatprep.subr.bf16.mxu0 %v6344
        %9030 = vmatpush1.bf16.msra.mxu0 %v6343
        %9031 = vmatprep.subr.bf16.mxu0 %v6346
        %9032 = vmatpush1.bf16.msra.mxu0 %v6345
        %9033 = vmatprep.subr.bf16.mxu0 %v6348
        %9034 = vmatpush1.bf16.msra.mxu0 %v6347
        %9035 = vmatprep.subr.bf16.mxu0 %v6350
        %9036 = vmatpush1.bf16.msra.mxu0 %v6349
        %9037 = vmatprep.subr.bf16.mxu0 %v6352
        %9038 = vmatpush1.bf16.msra.mxu0 %v6351
        %9039 = vmatprep.subr.bf16.mxu0 %v6354
        %9040 = vmatpush1.bf16.msra.mxu0 %v6353
        %9041 = vmatprep.subr.bf16.mxu0 %v6356
        %9042 = vmatpush1.bf16.msra.mxu0 %v6355
        %9043 = vmatprep.subr.bf16.mxu0 %v6358
        %9044 = vmatpush1.bf16.msra.mxu0 %v6357
        %9045 = vmatprep.subr.bf16.mxu0 %v6360
        %9046 = vmatpush1.bf16.msra.mxu0 %v6359
        %9047 = vmatprep.subr.bf16.mxu0 %v6362
        %9048 = vmatpush1.bf16.msra.mxu0 %v6361
        %9049 = vmatprep.subr.bf16.mxu0 %v6364
        %9050 = vmatpush1.bf16.msra.mxu0 %v6363
        %9051 = vmatprep.subr.bf16.mxu0 %v6366
        %9052 = vmatpush1.bf16.msra.mxu0 %v6365
        %9053 = vmatprep.subr.bf16.mxu0 %v6368
        %9054 = vmatpush1.bf16.msra.mxu0 %v6367
        %9055 = vmatprep.subr.bf16.mxu0 %v6370
        %9056 = vmatpush1.bf16.msra.mxu0 %v6369
        %9057 = vmatprep.subr.bf16.mxu0 %v6372
        %9058 = vmatpush1.bf16.msra.mxu0 %v6371
        %9059 = vmatprep.subr.bf16.mxu0 %v6374
        %9060 = vmatpush1.bf16.msra.mxu0 %v6373
        %9061 = vmatprep.mubr.bf16.mxu0 %v1676
        %9062 = vmatmul.mubr.bf16.gmra.mrb[0].mxu0 %v1662
        %v9063 = vpop.f32.mrb[0].mxu0
        %v9064 = vadd.f32 %v9023, %v9063
        %v9065 = vpop.f32.mrb[0].mxu0
        %v9066 = vadd.f32 %v9025, %v9065
        %v9067 = vpop.f32.mrb[0].mxu0
        %v9068 = vpop.f32.mrb[0].mxu0
        %9069 = vdwg.mxu0
        %9070 = vmatprep.subr.bf16.mxu0 %v6376
        %9071 = vmatpush1.bf16.msra.mxu0 %v6375
        %9072 = vmatprep.subr.bf16.mxu0 %v6378
        %9073 = vmatpush1.bf16.msra.mxu0 %v6377
        %9074 = vmatprep.subr.bf16.mxu0 %v6380
        %9075 = vmatpush1.bf16.msra.mxu0 %v6379
        %9076 = vmatprep.subr.bf16.mxu0 %v6382
        %9077 = vmatpush1.bf16.msra.mxu0 %v6381
        %9078 = vmatprep.subr.bf16.mxu0 %v6384
        %9079 = vmatpush1.bf16.msra.mxu0 %v6383
        %9080 = vmatprep.subr.bf16.mxu0 %v6386
        %9081 = vmatpush1.bf16.msra.mxu0 %v6385
        %9082 = vmatprep.subr.bf16.mxu0 %v6388
        %9083 = vmatpush1.bf16.msra.mxu0 %v6387
        %9084 = vmatprep.subr.bf16.mxu0 %v6390
        %9085 = vmatpush1.bf16.msra.mxu0 %v6389
        %9086 = vmatprep.subr.bf16.mxu0 %v6392
        %9087 = vmatpush1.bf16.msra.mxu0 %v6391
        %9088 = vmatprep.subr.bf16.mxu0 %v6394
        %9089 = vmatpush1.bf16.msra.mxu0 %v6393
        %9090 = vmatprep.subr.bf16.mxu0 %v6396
        %9091 = vmatpush1.bf16.msra.mxu0 %v6395
        %9092 = vmatprep.subr.bf16.mxu0 %v6398
        %9093 = vmatpush1.bf16.msra.mxu0 %v6397
        %9094 = vmatprep.subr.bf16.mxu0 %v6400
        %9095 = vmatpush1.bf16.msra.mxu0 %v6399
        %9096 = vmatprep.subr.bf16.mxu0 %v6402
        %9097 = vmatpush1.bf16.msra.mxu0 %v6401
        %9098 = vmatprep.subr.bf16.mxu0 %v6404
        %9099 = vmatpush1.bf16.msra.mxu0 %v6403
        %9100 = vmatprep.subr.bf16.mxu0 %v6406
        %9101 = vmatpush1.bf16.msra.mxu0 %v6405
        %9102 = vmatprep.mubr.bf16.mxu0 %v1680
        %9103 = vmatmul.mubr.bf16.gmra.mrb[0].mxu0 %v1678
        %v9104 = vpop.f32.mrb[0].mxu0
        %v9105 = vadd.f32 %v9064, %v9104
        %v9106 = vpop.f32.mrb[0].mxu0
        %v9107 = vadd.f32 %v9066, %v9106
        %v9108 = vpop.f32.mrb[0].mxu0
        %v9109 = vpop.f32.mrb[0].mxu0
        %9110 = vdwg.mxu0
        %9111 = vmatprep.subr.bf16.mxu0 %v6408
        %9112 = vmatpush1.bf16.msra.mxu0 %v6407
        %9113 = vmatprep.subr.bf16.mxu0 %v6410
        %9114 = vmatpush1.bf16.msra.mxu0 %v6409
        %9115 = vmatprep.subr.bf16.mxu0 %v6412
        %9116 = vmatpush1.bf16.msra.mxu0 %v6411
        %9117 = vmatprep.subr.bf16.mxu0 %v6414
        %9118 = vmatpush1.bf16.msra.mxu0 %v6413
        %9119 = vmatprep.subr.bf16.mxu0 %v6416
        %9120 = vmatpush1.bf16.msra.mxu0 %v6415
        %9121 = vmatprep.subr.bf16.mxu0 %v6418
        %9122 = vmatpush1.bf16.msra.mxu0 %v6417
        %9123 = vmatprep.subr.bf16.mxu0 %v6420
        %9124 = vmatpush1.bf16.msra.mxu0 %v6419
        %9125 = vmatprep.subr.bf16.mxu0 %v6422
        %9126 = vmatpush1.bf16.msra.mxu0 %v6421
        %9127 = vmatprep.subr.bf16.mxu0 %v6424
        %9128 = vmatpush1.bf16.msra.mxu0 %v6423
        %9129 = vmatprep.subr.bf16.mxu0 %v6426
        %9130 = vmatpush1.bf16.msra.mxu0 %v6425
        %9131 = vmatprep.subr.bf16.mxu0 %v6428
        %9132 = vmatpush1.bf16.msra.mxu0 %v6427
        %9133 = vmatprep.subr.bf16.mxu0 %v6430
        %9134 = vmatpush1.bf16.msra.mxu0 %v6429
        %9135 = vmatprep.subr.bf16.mxu0 %v6432
        %9136 = vmatpush1.bf16.msra.mxu0 %v6431
        %9137 = vmatprep.subr.bf16.mxu0 %v6434
        %9138 = vmatpush1.bf16.msra.mxu0 %v6433
        %9139 = vmatprep.subr.bf16.mxu0 %v6436
        %9140 = vmatpush1.bf16.msra.mxu0 %v6435
        %9141 = vmatprep.subr.bf16.mxu0 %v6438
        %9142 = vmatpush1.bf16.msra.mxu0 %v6437
        %9143 = vmatprep.mubr.bf16.mxu0 %v1718
        %9144 = vmatmul.mubr.bf16.gmra.mrb[0].mxu0 %v1704
        %v9145 = vpop.f32.mrb[0].mxu0
        %v9146 = vadd.f32 %v9105, %v9145
        %v9147 = vpop.f32.mrb[0].mxu0
        %v9148 = vadd.f32 %v9107, %v9147
        %v9149 = vpop.f32.mrb[0].mxu0
        %v9150 = vpop.f32.mrb[0].mxu0
        %9151 = vdwg.mxu0
        %9152 = vmatprep.subr.bf16.mxu0 %v6440
        %9153 = vmatpush1.bf16.msra.mxu0 %v6439
        %9154 = vmatprep.subr.bf16.mxu0 %v6442
        %9155 = vmatpush1.bf16.msra.mxu0 %v6441
        %9156 = vmatprep.subr.bf16.mxu0 %v6444
        %9157 = vmatpush1.bf16.msra.mxu0 %v6443
        %9158 = vmatprep.subr.bf16.mxu0 %v6446
        %9159 = vmatpush1.bf16.msra.mxu0 %v6445
        %9160 = vmatprep.subr.bf16.mxu0 %v6448
        %9161 = vmatpush1.bf16.msra.mxu0 %v6447
        %9162 = vmatprep.subr.bf16.mxu0 %v6450
        %9163 = vmatpush1.bf16.msra.mxu0 %v6449
        %9164 = vmatprep.subr.bf16.mxu0 %v6452
        %9165 = vmatpush1.bf16.msra.mxu0 %v6451
        %9166 = vmatprep.subr.bf16.mxu0 %v6454
        %9167 = vmatpush1.bf16.msra.mxu0 %v6453
        %9168 = vmatprep.subr.bf16.mxu0 %v6456
        %9169 = vmatpush1.bf16.msra.mxu0 %v6455
        %9170 = vmatprep.subr.bf16.mxu0 %v6458
        %9171 = vmatpush1.bf16.msra.mxu0 %v6457
        %9172 = vmatprep.subr.bf16.mxu0 %v6460
        %9173 = vmatpush1.bf16.msra.mxu0 %v6459
        %9174 = vmatprep.subr.bf16.mxu0 %v6462
        %9175 = vmatpush1.bf16.msra.mxu0 %v6461
        %9176 = vmatprep.subr.bf16.mxu0 %v6464
        %9177 = vmatpush1.bf16.msra.mxu0 %v6463
        %9178 = vmatprep.subr.bf16.mxu0 %v6466
        %9179 = vmatpush1.bf16.msra.mxu0 %v6465
        %9180 = vmatprep.subr.bf16.mxu0 %v6468
        %9181 = vmatpush1.bf16.msra.mxu0 %v6467
        %9182 = vmatprep.subr.bf16.mxu0 %v6470
        %9183 = vmatpush1.bf16.msra.mxu0 %v6469
        %9184 = vmatprep.mubr.bf16.mxu0 %v1728
        %9185 = vmatmul.mubr.bf16.gmra.mrb[0].mxu0 %v1726
        %v9186 = vpop.f32.mrb[0].mxu0
        %v9187 = vadd.f32 %v9146, %v9186
        %v9188 = vpop.f32.mrb[0].mxu0
        %v9189 = vadd.f32 %v9148, %v9188
        %v9190 = vpop.f32.mrb[0].mxu0
        %v9191 = vpop.f32.mrb[0].mxu0
        %9192 = vdwg.mxu0
        %9193 = vmatprep.subr.bf16.mxu0 %v6472
        %9194 = vmatpush1.bf16.msra.mxu0 %v6471
        %9195 = vmatprep.subr.bf16.mxu0 %v6474
        %9196 = vmatpush1.bf16.msra.mxu0 %v6473
        %9197 = vmatprep.subr.bf16.mxu0 %v6476
        %9198 = vmatpush1.bf16.msra.mxu0 %v6475
        %9199 = vmatprep.subr.bf16.mxu0 %v6478
        %9200 = vmatpush1.bf16.msra.mxu0 %v6477
        %9201 = vmatprep.subr.bf16.mxu0 %v6480
        %9202 = vmatpush1.bf16.msra.mxu0 %v6479
        %9203 = vmatprep.subr.bf16.mxu0 %v6482
        %9204 = vmatpush1.bf16.msra.mxu0 %v6481
        %9205 = vmatprep.subr.bf16.mxu0 %v6484
        %9206 = vmatpush1.bf16.msra.mxu0 %v6483
        %9207 = vmatprep.subr.bf16.mxu0 %v6486
        %9208 = vmatpush1.bf16.msra.mxu0 %v6485
        %9209 = vmatprep.subr.bf16.mxu0 %v6488
        %9210 = vmatpush1.bf16.msra.mxu0 %v6487
        %9211 = vmatprep.subr.bf16.mxu0 %v6490
        %9212 = vmatpush1.bf16.msra.mxu0 %v6489
        %9213 = vmatprep.subr.bf16.mxu0 %v6492
        %9214 = vmatpush1.bf16.msra.mxu0 %v6491
        %9215 = vmatprep.subr.bf16.mxu0 %v6494
        %9216 = vmatpush1.bf16.msra.mxu0 %v6493
        %9217 = vmatprep.subr.bf16.mxu0 %v6496
        %9218 = vmatpush1.bf16.msra.mxu0 %v6495
        %9219 = vmatprep.subr.bf16.mxu0 %v6498
        %9220 = vmatpush1.bf16.msra.mxu0 %v6497
        %9221 = vmatprep.subr.bf16.mxu0 %v6500
        %9222 = vmatpush1.bf16.msra.mxu0 %v6499
        %9223 = vmatprep.subr.bf16.mxu0 %v6502
        %9224 = vmatpush1.bf16.msra.mxu0 %v6501
        %9225 = vmatprep.mubr.bf16.mxu0 %v1725
        %9226 = vmatmul.mubr.bf16.gmra.mrb[0].mxu0 %v1711
        %v9227 = vpop.f32.mrb[0].mxu0
        %v9228 = vadd.f32 %v9187, %v9227
        %v9229 = vpop.f32.mrb[0].mxu0
        %v9230 = vadd.f32 %v9189, %v9229
        %v9231 = vpop.f32.mrb[0].mxu0
        %v9232 = vpop.f32.mrb[0].mxu0
        %9233 = vdwg.mxu0
        %9234 = vmatprep.subr.bf16.mxu0 %v6504
        %9235 = vmatpush1.bf16.msra.mxu0 %v6503
        %9236 = vmatprep.subr.bf16.mxu0 %v6506
        %9237 = vmatpush1.bf16.msra.mxu0 %v6505
        %9238 = vmatprep.subr.bf16.mxu0 %v6508
        %9239 = vmatpush1.bf16.msra.mxu0 %v6507
        %9240 = vmatprep.subr.bf16.mxu0 %v6510
        %9241 = vmatpush1.bf16.msra.mxu0 %v6509
        %9242 = vmatprep.subr.bf16.mxu0 %v6512
        %9243 = vmatpush1.bf16.msra.mxu0 %v6511
        %9244 = vmatprep.subr.bf16.mxu0 %v6514
        %9245 = vmatpush1.bf16.msra.mxu0 %v6513
        %9246 = vmatprep.subr.bf16.mxu0 %v6516
        %9247 = vmatpush1.bf16.msra.mxu0 %v6515
        %9248 = vmatprep.subr.bf16.mxu0 %v6518
        %9249 = vmatpush1.bf16.msra.mxu0 %v6517
        %9250 = vmatprep.subr.bf16.mxu0 %v6520
        %9251 = vmatpush1.bf16.msra.mxu0 %v6519
        %9252 = vmatprep.subr.bf16.mxu0 %v6522
        %9253 = vmatpush1.bf16.msra.mxu0 %v6521
        %9254 = vmatprep.subr.bf16.mxu0 %v6524
        %9255 = vmatpush1.bf16.msra.mxu0 %v6523
        %9256 = vmatprep.subr.bf16.mxu0 %v6526
        %9257 = vmatpush1.bf16.msra.mxu0 %v6525
        %9258 = vmatprep.subr.bf16.mxu0 %v6528
        %9259 = vmatpush1.bf16.msra.mxu0 %v6527
        %9260 = vmatprep.subr.bf16.mxu0 %v6530
        %9261 = vmatpush1.bf16.msra.mxu0 %v6529
        %9262 = vmatprep.subr.bf16.mxu0 %v6532
        %9263 = vmatpush1.bf16.msra.mxu0 %v6531
        %9264 = vmatprep.subr.bf16.mxu0 %v6534
        %9265 = vmatpush1.bf16.msra.mxu0 %v6533
        %9266 = vmatprep.mubr.bf16.mxu0 %v1729
        %9267 = vmatmul.mubr.bf16.gmra.mrb[0].mxu0 %v1727
        %v9268 = vpop.f32.mrb[0].mxu0
        %v9269 = vadd.f32 %v9228, %v9268
        %v9270 = vpop.f32.mrb[0].mxu0
        %v9271 = vadd.f32 %v9230, %v9270
        %v9272 = vpop.f32.mrb[0].mxu0
        %v9273 = vpop.f32.mrb[0].mxu0
        %9274 = vdwg.mxu0
        %9275 = vmatprep.subr.bf16.mxu0 %v6536
        %9276 = vmatpush1.bf16.msra.mxu0 %v6535
        %9277 = vmatprep.subr.bf16.mxu0 %v6538
        %9278 = vmatpush1.bf16.msra.mxu0 %v6537
        %9279 = vmatprep.subr.bf16.mxu0 %v6540
        %9280 = vmatpush1.bf16.msra.mxu0 %v6539
        %9281 = vmatprep.subr.bf16.mxu0 %v6542
        %9282 = vmatpush1.bf16.msra.mxu0 %v6541
        %9283 = vmatprep.subr.bf16.mxu0 %v6544
        %9284 = vmatpush1.bf16.msra.mxu0 %v6543
        %9285 = vmatprep.subr.bf16.mxu0 %v6546
        %9286 = vmatpush1.bf16.msra.mxu0 %v6545
        %9287 = vmatprep.subr.bf16.mxu0 %v6548
        %9288 = vmatpush1.bf16.msra.mxu0 %v6547
        %9289 = vmatprep.subr.bf16.mxu0 %v6550
        %9290 = vmatpush1.bf16.msra.mxu0 %v6549
        %9291 = vmatprep.subr.bf16.mxu0 %v6552
        %9292 = vmatpush1.bf16.msra.mxu0 %v6551
        %9293 = vmatprep.subr.bf16.mxu0 %v6554
        %9294 = vmatpush1.bf16.msra.mxu0 %v6553
        %9295 = vmatprep.subr.bf16.mxu0 %v6556
        %9296 = vmatpush1.bf16.msra.mxu0 %v6555
        %9297 = vmatprep.subr.bf16.mxu0 %v6558
        %9298 = vmatpush1.bf16.msra.mxu0 %v6557
        %9299 = vmatprep.subr.bf16.mxu0 %v6560
        %9300 = vmatpush1.bf16.msra.mxu0 %v6559
        %9301 = vmatprep.subr.bf16.mxu0 %v6562
        %9302 = vmatpush1.bf16.msra.mxu0 %v6561
        %9303 = vmatprep.subr.bf16.mxu0 %v6564
        %9304 = vmatpush1.bf16.msra.mxu0 %v6563
        %9305 = vmatprep.subr.bf16.mxu0 %v6566
        %9306 = vmatpush1.bf16.msra.mxu0 %v6565
        %9307 = vmatprep.mubr.bf16.mxu0 %v1767
        %9308 = vmatmul.mubr.bf16.gmra.mrb[0].mxu0 %v1753
        %v9309 = vpop.f32.mrb[0].mxu0
        %v9310 = vadd.f32 %v9269, %v9309
        %v9311 = vpop.f32.mrb[0].mxu0
        %v9312 = vadd.f32 %v9271, %v9311
        %v9313 = vpop.f32.mrb[0].mxu0
        %v9314 = vpop.f32.mrb[0].mxu0
        %9315 = vdwg.mxu0
        %9316 = vmatprep.subr.bf16.mxu0 %v6568
        %9317 = vmatpush1.bf16.msra.mxu0 %v6567
        %9318 = vmatprep.subr.bf16.mxu0 %v6570
        %9319 = vmatpush1.bf16.msra.mxu0 %v6569
        %9320 = vmatprep.subr.bf16.mxu0 %v6572
        %9321 = vmatpush1.bf16.msra.mxu0 %v6571
        %9322 = vmatprep.subr.bf16.mxu0 %v6574
        %9323 = vmatpush1.bf16.msra.mxu0 %v6573
        %9324 = vmatprep.subr.bf16.mxu0 %v6576
        %9325 = vmatpush1.bf16.msra.mxu0 %v6575
        %9326 = vmatprep.subr.bf16.mxu0 %v6578
        %9327 = vmatpush1.bf16.msra.mxu0 %v6577
        %9328 = vmatprep.subr.bf16.mxu0 %v6580
        %9329 = vmatpush1.bf16.msra.mxu0 %v6579
        %9330 = vmatprep.subr.bf16.mxu0 %v6582
        %9331 = vmatpush1.bf16.msra.mxu0 %v6581
        %9332 = vmatprep.subr.bf16.mxu0 %v6584
        %9333 = vmatpush1.bf16.msra.mxu0 %v6583
        %9334 = vmatprep.subr.bf16.mxu0 %v6586
        %9335 = vmatpush1.bf16.msra.mxu0 %v6585
        %9336 = vmatprep.subr.bf16.mxu0 %v6588
        %9337 = vmatpush1.bf16.msra.mxu0 %v6587
        %9338 = vmatprep.subr.bf16.mxu0 %v6590
        %9339 = vmatpush1.bf16.msra.mxu0 %v6589
        %9340 = vmatprep.subr.bf16.mxu0 %v6592
        %9341 = vmatpush1.bf16.msra.mxu0 %v6591
        %9342 = vmatprep.subr.bf16.mxu0 %v6594
        %9343 = vmatpush1.bf16.msra.mxu0 %v6593
        %9344 = vmatprep.subr.bf16.mxu0 %v6596
        %9345 = vmatpush1.bf16.msra.mxu0 %v6595
        %9346 = vmatprep.subr.bf16.mxu0 %v6598
        %9347 = vmatpush1.bf16.msra.mxu0 %v6597
        %9348 = vmatprep.mubr.bf16.mxu0 %v1777
        %9349 = vmatmul.mubr.bf16.gmra.mrb[0].mxu0 %v1775
        %v9350 = vpop.f32.mrb[0].mxu0
        %v9351 = vadd.f32 %v9310, %v9350
        %v9352 = vpop.f32.mrb[0].mxu0
        %v9353 = vadd.f32 %v9312, %v9352
        %v9354 = vpop.f32.mrb[0].mxu0
        %v9355 = vpop.f32.mrb[0].mxu0
        %9356 = vdwg.mxu0
        %9357 = vmatprep.subr.bf16.mxu0 %v6600
        %9358 = vmatpush1.bf16.msra.mxu0 %v6599
        %9359 = vmatprep.subr.bf16.mxu0 %v6602
        %9360 = vmatpush1.bf16.msra.mxu0 %v6601
        %9361 = vmatprep.subr.bf16.mxu0 %v6604
        %9362 = vmatpush1.bf16.msra.mxu0 %v6603
        %9363 = vmatprep.subr.bf16.mxu0 %v6606
        %9364 = vmatpush1.bf16.msra.mxu0 %v6605
        %9365 = vmatprep.subr.bf16.mxu0 %v6608
        %9366 = vmatpush1.bf16.msra.mxu0 %v6607
        %9367 = vmatprep.subr.bf16.mxu0 %v6610
        %9368 = vmatpush1.bf16.msra.mxu0 %v6609
        %9369 = vmatprep.subr.bf16.mxu0 %v6612
        %9370 = vmatpush1.bf16.msra.mxu0 %v6611
        %9371 = vmatprep.subr.bf16.mxu0 %v6614
        %9372 = vmatpush1.bf16.msra.mxu0 %v6613
        %9373 = vmatprep.subr.bf16.mxu0 %v6616
        %9374 = vmatpush1.bf16.msra.mxu0 %v6615
        %9375 = vmatprep.subr.bf16.mxu0 %v6618
        %9376 = vmatpush1.bf16.msra.mxu0 %v6617
        %9377 = vmatprep.subr.bf16.mxu0 %v6620
        %9378 = vmatpush1.bf16.msra.mxu0 %v6619
        %9379 = vmatprep.subr.bf16.mxu0 %v6622
        %9380 = vmatpush1.bf16.msra.mxu0 %v6621
        %9381 = vmatprep.subr.bf16.mxu0 %v6624
        %9382 = vmatpush1.bf16.msra.mxu0 %v6623
        %9383 = vmatprep.subr.bf16.mxu0 %v6626
        %9384 = vmatpush1.bf16.msra.mxu0 %v6625
        %9385 = vmatprep.subr.bf16.mxu0 %v6628
        %9386 = vmatpush1.bf16.msra.mxu0 %v6627
        %9387 = vmatprep.subr.bf16.mxu0 %v6630
        %9388 = vmatpush1.bf16.msra.mxu0 %v6629
        %9389 = vmatprep.mubr.bf16.mxu0 %v1774
        %9390 = vmatmul.mubr.bf16.gmra.mrb[0].mxu0 %v1760
        %v9391 = vpop.f32.mrb[0].mxu0
        %v9392 = vadd.f32 %v9351, %v9391
        %v9393 = vpop.f32.mrb[0].mxu0
        %v9394 = vadd.f32 %v9353, %v9393
        %v9395 = vpop.f32.mrb[0].mxu0
        %v9396 = vpop.f32.mrb[0].mxu0
        %9397 = vdwg.mxu0
        %9398 = vmatprep.subr.bf16.mxu0 %v6632
        %9399 = vmatpush1.bf16.msra.mxu0 %v6631
        %9400 = vmatprep.subr.bf16.mxu0 %v6634
        %9401 = vmatpush1.bf16.msra.mxu0 %v6633
        %9402 = vmatprep.subr.bf16.mxu0 %v6636
        %9403 = vmatpush1.bf16.msra.mxu0 %v6635
        %9404 = vmatprep.subr.bf16.mxu0 %v6638
        %9405 = vmatpush1.bf16.msra.mxu0 %v6637
        %9406 = vmatprep.subr.bf16.mxu0 %v6640
        %9407 = vmatpush1.bf16.msra.mxu0 %v6639
        %9408 = vmatprep.subr.bf16.mxu0 %v6642
        %9409 = vmatpush1.bf16.msra.mxu0 %v6641
        %9410 = vmatprep.subr.bf16.mxu0 %v6644
        %9411 = vmatpush1.bf16.msra.mxu0 %v6643
        %9412 = vmatprep.subr.bf16.mxu0 %v6646
        %9413 = vmatpush1.bf16.msra.mxu0 %v6645
        %9414 = vmatprep.subr.bf16.mxu0 %v6648
        %9415 = vmatpush1.bf16.msra.mxu0 %v6647
        %9416 = vmatprep.subr.bf16.mxu0 %v6650
        %9417 = vmatpush1.bf16.msra.mxu0 %v6649
        %9418 = vmatprep.subr.bf16.mxu0 %v6652
        %9419 = vmatpush1.bf16.msra.mxu0 %v6651
        %9420 = vmatprep.subr.bf16.mxu0 %v6654
        %9421 = vmatpush1.bf16.msra.mxu0 %v6653
        %9422 = vmatprep.subr.bf16.mxu0 %v6656
        %9423 = vmatpush1.bf16.msra.mxu0 %v6655
        %9424 = vmatprep.subr.bf16.mxu0 %v6658
        %9425 = vmatpush1.bf16.msra.mxu0 %v6657
        %9426 = vmatprep.subr.bf16.mxu0 %v6660
        %9427 = vmatpush1.bf16.msra.mxu0 %v6659
        %9428 = vmatprep.subr.bf16.mxu0 %v6662
        %9429 = vmatpush1.bf16.msra.mxu0 %v6661
        %9430 = vmatprep.mubr.bf16.mxu0 %v1778
        %9431 = vmatmul.mubr.bf16.gmra.mrb[0].mxu0 %v1776
        %v9432 = vpop.f32.mrb[0].mxu0
        %v9433 = vadd.f32 %v9392, %v9432
        %v9434 = vpop.f32.mrb[0].mxu0
        %v9435 = vadd.f32 %v9394, %v9434
        %v9436 = vpop.f32.mrb[0].mxu0
        %v9437 = vpop.f32.mrb[0].mxu0
        %9438 = vdwg.mxu0
        %9439 = vmatprep.subr.bf16.mxu0 %v6664
        %9440 = vmatpush1.bf16.msra.mxu0 %v6663
        %9441 = vmatprep.subr.bf16.mxu0 %v6666
        %9442 = vmatpush1.bf16.msra.mxu0 %v6665
        %9443 = vmatprep.subr.bf16.mxu0 %v6668
        %9444 = vmatpush1.bf16.msra.mxu0 %v6667
        %9445 = vmatprep.subr.bf16.mxu0 %v6670
        %9446 = vmatpush1.bf16.msra.mxu0 %v6669
        %9447 = vmatprep.subr.bf16.mxu0 %v6672
        %9448 = vmatpush1.bf16.msra.mxu0 %v6671
        %9449 = vmatprep.subr.bf16.mxu0 %v6674
        %9450 = vmatpush1.bf16.msra.mxu0 %v6673
        %9451 = vmatprep.subr.bf16.mxu0 %v6676
        %9452 = vmatpush1.bf16.msra.mxu0 %v6675
        %9453 = vmatprep.subr.bf16.mxu0 %v6678
        %9454 = vmatpush1.bf16.msra.mxu0 %v6677
        %9455 = vmatprep.subr.bf16.mxu0 %v6680
        %9456 = vmatpush1.bf16.msra.mxu0 %v6679
        %9457 = vmatprep.subr.bf16.mxu0 %v6682
        %9458 = vmatpush1.bf16.msra.mxu0 %v6681
        %9459 = vmatprep.subr.bf16.mxu0 %v6684
        %9460 = vmatpush1.bf16.msra.mxu0 %v6683
        %9461 = vmatprep.subr.bf16.mxu0 %v6686
        %9462 = vmatpush1.bf16.msra.mxu0 %v6685
        %9463 = vmatprep.subr.bf16.mxu0 %v6688
        %9464 = vmatpush1.bf16.msra.mxu0 %v6687
        %9465 = vmatprep.subr.bf16.mxu0 %v6690
        %9466 = vmatpush1.bf16.msra.mxu0 %v6689
        %9467 = vmatprep.subr.bf16.mxu0 %v6692
        %9468 = vmatpush1.bf16.msra.mxu0 %v6691
        %9469 = vmatprep.subr.bf16.mxu0 %v6694
        %9470 = vmatpush1.bf16.msra.mxu0 %v6693
        %9471 = vmatprep.mubr.bf16.mxu0 %v1816
        %9472 = vmatmul.mubr.bf16.gmra.mrb[0].mxu0 %v1802
        %v9473 = vpop.f32.mrb[0].mxu0
        %v9474 = vadd.f32 %v9433, %v9473
        %v9475 = vpop.f32.mrb[0].mxu0
        %v9476 = vadd.f32 %v9435, %v9475
        %v9477 = vpop.f32.mrb[0].mxu0
        %v9478 = vpop.f32.mrb[0].mxu0
        %9479 = vdwg.mxu0
        %9480 = vmatprep.subr.bf16.mxu0 %v6696
        %9481 = vmatpush1.bf16.msra.mxu0 %v6695
        %9482 = vmatprep.subr.bf16.mxu0 %v6698
        %9483 = vmatpush1.bf16.msra.mxu0 %v6697
        %9484 = vmatprep.subr.bf16.mxu0 %v6700
        %9485 = vmatpush1.bf16.msra.mxu0 %v6699
        %9486 = vmatprep.subr.bf16.mxu0 %v6702
        %9487 = vmatpush1.bf16.msra.mxu0 %v6701
        %9488 = vmatprep.subr.bf16.mxu0 %v6704
        %9489 = vmatpush1.bf16.msra.mxu0 %v6703
        %9490 = vmatprep.subr.bf16.mxu0 %v6706
        %9491 = vmatpush1.bf16.msra.mxu0 %v6705
        %9492 = vmatprep.subr.bf16.mxu0 %v6708
        %9493 = vmatpush1.bf16.msra.mxu0 %v6707
        %9494 = vmatprep.subr.bf16.mxu0 %v6710
        %9495 = vmatpush1.bf16.msra.mxu0 %v6709
        %9496 = vmatprep.subr.bf16.mxu0 %v6712
        %9497 = vmatpush1.bf16.msra.mxu0 %v6711
        %9498 = vmatprep.subr.bf16.mxu0 %v6714
        %9499 = vmatpush1.bf16.msra.mxu0 %v6713
        %9500 = vmatprep.subr.bf16.mxu0 %v6716
        %9501 = vmatpush1.bf16.msra.mxu0 %v6715
        %9502 = vmatprep.subr.bf16.mxu0 %v6718
        %9503 = vmatpush1.bf16.msra.mxu0 %v6717
        %9504 = vmatprep.subr.bf16.mxu0 %v6720
        %9505 = vmatpush1.bf16.msra.mxu0 %v6719
        %9506 = vmatprep.subr.bf16.mxu0 %v6722
        %9507 = vmatpush1.bf16.msra.mxu0 %v6721
        %9508 = vmatprep.subr.bf16.mxu0 %v6724
        %9509 = vmatpush1.bf16.msra.mxu0 %v6723
        %9510 = vmatprep.subr.bf16.mxu0 %v6726
        %9511 = vmatpush1.bf16.msra.mxu0 %v6725
        %9512 = vmatprep.mubr.bf16.mxu0 %v1826
        %9513 = vmatmul.mubr.bf16.gmra.mrb[0].mxu0 %v1824
        %v9514 = vpop.f32.mrb[0].mxu0
        %v9515 = vadd.f32 %v9474, %v9514
        %v9516 = vpop.f32.mrb[0].mxu0
        %v9517 = vadd.f32 %v9476, %v9516
        %v9518 = vpop.f32.mrb[0].mxu0
        %v9519 = vpop.f32.mrb[0].mxu0
        %9520 = vdwg.mxu0
        %9521 = vmatprep.subr.bf16.mxu0 %v6728
        %9522 = vmatpush1.bf16.msra.mxu0 %v6727
        %9523 = vmatprep.subr.bf16.mxu0 %v6730
        %9524 = vmatpush1.bf16.msra.mxu0 %v6729
        %9525 = vmatprep.subr.bf16.mxu0 %v6732
        %9526 = vmatpush1.bf16.msra.mxu0 %v6731
        %9527 = vmatprep.subr.bf16.mxu0 %v6734
        %9528 = vmatpush1.bf16.msra.mxu0 %v6733
        %9529 = vmatprep.subr.bf16.mxu0 %v6736
        %9530 = vmatpush1.bf16.msra.mxu0 %v6735
        %9531 = vmatprep.subr.bf16.mxu0 %v6738
        %9532 = vmatpush1.bf16.msra.mxu0 %v6737
        %9533 = vmatprep.subr.bf16.mxu0 %v6740
        %9534 = vmatpush1.bf16.msra.mxu0 %v6739
        %9535 = vmatprep.subr.bf16.mxu0 %v6742
        %9536 = vmatpush1.bf16.msra.mxu0 %v6741
        %9537 = vmatprep.subr.bf16.mxu0 %v6744
        %9538 = vmatpush1.bf16.msra.mxu0 %v6743
        %9539 = vmatprep.subr.bf16.mxu0 %v6746
        %9540 = vmatpush1.bf16.msra.mxu0 %v6745
        %9541 = vmatprep.subr.bf16.mxu0 %v6748
        %9542 = vmatpush1.bf16.msra.mxu0 %v6747
        %9543 = vmatprep.subr.bf16.mxu0 %v6750
        %9544 = vmatpush1.bf16.msra.mxu0 %v6749
        %9545 = vmatprep.subr.bf16.mxu0 %v6752
        %9546 = vmatpush1.bf16.msra.mxu0 %v6751
        %9547 = vmatprep.subr.bf16.mxu0 %v6754
        %9548 = vmatpush1.bf16.msra.mxu0 %v6753
        %9549 = vmatprep.subr.bf16.mxu0 %v6756
        %9550 = vmatpush1.bf16.msra.mxu0 %v6755
        %9551 = vmatprep.subr.bf16.mxu0 %v6758
        %9552 = vmatpush1.bf16.msra.mxu0 %v6757
        %9553 = vmatprep.mubr.bf16.mxu0 %v1823
        %9554 = vmatmul.mubr.bf16.gmra.mrb[0].mxu0 %v1809
        %v9555 = vpop.f32.mrb[0].mxu0
        %v9556 = vadd.f32 %v9515, %v9555
        %v9557 = vpop.f32.mrb[0].mxu0
        %v9558 = vadd.f32 %v9517, %v9557
        %v9559 = vpop.f32.mrb[0].mxu0
        %v9560 = vpop.f32.mrb[0].mxu0
        %9561 = vdwg.mxu0
        %9562 = vmatprep.subr.bf16.mxu0 %v6760
        %9563 = vmatpush1.bf16.msra.mxu0 %v6759
        %9564 = vmatprep.subr.bf16.mxu0 %v6762
        %9565 = vmatpush1.bf16.msra.mxu0 %v6761
        %9566 = vmatprep.subr.bf16.mxu0 %v6764
        %9567 = vmatpush1.bf16.msra.mxu0 %v6763
        %9568 = vmatprep.subr.bf16.mxu0 %v6766
        %9569 = vmatpush1.bf16.msra.mxu0 %v6765
        %9570 = vmatprep.subr.bf16.mxu0 %v6768
        %9571 = vmatpush1.bf16.msra.mxu0 %v6767
        %9572 = vmatprep.subr.bf16.mxu0 %v6770
        %9573 = vmatpush1.bf16.msra.mxu0 %v6769
        %9574 = vmatprep.subr.bf16.mxu0 %v6772
        %9575 = vmatpush1.bf16.msra.mxu0 %v6771
        %9576 = vmatprep.subr.bf16.mxu0 %v6774
        %9577 = vmatpush1.bf16.msra.mxu0 %v6773
        %9578 = vmatprep.subr.bf16.mxu0 %v6776
        %9579 = vmatpush1.bf16.msra.mxu0 %v6775
        %9580 = vmatprep.subr.bf16.mxu0 %v6778
        %9581 = vmatpush1.bf16.msra.mxu0 %v6777
        %9582 = vmatprep.subr.bf16.mxu0 %v6780
        %9583 = vmatpush1.bf16.msra.mxu0 %v6779
        %9584 = vmatprep.subr.bf16.mxu0 %v6782
        %9585 = vmatpush1.bf16.msra.mxu0 %v6781
        %9586 = vmatprep.subr.bf16.mxu0 %v6784
        %9587 = vmatpush1.bf16.msra.mxu0 %v6783
        %9588 = vmatprep.subr.bf16.mxu0 %v6786
        %9589 = vmatpush1.bf16.msra.mxu0 %v6785
        %9590 = vmatprep.subr.bf16.mxu0 %v6788
        %9591 = vmatpush1.bf16.msra.mxu0 %v6787
        %9592 = vmatprep.subr.bf16.mxu0 %v6790
        %9593 = vmatpush1.bf16.msra.mxu0 %v6789
        %9594 = vmatprep.mubr.bf16.mxu0 %v1827
        %9595 = vmatmul.mubr.bf16.gmra.mrb[0].mxu0 %v1825
        %v9596 = vpop.f32.mrb[0].mxu0
        %v9597 = vadd.f32 %v9556, %v9596
        %v9598 = vpop.f32.mrb[0].mxu0
        %v9599 = vadd.f32 %v9558, %v9598
        %v9600 = vpop.f32.mrb[0].mxu0
        %v9601 = vpop.f32.mrb[0].mxu0
        %9602 = vdwg.mxu0
        %9603 = vmatprep.subr.bf16.mxu0 %v6792
        %9604 = vmatpush1.bf16.msra.mxu0 %v6791
        %9605 = vmatprep.subr.bf16.mxu0 %v6794
        %9606 = vmatpush1.bf16.msra.mxu0 %v6793
        %9607 = vmatprep.subr.bf16.mxu0 %v6796
        %9608 = vmatpush1.bf16.msra.mxu0 %v6795
        %9609 = vmatprep.subr.bf16.mxu0 %v6798
        %9610 = vmatpush1.bf16.msra.mxu0 %v6797
        %9611 = vmatprep.subr.bf16.mxu0 %v6800
        %9612 = vmatpush1.bf16.msra.mxu0 %v6799
        %9613 = vmatprep.subr.bf16.mxu0 %v6802
        %9614 = vmatpush1.bf16.msra.mxu0 %v6801
        %9615 = vmatprep.subr.bf16.mxu0 %v6804
        %9616 = vmatpush1.bf16.msra.mxu0 %v6803
        %9617 = vmatprep.subr.bf16.mxu0 %v6806
        %9618 = vmatpush1.bf16.msra.mxu0 %v6805
        %9619 = vmatprep.subr.bf16.mxu0 %v6808
        %9620 = vmatpush1.bf16.msra.mxu0 %v6807
        %9621 = vmatprep.subr.bf16.mxu0 %v6810
        %9622 = vmatpush1.bf16.msra.mxu0 %v6809
        %9623 = vmatprep.subr.bf16.mxu0 %v6812
        %9624 = vmatpush1.bf16.msra.mxu0 %v6811
        %9625 = vmatprep.subr.bf16.mxu0 %v6814
        %9626 = vmatpush1.bf16.msra.mxu0 %v6813
        %9627 = vmatprep.subr.bf16.mxu0 %v6816
        %9628 = vmatpush1.bf16.msra.mxu0 %v6815
        %9629 = vmatprep.subr.bf16.mxu0 %v6818
        %9630 = vmatpush1.bf16.msra.mxu0 %v6817
        %9631 = vmatprep.subr.bf16.mxu0 %v6820
        %9632 = vmatpush1.bf16.msra.mxu0 %v6819
        %9633 = vmatprep.subr.bf16.mxu0 %v6822
        %9634 = vmatpush1.bf16.msra.mxu0 %v6821
        %9635 = vmatprep.mubr.bf16.mxu0 %v1865
        %9636 = vmatmul.mubr.bf16.gmra.mrb[0].mxu0 %v1851
        %v9637 = vpop.f32.mrb[0].mxu0
        %v9638 = vadd.f32 %v9597, %v9637
        %v9639 = vpop.f32.mrb[0].mxu0
        %v9640 = vadd.f32 %v9599, %v9639
        %v9641 = vpop.f32.mrb[0].mxu0
        %v9642 = vpop.f32.mrb[0].mxu0
        %9643 = vdwg.mxu0
        %9644 = vmatprep.subr.bf16.mxu0 %v6824
        %9645 = vmatpush1.bf16.msra.mxu0 %v6823
        %9646 = vmatprep.subr.bf16.mxu0 %v6826
        %9647 = vmatpush1.bf16.msra.mxu0 %v6825
        %9648 = vmatprep.subr.bf16.mxu0 %v6828
        %9649 = vmatpush1.bf16.msra.mxu0 %v6827
        %9650 = vmatprep.subr.bf16.mxu0 %v6830
        %9651 = vmatpush1.bf16.msra.mxu0 %v6829
        %9652 = vmatprep.subr.bf16.mxu0 %v6832
        %9653 = vmatpush1.bf16.msra.mxu0 %v6831
        %9654 = vmatprep.subr.bf16.mxu0 %v6834
        %9655 = vmatpush1.bf16.msra.mxu0 %v6833
        %9656 = vmatprep.subr.bf16.mxu0 %v6836
        %9657 = vmatpush1.bf16.msra.mxu0 %v6835
        %9658 = vmatprep.subr.bf16.mxu0 %v6838
        %9659 = vmatpush1.bf16.msra.mxu0 %v6837
        %9660 = vmatprep.subr.bf16.mxu0 %v6840
        %9661 = vmatpush1.bf16.msra.mxu0 %v6839
        %9662 = vmatprep.subr.bf16.mxu0 %v6842
        %9663 = vmatpush1.bf16.msra.mxu0 %v6841
        %9664 = vmatprep.subr.bf16.mxu0 %v6844
        %9665 = vmatpush1.bf16.msra.mxu0 %v6843
        %9666 = vmatprep.subr.bf16.mxu0 %v6846
        %9667 = vmatpush1.bf16.msra.mxu0 %v6845
        %9668 = vmatprep.subr.bf16.mxu0 %v6848
        %9669 = vmatpush1.bf16.msra.mxu0 %v6847
        %9670 = vmatprep.subr.bf16.mxu0 %v6850
        %9671 = vmatpush1.bf16.msra.mxu0 %v6849
        %9672 = vmatprep.subr.bf16.mxu0 %v6852
        %9673 = vmatpush1.bf16.msra.mxu0 %v6851
        %9674 = vmatprep.subr.bf16.mxu0 %v6854
        %9675 = vmatpush1.bf16.msra.mxu0 %v6853
        %9676 = vmatprep.mubr.bf16.mxu0 %v1875
        %9677 = vmatmul.mubr.bf16.gmra.mrb[0].mxu0 %v1873
        %v9678 = vpop.f32.mrb[0].mxu0
        %v9679 = vadd.f32 %v9638, %v9678
        %v9680 = vpop.f32.mrb[0].mxu0
        %v9681 = vadd.f32 %v9640, %v9680
        %v9682 = vpop.f32.mrb[0].mxu0
        %v9683 = vpop.f32.mrb[0].mxu0
        %9684 = vdwg.mxu0
        %9685 = vmatprep.subr.bf16.mxu0 %v6856
        %9686 = vmatpush1.bf16.msra.mxu0 %v6855
        %9687 = vmatprep.subr.bf16.mxu0 %v6858
        %9688 = vmatpush1.bf16.msra.mxu0 %v6857
        %9689 = vmatprep.subr.bf16.mxu0 %v6860
        %9690 = vmatpush1.bf16.msra.mxu0 %v6859
        %9691 = vmatprep.subr.bf16.mxu0 %v6862
        %9692 = vmatpush1.bf16.msra.mxu0 %v6861
        %9693 = vmatprep.subr.bf16.mxu0 %v6864
        %9694 = vmatpush1.bf16.msra.mxu0 %v6863
        %9695 = vmatprep.subr.bf16.mxu0 %v6866
        %9696 = vmatpush1.bf16.msra.mxu0 %v6865
        %9697 = vmatprep.subr.bf16.mxu0 %v6868
        %9698 = vmatpush1.bf16.msra.mxu0 %v6867
        %9699 = vmatprep.subr.bf16.mxu0 %v6870
        %9700 = vmatpush1.bf16.msra.mxu0 %v6869
        %9701 = vmatprep.subr.bf16.mxu0 %v6872
        %9702 = vmatpush1.bf16.msra.mxu0 %v6871
        %9703 = vmatprep.subr.bf16.mxu0 %v6874
        %9704 = vmatpush1.bf16.msra.mxu0 %v6873
        %9705 = vmatprep.subr.bf16.mxu0 %v6876
        %9706 = vmatpush1.bf16.msra.mxu0 %v6875
        %9707 = vmatprep.subr.bf16.mxu0 %v6878
        %9708 = vmatpush1.bf16.msra.mxu0 %v6877
        %9709 = vmatprep.subr.bf16.mxu0 %v6880
        %9710 = vmatpush1.bf16.msra.mxu0 %v6879
        %9711 = vmatprep.subr.bf16.mxu0 %v6882
        %9712 = vmatpush1.bf16.msra.mxu0 %v6881
        %9713 = vmatprep.subr.bf16.mxu0 %v6884
        %9714 = vmatpush1.bf16.msra.mxu0 %v6883
        %9715 = vmatprep.subr.bf16.mxu0 %v6886
        %9716 = vmatpush1.bf16.msra.mxu0 %v6885
        %9717 = vmatprep.mubr.bf16.mxu0 %v1872
        %9718 = vmatmul.mubr.bf16.gmra.mrb[0].mxu0 %v1858
        %v9719 = vpop.f32.mrb[0].mxu0
        %v9720 = vadd.f32 %v9679, %v9719
        %v9721 = vpop.f32.mrb[0].mxu0
        %v9722 = vadd.f32 %v9681, %v9721
        %v9723 = vpop.f32.mrb[0].mxu0
        %v9724 = vpop.f32.mrb[0].mxu0
        %9725 = vdwg.mxu0
        %9726 = vmatprep.subr.bf16.mxu0 %v6888
        %9727 = vmatpush1.bf16.msra.mxu0 %v6887
        %9728 = vmatprep.subr.bf16.mxu0 %v6890
        %9729 = vmatpush1.bf16.msra.mxu0 %v6889
        %9730 = vmatprep.subr.bf16.mxu0 %v6892
        %9731 = vmatpush1.bf16.msra.mxu0 %v6891
        %9732 = vmatprep.subr.bf16.mxu0 %v6894
        %9733 = vmatpush1.bf16.msra.mxu0 %v6893
        %9734 = vmatprep.subr.bf16.mxu0 %v6896
        %9735 = vmatpush1.bf16.msra.mxu0 %v6895
        %9736 = vmatprep.subr.bf16.mxu0 %v6898
        %9737 = vmatpush1.bf16.msra.mxu0 %v6897
        %9738 = vmatprep.subr.bf16.mxu0 %v6900
        %9739 = vmatpush1.bf16.msra.mxu0 %v6899
        %9740 = vmatprep.subr.bf16.mxu0 %v6902
        %9741 = vmatpush1.bf16.msra.mxu0 %v6901
        %9742 = vmatprep.subr.bf16.mxu0 %v6904
        %9743 = vmatpush1.bf16.msra.mxu0 %v6903
        %9744 = vmatprep.subr.bf16.mxu0 %v6906
        %9745 = vmatpush1.bf16.msra.mxu0 %v6905
        %9746 = vmatprep.subr.bf16.mxu0 %v6908
        %9747 = vmatpush1.bf16.msra.mxu0 %v6907
        %9748 = vmatprep.subr.bf16.mxu0 %v6910
        %9749 = vmatpush1.bf16.msra.mxu0 %v6909
        %9750 = vmatprep.subr.bf16.mxu0 %v6912
        %9751 = vmatpush1.bf16.msra.mxu0 %v6911
        %9752 = vmatprep.subr.bf16.mxu0 %v6914
        %9753 = vmatpush1.bf16.msra.mxu0 %v6913
        %9754 = vmatprep.subr.bf16.mxu0 %v6916
        %9755 = vmatpush1.bf16.msra.mxu0 %v6915
        %9756 = vmatprep.subr.bf16.mxu0 %v6918
        %9757 = vmatpush1.bf16.msra.mxu0 %v6917
        %9758 = vmatprep.mubr.bf16.mxu0 %v1876
        %9759 = vmatmul.mubr.bf16.gmra.mrb[0].mxu0 %v1874
        %v9760 = vpop.f32.mrb[0].mxu0
        %v9761 = vadd.f32 %v9720, %v9760
        %v9762 = vpop.f32.mrb[0].mxu0
        %v9763 = vadd.f32 %v9722, %v9762
        %v9764 = vpop.f32.mrb[0].mxu0
        %v9765 = vpop.f32.mrb[0].mxu0
        %9766 = vdwg.mxu0
        %9767 = vmatprep.subr.bf16.mxu0 %v6920
        %9768 = vmatpush1.bf16.msra.mxu0 %v6919
        %9769 = vmatprep.subr.bf16.mxu0 %v6922
        %9770 = vmatpush1.bf16.msra.mxu0 %v6921
        %9771 = vmatprep.subr.bf16.mxu0 %v6924
        %9772 = vmatpush1.bf16.msra.mxu0 %v6923
        %9773 = vmatprep.subr.bf16.mxu0 %v6926
        %9774 = vmatpush1.bf16.msra.mxu0 %v6925
        %9775 = vmatprep.subr.bf16.mxu0 %v6928
        %9776 = vmatpush1.bf16.msra.mxu0 %v6927
        %9777 = vmatprep.subr.bf16.mxu0 %v6930
        %9778 = vmatpush1.bf16.msra.mxu0 %v6929
        %9779 = vmatprep.subr.bf16.mxu0 %v6932
        %9780 = vmatpush1.bf16.msra.mxu0 %v6931
        %9781 = vmatprep.subr.bf16.mxu0 %v6934
        %9782 = vmatpush1.bf16.msra.mxu0 %v6933
        %9783 = vmatprep.subr.bf16.mxu0 %v6936
        %9784 = vmatpush1.bf16.msra.mxu0 %v6935
        %9785 = vmatprep.subr.bf16.mxu0 %v6938
        %9786 = vmatpush1.bf16.msra.mxu0 %v6937
        %9787 = vmatprep.subr.bf16.mxu0 %v6940
        %9788 = vmatpush1.bf16.msra.mxu0 %v6939
        %9789 = vmatprep.subr.bf16.mxu0 %v6942
        %9790 = vmatpush1.bf16.msra.mxu0 %v6941
        %9791 = vmatprep.subr.bf16.mxu0 %v6944
        %9792 = vmatpush1.bf16.msra.mxu0 %v6943
        %9793 = vmatprep.subr.bf16.mxu0 %v6946
        %9794 = vmatpush1.bf16.msra.mxu0 %v6945
        %9795 = vmatprep.subr.bf16.mxu0 %v6948
        %9796 = vmatpush1.bf16.msra.mxu0 %v6947
        %9797 = vmatprep.subr.bf16.mxu0 %v6950
        %9798 = vmatpush1.bf16.msra.mxu0 %v6949
        %9799 = vmatprep.mubr.bf16.mxu0 %v1914
        %9800 = vmatmul.mubr.bf16.gmra.mrb[0].mxu0 %v1900
        %v9801 = vpop.f32.mrb[0].mxu0
        %v9802 = vadd.f32 %v9761, %v9801
        %v9803 = vpop.f32.mrb[0].mxu0
        %v9804 = vadd.f32 %v9763, %v9803
        %v9805 = vpop.f32.mrb[0].mxu0
        %v9806 = vpop.f32.mrb[0].mxu0
        %9807 = vdwg.mxu0
        %9808 = vmatprep.subr.bf16.mxu0 %v6952
        %9809 = vmatpush1.bf16.msra.mxu0 %v6951
        %9810 = vmatprep.subr.bf16.mxu0 %v6954
        %9811 = vmatpush1.bf16.msra.mxu0 %v6953
        %9812 = vmatprep.subr.bf16.mxu0 %v6956
        %9813 = vmatpush1.bf16.msra.mxu0 %v6955
        %9814 = vmatprep.subr.bf16.mxu0 %v6958
        %9815 = vmatpush1.bf16.msra.mxu0 %v6957
        %9816 = vmatprep.subr.bf16.mxu0 %v6960
        %9817 = vmatpush1.bf16.msra.mxu0 %v6959
        %9818 = vmatprep.subr.bf16.mxu0 %v6962
        %9819 = vmatpush1.bf16.msra.mxu0 %v6961
        %9820 = vmatprep.subr.bf16.mxu0 %v6964
        %9821 = vmatpush1.bf16.msra.mxu0 %v6963
        %9822 = vmatprep.subr.bf16.mxu0 %v6966
        %9823 = vmatpush1.bf16.msra.mxu0 %v6965
        %9824 = vmatprep.subr.bf16.mxu0 %v6968
        %9825 = vmatpush1.bf16.msra.mxu0 %v6967
        %9826 = vmatprep.subr.bf16.mxu0 %v6970
        %9827 = vmatpush1.bf16.msra.mxu0 %v6969
        %9828 = vmatprep.subr.bf16.mxu0 %v6972
        %9829 = vmatpush1.bf16.msra.mxu0 %v6971
        %9830 = vmatprep.subr.bf16.mxu0 %v6974
        %9831 = vmatpush1.bf16.msra.mxu0 %v6973
        %9832 = vmatprep.subr.bf16.mxu0 %v6976
        %9833 = vmatpush1.bf16.msra.mxu0 %v6975
        %9834 = vmatprep.subr.bf16.mxu0 %v6978
        %9835 = vmatpush1.bf16.msra.mxu0 %v6977
        %9836 = vmatprep.subr.bf16.mxu0 %v6980
        %9837 = vmatpush1.bf16.msra.mxu0 %v6979
        %9838 = vmatprep.subr.bf16.mxu0 %v6982
        %9839 = vmatpush1.bf16.msra.mxu0 %v6981
        %9840 = vmatprep.mubr.bf16.mxu0 %v1924
        %9841 = vmatmul.mubr.bf16.gmra.mrb[0].mxu0 %v1922
        %v9842 = vpop.f32.mrb[0].mxu0
        %v9843 = vadd.f32 %v9802, %v9842
        %v9844 = vpop.f32.mrb[0].mxu0
        %v9845 = vadd.f32 %v9804, %v9844
        %v9846 = vpop.f32.mrb[0].mxu0
        %v9847 = vpop.f32.mrb[0].mxu0
        %9848 = vdwg.mxu0
        %9849 = vmatprep.subr.bf16.mxu0 %v6984
        %9850 = vmatpush1.bf16.msra.mxu0 %v6983
        %9851 = vmatprep.subr.bf16.mxu0 %v6986
        %9852 = vmatpush1.bf16.msra.mxu0 %v6985
        %9853 = vmatprep.subr.bf16.mxu0 %v6988
        %9854 = vmatpush1.bf16.msra.mxu0 %v6987
        %9855 = vmatprep.subr.bf16.mxu0 %v6990
        %9856 = vmatpush1.bf16.msra.mxu0 %v6989
        %9857 = vmatprep.subr.bf16.mxu0 %v6992
        %9858 = vmatpush1.bf16.msra.mxu0 %v6991
        %9859 = vmatprep.subr.bf16.mxu0 %v6994
        %9860 = vmatpush1.bf16.msra.mxu0 %v6993
        %9861 = vmatprep.subr.bf16.mxu0 %v6996
        %9862 = vmatpush1.bf16.msra.mxu0 %v6995
        %9863 = vmatprep.subr.bf16.mxu0 %v6998
        %9864 = vmatpush1.bf16.msra.mxu0 %v6997
        %9865 = vmatprep.subr.bf16.mxu0 %v7000
        %9866 = vmatpush1.bf16.msra.mxu0 %v6999
        %9867 = vmatprep.subr.bf16.mxu0 %v7002
        %9868 = vmatpush1.bf16.msra.mxu0 %v7001
        %9869 = vmatprep.subr.bf16.mxu0 %v7004
        %9870 = vmatpush1.bf16.msra.mxu0 %v7003
        %9871 = vmatprep.subr.bf16.mxu0 %v7006
        %9872 = vmatpush1.bf16.msra.mxu0 %v7005
        %9873 = vmatprep.subr.bf16.mxu0 %v7008
        %9874 = vmatpush1.bf16.msra.mxu0 %v7007
        %9875 = vmatprep.subr.bf16.mxu0 %v7010
        %9876 = vmatpush1.bf16.msra.mxu0 %v7009
        %9877 = vmatprep.subr.bf16.mxu0 %v7012
        %9878 = vmatpush1.bf16.msra.mxu0 %v7011
        %9879 = vmatprep.subr.bf16.mxu0 %v7014
        %9880 = vmatpush1.bf16.msra.mxu0 %v7013
        %9881 = vmatprep.mubr.bf16.mxu0 %v1921
        %9882 = vmatmul.mubr.bf16.gmra.mrb[0].mxu0 %v1907
        %v9883 = vpop.f32.mrb[0].mxu0
        %v9884 = vadd.f32 %v9843, %v9883
        %v9885 = vpop.f32.mrb[0].mxu0
        %v9886 = vadd.f32 %v9845, %v9885
        %v9887 = vpop.f32.mrb[0].mxu0
        %v9888 = vpop.f32.mrb[0].mxu0
        %9889 = vdwg.mxu0
        %9890 = vmatprep.subr.bf16.mxu0 %v7016
        %9891 = vmatpush1.bf16.msra.mxu0 %v7015
        %9892 = vmatprep.subr.bf16.mxu0 %v7018
        %9893 = vmatpush1.bf16.msra.mxu0 %v7017
        %9894 = vmatprep.subr.bf16.mxu0 %v7020
        %9895 = vmatpush1.bf16.msra.mxu0 %v7019
        %9896 = vmatprep.subr.bf16.mxu0 %v7022
        %9897 = vmatpush1.bf16.msra.mxu0 %v7021
        %9898 = vmatprep.subr.bf16.mxu0 %v7024
        %9899 = vmatpush1.bf16.msra.mxu0 %v7023
        %9900 = vmatprep.subr.bf16.mxu0 %v7026
        %9901 = vmatpush1.bf16.msra.mxu0 %v7025
        %9902 = vmatprep.subr.bf16.mxu0 %v7028
        %9903 = vmatpush1.bf16.msra.mxu0 %v7027
        %9904 = vmatprep.subr.bf16.mxu0 %v7030
        %9905 = vmatpush1.bf16.msra.mxu0 %v7029
        %9906 = vmatprep.subr.bf16.mxu0 %v7032
        %9907 = vmatpush1.bf16.msra.mxu0 %v7031
        %9908 = vmatprep.subr.bf16.mxu0 %v7034
        %9909 = vmatpush1.bf16.msra.mxu0 %v7033
        %9910 = vmatprep.subr.bf16.mxu0 %v7036
        %9911 = vmatpush1.bf16.msra.mxu0 %v7035
        %9912 = vmatprep.subr.bf16.mxu0 %v7038
        %9913 = vmatpush1.bf16.msra.mxu0 %v7037
        %9914 = vmatprep.subr.bf16.mxu0 %v7040
        %9915 = vmatpush1.bf16.msra.mxu0 %v7039
        %9916 = vmatprep.subr.bf16.mxu0 %v7042
        %9917 = vmatpush1.bf16.msra.mxu0 %v7041
        %9918 = vmatprep.subr.bf16.mxu0 %v7044
        %9919 = vmatpush1.bf16.msra.mxu0 %v7043
        %9920 = vmatprep.subr.bf16.mxu0 %v7046
        %9921 = vmatpush1.bf16.msra.mxu0 %v7045
        %9922 = vmatprep.mubr.bf16.mxu0 %v1925
        %9923 = vmatmul.mubr.bf16.gmra.mrb[0].mxu0 %v1923
        %v9924 = vpop.f32.mrb[0].mxu0
        %v9925 = vadd.f32 %v9884, %v9924
        %v9926 = vpop.f32.mrb[0].mxu0
        %v9927 = vadd.f32 %v9886, %v9926
        %v9928 = vpop.f32.mrb[0].mxu0
        %v9929 = vpop.f32.mrb[0].mxu0
        %9930 = vdwg.mxu0
        %9931 = vmatprep.subr.bf16.mxu0 %v7048
        %9932 = vmatpush1.bf16.msra.mxu0 %v7047
        %9933 = vmatprep.subr.bf16.mxu0 %v7050
        %9934 = vmatpush1.bf16.msra.mxu0 %v7049
        %9935 = vmatprep.subr.bf16.mxu0 %v7052
        %9936 = vmatpush1.bf16.msra.mxu0 %v7051
        %9937 = vmatprep.subr.bf16.mxu0 %v7054
        %9938 = vmatpush1.bf16.msra.mxu0 %v7053
        %9939 = vmatprep.subr.bf16.mxu0 %v7056
        %9940 = vmatpush1.bf16.msra.mxu0 %v7055
        %9941 = vmatprep.subr.bf16.mxu0 %v7058
        %9942 = vmatpush1.bf16.msra.mxu0 %v7057
        %9943 = vmatprep.subr.bf16.mxu0 %v7060
        %9944 = vmatpush1.bf16.msra.mxu0 %v7059
        %9945 = vmatprep.subr.bf16.mxu0 %v7062
        %9946 = vmatpush1.bf16.msra.mxu0 %v7061
        %9947 = vmatprep.subr.bf16.mxu0 %v7064
        %9948 = vmatpush1.bf16.msra.mxu0 %v7063
        %9949 = vmatprep.subr.bf16.mxu0 %v7066
        %9950 = vmatpush1.bf16.msra.mxu0 %v7065
        %9951 = vmatprep.subr.bf16.mxu0 %v7068
        %9952 = vmatpush1.bf16.msra.mxu0 %v7067
        %9953 = vmatprep.subr.bf16.mxu0 %v7070
        %9954 = vmatpush1.bf16.msra.mxu0 %v7069
        %9955 = vmatprep.subr.bf16.mxu0 %v7072
        %9956 = vmatpush1.bf16.msra.mxu0 %v7071
        %9957 = vmatprep.subr.bf16.mxu0 %v7074
        %9958 = vmatpush1.bf16.msra.mxu0 %v7073
        %9959 = vmatprep.subr.bf16.mxu0 %v7076
        %9960 = vmatpush1.bf16.msra.mxu0 %v7075
        %9961 = vmatprep.subr.bf16.mxu0 %v7078
        %9962 = vmatpush1.bf16.msra.mxu0 %v7077
        %9963 = vmatprep.mubr.bf16.mxu0 %v1963
        %9964 = vmatmul.mubr.bf16.gmra.mrb[0].mxu0 %v1949
        %v9965 = vpop.f32.mrb[0].mxu0
        %v9966 = vadd.f32 %v9925, %v9965
        %v9967 = vpop.f32.mrb[0].mxu0
        %v9968 = vadd.f32 %v9927, %v9967
        %v9969 = vpop.f32.mrb[0].mxu0
        %v9970 = vpop.f32.mrb[0].mxu0
        %9971 = vdwg.mxu0
        %9972 = vmatprep.subr.bf16.mxu0 %v7080
        %9973 = vmatpush1.bf16.msra.mxu0 %v7079
        %9974 = vmatprep.subr.bf16.mxu0 %v7082
        %9975 = vmatpush1.bf16.msra.mxu0 %v7081
        %9976 = vmatprep.subr.bf16.mxu0 %v7084
        %9977 = vmatpush1.bf16.msra.mxu0 %v7083
        %9978 = vmatprep.subr.bf16.mxu0 %v7086
        %9979 = vmatpush1.bf16.msra.mxu0 %v7085
        %9980 = vmatprep.subr.bf16.mxu0 %v7088
        %9981 = vmatpush1.bf16.msra.mxu0 %v7087
        %9982 = vmatprep.subr.bf16.mxu0 %v7090
        %9983 = vmatpush1.bf16.msra.mxu0 %v7089
        %9984 = vmatprep.subr.bf16.mxu0 %v7092
        %9985 = vmatpush1.bf16.msra.mxu0 %v7091
        %9986 = vmatprep.subr.bf16.mxu0 %v7094
        %9987 = vmatpush1.bf16.msra.mxu0 %v7093
        %9988 = vmatprep.subr.bf16.mxu0 %v7096
        %9989 = vmatpush1.bf16.msra.mxu0 %v7095
        %9990 = vmatprep.subr.bf16.mxu0 %v7098
        %9991 = vmatpush1.bf16.msra.mxu0 %v7097
        %9992 = vmatprep.subr.bf16.mxu0 %v7100
        %9993 = vmatpush1.bf16.msra.mxu0 %v7099
        %9994 = vmatprep.subr.bf16.mxu0 %v7102
        %9995 = vmatpush1.bf16.msra.mxu0 %v7101
        %9996 = vmatprep.subr.bf16.mxu0 %v7104
        %9997 = vmatpush1.bf16.msra.mxu0 %v7103
        %9998 = vmatprep.subr.bf16.mxu0 %v7106
        %9999 = vmatpush1.bf16.msra.mxu0 %v7105
        %10000 = vmatprep.subr.bf16.mxu0 %v7108
        %10001 = vmatpush1.bf16.msra.mxu0 %v7107
        %10002 = vmatprep.subr.bf16.mxu0 %v7110
        %10003 = vmatpush1.bf16.msra.mxu0 %v7109
        %10004 = vmatprep.mubr.bf16.mxu0 %v1973
        %10005 = vmatmul.mubr.bf16.gmra.mrb[0].mxu0 %v1971
        %v10006 = vpop.f32.mrb[0].mxu0
        %v10007 = vadd.f32 %v9966, %v10006
        %v10008 = vpop.f32.mrb[0].mxu0
        %v10009 = vadd.f32 %v9968, %v10008
        %v10010 = vpop.f32.mrb[0].mxu0
        %v10011 = vpop.f32.mrb[0].mxu0
        %10012 = vdwg.mxu0
        %10013 = vmatprep.subr.bf16.mxu0 %v7112
        %10014 = vmatpush1.bf16.msra.mxu0 %v7111
        %10015 = vmatprep.subr.bf16.mxu0 %v7114
        %10016 = vmatpush1.bf16.msra.mxu0 %v7113
        %10017 = vmatprep.subr.bf16.mxu0 %v7116
        %10018 = vmatpush1.bf16.msra.mxu0 %v7115
        %10019 = vmatprep.subr.bf16.mxu0 %v7118
        %10020 = vmatpush1.bf16.msra.mxu0 %v7117
        %10021 = vmatprep.subr.bf16.mxu0 %v7120
        %10022 = vmatpush1.bf16.msra.mxu0 %v7119
        %10023 = vmatprep.subr.bf16.mxu0 %v7122
        %10024 = vmatpush1.bf16.msra.mxu0 %v7121
        %10025 = vmatprep.subr.bf16.mxu0 %v7124
        %10026 = vmatpush1.bf16.msra.mxu0 %v7123
        %10027 = vmatprep.subr.bf16.mxu0 %v7126
        %10028 = vmatpush1.bf16.msra.mxu0 %v7125
        %10029 = vmatprep.subr.bf16.mxu0 %v7128
        %10030 = vmatpush1.bf16.msra.mxu0 %v7127
        %10031 = vmatprep.subr.bf16.mxu0 %v7130
        %10032 = vmatpush1.bf16.msra.mxu0 %v7129
        %10033 = vmatprep.subr.bf16.mxu0 %v7132
        %10034 = vmatpush1.bf16.msra.mxu0 %v7131
        %10035 = vmatprep.subr.bf16.mxu0 %v7134
        %10036 = vmatpush1.bf16.msra.mxu0 %v7133
        %10037 = vmatprep.subr.bf16.mxu0 %v7136
        %10038 = vmatpush1.bf16.msra.mxu0 %v7135
        %10039 = vmatprep.subr.bf16.mxu0 %v7138
        %10040 = vmatpush1.bf16.msra.mxu0 %v7137
        %10041 = vmatprep.subr.bf16.mxu0 %v7140
        %10042 = vmatpush1.bf16.msra.mxu0 %v7139
        %10043 = vmatprep.subr.bf16.mxu0 %v7142
        %10044 = vmatpush1.bf16.msra.mxu0 %v7141
        %10045 = vmatprep.mubr.bf16.mxu0 %v1970
        %10046 = vmatmul.mubr.bf16.gmra.mrb[0].mxu0 %v1956
        %v10047 = vpop.f32.mrb[0].mxu0
        %v10048 = vadd.f32 %v10007, %v10047
        %v10049 = vpop.f32.mrb[0].mxu0
        %v10050 = vadd.f32 %v10009, %v10049
        %v10051 = vpop.f32.mrb[0].mxu0
        %v10052 = vpop.f32.mrb[0].mxu0
        %10053 = vdwg.mxu0
        %10054 = vmatprep.subr.bf16.mxu0 %v7144
        %10055 = vmatpush1.bf16.msra.mxu0 %v7143
        %10056 = vmatprep.subr.bf16.mxu0 %v7146
        %10057 = vmatpush1.bf16.msra.mxu0 %v7145
        %10058 = vmatprep.subr.bf16.mxu0 %v7148
        %10059 = vmatpush1.bf16.msra.mxu0 %v7147
        %10060 = vmatprep.subr.bf16.mxu0 %v7150
        %10061 = vmatpush1.bf16.msra.mxu0 %v7149
        %10062 = vmatprep.subr.bf16.mxu0 %v7152
        %10063 = vmatpush1.bf16.msra.mxu0 %v7151
        %10064 = vmatprep.subr.bf16.mxu0 %v7154
        %10065 = vmatpush1.bf16.msra.mxu0 %v7153
        %10066 = vmatprep.subr.bf16.mxu0 %v7156
        %10067 = vmatpush1.bf16.msra.mxu0 %v7155
        %10068 = vmatprep.subr.bf16.mxu0 %v7158
        %10069 = vmatpush1.bf16.msra.mxu0 %v7157
        %10070 = vmatprep.subr.bf16.mxu0 %v7160
        %10071 = vmatpush1.bf16.msra.mxu0 %v7159
        %10072 = vmatprep.subr.bf16.mxu0 %v7162
        %10073 = vmatpush1.bf16.msra.mxu0 %v7161
        %10074 = vmatprep.subr.bf16.mxu0 %v7164
        %10075 = vmatpush1.bf16.msra.mxu0 %v7163
        %10076 = vmatprep.subr.bf16.mxu0 %v7166
        %10077 = vmatpush1.bf16.msra.mxu0 %v7165
        %10078 = vmatprep.subr.bf16.mxu0 %v7168
        %10079 = vmatpush1.bf16.msra.mxu0 %v7167
        %10080 = vmatprep.subr.bf16.mxu0 %v7170
        %10081 = vmatpush1.bf16.msra.mxu0 %v7169
        %10082 = vmatprep.subr.bf16.mxu0 %v7172
        %10083 = vmatpush1.bf16.msra.mxu0 %v7171
        %10084 = vmatprep.subr.bf16.mxu0 %v7174
        %10085 = vmatpush1.bf16.msra.mxu0 %v7173
        %10086 = vmatprep.mubr.bf16.mxu0 %v1974
        %10087 = vmatmul.mubr.bf16.gmra.mrb[0].mxu0 %v1972
        %v10088 = vpop.f32.mrb[0].mxu0
        %v10089 = vadd.f32 %v10048, %v10088
        %v10090 = vpop.f32.mrb[0].mxu0
        %v10091 = vadd.f32 %v10050, %v10090
        %v10092 = vpop.f32.mrb[0].mxu0
        %v10093 = vpop.f32.mrb[0].mxu0
        %10094 = vdwg.mxu0
        %v10097 = vcombine.low %v10089, %v10091
        %v10099 = vunpack.c.l.s4 1983009808
        %v10100 = vunpack.c.0.s8 %v10099
        %v10101 = vlaneseq
        %v10102 = vshrl.u32 %v10101, 7
        %v10103 = vsub.s32 %v10100, %v10102
        %v10104 = vrot.slane %v10097, %v10103
        %10106 = vst [vmem:[%s184] sm:$0xf] %v10104
        %p10107 = scmp.lt.s32.totalorder %s16, 1
        %s10108 = scalar_select %p10107, %s16, 1
        %s10109 = smul.addr %s10108, 2
        %s10110 = smul.addr %s10109, 2
        %s10111 = scalar_lea.vmem %s2, %s10110
        // Predicated region
        $region33: #{omic_network_forward.1} parent=27 // pred_check
          %p10112 = pneg %p86
        $region34: #{omic_network_forward.1} parent=27 // pred_check_branch
          %10114 = sbr.rel (%p10112) target = $region36
        $region35: #{omic_network_forward.1} parent=27 // pred_region
          _
        $region36: #{omic_network_forward.1} parent=27 // pred_fallthru
          _
      $region28: #{omic_network_forward.1} parent=5 // pred_fallthru
        _
      %p10115 = scmp.le.s32.totalorder 2, %s11
      // Predicated region
      $region37: #{omic_network_forward.1} parent=5 // pred_check
        %p10116 = pneg %p10115
      $region38: #{omic_network_forward.1} parent=5 // pred_check_branch
        %10118 = sbr.rel (%p10116) target = $region40
      $region39: #{omic_network_forward.1} parent=5 // pred_region
        %s10119 = ssub.s32 %s11, 2
        // Predicated region
        $region41: #{omic_network_forward.1} parent=39 // pred_check
          %p10120 = pneg %p92
        $region42: #{omic_network_forward.1} parent=39 // pred_check_branch
          %10122 = sbr.rel (%p10120) target = $region44
        $region43: #{omic_network_forward.1} parent=39 // pred_region
          %p10123 = scmp.lt.s32.totalorder %s17, 1
          %s10124 = scalar_select %p10123, %s17, 1
          %s10125 = smul.addr %s10124, 2
          %s10126 = smul.addr %s10125, 2
          %s10127 = scalar_lea.vmem %s2, %s10126
        $region44: #{omic_network_forward.1} parent=39 // pred_fallthru
          _
      $region40: #{omic_network_forward.1} parent=5 // pred_fallthru
        _
    $region6: #{omic_network_forward.1} parent=1 // loop_footer
      %s15 = sadd.s32 1, %s11
    $region7: #{omic_network_forward.1} parent=1 // loop_footer_branch
      %10 = sbr.rel target = $region3
    $region8: #{omic_network_forward.1} parent=1 // loop_exit
      _
    %10128 = vsyncpa [#allocation3], 1
    %s10129 = scalar_lea.sflag [#allocation3], 1
    %10130 = vsyncpa %s10129, 1

</llo_original>
